<compile_context>
chip_gen: v7x
topology: tpu7x:2x2x1
jax: 0.10.0
libtpu: 0.0.40
codegen_flags: <defaults>
</compile_context>

<pallas_src>
import functools

import jax
import jax.numpy as jnp
from jax.experimental import pallas as pl
from jax.experimental.pallas import tpu as pltpu

NEG_SLOPE = 0.01      # F.leaky_relu default
BN_EPS = 1e-5         # nn.BatchNorm1d default
HIDDEN = [1500, 1250, 1000, 750]


def _ceil_to(n, m):
  return ((n + m - 1) // m) * m


def _pad2(a, rows, cols):
  return jnp.zeros((rows, cols), a.dtype).at[:a.shape[0], :a.shape[1]].set(a)


def _pad1(a, n):
  return jnp.zeros((n,), a.dtype).at[:a.shape[0]].set(a)


# -----------------------------------------------------------------------------
# Single fused kernel: 5 x (int8->bf16 dequant cast, bf16 matmul on MXU with
# f32 accumulation, per-column dequant scale + bias + leaky_relu on the VPU).
# All weights/scales/biases are VMEM-resident for the whole call.
# -----------------------------------------------------------------------------
def _mlp_fused_kernel(x_ref,
                      w1_ref, s1_ref, b1_ref,
                      w2_ref, s2_ref, b2_ref,
                      w3_ref, s3_ref, b3_ref,
                      w4_ref, s4_ref, b4_ref,
                      w5_ref, s5_ref, b5_ref,
                      o_ref):
  def layer(h, w_ref, s_ref, b_ref, act):
    # int8 -> bf16 dequant cast (exact: |q| <= 127 fits bf16), MXU bf16 matmul.
    w = w_ref[...].astype(jnp.bfloat16)
    y = jnp.dot(h, w, preferred_element_type=jnp.float32)
    y = y * s_ref[...] + b_ref[...]          # per-column dequant scale + bias
    if act:
      y = jnp.maximum(y, NEG_SLOPE * y)      # leaky_relu (mul + max)
      return y.astype(jnp.bfloat16)          # next layer's MXU input
    return y

  h = x_ref[...]
  h = layer(h, w1_ref, s1_ref, b1_ref, True)
  h = layer(h, w2_ref, s2_ref, b2_ref, True)
  h = layer(h, w3_ref, s3_ref, b3_ref, True)
  h = layer(h, w4_ref, s4_ref, b4_ref, True)
  o_ref[...] = layer(h, w5_ref, s5_ref, b5_ref, False).astype(o_ref.dtype)


def model_forward(packed, x, *, num_targets):
  """Fused forward pass. `packed` = [w_q(int8), scale, bias] * 5 (BN-folded,
  per-column int8-quantized, zero-padded to multiples of 128)."""
  B, F = x.shape
  F_pad = packed[0].shape[0]
  out_pad = packed[-1].shape[1]

  # Batch tiling: 256-row tiles for large batches (full MXU height on
  # v6e/v7x); a single 8-aligned tile covering the whole batch when small.
  if B > 256:
    bm = 256
  else:
    bm = _ceil_to(max(B, 8), 8)
  B_pad = _ceil_to(B, bm)

  x_pad = jnp.zeros((B_pad, F_pad), jnp.bfloat16).at[:B, :F].set(
      x.astype(jnp.bfloat16))

  in_specs = [pl.BlockSpec((bm, F_pad), lambda i: (i, 0))]
  for p in packed:
    # Block index constant across the batch axis -> weights/scales/biases are
    # DMA'd once and stay VMEM-resident for all batch tiles.
    in_specs.append(pl.BlockSpec(p.shape, lambda i: (0, 0)))

  out_padded = pl.pallas_call(
      _mlp_fused_kernel,
      out_shape=jax.ShapeDtypeStruct((B_pad, out_pad), jnp.float32),
      grid=(B_pad // bm,),
      in_specs=in_specs,
      out_specs=pl.BlockSpec((bm, out_pad), lambda i: (i, 0)),
      compiler_params=pltpu.CompilerParams(
          # Weight-DMA bound at small batch: keep on a single TensorCore
          # ("arbitrary") so megacore doesn't duplicate the weight DMA.
          dimension_semantics=("arbitrary",),
          vmem_limit_bytes=32 << 20),
  )(x_pad, *packed)
  return out_padded[:B, :num_targets]


# -----------------------------------------------------------------------------
# Parameter construction (PyTorch-equivalent, deterministic, in-script)
# -----------------------------------------------------------------------------
def init_raw_params(key, num_features, num_targets):
  """Original-structure f32 parameters (what nn.Module would hold)."""
  dims_in = [num_features] + HIDDEN
  dims_out = HIDDEN + [num_targets]
  keys = iter(jax.random.split(key, 40))
  raw = {}
  # BatchNorm1d layers: gamma, beta, running_mean, running_var
  for li, f in enumerate(dims_in):
    gamma = 1.0 + 0.1 * jax.random.normal(next(keys), (f,), jnp.float32)
    beta = 0.1 * jax.random.normal(next(keys), (f,), jnp.float32)
    rmean = 0.05 * jax.random.normal(next(keys), (f,), jnp.float32)
    rvar = 1.0 + 0.1 * jax.random.uniform(next(keys), (f,), jnp.float32)
    raw[f"bn{li + 1}"] = (gamma, beta, rmean, rvar)
  # dense1..dense4 (plain Linear), weights stored (in, out)
  for li in range(4):
    fin, fout = dims_in[li], dims_out[li]
    w = 0.02 * jax.random.normal(next(keys), (fin, fout), jnp.float32)
    b = 0.02 * jax.random.normal(next(keys), (fout,), jnp.float32)
    raw[f"dense{li + 1}"] = (w, b)
  # dense5 with weight_norm (PyTorch dim=0: per-output-row norm of v)
  fin, fout = dims_in[4], dims_out[4]
  v = 0.02 * jax.random.normal(next(keys), (fout, fin), jnp.float32)
  g = jnp.linalg.norm(v, axis=1) * (
      1.0 + 0.05 * jax.random.normal(next(keys), (fout,), jnp.float32))
  b = 0.02 * jax.random.normal(next(keys), (fout,), jnp.float32)
  raw["dense5"] = (v, g, b)
  return raw


def pack_params(raw, num_features, num_targets):
  """Fold eval-mode BN into each Linear, quantize the folded weights to int8
  with per-output-column f32 scales, zero-pad every feature dim to a multiple
  of 128 (lane-dense).  Biases and scales stay f32."""
  dims_in = [num_features] + HIDDEN
  dims_out = HIDDEN + [num_targets]
  pad_in = [_ceil_to(d, 128) for d in dims_in]
  pad_out = [_ceil_to(d, 128) for d in dims_out]

  packed = []
  for li in range(5):
    gamma, beta, rmean, rvar = raw[f"bn{li + 1}"]
    bn_scale = gamma / jnp.sqrt(rvar + BN_EPS)
    bn_shift = beta - rmean * bn_scale
    if li < 4:
      w, b = raw[f"dense{li + 1}"]
    else:
      v, g, b = raw["dense5"]
      w = (g[:, None] * v / jnp.linalg.norm(v, axis=1, keepdims=True)).T
    w_f = bn_scale[:, None] * w            # BN scale folded into weight rows
    b_f = b + bn_shift @ w                 # BN shift folded into bias

    # Symmetric per-output-column int8 quantization.
    col_max = jnp.maximum(jnp.max(jnp.abs(w_f), axis=0), 1e-12)
    qscale = (col_max / 127.0).astype(jnp.float32)
    w_q = jnp.clip(jnp.round(w_f / qscale), -127.0, 127.0).astype(jnp.int8)

    packed.append(_pad2(w_q, pad_in[li], pad_out[li]))
    packed.append(_pad1(qscale, pad_out[li]).reshape(1, -1))
    packed.append(_pad1(b_f.astype(jnp.float32), pad_out[li]).reshape(1, -1))
  return packed


# -----------------------------------------------------------------------------
# References
# -----------------------------------------------------------------------------
def model_forward_quant_ref(packed, x, *, num_features, num_targets):
  """Pure-JAX mirror of the kernel math (int8 weights, bf16 activations, f32
  accumulation) for a tight kernel-correctness check."""
  F_pad = packed[0].shape[0]
  h = jnp.zeros((x.shape[0], F_pad), jnp.bfloat16).at[:, :num_features].set(
      x.astype(jnp.bfloat16))
  y = None
  for li in range(5):
    w_q, s, b = packed[3 * li], packed[3 * li + 1], packed[3 * li + 2]
    y = jnp.dot(h, w_q.astype(jnp.bfloat16),
                preferred_element_type=jnp.float32) * s + b
    if li < 4:
      y = jnp.maximum(y, NEG_SLOPE * y)
      h = y.astype(jnp.bfloat16)
  return y[:, :num_targets]


def model_forward_ref(raw, x):
  """Pure-JAX f32 reference with the original (unfolded, unquantized) params."""
  def bn(h, gamma, beta, rmean, rvar):
    return (h - rmean) / jnp.sqrt(rvar + BN_EPS) * gamma + beta

  h = x
  for li in range(4):
    h = bn(h, *raw[f"bn{li + 1}"])
    w, b = raw[f"dense{li + 1}"]
    h = h @ w + b
    h = jnp.where(h > 0, h, NEG_SLOPE * h)
  h = bn(h, *raw["bn5"])
  v, g, b = raw["dense5"]
  w5 = (g[:, None] * v / jnp.linalg.norm(v, axis=1, keepdims=True)).T
  return h @ w5 + b


if __name__ == "__main__":
  num_features = 64
  num_targets = 32
  batch = 8

  key = jax.random.PRNGKey(0)
  pkey, xkey = jax.random.split(key)
  raw = init_raw_params(pkey, num_features, num_targets)
  packed = pack_params(raw, num_features, num_targets)
  x = jax.random.normal(xkey, (batch, num_features), jnp.float32)

  fwd = jax.jit(functools.partial(model_forward, num_targets=num_targets))
  out = jax.block_until_ready(fwd(packed, x))
  assert out.shape == (batch, num_targets), out.shape

  # 1) Kernel correctness: compare against a pure-JAX mirror of the exact
  #    quantized / bf16 math (differences are only f32 accumulation order).
  ref_q = model_forward_quant_ref(packed, x, num_features=num_features,
                                  num_targets=num_targets)
  err_kernel = float(jnp.max(jnp.abs(out - ref_q)) /
                     (jnp.max(jnp.abs(ref_q)) + 1e-6))
  assert err_kernel < 1e-2, f"kernel vs quantized reference: {err_kernel}"

  # 2) Quantization fidelity: compare against the original f32 model.
  #    int8 per-column weights + bf16 activations stay within a few percent.
  ref_f = model_forward_ref(raw, x)
  err_quant = float(jnp.max(jnp.abs(out - ref_f)) /
                    (jnp.max(jnp.abs(ref_f)) + 1e-6))
  assert err_quant < 0.12, f"kernel vs f32 reference: {err_quant}"

  print("KERNEL_OK")
</pallas_src>

<mosaic_0001>
module attributes {stable_mosaic.version = 11 : i64} {
  func.func @_mlp_fused_kernel(%arg0: i32, %arg1: memref<8x128xbf16, #tpu.memory_space<vmem>>, %arg2: memref<128x1536xi8, #tpu.memory_space<vmem>>, %arg3: memref<1x1536xf32, #tpu.memory_space<vmem>>, %arg4: memref<1x1536xf32, #tpu.memory_space<vmem>>, %arg5: memref<1536x1280xi8, #tpu.memory_space<vmem>>, %arg6: memref<1x1280xf32, #tpu.memory_space<vmem>>, %arg7: memref<1x1280xf32, #tpu.memory_space<vmem>>, %arg8: memref<1280x1024xi8, #tpu.memory_space<vmem>>, %arg9: memref<1x1024xf32, #tpu.memory_space<vmem>>, %arg10: memref<1x1024xf32, #tpu.memory_space<vmem>>, %arg11: memref<1024x768xi8, #tpu.memory_space<vmem>>, %arg12: memref<1x768xf32, #tpu.memory_space<vmem>>, %arg13: memref<1x768xf32, #tpu.memory_space<vmem>>, %arg14: memref<768x128xi8, #tpu.memory_space<vmem>>, %arg15: memref<1x128xf32, #tpu.memory_space<vmem>>, %arg16: memref<1x128xf32, #tpu.memory_space<vmem>>, %arg17: memref<8x128xf32, #tpu.memory_space<vmem>>) attributes {dimension_semantics = [#tpu.dimension_semantics<arbitrary>], iteration_bounds = array<i64: 1>, scalar_prefetch = 0 : i64, scratch_operands = 0 : i64, tpu.core_type = #tpu.core_type<tc>, window_params = [{transform_indices = @transform_0, window_bounds = array<i64: 8, 128>}, {pipeline_mode = #tpu.pipeline_mode<synchronous>, transform_indices = @transform_1, window_bounds = array<i64: 128, 1536>}, {pipeline_mode = #tpu.pipeline_mode<synchronous>, transform_indices = @transform_2, window_bounds = array<i64: 1, 1536>}, {pipeline_mode = #tpu.pipeline_mode<synchronous>, transform_indices = @transform_3, window_bounds = array<i64: 1, 1536>}, {pipeline_mode = #tpu.pipeline_mode<synchronous>, transform_indices = @transform_4, window_bounds = array<i64: 1536, 1280>}, {pipeline_mode = #tpu.pipeline_mode<synchronous>, transform_indices = @transform_5, window_bounds = array<i64: 1, 1280>}, {pipeline_mode = #tpu.pipeline_mode<synchronous>, transform_indices = @transform_6, window_bounds = array<i64: 1, 1280>}, {pipeline_mode = #tpu.pipeline_mode<synchronous>, transform_indices = @transform_7, window_bounds = array<i64: 1280, 1024>}, {pipeline_mode = #tpu.pipeline_mode<synchronous>, transform_indices = @transform_8, window_bounds = array<i64: 1, 1024>}, {pipeline_mode = #tpu.pipeline_mode<synchronous>, transform_indices = @transform_9, window_bounds = array<i64: 1, 1024>}, {pipeline_mode = #tpu.pipeline_mode<synchronous>, transform_indices = @transform_10, window_bounds = array<i64: 1024, 768>}, {pipeline_mode = #tpu.pipeline_mode<synchronous>, transform_indices = @transform_11, window_bounds = array<i64: 1, 768>}, {pipeline_mode = #tpu.pipeline_mode<synchronous>, transform_indices = @transform_12, window_bounds = array<i64: 1, 768>}, {pipeline_mode = #tpu.pipeline_mode<synchronous>, transform_indices = @transform_13, window_bounds = array<i64: 768, 128>}, {pipeline_mode = #tpu.pipeline_mode<synchronous>, transform_indices = @transform_14, window_bounds = array<i64: 1, 128>}, {pipeline_mode = #tpu.pipeline_mode<synchronous>, transform_indices = @transform_15, window_bounds = array<i64: 1, 128>}, {transform_indices = @transform_16, window_bounds = array<i64: 8, 128>}]} {
    %c0 = arith.constant 0 : index
    %c0_0 = arith.constant 0 : index
    %0 = vector.load %arg1[%c0, %c0_0] : memref<8x128xbf16, #tpu.memory_space<vmem>>, vector<8x128xbf16>
    %c0_1 = arith.constant 0 : index
    %c0_2 = arith.constant 0 : index
    %1 = vector.load %arg2[%c0_1, %c0_2] : memref<128x1536xi8, #tpu.memory_space<vmem>>, vector<128x1536xi8>
    %2 = arith.sitofp %1 : vector<128x1536xi8> to vector<128x1536xbf16>
    %cst = arith.constant dense<0.000000e+00> : vector<8x1536xf32>
    %3 = tpu.matmul %0, %2, %cst {dimension_numbers = #tpu.dot_dimension_numbers<[1], [0], [0], [1], [0, 0, 1, 1], [], []>} : vector<8x128xbf16>, vector<128x1536xbf16>, vector<8x1536xf32> -> vector<8x1536xf32>
    %c0_3 = arith.constant 0 : index
    %c0_4 = arith.constant 0 : index
    %4 = vector.load %arg3[%c0_3, %c0_4] : memref<1x1536xf32, #tpu.memory_space<vmem>>, vector<1x1536xf32>
    %5 = vector.broadcast %4 : vector<1x1536xf32> to vector<8x1536xf32>
    %6 = arith.mulf %3, %5 : vector<8x1536xf32>
    %c0_5 = arith.constant 0 : index
    %c0_6 = arith.constant 0 : index
    %7 = vector.load %arg4[%c0_5, %c0_6] : memref<1x1536xf32, #tpu.memory_space<vmem>>, vector<1x1536xf32>
    %8 = vector.broadcast %7 : vector<1x1536xf32> to vector<8x1536xf32>
    %9 = arith.addf %6, %8 : vector<8x1536xf32>
    %cst_7 = arith.constant 0.00999999977 : f32
    %10 = vector.broadcast %cst_7 : f32 to vector<8x1536xf32>
    %11 = arith.mulf %10, %9 : vector<8x1536xf32>
    %12 = arith.maximumf %9, %11 : vector<8x1536xf32>
    %13 = arith.truncf %12 : vector<8x1536xf32> to vector<8x1536xbf16>
    %c0_8 = arith.constant 0 : index
    %c0_9 = arith.constant 0 : index
    %14 = vector.load %arg5[%c0_8, %c0_9] : memref<1536x1280xi8, #tpu.memory_space<vmem>>, vector<1536x1280xi8>
    %15 = arith.sitofp %14 : vector<1536x1280xi8> to vector<1536x1280xbf16>
    %cst_10 = arith.constant dense<0.000000e+00> : vector<8x1280xf32>
    %16 = tpu.matmul %13, %15, %cst_10 {dimension_numbers = #tpu.dot_dimension_numbers<[1], [0], [0], [1], [0, 0, 1, 1], [], []>} : vector<8x1536xbf16>, vector<1536x1280xbf16>, vector<8x1280xf32> -> vector<8x1280xf32>
    %c0_11 = arith.constant 0 : index
    %c0_12 = arith.constant 0 : index
    %17 = vector.load %arg6[%c0_11, %c0_12] : memref<1x1280xf32, #tpu.memory_space<vmem>>, vector<1x1280xf32>
    %18 = vector.broadcast %17 : vector<1x1280xf32> to vector<8x1280xf32>
    %19 = arith.mulf %16, %18 : vector<8x1280xf32>
    %c0_13 = arith.constant 0 : index
    %c0_14 = arith.constant 0 : index
    %20 = vector.load %arg7[%c0_13, %c0_14] : memref<1x1280xf32, #tpu.memory_space<vmem>>, vector<1x1280xf32>
    %21 = vector.broadcast %20 : vector<1x1280xf32> to vector<8x1280xf32>
    %22 = arith.addf %19, %21 : vector<8x1280xf32>
    %cst_15 = arith.constant 0.00999999977 : f32
    %23 = vector.broadcast %cst_15 : f32 to vector<8x1280xf32>
    %24 = arith.mulf %23, %22 : vector<8x1280xf32>
    %25 = arith.maximumf %22, %24 : vector<8x1280xf32>
    %26 = arith.truncf %25 : vector<8x1280xf32> to vector<8x1280xbf16>
    %c0_16 = arith.constant 0 : index
    %c0_17 = arith.constant 0 : index
    %27 = vector.load %arg8[%c0_16, %c0_17] : memref<1280x1024xi8, #tpu.memory_space<vmem>>, vector<1280x1024xi8>
    %28 = arith.sitofp %27 : vector<1280x1024xi8> to vector<1280x1024xbf16>
    %cst_18 = arith.constant dense<0.000000e+00> : vector<8x1024xf32>
    %29 = tpu.matmul %26, %28, %cst_18 {dimension_numbers = #tpu.dot_dimension_numbers<[1], [0], [0], [1], [0, 0, 1, 1], [], []>} : vector<8x1280xbf16>, vector<1280x1024xbf16>, vector<8x1024xf32> -> vector<8x1024xf32>
    %c0_19 = arith.constant 0 : index
    %c0_20 = arith.constant 0 : index
    %30 = vector.load %arg9[%c0_19, %c0_20] : memref<1x1024xf32, #tpu.memory_space<vmem>>, vector<1x1024xf32>
    %31 = vector.broadcast %30 : vector<1x1024xf32> to vector<8x1024xf32>
    %32 = arith.mulf %29, %31 : vector<8x1024xf32>
    %c0_21 = arith.constant 0 : index
    %c0_22 = arith.constant 0 : index
    %33 = vector.load %arg10[%c0_21, %c0_22] : memref<1x1024xf32, #tpu.memory_space<vmem>>, vector<1x1024xf32>
    %34 = vector.broadcast %33 : vector<1x1024xf32> to vector<8x1024xf32>
    %35 = arith.addf %32, %34 : vector<8x1024xf32>
    %cst_23 = arith.constant 0.00999999977 : f32
    %36 = vector.broadcast %cst_23 : f32 to vector<8x1024xf32>
    %37 = arith.mulf %36, %35 : vector<8x1024xf32>
    %38 = arith.maximumf %35, %37 : vector<8x1024xf32>
    %39 = arith.truncf %38 : vector<8x1024xf32> to vector<8x1024xbf16>
    %c0_24 = arith.constant 0 : index
    %c0_25 = arith.constant 0 : index
    %40 = vector.load %arg11[%c0_24, %c0_25] : memref<1024x768xi8, #tpu.memory_space<vmem>>, vector<1024x768xi8>
    %41 = arith.sitofp %40 : vector<1024x768xi8> to vector<1024x768xbf16>
    %cst_26 = arith.constant dense<0.000000e+00> : vector<8x768xf32>
    %42 = tpu.matmul %39, %41, %cst_26 {dimension_numbers = #tpu.dot_dimension_numbers<[1], [0], [0], [1], [0, 0, 1, 1], [], []>} : vector<8x1024xbf16>, vector<1024x768xbf16>, vector<8x768xf32> -> vector<8x768xf32>
    %c0_27 = arith.constant 0 : index
    %c0_28 = arith.constant 0 : index
    %43 = vector.load %arg12[%c0_27, %c0_28] : memref<1x768xf32, #tpu.memory_space<vmem>>, vector<1x768xf32>
    %44 = vector.broadcast %43 : vector<1x768xf32> to vector<8x768xf32>
    %45 = arith.mulf %42, %44 : vector<8x768xf32>
    %c0_29 = arith.constant 0 : index
    %c0_30 = arith.constant 0 : index
    %46 = vector.load %arg13[%c0_29, %c0_30] : memref<1x768xf32, #tpu.memory_space<vmem>>, vector<1x768xf32>
    %47 = vector.broadcast %46 : vector<1x768xf32> to vector<8x768xf32>
    %48 = arith.addf %45, %47 : vector<8x768xf32>
    %cst_31 = arith.constant 0.00999999977 : f32
    %49 = vector.broadcast %cst_31 : f32 to vector<8x768xf32>
    %50 = arith.mulf %49, %48 : vector<8x768xf32>
    %51 = arith.maximumf %48, %50 : vector<8x768xf32>
    %52 = arith.truncf %51 : vector<8x768xf32> to vector<8x768xbf16>
    %c0_32 = arith.constant 0 : index
    %c0_33 = arith.constant 0 : index
    %53 = vector.load %arg14[%c0_32, %c0_33] : memref<768x128xi8, #tpu.memory_space<vmem>>, vector<768x128xi8>
    %54 = arith.sitofp %53 : vector<768x128xi8> to vector<768x128xbf16>
    %cst_34 = arith.constant dense<0.000000e+00> : vector<8x128xf32>
    %55 = tpu.matmul %52, %54, %cst_34 {dimension_numbers = #tpu.dot_dimension_numbers<[1], [0], [0], [1], [0, 0, 1, 1], [], []>} : vector<8x768xbf16>, vector<768x128xbf16>, vector<8x128xf32> -> vector<8x128xf32>
    %c0_35 = arith.constant 0 : index
    %c0_36 = arith.constant 0 : index
    %56 = vector.load %arg15[%c0_35, %c0_36] : memref<1x128xf32, #tpu.memory_space<vmem>>, vector<1x128xf32>
    %57 = vector.broadcast %56 : vector<1x128xf32> to vector<8x128xf32>
    %58 = arith.mulf %55, %57 : vector<8x128xf32>
    %c0_37 = arith.constant 0 : index
    %c0_38 = arith.constant 0 : index
    %59 = vector.load %arg16[%c0_37, %c0_38] : memref<1x128xf32, #tpu.memory_space<vmem>>, vector<1x128xf32>
    %60 = vector.broadcast %59 : vector<1x128xf32> to vector<8x128xf32>
    %61 = arith.addf %58, %60 : vector<8x128xf32>
    %c0_39 = arith.constant 0 : index
    %c0_40 = arith.constant 0 : index
    %62 = vector.load %arg17[%c0_39, %c0_40] : memref<8x128xf32, #tpu.memory_space<vmem>>, vector<8x128xf32>
    tpu.vector_store %arg17[%c0_39, %c0_40], %61 {strides = array<i32>} : memref<8x128xf32, #tpu.memory_space<vmem>>, vector<8x128xf32>,
    return
  }
  func.func @transform_0(%arg0: i32) -> (i32, i32) {
    %c0_i32 = arith.constant 0 : i32
    %c0_i32_0 = arith.constant 0 : i32
    return %arg0, %c0_i32 : i32, i32
  }
  func.func @transform_1(%arg0: i32) -> (i32, i32) {
    %c0_i32 = arith.constant 0 : i32
    %c0_i32_0 = arith.constant 0 : i32
    %c0_i32_1 = arith.constant 0 : i32
    return %c0_i32, %c0_i32_0 : i32, i32
  }
  func.func @transform_2(%arg0: i32) -> (i32, i32) {
    %c0_i32 = arith.constant 0 : i32
    %c0_i32_0 = arith.constant 0 : i32
    %c0_i32_1 = arith.constant 0 : i32
    return %c0_i32, %c0_i32_0 : i32, i32
  }
  func.func @transform_3(%arg0: i32) -> (i32, i32) {
    %c0_i32 = arith.constant 0 : i32
    %c0_i32_0 = arith.constant 0 : i32
    %c0_i32_1 = arith.constant 0 : i32
    return %c0_i32, %c0_i32_0 : i32, i32
  }
  func.func @transform_4(%arg0: i32) -> (i32, i32) {
    %c0_i32 = arith.constant 0 : i32
    %c0_i32_0 = arith.constant 0 : i32
    %c0_i32_1 = arith.constant 0 : i32
    return %c0_i32, %c0_i32_0 : i32, i32
  }
  func.func @transform_5(%arg0: i32) -> (i32, i32) {
    %c0_i32 = arith.constant 0 : i32
    %c0_i32_0 = arith.constant 0 : i32
    %c0_i32_1 = arith.constant 0 : i32
    return %c0_i32, %c0_i32_0 : i32, i32
  }
  func.func @transform_6(%arg0: i32) -> (i32, i32) {
    %c0_i32 = arith.constant 0 : i32
    %c0_i32_0 = arith.constant 0 : i32
    %c0_i32_1 = arith.constant 0 : i32
    return %c0_i32, %c0_i32_0 : i32, i32
  }
  func.func @transform_7(%arg0: i32) -> (i32, i32) {
    %c0_i32 = arith.constant 0 : i32
    %c0_i32_0 = arith.constant 0 : i32
    %c0_i32_1 = arith.constant 0 : i32
    return %c0_i32, %c0_i32_0 : i32, i32
  }
  func.func @transform_8(%arg0: i32) -> (i32, i32) {
    %c0_i32 = arith.constant 0 : i32
    %c0_i32_0 = arith.constant 0 : i32
    %c0_i32_1 = arith.constant 0 : i32
    return %c0_i32, %c0_i32_0 : i32, i32
  }
  func.func @transform_9(%arg0: i32) -> (i32, i32) {
    %c0_i32 = arith.constant 0 : i32
    %c0_i32_0 = arith.constant 0 : i32
    %c0_i32_1 = arith.constant 0 : i32
    return %c0_i32, %c0_i32_0 : i32, i32
  }
  func.func @transform_10(%arg0: i32) -> (i32, i32) {
    %c0_i32 = arith.constant 0 : i32
    %c0_i32_0 = arith.constant 0 : i32
    %c0_i32_1 = arith.constant 0 : i32
    return %c0_i32, %c0_i32_0 : i32, i32
  }
  func.func @transform_11(%arg0: i32) -> (i32, i32) {
    %c0_i32 = arith.constant 0 : i32
    %c0_i32_0 = arith.constant 0 : i32
    %c0_i32_1 = arith.constant 0 : i32
    return %c0_i32, %c0_i32_0 : i32, i32
  }
  func.func @transform_12(%arg0: i32) -> (i32, i32) {
    %c0_i32 = arith.constant 0 : i32
    %c0_i32_0 = arith.constant 0 : i32
    %c0_i32_1 = arith.constant 0 : i32
    return %c0_i32, %c0_i32_0 : i32, i32
  }
  func.func @transform_13(%arg0: i32) -> (i32, i32) {
    %c0_i32 = arith.constant 0 : i32
    %c0_i32_0 = arith.constant 0 : i32
    %c0_i32_1 = arith.constant 0 : i32
    return %c0_i32, %c0_i32_0 : i32, i32
  }
  func.func @transform_14(%arg0: i32) -> (i32, i32) {
    %c0_i32 = arith.constant 0 : i32
    %c0_i32_0 = arith.constant 0 : i32
    %c0_i32_1 = arith.constant 0 : i32
    return %c0_i32, %c0_i32_0 : i32, i32
  }
  func.func @transform_15(%arg0: i32) -> (i32, i32) {
    %c0_i32 = arith.constant 0 : i32
    %c0_i32_0 = arith.constant 0 : i32
    %c0_i32_1 = arith.constant 0 : i32
    return %c0_i32, %c0_i32_0 : i32, i32
  }
  func.func @transform_16(%arg0: i32) -> (i32, i32) {
    %c0_i32 = arith.constant 0 : i32
    %c0_i32_0 = arith.constant 0 : i32
    return %arg0, %c0_i32 : i32, i32
  }
}

</mosaic_0001>

<llo_original>
// kernel: model_forward.1
$region0: #{model_forward.1}
  #allocation0 [shape = 'u32[]', space=smem, size = 0x4, offset = 0x4, fixed_abs, tag = 'smem constant byte address 0x4 - core index']
  #allocation1 [shape = 'u32[144,128]{1,0:T(1,128)}', space=vmem, size = 0x12000, scoped, tag = 'internal scratch']
  %s0 = inlined_call_operand.vmem [shape: bf16[8,128], index: 0, kind: input, shape index: {}]
  %s1 = inlined_call_operand.hbm [shape: s8[128,1536], index: 1, kind: input, shape index: {}]
  %s2 = inlined_call_operand.hbm [shape: f32[1,1536], index: 2, kind: input, shape index: {}]
  %s3 = inlined_call_operand.hbm [shape: f32[1,1536], index: 3, kind: input, shape index: {}]
  %s4 = inlined_call_operand.hbm [shape: s8[1536,1280], index: 4, kind: input, shape index: {}]
  %s5 = inlined_call_operand.hbm [shape: f32[1,1280], index: 5, kind: input, shape index: {}]
  %s6 = inlined_call_operand.hbm [shape: f32[1,1280], index: 6, kind: input, shape index: {}]
  %s7 = inlined_call_operand.hbm [shape: s8[1280,1024], index: 7, kind: input, shape index: {}]
  %s8 = inlined_call_operand.hbm [shape: f32[1,1024], index: 8, kind: input, shape index: {}]
  %s9 = inlined_call_operand.hbm [shape: f32[1,1024], index: 9, kind: input, shape index: {}]
  %s10 = inlined_call_operand.hbm [shape: s8[1024,768], index: 10, kind: input, shape index: {}]
  %s11 = inlined_call_operand.hbm [shape: f32[1,768], index: 11, kind: input, shape index: {}]
  %s12 = inlined_call_operand.hbm [shape: f32[1,768], index: 12, kind: input, shape index: {}]
  %s13 = inlined_call_operand.hbm [shape: s8[768,128], index: 13, kind: input, shape index: {}]
  %s14 = inlined_call_operand.hbm [shape: f32[1,128], index: 14, kind: input, shape index: {}]
  %s15 = inlined_call_operand.hbm [shape: f32[1,128], index: 15, kind: input, shape index: {}]
  %s16 = inlined_call_operand.hbm [shape: f32[8,128], index: 16, kind: output, shape index: {}]
  %s17 = sld [smem:[#allocation0]]
  $region134: #{model_forward.1} parent=0
    _
  %s19 = ssub.s32 1, %s17
  %s20 = scalar_select 0, %s19, %s17
  $region1: #{model_forward.1} parent=0
    #allocation2 [shape = 'u8[196608]{0}', space=vmem, size = 0x30000, scoped, tag = 'input window, operand 1, single buffered']
    #allocation3 [shape = 's32[1]{0}', space=sflag, size = 0x4, scoped, tag = 'scoped memory for model_forward.1']
    #allocation4 [shape = 's32[1]{0}', space=sflag, size = 0x4, scoped, tag = 'scoped memory for model_forward.1']
    #allocation5 [shape = 'u8[6144]{0}', space=vmem, size = 0x1800, scoped, tag = 'input window, operand 2, single buffered']
    #allocation6 [shape = 's32[1]{0}', space=sflag, size = 0x4, scoped, tag = 'scoped memory for model_forward.1']
    #allocation7 [shape = 'u8[6144]{0}', space=vmem, size = 0x1800, scoped, tag = 'input window, operand 3, single buffered']
    #allocation8 [shape = 'u8[1966080]{0}', space=vmem, size = 0x1e0000, scoped, tag = 'input window, operand 4, single buffered']
    #allocation9 [shape = 's32[1]{0}', space=sflag, size = 0x4, scoped, tag = 'scoped memory for model_forward.1']
    #allocation10 [shape = 'u8[5120]{0}', space=vmem, size = 0x1400, scoped, tag = 'input window, operand 5, single buffered']
    #allocation11 [shape = 'u8[5120]{0}', space=vmem, size = 0x1400, scoped, tag = 'input window, operand 6, single buffered']
    #allocation12 [shape = 's32[1]{0}', space=sflag, size = 0x4, scoped, tag = 'scoped memory for model_forward.1']
    #allocation13 [shape = 'u8[1310720]{0}', space=vmem, size = 0x140000, scoped, tag = 'input window, operand 7, single buffered']
    #allocation14 [shape = 'u8[4096]{0}', space=vmem, size = 0x1000, scoped, tag = 'input window, operand 8, single buffered']
    #allocation15 [shape = 's32[1]{0}', space=sflag, size = 0x4, scoped, tag = 'scoped memory for model_forward.1']
    #allocation16 [shape = 'u8[4096]{0}', space=vmem, size = 0x1000, scoped, tag = 'input window, operand 9, single buffered']
    #allocation17 [shape = 'u8[786432]{0}', space=vmem, size = 0xc0000, scoped, tag = 'input window, operand 10, single buffered']
    #allocation18 [shape = 's32[1]{0}', space=sflag, size = 0x4, scoped, tag = 'scoped memory for model_forward.1']
    #allocation19 [shape = 'u8[3072]{0}', space=vmem, size = 0xc00, scoped, tag = 'input window, operand 11, single buffered']
    #allocation20 [shape = 'u8[3072]{0}', space=vmem, size = 0xc00, scoped, tag = 'input window, operand 12, single buffered']
    #allocation21 [shape = 's32[1]{0}', space=sflag, size = 0x4, scoped, tag = 'scoped memory for model_forward.1']
    #allocation22 [shape = 'u8[98304]{0}', space=vmem, size = 0x18000, scoped, tag = 'input window, operand 13, single buffered']
    #allocation23 [shape = 'u8[512]{0}', space=vmem, size = 0x400, scoped, tag = 'input window, operand 14, single buffered']
    #allocation24 [shape = 's32[1]{0}', space=sflag, size = 0x4, scoped, tag = 'scoped memory for model_forward.1']
    #allocation25 [shape = 'u8[512]{0}', space=vmem, size = 0x400, scoped, tag = 'input window, operand 15, single buffered']
    #allocation26 [shape = 'u8[4096]{0}', space=vmem, size = 0x1000, scoped, tag = 'output window, operand 0, single buffered']
    %21 = vsyncpa [#allocation3], 0
    %22 = vsyncpa [#allocation6], 0
    %23 = vsyncpa [#allocation9], 0
    %24 = vsyncpa [#allocation12], 0
    %25 = vsyncpa [#allocation15], 0
    %26 = vsyncpa [#allocation18], 0
    %27 = vsyncpa [#allocation21], 0
    %28 = vsyncpa [#allocation24], 0
    %29 = vsyncpa [#allocation4], 0
    // Predicated region
    $region2: #{model_forward.1} parent=1 // pred_check
      _
    $region3: #{model_forward.1} parent=1 // pred_check_branch
      %31 = sbr.rel (0) target = $region5
    $region4: #{model_forward.1} parent=1 // pred_region
      _
    $region5: #{model_forward.1} parent=1 // pred_fallthru
      _
    // Predicated region
    $region6: #{model_forward.1} parent=1 // pred_check
      _
    $region7: #{model_forward.1} parent=1 // pred_check_branch
      %33 = sbr.rel (0) target = $region9
    $region8: #{model_forward.1} parent=1 // pred_region
      %s35 = ssub.s32 6144, 6144
      %36 = vsyncadd [#allocation3], %s35
      %s37 = sshll.u32 [#allocation2], 4
      %s38 = int_to_ptr.vmem [resolvable:$true] %s37
      %43 = dma.hbm_to_vmem [thread:$0]  %s1, 6144, %s38, [#allocation3], 1536, 1536, 96
    $region9: #{model_forward.1} parent=1 // pred_fallthru
      _
    // Predicated region
    $region10: #{model_forward.1} parent=1 // pred_check
      _
    $region11: #{model_forward.1} parent=1 // pred_check_branch
      %45 = sbr.rel (0) target = $region13
    $region12: #{model_forward.1} parent=1 // pred_region
      %s47 = ssub.s32 192, 192
      %48 = vsyncadd [#allocation6], %s47
      %s50 = sshll.u32 [#allocation5], 4
      %s51 = int_to_ptr.vmem [resolvable:$true] %s50
      %53 = dma.hbm_to_vmem [thread:$0]  %s2, 192, %s51, [#allocation6]
    $region13: #{model_forward.1} parent=1 // pred_fallthru
      _
    // Predicated region
    $region14: #{model_forward.1} parent=1 // pred_check
      _
    $region15: #{model_forward.1} parent=1 // pred_check_branch
      %55 = sbr.rel (0) target = $region17
    $region16: #{model_forward.1} parent=1 // pred_region
      %s57 = ssub.s32 192, 192
      %58 = vsyncadd [#allocation6], %s57
      %s60 = sshll.u32 [#allocation7], 4
      %s61 = int_to_ptr.vmem [resolvable:$true] %s60
      %63 = dma.hbm_to_vmem [thread:$0]  %s3, 192, %s61, [#allocation6]
    $region17: #{model_forward.1} parent=1 // pred_fallthru
      _
    // Predicated region
    $region18: #{model_forward.1} parent=1 // pred_check
      _
    $region19: #{model_forward.1} parent=1 // pred_check_branch
      %65 = sbr.rel (0) target = $region21
    $region20: #{model_forward.1} parent=1 // pred_region
      %s67 = ssub.s32 61440, 61440
      %68 = vsyncadd [#allocation9], %s67
      %s69 = sshll.u32 [#allocation8], 4
      %s70 = int_to_ptr.vmem [resolvable:$true] %s69
      %75 = dma.hbm_to_vmem [thread:$0]  %s4, 61440, %s70, [#allocation9], 1280, 1280, 80
    $region21: #{model_forward.1} parent=1 // pred_fallthru
      _
    // Predicated region
    $region22: #{model_forward.1} parent=1 // pred_check
      _
    $region23: #{model_forward.1} parent=1 // pred_check_branch
      %77 = sbr.rel (0) target = $region25
    $region24: #{model_forward.1} parent=1 // pred_region
      %s79 = ssub.s32 160, 160
      %80 = vsyncadd [#allocation9], %s79
      %s82 = sshll.u32 [#allocation10], 4
      %s83 = int_to_ptr.vmem [resolvable:$true] %s82
      %85 = dma.hbm_to_vmem [thread:$0]  %s5, 160, %s83, [#allocation9]
    $region25: #{model_forward.1} parent=1 // pred_fallthru
      _
    // Predicated region
    $region26: #{model_forward.1} parent=1 // pred_check
      _
    $region27: #{model_forward.1} parent=1 // pred_check_branch
      %87 = sbr.rel (0) target = $region29
    $region28: #{model_forward.1} parent=1 // pred_region
      %s89 = ssub.s32 160, 160
      %90 = vsyncadd [#allocation12], %s89
      %s92 = sshll.u32 [#allocation11], 4
      %s93 = int_to_ptr.vmem [resolvable:$true] %s92
      %95 = dma.hbm_to_vmem [thread:$0]  %s6, 160, %s93, [#allocation12]
    $region29: #{model_forward.1} parent=1 // pred_fallthru
      _
    // Predicated region
    $region30: #{model_forward.1} parent=1 // pred_check
      _
    $region31: #{model_forward.1} parent=1 // pred_check_branch
      %97 = sbr.rel (0) target = $region33
    $region32: #{model_forward.1} parent=1 // pred_region
      %s99 = ssub.s32 40960, 40960
      %100 = vsyncadd [#allocation12], %s99
      %s101 = sshll.u32 [#allocation13], 4
      %s102 = int_to_ptr.vmem [resolvable:$true] %s101
      %107 = dma.hbm_to_vmem [thread:$0]  %s7, 40960, %s102, [#allocation12], 1024, 1024, 64
    $region33: #{model_forward.1} parent=1 // pred_fallthru
      _
    // Predicated region
    $region34: #{model_forward.1} parent=1 // pred_check
      _
    $region35: #{model_forward.1} parent=1 // pred_check_branch
      %109 = sbr.rel (0) target = $region37
    $region36: #{model_forward.1} parent=1 // pred_region
      %s111 = ssub.s32 128, 128
      %112 = vsyncadd [#allocation15], %s111
      %s114 = sshll.u32 [#allocation14], 4
      %s115 = int_to_ptr.vmem [resolvable:$true] %s114
      %117 = dma.hbm_to_vmem [thread:$0]  %s8, 128, %s115, [#allocation15]
    $region37: #{model_forward.1} parent=1 // pred_fallthru
      _
    // Predicated region
    $region38: #{model_forward.1} parent=1 // pred_check
      _
    $region39: #{model_forward.1} parent=1 // pred_check_branch
      %119 = sbr.rel (0) target = $region41
    $region40: #{model_forward.1} parent=1 // pred_region
      %s121 = ssub.s32 128, 128
      %122 = vsyncadd [#allocation15], %s121
      %s124 = sshll.u32 [#allocation16], 4
      %s125 = int_to_ptr.vmem [resolvable:$true] %s124
      %127 = dma.hbm_to_vmem [thread:$0]  %s9, 128, %s125, [#allocation15]
    $region41: #{model_forward.1} parent=1 // pred_fallthru
      _
    // Predicated region
    $region42: #{model_forward.1} parent=1 // pred_check
      _
    $region43: #{model_forward.1} parent=1 // pred_check_branch
      %129 = sbr.rel (0) target = $region45
    $region44: #{model_forward.1} parent=1 // pred_region
      %s131 = ssub.s32 24576, 24576
      %132 = vsyncadd [#allocation18], %s131
      %s133 = sshll.u32 [#allocation17], 4
      %s134 = int_to_ptr.vmem [resolvable:$true] %s133
      %139 = dma.hbm_to_vmem [thread:$0]  %s10, 24576, %s134, [#allocation18], 768, 768, 48
    $region45: #{model_forward.1} parent=1 // pred_fallthru
      _
    // Predicated region
    $region46: #{model_forward.1} parent=1 // pred_check
      _
    $region47: #{model_forward.1} parent=1 // pred_check_branch
      %141 = sbr.rel (0) target = $region49
    $region48: #{model_forward.1} parent=1 // pred_region
      %s143 = ssub.s32 96, 96
      %144 = vsyncadd [#allocation18], %s143
      %s146 = sshll.u32 [#allocation19], 4
      %s147 = int_to_ptr.vmem [resolvable:$true] %s146
      %149 = dma.hbm_to_vmem [thread:$0]  %s11, 96, %s147, [#allocation18]
    $region49: #{model_forward.1} parent=1 // pred_fallthru
      _
    // Predicated region
    $region50: #{model_forward.1} parent=1 // pred_check
      _
    $region51: #{model_forward.1} parent=1 // pred_check_branch
      %151 = sbr.rel (0) target = $region53
    $region52: #{model_forward.1} parent=1 // pred_region
      %s153 = ssub.s32 96, 96
      %154 = vsyncadd [#allocation21], %s153
      %s156 = sshll.u32 [#allocation20], 4
      %s157 = int_to_ptr.vmem [resolvable:$true] %s156
      %159 = dma.hbm_to_vmem [thread:$0]  %s12, 96, %s157, [#allocation21]
    $region53: #{model_forward.1} parent=1 // pred_fallthru
      _
    // Predicated region
    $region54: #{model_forward.1} parent=1 // pred_check
      _
    $region55: #{model_forward.1} parent=1 // pred_check_branch
      %161 = sbr.rel (0) target = $region57
    $region56: #{model_forward.1} parent=1 // pred_region
      %s163 = ssub.s32 3072, 3072
      %164 = vsyncadd [#allocation21], %s163
      %s165 = sshll.u32 [#allocation22], 4
      %s166 = int_to_ptr.vmem [resolvable:$true] %s165
      %171 = dma.hbm_to_vmem [thread:$0]  %s13, 3072, %s166, [#allocation21], 128, 128, 8
    $region57: #{model_forward.1} parent=1 // pred_fallthru
      _
    // Predicated region
    $region58: #{model_forward.1} parent=1 // pred_check
      _
    $region59: #{model_forward.1} parent=1 // pred_check_branch
      %173 = sbr.rel (0) target = $region61
    $region60: #{model_forward.1} parent=1 // pred_region
      %s175 = ssub.s32 16, 16
      %176 = vsyncadd [#allocation24], %s175
      %s178 = sshll.u32 [#allocation23], 4
      %s179 = int_to_ptr.vmem [resolvable:$true] %s178
      %181 = dma.hbm_to_vmem [thread:$0]  %s14, 16, %s179, [#allocation24]
    $region61: #{model_forward.1} parent=1 // pred_fallthru
      _
    // Predicated region
    $region62: #{model_forward.1} parent=1 // pred_check
      _
    $region63: #{model_forward.1} parent=1 // pred_check_branch
      %183 = sbr.rel (0) target = $region65
    $region64: #{model_forward.1} parent=1 // pred_region
      %s185 = ssub.s32 16, 16
      %186 = vsyncadd [#allocation24], %s185
      %s188 = sshll.u32 [#allocation25], 4
      %s189 = int_to_ptr.vmem [resolvable:$true] %s188
      %191 = dma.hbm_to_vmem [thread:$0]  %s15, 16, %s189, [#allocation24]
    $region65: #{model_forward.1} parent=1 // pred_fallthru
      _
    // Predicated region
    $region66: #{model_forward.1} parent=1 // pred_check
      _
    $region67: #{model_forward.1} parent=1 // pred_check_branch
      %193 = sbr.rel (0) target = $region69
    $region68: #{model_forward.1} parent=1 // pred_region
      %194 = dma.done [#allocation3], 6144
    $region69: #{model_forward.1} parent=1 // pred_fallthru
      _
    // Predicated region
    $region70: #{model_forward.1} parent=1 // pred_check
      _
    $region71: #{model_forward.1} parent=1 // pred_check_branch
      %196 = sbr.rel (0) target = $region73
    $region72: #{model_forward.1} parent=1 // pred_region
      %197 = dma.done [#allocation6], 192
    $region73: #{model_forward.1} parent=1 // pred_fallthru
      _
    // Predicated region
    $region74: #{model_forward.1} parent=1 // pred_check
      _
    $region75: #{model_forward.1} parent=1 // pred_check_branch
      %199 = sbr.rel (0) target = $region77
    $region76: #{model_forward.1} parent=1 // pred_region
      %200 = dma.done [#allocation6], 192
    $region77: #{model_forward.1} parent=1 // pred_fallthru
      _
    // Predicated region
    $region78: #{model_forward.1} parent=1 // pred_check
      _
    $region79: #{model_forward.1} parent=1 // pred_check_branch
      %202 = sbr.rel (0) target = $region81
    $region80: #{model_forward.1} parent=1 // pred_region
      %203 = dma.done [#allocation9], 61440
    $region81: #{model_forward.1} parent=1 // pred_fallthru
      _
    // Predicated region
    $region82: #{model_forward.1} parent=1 // pred_check
      _
    $region83: #{model_forward.1} parent=1 // pred_check_branch
      %205 = sbr.rel (0) target = $region85
    $region84: #{model_forward.1} parent=1 // pred_region
      %206 = dma.done [#allocation9], 160
    $region85: #{model_forward.1} parent=1 // pred_fallthru
      _
    // Predicated region
    $region86: #{model_forward.1} parent=1 // pred_check
      _
    $region87: #{model_forward.1} parent=1 // pred_check_branch
      %208 = sbr.rel (0) target = $region89
    $region88: #{model_forward.1} parent=1 // pred_region
      %209 = dma.done [#allocation12], 160
    $region89: #{model_forward.1} parent=1 // pred_fallthru
      _
    // Predicated region
    $region90: #{model_forward.1} parent=1 // pred_check
      _
    $region91: #{model_forward.1} parent=1 // pred_check_branch
      %211 = sbr.rel (0) target = $region93
    $region92: #{model_forward.1} parent=1 // pred_region
      %212 = dma.done [#allocation12], 40960
    $region93: #{model_forward.1} parent=1 // pred_fallthru
      _
    // Predicated region
    $region94: #{model_forward.1} parent=1 // pred_check
      _
    $region95: #{model_forward.1} parent=1 // pred_check_branch
      %214 = sbr.rel (0) target = $region97
    $region96: #{model_forward.1} parent=1 // pred_region
      %215 = dma.done [#allocation15], 128
    $region97: #{model_forward.1} parent=1 // pred_fallthru
      _
    // Predicated region
    $region98: #{model_forward.1} parent=1 // pred_check
      _
    $region99: #{model_forward.1} parent=1 // pred_check_branch
      %217 = sbr.rel (0) target = $region101
    $region100: #{model_forward.1} parent=1 // pred_region
      %218 = dma.done [#allocation15], 128
    $region101: #{model_forward.1} parent=1 // pred_fallthru
      _
    // Predicated region
    $region102: #{model_forward.1} parent=1 // pred_check
      _
    $region103: #{model_forward.1} parent=1 // pred_check_branch
      %220 = sbr.rel (0) target = $region105
    $region104: #{model_forward.1} parent=1 // pred_region
      %221 = dma.done [#allocation18], 24576
    $region105: #{model_forward.1} parent=1 // pred_fallthru
      _
    // Predicated region
    $region106: #{model_forward.1} parent=1 // pred_check
      _
    $region107: #{model_forward.1} parent=1 // pred_check_branch
      %223 = sbr.rel (0) target = $region109
    $region108: #{model_forward.1} parent=1 // pred_region
      %224 = dma.done [#allocation18], 96
    $region109: #{model_forward.1} parent=1 // pred_fallthru
      _
    // Predicated region
    $region110: #{model_forward.1} parent=1 // pred_check
      _
    $region111: #{model_forward.1} parent=1 // pred_check_branch
      %226 = sbr.rel (0) target = $region113
    $region112: #{model_forward.1} parent=1 // pred_region
      %227 = dma.done [#allocation21], 96
    $region113: #{model_forward.1} parent=1 // pred_fallthru
      _
    // Predicated region
    $region114: #{model_forward.1} parent=1 // pred_check
      _
    $region115: #{model_forward.1} parent=1 // pred_check_branch
      %229 = sbr.rel (0) target = $region117
    $region116: #{model_forward.1} parent=1 // pred_region
      %230 = dma.done [#allocation21], 3072
    $region117: #{model_forward.1} parent=1 // pred_fallthru
      _
    // Predicated region
    $region118: #{model_forward.1} parent=1 // pred_check
      _
    $region119: #{model_forward.1} parent=1 // pred_check_branch
      %232 = sbr.rel (0) target = $region121
    $region120: #{model_forward.1} parent=1 // pred_region
      %233 = dma.done [#allocation24], 16
    $region121: #{model_forward.1} parent=1 // pred_fallthru
      _
    // Predicated region
    $region122: #{model_forward.1} parent=1 // pred_check
      _
    $region123: #{model_forward.1} parent=1 // pred_check_branch
      %235 = sbr.rel (0) target = $region125
    $region124: #{model_forward.1} parent=1 // pred_region
      %236 = dma.done [#allocation24], 16
    $region125: #{model_forward.1} parent=1 // pred_fallthru
      _
    %v238 = vld [vmem:[%s0] sm:$0xf]
    %v239 = vld [vmem:[#allocation2] sm:$0xff]
    %v240 = vld [vmem:[#allocation2 + $0x8] sm:$0xff]
    %v241 = vld [vmem:[#allocation2 + $0x10] sm:$0xff]
    %v242 = vld [vmem:[#allocation2 + $0x18] sm:$0xff]
    %v243 = vld [vmem:[#allocation2 + $0x20] sm:$0xff]
    %v244 = vld [vmem:[#allocation2 + $0x28] sm:$0xff]
    %v245 = vld [vmem:[#allocation2 + $0x30] sm:$0xff]
    %v246 = vld [vmem:[#allocation2 + $0x38] sm:$0xff]
    %v247 = vld [vmem:[#allocation2 + $0x40] sm:$0xff]
    %v248 = vld [vmem:[#allocation2 + $0x48] sm:$0xff]
    %v249 = vld [vmem:[#allocation2 + $0x50] sm:$0xff]
    %v250 = vld [vmem:[#allocation2 + $0x58] sm:$0xff]
    %v251 = vld [vmem:[#allocation2 + $0x60] sm:$0xff]
    %v252 = vld [vmem:[#allocation2 + $0x68] sm:$0xff]
    %v253 = vld [vmem:[#allocation2 + $0x70] sm:$0xff]
    %v254 = vld [vmem:[#allocation2 + $0x78] sm:$0xff]
    %v255 = vld [vmem:[#allocation2 + $0x80] sm:$0xff]
    %v256 = vld [vmem:[#allocation2 + $0x88] sm:$0xff]
    %v257 = vld [vmem:[#allocation2 + $0x90] sm:$0xff]
    %v258 = vld [vmem:[#allocation2 + $0x98] sm:$0xff]
    %v259 = vld [vmem:[#allocation2 + $0xa0] sm:$0xff]
    %v260 = vld [vmem:[#allocation2 + $0xa8] sm:$0xff]
    %v261 = vld [vmem:[#allocation2 + $0xb0] sm:$0xff]
    %v262 = vld [vmem:[#allocation2 + $0xb8] sm:$0xff]
    %v263 = vld [vmem:[#allocation2 + $0xc0] sm:$0xff]
    %v264 = vld [vmem:[#allocation2 + $0xc8] sm:$0xff]
    %v265 = vld [vmem:[#allocation2 + $0xd0] sm:$0xff]
    %v266 = vld [vmem:[#allocation2 + $0xd8] sm:$0xff]
    %v267 = vld [vmem:[#allocation2 + $0xe0] sm:$0xff]
    %v268 = vld [vmem:[#allocation2 + $0xe8] sm:$0xff]
    %v269 = vld [vmem:[#allocation2 + $0xf0] sm:$0xff]
    %v270 = vld [vmem:[#allocation2 + $0xf8] sm:$0xff]
    %v271 = vld [vmem:[#allocation2 + $0x100] sm:$0xff]
    %v272 = vld [vmem:[#allocation2 + $0x108] sm:$0xff]
    %v273 = vld [vmem:[#allocation2 + $0x110] sm:$0xff]
    %v274 = vld [vmem:[#allocation2 + $0x118] sm:$0xff]
    %v275 = vld [vmem:[#allocation2 + $0x120] sm:$0xff]
    %v276 = vld [vmem:[#allocation2 + $0x128] sm:$0xff]
    %v277 = vld [vmem:[#allocation2 + $0x130] sm:$0xff]
    %v278 = vld [vmem:[#allocation2 + $0x138] sm:$0xff]
    %v279 = vld [vmem:[#allocation2 + $0x140] sm:$0xff]
    %v280 = vld [vmem:[#allocation2 + $0x148] sm:$0xff]
    %v281 = vld [vmem:[#allocation2 + $0x150] sm:$0xff]
    %v282 = vld [vmem:[#allocation2 + $0x158] sm:$0xff]
    %v283 = vld [vmem:[#allocation2 + $0x160] sm:$0xff]
    %v284 = vld [vmem:[#allocation2 + $0x168] sm:$0xff]
    %v285 = vld [vmem:[#allocation2 + $0x170] sm:$0xff]
    %v286 = vld [vmem:[#allocation2 + $0x178] sm:$0xff]
    %v287 = vunpack.c.l.s8.bf16 %v239
    %v288 = vunpack.c.l.s8.bf16 %v240
    %v289 = vunpack.c.l.s8.bf16 %v241
    %v290 = vunpack.c.l.s8.bf16 %v242
    %v291 = vunpack.c.l.s8.bf16 %v243
    %v292 = vunpack.c.l.s8.bf16 %v244
    %v293 = vunpack.c.l.s8.bf16 %v245
    %v294 = vunpack.c.l.s8.bf16 %v246
    %v295 = vunpack.c.l.s8.bf16 %v247
    %v296 = vunpack.c.l.s8.bf16 %v248
    %v297 = vunpack.c.l.s8.bf16 %v249
    %v298 = vunpack.c.l.s8.bf16 %v250
    %v299 = vunpack.c.h.s8.bf16 %v239
    %v300 = vunpack.c.h.s8.bf16 %v240
    %v301 = vunpack.c.h.s8.bf16 %v241
    %v302 = vunpack.c.h.s8.bf16 %v242
    %v303 = vunpack.c.h.s8.bf16 %v243
    %v304 = vunpack.c.h.s8.bf16 %v244
    %v305 = vunpack.c.h.s8.bf16 %v245
    %v306 = vunpack.c.h.s8.bf16 %v246
    %v307 = vunpack.c.h.s8.bf16 %v247
    %v308 = vunpack.c.h.s8.bf16 %v248
    %v309 = vunpack.c.h.s8.bf16 %v249
    %v310 = vunpack.c.h.s8.bf16 %v250
    %v311 = vunpack.c.l.s8.bf16 %v251
    %v312 = vunpack.c.l.s8.bf16 %v252
    %v313 = vunpack.c.l.s8.bf16 %v253
    %v314 = vunpack.c.l.s8.bf16 %v254
    %v315 = vunpack.c.l.s8.bf16 %v255
    %v316 = vunpack.c.l.s8.bf16 %v256
    %v317 = vunpack.c.l.s8.bf16 %v257
    %v318 = vunpack.c.l.s8.bf16 %v258
    %v319 = vunpack.c.l.s8.bf16 %v259
    %v320 = vunpack.c.l.s8.bf16 %v260
    %v321 = vunpack.c.l.s8.bf16 %v261
    %v322 = vunpack.c.l.s8.bf16 %v262
    %v323 = vunpack.c.h.s8.bf16 %v251
    %v324 = vunpack.c.h.s8.bf16 %v252
    %v325 = vunpack.c.h.s8.bf16 %v253
    %v326 = vunpack.c.h.s8.bf16 %v254
    %v327 = vunpack.c.h.s8.bf16 %v255
    %v328 = vunpack.c.h.s8.bf16 %v256
    %v329 = vunpack.c.h.s8.bf16 %v257
    %v330 = vunpack.c.h.s8.bf16 %v258
    %v331 = vunpack.c.h.s8.bf16 %v259
    %v332 = vunpack.c.h.s8.bf16 %v260
    %v333 = vunpack.c.h.s8.bf16 %v261
    %v334 = vunpack.c.h.s8.bf16 %v262
    %v335 = vunpack.c.l.s8.bf16 %v263
    %v336 = vunpack.c.l.s8.bf16 %v264
    %v337 = vunpack.c.l.s8.bf16 %v265
    %v338 = vunpack.c.l.s8.bf16 %v266
    %v339 = vunpack.c.l.s8.bf16 %v267
    %v340 = vunpack.c.l.s8.bf16 %v268
    %v341 = vunpack.c.l.s8.bf16 %v269
    %v342 = vunpack.c.l.s8.bf16 %v270
    %v343 = vunpack.c.l.s8.bf16 %v271
    %v344 = vunpack.c.l.s8.bf16 %v272
    %v345 = vunpack.c.l.s8.bf16 %v273
    %v346 = vunpack.c.l.s8.bf16 %v274
    %v347 = vunpack.c.h.s8.bf16 %v263
    %v348 = vunpack.c.h.s8.bf16 %v264
    %v349 = vunpack.c.h.s8.bf16 %v265
    %v350 = vunpack.c.h.s8.bf16 %v266
    %v351 = vunpack.c.h.s8.bf16 %v267
    %v352 = vunpack.c.h.s8.bf16 %v268
    %v353 = vunpack.c.h.s8.bf16 %v269
    %v354 = vunpack.c.h.s8.bf16 %v270
    %v355 = vunpack.c.h.s8.bf16 %v271
    %v356 = vunpack.c.h.s8.bf16 %v272
    %v357 = vunpack.c.h.s8.bf16 %v273
    %v358 = vunpack.c.h.s8.bf16 %v274
    %v359 = vunpack.c.l.s8.bf16 %v275
    %v360 = vunpack.c.l.s8.bf16 %v276
    %v361 = vunpack.c.l.s8.bf16 %v277
    %v362 = vunpack.c.l.s8.bf16 %v278
    %v363 = vunpack.c.l.s8.bf16 %v279
    %v364 = vunpack.c.l.s8.bf16 %v280
    %v365 = vunpack.c.l.s8.bf16 %v281
    %v366 = vunpack.c.l.s8.bf16 %v282
    %v367 = vunpack.c.l.s8.bf16 %v283
    %v368 = vunpack.c.l.s8.bf16 %v284
    %v369 = vunpack.c.l.s8.bf16 %v285
    %v370 = vunpack.c.l.s8.bf16 %v286
    %v371 = vunpack.c.h.s8.bf16 %v275
    %v372 = vunpack.c.h.s8.bf16 %v276
    %v373 = vunpack.c.h.s8.bf16 %v277
    %v374 = vunpack.c.h.s8.bf16 %v278
    %v375 = vunpack.c.h.s8.bf16 %v279
    %v376 = vunpack.c.h.s8.bf16 %v280
    %v377 = vunpack.c.h.s8.bf16 %v281
    %v378 = vunpack.c.h.s8.bf16 %v282
    %v379 = vunpack.c.h.s8.bf16 %v283
    %v380 = vunpack.c.h.s8.bf16 %v284
    %v381 = vunpack.c.h.s8.bf16 %v285
    %v382 = vunpack.c.h.s8.bf16 %v286
    %383 = vmatprep.subr.bf16.mxu0 %v288
    %384 = vmatpush1.bf16.msra.mxu0 %v287
    %385 = vmatprep.subr.bf16.mxu0 %v300
    %386 = vmatpush1.bf16.msra.mxu0 %v299
    %387 = vmatprep.subr.bf16.mxu0 %v312
    %388 = vmatpush1.bf16.msra.mxu0 %v311
    %389 = vmatprep.subr.bf16.mxu0 %v324
    %390 = vmatpush1.bf16.msra.mxu0 %v323
    %391 = vmatprep.subr.bf16.mxu0 %v336
    %392 = vmatpush1.bf16.msra.mxu0 %v335
    %393 = vmatprep.subr.bf16.mxu0 %v348
    %394 = vmatpush1.bf16.msra.mxu0 %v347
    %395 = vmatprep.subr.bf16.mxu0 %v360
    %396 = vmatpush1.bf16.msra.mxu0 %v359
    %397 = vmatprep.subr.bf16.mxu0 %v372
    %398 = vmatpush1.bf16.msra.mxu0 %v371
    %399 = vmatprep.subr.bf16.mxu0 0
    %400 = vmatpush1.bf16.msra.mxu0 0
    %401 = vmatprep.subr.bf16.mxu0 0
    %402 = vmatpush1.bf16.msra.mxu0 0
    %403 = vmatprep.subr.bf16.mxu0 0
    %404 = vmatpush1.bf16.msra.mxu0 0
    %405 = vmatprep.subr.bf16.mxu0 0
    %406 = vmatpush1.bf16.msra.mxu0 0
    %407 = vmatprep.subr.bf16.mxu0 0
    %408 = vmatpush1.bf16.msra.mxu0 0
    %409 = vmatprep.subr.bf16.mxu0 0
    %410 = vmatpush1.bf16.msra.mxu0 0
    %411 = vmatprep.subr.bf16.mxu0 0
    %412 = vmatpush1.bf16.msra.mxu0 0
    %413 = vmatprep.subr.bf16.mxu0 0
    %414 = vmatpush1.bf16.msra.mxu0 0
    %415 = vmatprep.mubr.bf16.mxu0 0
    %416 = vmatmul.mubr.bf16.gmra.mrb[0].mxu0 %v238
    %v417 = vpop.f32.mrb[0].mxu0
    %v418 = vadd.f32 0.0, %v417
    %v419 = vpop.f32.mrb[0].mxu0
    %v420 = vadd.f32 0.0, %v419
    %v421 = vpop.f32.mrb[0].mxu0
    %v422 = vpop.f32.mrb[0].mxu0
    %423 = vdwg.mxu0
    %424 = vmatprep.subr.bf16.mxu0 %v290
    %425 = vmatpush1.bf16.msra.mxu0 %v289
    %426 = vmatprep.subr.bf16.mxu0 %v302
    %427 = vmatpush1.bf16.msra.mxu0 %v301
    %428 = vmatprep.subr.bf16.mxu0 %v314
    %429 = vmatpush1.bf16.msra.mxu0 %v313
    %430 = vmatprep.subr.bf16.mxu0 %v326
    %431 = vmatpush1.bf16.msra.mxu0 %v325
    %432 = vmatprep.subr.bf16.mxu0 %v338
    %433 = vmatpush1.bf16.msra.mxu0 %v337
    %434 = vmatprep.subr.bf16.mxu0 %v350
    %435 = vmatpush1.bf16.msra.mxu0 %v349
    %436 = vmatprep.subr.bf16.mxu0 %v362
    %437 = vmatpush1.bf16.msra.mxu0 %v361
    %438 = vmatprep.subr.bf16.mxu0 %v374
    %439 = vmatpush1.bf16.msra.mxu0 %v373
    %440 = vmatprep.subr.bf16.mxu0 0
    %441 = vmatpush1.bf16.msra.mxu0 0
    %442 = vmatprep.subr.bf16.mxu0 0
    %443 = vmatpush1.bf16.msra.mxu0 0
    %444 = vmatprep.subr.bf16.mxu0 0
    %445 = vmatpush1.bf16.msra.mxu0 0
    %446 = vmatprep.subr.bf16.mxu0 0
    %447 = vmatpush1.bf16.msra.mxu0 0
    %448 = vmatprep.subr.bf16.mxu0 0
    %449 = vmatpush1.bf16.msra.mxu0 0
    %450 = vmatprep.subr.bf16.mxu0 0
    %451 = vmatpush1.bf16.msra.mxu0 0
    %452 = vmatprep.subr.bf16.mxu0 0
    %453 = vmatpush1.bf16.msra.mxu0 0
    %454 = vmatprep.subr.bf16.mxu0 0
    %455 = vmatpush1.bf16.msra.mxu0 0
    %456 = vmatprep.mubr.bf16.mxu0 0
    %457 = vmatmul.mubr.bf16.gmra.mrb[0].mxu0 %v238
    %v458 = vpop.f32.mrb[0].mxu0
    %v459 = vadd.f32 0.0, %v458
    %v460 = vpop.f32.mrb[0].mxu0
    %v461 = vadd.f32 0.0, %v460
    %v462 = vpop.f32.mrb[0].mxu0
    %v463 = vpop.f32.mrb[0].mxu0
    %464 = vdwg.mxu0
    %465 = vmatprep.subr.bf16.mxu0 %v292
    %466 = vmatpush1.bf16.msra.mxu0 %v291
    %467 = vmatprep.subr.bf16.mxu0 %v304
    %468 = vmatpush1.bf16.msra.mxu0 %v303
    %469 = vmatprep.subr.bf16.mxu0 %v316
    %470 = vmatpush1.bf16.msra.mxu0 %v315
    %471 = vmatprep.subr.bf16.mxu0 %v328
    %472 = vmatpush1.bf16.msra.mxu0 %v327
    %473 = vmatprep.subr.bf16.mxu0 %v340
    %474 = vmatpush1.bf16.msra.mxu0 %v339
    %475 = vmatprep.subr.bf16.mxu0 %v352
    %476 = vmatpush1.bf16.msra.mxu0 %v351
    %477 = vmatprep.subr.bf16.mxu0 %v364
    %478 = vmatpush1.bf16.msra.mxu0 %v363
    %479 = vmatprep.subr.bf16.mxu0 %v376
    %480 = vmatpush1.bf16.msra.mxu0 %v375
    %481 = vmatprep.subr.bf16.mxu0 0
    %482 = vmatpush1.bf16.msra.mxu0 0
    %483 = vmatprep.subr.bf16.mxu0 0
    %484 = vmatpush1.bf16.msra.mxu0 0
    %485 = vmatprep.subr.bf16.mxu0 0
    %486 = vmatpush1.bf16.msra.mxu0 0
    %487 = vmatprep.subr.bf16.mxu0 0
    %488 = vmatpush1.bf16.msra.mxu0 0
    %489 = vmatprep.subr.bf16.mxu0 0
    %490 = vmatpush1.bf16.msra.mxu0 0
    %491 = vmatprep.subr.bf16.mxu0 0
    %492 = vmatpush1.bf16.msra.mxu0 0
    %493 = vmatprep.subr.bf16.mxu0 0
    %494 = vmatpush1.bf16.msra.mxu0 0
    %495 = vmatprep.subr.bf16.mxu0 0
    %496 = vmatpush1.bf16.msra.mxu0 0
    %497 = vmatprep.mubr.bf16.mxu0 0
    %498 = vmatmul.mubr.bf16.gmra.mrb[0].mxu0 %v238
    %v499 = vpop.f32.mrb[0].mxu0
    %v500 = vadd.f32 0.0, %v499
    %v501 = vpop.f32.mrb[0].mxu0
    %v502 = vadd.f32 0.0, %v501
    %v503 = vpop.f32.mrb[0].mxu0
    %v504 = vpop.f32.mrb[0].mxu0
    %505 = vdwg.mxu0
    %506 = vmatprep.subr.bf16.mxu0 %v294
    %507 = vmatpush1.bf16.msra.mxu0 %v293
    %508 = vmatprep.subr.bf16.mxu0 %v306
    %509 = vmatpush1.bf16.msra.mxu0 %v305
    %510 = vmatprep.subr.bf16.mxu0 %v318
    %511 = vmatpush1.bf16.msra.mxu0 %v317
    %512 = vmatprep.subr.bf16.mxu0 %v330
    %513 = vmatpush1.bf16.msra.mxu0 %v329
    %514 = vmatprep.subr.bf16.mxu0 %v342
    %515 = vmatpush1.bf16.msra.mxu0 %v341
    %516 = vmatprep.subr.bf16.mxu0 %v354
    %517 = vmatpush1.bf16.msra.mxu0 %v353
    %518 = vmatprep.subr.bf16.mxu0 %v366
    %519 = vmatpush1.bf16.msra.mxu0 %v365
    %520 = vmatprep.subr.bf16.mxu0 %v378
    %521 = vmatpush1.bf16.msra.mxu0 %v377
    %522 = vmatprep.subr.bf16.mxu0 0
    %523 = vmatpush1.bf16.msra.mxu0 0
    %524 = vmatprep.subr.bf16.mxu0 0
    %525 = vmatpush1.bf16.msra.mxu0 0
    %526 = vmatprep.subr.bf16.mxu0 0
    %527 = vmatpush1.bf16.msra.mxu0 0
    %528 = vmatprep.subr.bf16.mxu0 0
    %529 = vmatpush1.bf16.msra.mxu0 0
    %530 = vmatprep.subr.bf16.mxu0 0
    %531 = vmatpush1.bf16.msra.mxu0 0
    %532 = vmatprep.subr.bf16.mxu0 0
    %533 = vmatpush1.bf16.msra.mxu0 0
    %534 = vmatprep.subr.bf16.mxu0 0
    %535 = vmatpush1.bf16.msra.mxu0 0
    %536 = vmatprep.subr.bf16.mxu0 0
    %537 = vmatpush1.bf16.msra.mxu0 0
    %538 = vmatprep.mubr.bf16.mxu0 0
    %539 = vmatmul.mubr.bf16.gmra.mrb[0].mxu0 %v238
    %v540 = vpop.f32.mrb[0].mxu0
    %v541 = vadd.f32 0.0, %v540
    %v542 = vpop.f32.mrb[0].mxu0
    %v543 = vadd.f32 0.0, %v542
    %v544 = vpop.f32.mrb[0].mxu0
    %v545 = vpop.f32.mrb[0].mxu0
    %546 = vdwg.mxu0
    %547 = vmatprep.subr.bf16.mxu0 %v296
    %548 = vmatpush1.bf16.msra.mxu0 %v295
    %549 = vmatprep.subr.bf16.mxu0 %v308
    %550 = vmatpush1.bf16.msra.mxu0 %v307
    %551 = vmatprep.subr.bf16.mxu0 %v320
    %552 = vmatpush1.bf16.msra.mxu0 %v319
    %553 = vmatprep.subr.bf16.mxu0 %v332
    %554 = vmatpush1.bf16.msra.mxu0 %v331
    %555 = vmatprep.subr.bf16.mxu0 %v344
    %556 = vmatpush1.bf16.msra.mxu0 %v343
    %557 = vmatprep.subr.bf16.mxu0 %v356
    %558 = vmatpush1.bf16.msra.mxu0 %v355
    %559 = vmatprep.subr.bf16.mxu0 %v368
    %560 = vmatpush1.bf16.msra.mxu0 %v367
    %561 = vmatprep.subr.bf16.mxu0 %v380
    %562 = vmatpush1.bf16.msra.mxu0 %v379
    %563 = vmatprep.subr.bf16.mxu0 0
    %564 = vmatpush1.bf16.msra.mxu0 0
    %565 = vmatprep.subr.bf16.mxu0 0
    %566 = vmatpush1.bf16.msra.mxu0 0
    %567 = vmatprep.subr.bf16.mxu0 0
    %568 = vmatpush1.bf16.msra.mxu0 0
    %569 = vmatprep.subr.bf16.mxu0 0
    %570 = vmatpush1.bf16.msra.mxu0 0
    %571 = vmatprep.subr.bf16.mxu0 0
    %572 = vmatpush1.bf16.msra.mxu0 0
    %573 = vmatprep.subr.bf16.mxu0 0
    %574 = vmatpush1.bf16.msra.mxu0 0
    %575 = vmatprep.subr.bf16.mxu0 0
    %576 = vmatpush1.bf16.msra.mxu0 0
    %577 = vmatprep.subr.bf16.mxu0 0
    %578 = vmatpush1.bf16.msra.mxu0 0
    %579 = vmatprep.mubr.bf16.mxu0 0
    %580 = vmatmul.mubr.bf16.gmra.mrb[0].mxu0 %v238
    %v581 = vpop.f32.mrb[0].mxu0
    %v582 = vadd.f32 0.0, %v581
    %v583 = vpop.f32.mrb[0].mxu0
    %v584 = vadd.f32 0.0, %v583
    %v585 = vpop.f32.mrb[0].mxu0
    %v586 = vpop.f32.mrb[0].mxu0
    %587 = vdwg.mxu0
    %588 = vmatprep.subr.bf16.mxu0 %v298
    %589 = vmatpush1.bf16.msra.mxu0 %v297
    %590 = vmatprep.subr.bf16.mxu0 %v310
    %591 = vmatpush1.bf16.msra.mxu0 %v309
    %592 = vmatprep.subr.bf16.mxu0 %v322
    %593 = vmatpush1.bf16.msra.mxu0 %v321
    %594 = vmatprep.subr.bf16.mxu0 %v334
    %595 = vmatpush1.bf16.msra.mxu0 %v333
    %596 = vmatprep.subr.bf16.mxu0 %v346
    %597 = vmatpush1.bf16.msra.mxu0 %v345
    %598 = vmatprep.subr.bf16.mxu0 %v358
    %599 = vmatpush1.bf16.msra.mxu0 %v357
    %600 = vmatprep.subr.bf16.mxu0 %v370
    %601 = vmatpush1.bf16.msra.mxu0 %v369
    %602 = vmatprep.subr.bf16.mxu0 %v382
    %603 = vmatpush1.bf16.msra.mxu0 %v381
    %604 = vmatprep.subr.bf16.mxu0 0
    %605 = vmatpush1.bf16.msra.mxu0 0
    %606 = vmatprep.subr.bf16.mxu0 0
    %607 = vmatpush1.bf16.msra.mxu0 0
    %608 = vmatprep.subr.bf16.mxu0 0
    %609 = vmatpush1.bf16.msra.mxu0 0
    %610 = vmatprep.subr.bf16.mxu0 0
    %611 = vmatpush1.bf16.msra.mxu0 0
    %612 = vmatprep.subr.bf16.mxu0 0
    %613 = vmatpush1.bf16.msra.mxu0 0
    %614 = vmatprep.subr.bf16.mxu0 0
    %615 = vmatpush1.bf16.msra.mxu0 0
    %616 = vmatprep.subr.bf16.mxu0 0
    %617 = vmatpush1.bf16.msra.mxu0 0
    %618 = vmatprep.subr.bf16.mxu0 0
    %619 = vmatpush1.bf16.msra.mxu0 0
    %620 = vmatprep.mubr.bf16.mxu0 0
    %621 = vmatmul.mubr.bf16.gmra.mrb[0].mxu0 %v238
    %v622 = vpop.f32.mrb[0].mxu0
    %v623 = vadd.f32 0.0, %v622
    %v624 = vpop.f32.mrb[0].mxu0
    %v625 = vadd.f32 0.0, %v624
    %v626 = vpop.f32.mrb[0].mxu0
    %v627 = vpop.f32.mrb[0].mxu0
    %628 = vdwg.mxu0
    %v629 = vld [vmem:[#allocation5] sm:$0xff]
    %v630 = vld [vmem:[#allocation5 + $0x8] sm:$0xf]
    %v633 = vlaneseq
    %v634 = vshrl.u32 %v633, 7
    %v635 = vsub.s32 0, %v634
    %v636 = vrot.slane %v629, %v635
    %v637 = vlaneseq
    %v638 = vshrl.u32 %v637, 7
    %v639 = vsub.s32 1, %v638
    %v640 = vrot.slane %v629, %v639
    %v641 = vlaneseq
    %v642 = vshrl.u32 %v641, 7
    %v643 = vsub.s32 2, %v642
    %v644 = vrot.slane %v629, %v643
    %v645 = vlaneseq
    %v646 = vshrl.u32 %v645, 7
    %v647 = vsub.s32 3, %v646
    %v648 = vrot.slane %v629, %v647
    %v649 = vlaneseq
    %v650 = vshrl.u32 %v649, 7
    %v651 = vsub.s32 4, %v650
    %v652 = vrot.slane %v629, %v651
    %v653 = vlaneseq
    %v654 = vshrl.u32 %v653, 7
    %v655 = vsub.s32 5, %v654
    %v656 = vrot.slane %v629, %v655
    %v657 = vlaneseq
    %v658 = vshrl.u32 %v657, 7
    %v659 = vsub.s32 6, %v658
    %v660 = vrot.slane %v629, %v659
    %v661 = vlaneseq
    %v662 = vshrl.u32 %v661, 7
    %v663 = vsub.s32 7, %v662
    %v664 = vrot.slane %v629, %v663
    %v665 = vlaneseq
    %v666 = vshrl.u32 %v665, 7
    %v667 = vsub.s32 0, %v666
    %v668 = vrot.slane %v630, %v667
    %v669 = vlaneseq
    %v670 = vshrl.u32 %v669, 7
    %v671 = vsub.s32 1, %v670
    %v672 = vrot.slane %v630, %v671
    %v673 = vlaneseq
    %v674 = vshrl.u32 %v673, 7
    %v675 = vsub.s32 2, %v674
    %v676 = vrot.slane %v630, %v675
    %v677 = vlaneseq
    %v678 = vshrl.u32 %v677, 7
    %v679 = vsub.s32 3, %v678
    %v680 = vrot.slane %v630, %v679
    %v693 = vmul.f32 %v418, %v636
    %v694 = vmul.f32 %v420, %v640
    %v695 = vmul.f32 %v459, %v644
    %v696 = vmul.f32 %v461, %v648
    %v697 = vmul.f32 %v500, %v652
    %v698 = vmul.f32 %v502, %v656
    %v699 = vmul.f32 %v541, %v660
    %v700 = vmul.f32 %v543, %v664
    %v701 = vmul.f32 %v582, %v668
    %v702 = vmul.f32 %v584, %v672
    %v703 = vmul.f32 %v623, %v676
    %v704 = vmul.f32 %v625, %v680
    %v705 = vld [vmem:[#allocation7] sm:$0xff]
    %v706 = vld [vmem:[#allocation7 + $0x8] sm:$0xf]
    %v709 = vlaneseq
    %v710 = vshrl.u32 %v709, 7
    %v711 = vsub.s32 0, %v710
    %v712 = vrot.slane %v705, %v711
    %v713 = vlaneseq
    %v714 = vshrl.u32 %v713, 7
    %v715 = vsub.s32 1, %v714
    %v716 = vrot.slane %v705, %v715
    %v717 = vlaneseq
    %v718 = vshrl.u32 %v717, 7
    %v719 = vsub.s32 2, %v718
    %v720 = vrot.slane %v705, %v719
    %v721 = vlaneseq
    %v722 = vshrl.u32 %v721, 7
    %v723 = vsub.s32 3, %v722
    %v724 = vrot.slane %v705, %v723
    %v725 = vlaneseq
    %v726 = vshrl.u32 %v725, 7
    %v727 = vsub.s32 4, %v726
    %v728 = vrot.slane %v705, %v727
    %v729 = vlaneseq
    %v730 = vshrl.u32 %v729, 7
    %v731 = vsub.s32 5, %v730
    %v732 = vrot.slane %v705, %v731
    %v733 = vlaneseq
    %v734 = vshrl.u32 %v733, 7
    %v735 = vsub.s32 6, %v734
    %v736 = vrot.slane %v705, %v735
    %v737 = vlaneseq
    %v738 = vshrl.u32 %v737, 7
    %v739 = vsub.s32 7, %v738
    %v740 = vrot.slane %v705, %v739
    %v741 = vlaneseq
    %v742 = vshrl.u32 %v741, 7
    %v743 = vsub.s32 0, %v742
    %v744 = vrot.slane %v706, %v743
    %v745 = vlaneseq
    %v746 = vshrl.u32 %v745, 7
    %v747 = vsub.s32 1, %v746
    %v748 = vrot.slane %v706, %v747
    %v749 = vlaneseq
    %v750 = vshrl.u32 %v749, 7
    %v751 = vsub.s32 2, %v750
    %v752 = vrot.slane %v706, %v751
    %v753 = vlaneseq
    %v754 = vshrl.u32 %v753, 7
    %v755 = vsub.s32 3, %v754
    %v756 = vrot.slane %v706, %v755
    %v769 = vadd.f32 %v693, %v712
    %v770 = vadd.f32 %v694, %v716
    %v771 = vadd.f32 %v695, %v720
    %v772 = vadd.f32 %v696, %v724
    %v773 = vadd.f32 %v697, %v728
    %v774 = vadd.f32 %v698, %v732
    %v775 = vadd.f32 %v699, %v736
    %v776 = vadd.f32 %v700, %v740
    %v777 = vadd.f32 %v701, %v744
    %v778 = vadd.f32 %v702, %v748
    %v779 = vadd.f32 %v703, %v752
    %v780 = vadd.f32 %v704, %v756
    %v781 = vmul.f32 %v769, 0.01
    %v782 = vmul.f32 %v770, 0.01
    %v783 = vmul.f32 %v771, 0.01
    %v784 = vmul.f32 %v772, 0.01
    %v785 = vmul.f32 %v773, 0.01
    %v786 = vmul.f32 %v774, 0.01
    %v787 = vmul.f32 %v775, 0.01
    %v788 = vmul.f32 %v776, 0.01
    %v789 = vmul.f32 %v777, 0.01
    %v790 = vmul.f32 %v778, 0.01
    %v791 = vmul.f32 %v779, 0.01
    %v792 = vmul.f32 %v780, 0.01
    %v793 = vmax.f32 %v769, %v781
    %v794 = vmax.f32 %v770, %v782
    %v795 = vmax.f32 %v771, %v783
    %v796 = vmax.f32 %v772, %v784
    %v797 = vmax.f32 %v773, %v785
    %v798 = vmax.f32 %v774, %v786
    %v799 = vmax.f32 %v775, %v787
    %v800 = vmax.f32 %v776, %v788
    %v801 = vmax.f32 %v777, %v789
    %v802 = vmax.f32 %v778, %v790
    %v803 = vmax.f32 %v779, %v791
    %v804 = vmax.f32 %v780, %v792
    %v805 = vpack.c.bf16 %v793, %v793
    %v806 = vpack.c.bf16 %v794, %v794
    %v807 = vpack.c.bf16 %v795, %v795
    %v808 = vpack.c.bf16 %v796, %v796
    %v809 = vpack.c.bf16 %v797, %v797
    %v810 = vpack.c.bf16 %v798, %v798
    %v811 = vpack.c.bf16 %v799, %v799
    %v812 = vpack.c.bf16 %v800, %v800
    %v813 = vpack.c.bf16 %v801, %v801
    %v814 = vpack.c.bf16 %v802, %v802
    %v815 = vpack.c.bf16 %v803, %v803
    %v816 = vpack.c.bf16 %v804, %v804
    %v817 = vld [vmem:[#allocation8] sm:$0xff]
    %v818 = vld [vmem:[#allocation8 + $0x8] sm:$0xff]
    %v819 = vld [vmem:[#allocation8 + $0x10] sm:$0xff]
    %v820 = vld [vmem:[#allocation8 + $0x18] sm:$0xff]
    %v821 = vld [vmem:[#allocation8 + $0x20] sm:$0xff]
    %v822 = vld [vmem:[#allocation8 + $0x28] sm:$0xff]
    %v823 = vld [vmem:[#allocation8 + $0x30] sm:$0xff]
    %v824 = vld [vmem:[#allocation8 + $0x38] sm:$0xff]
    %v825 = vld [vmem:[#allocation8 + $0x40] sm:$0xff]
    %v826 = vld [vmem:[#allocation8 + $0x48] sm:$0xff]
    %v827 = vld [vmem:[#allocation8 + $0x50] sm:$0xff]
    %v828 = vld [vmem:[#allocation8 + $0x58] sm:$0xff]
    %v829 = vld [vmem:[#allocation8 + $0x60] sm:$0xff]
    %v830 = vld [vmem:[#allocation8 + $0x68] sm:$0xff]
    %v831 = vld [vmem:[#allocation8 + $0x70] sm:$0xff]
    %v832 = vld [vmem:[#allocation8 + $0x78] sm:$0xff]
    %v833 = vld [vmem:[#allocation8 + $0x80] sm:$0xff]
    %v834 = vld [vmem:[#allocation8 + $0x88] sm:$0xff]
    %v835 = vld [vmem:[#allocation8 + $0x90] sm:$0xff]
    %v836 = vld [vmem:[#allocation8 + $0x98] sm:$0xff]
    %v837 = vld [vmem:[#allocation8 + $0xa0] sm:$0xff]
    %v838 = vld [vmem:[#allocation8 + $0xa8] sm:$0xff]
    %v839 = vld [vmem:[#allocation8 + $0xb0] sm:$0xff]
    %v840 = vld [vmem:[#allocation8 + $0xb8] sm:$0xff]
    %v841 = vld [vmem:[#allocation8 + $0xc0] sm:$0xff]
    %v842 = vld [vmem:[#allocation8 + $0xc8] sm:$0xff]
    %v843 = vld [vmem:[#allocation8 + $0xd0] sm:$0xff]
    %v844 = vld [vmem:[#allocation8 + $0xd8] sm:$0xff]
    %v845 = vld [vmem:[#allocation8 + $0xe0] sm:$0xff]
    %v846 = vld [vmem:[#allocation8 + $0xe8] sm:$0xff]
    %v847 = vld [vmem:[#allocation8 + $0xf0] sm:$0xff]
    %v848 = vld [vmem:[#allocation8 + $0xf8] sm:$0xff]
    %v849 = vld [vmem:[#allocation8 + $0x100] sm:$0xff]
    %v850 = vld [vmem:[#allocation8 + $0x108] sm:$0xff]
    %v851 = vld [vmem:[#allocation8 + $0x110] sm:$0xff]
    %v852 = vld [vmem:[#allocation8 + $0x118] sm:$0xff]
    %v853 = vld [vmem:[#allocation8 + $0x120] sm:$0xff]
    %v854 = vld [vmem:[#allocation8 + $0x128] sm:$0xff]
    %v855 = vld [vmem:[#allocation8 + $0x130] sm:$0xff]
    %v856 = vld [vmem:[#allocation8 + $0x138] sm:$0xff]
    %v857 = vld [vmem:[#allocation8 + $0x140] sm:$0xff]
    %v858 = vld [vmem:[#allocation8 + $0x148] sm:$0xff]
    %v859 = vld [vmem:[#allocation8 + $0x150] sm:$0xff]
    %v860 = vld [vmem:[#allocation8 + $0x158] sm:$0xff]
    %v861 = vld [vmem:[#allocation8 + $0x160] sm:$0xff]
    %v862 = vld [vmem:[#allocation8 + $0x168] sm:$0xff]
    %v863 = vld [vmem:[#allocation8 + $0x170] sm:$0xff]
    %v864 = vld [vmem:[#allocation8 + $0x178] sm:$0xff]
    %v865 = vld [vmem:[#allocation8 + $0x180] sm:$0xff]
    %v866 = vld [vmem:[#allocation8 + $0x188] sm:$0xff]
    %v867 = vld [vmem:[#allocation8 + $0x190] sm:$0xff]
    %v868 = vld [vmem:[#allocation8 + $0x198] sm:$0xff]
    %v869 = vld [vmem:[#allocation8 + $0x1a0] sm:$0xff]
    %v870 = vld [vmem:[#allocation8 + $0x1a8] sm:$0xff]
    %v871 = vld [vmem:[#allocation8 + $0x1b0] sm:$0xff]
    %v872 = vld [vmem:[#allocation8 + $0x1b8] sm:$0xff]
    %v873 = vld [vmem:[#allocation8 + $0x1c0] sm:$0xff]
    %v874 = vld [vmem:[#allocation8 + $0x1c8] sm:$0xff]
    %v875 = vld [vmem:[#allocation8 + $0x1d0] sm:$0xff]
    %v876 = vld [vmem:[#allocation8 + $0x1d8] sm:$0xff]
    %v877 = vld [vmem:[#allocation8 + $0x1e0] sm:$0xff]
    %v878 = vld [vmem:[#allocation8 + $0x1e8] sm:$0xff]
    %v879 = vld [vmem:[#allocation8 + $0x1f0] sm:$0xff]
    %v880 = vld [vmem:[#allocation8 + $0x1f8] sm:$0xff]
    %v881 = vld [vmem:[#allocation8 + $0x200] sm:$0xff]
    %v882 = vld [vmem:[#allocation8 + $0x208] sm:$0xff]
    %v883 = vld [vmem:[#allocation8 + $0x210] sm:$0xff]
    %v884 = vld [vmem:[#allocation8 + $0x218] sm:$0xff]
    %v885 = vld [vmem:[#allocation8 + $0x220] sm:$0xff]
    %v886 = vld [vmem:[#allocation8 + $0x228] sm:$0xff]
    %v887 = vld [vmem:[#allocation8 + $0x230] sm:$0xff]
    %v888 = vld [vmem:[#allocation8 + $0x238] sm:$0xff]
    %v889 = vld [vmem:[#allocation8 + $0x240] sm:$0xff]
    %v890 = vld [vmem:[#allocation8 + $0x248] sm:$0xff]
    %v891 = vld [vmem:[#allocation8 + $0x250] sm:$0xff]
    %v892 = vld [vmem:[#allocation8 + $0x258] sm:$0xff]
    %v893 = vld [vmem:[#allocation8 + $0x260] sm:$0xff]
    %v894 = vld [vmem:[#allocation8 + $0x268] sm:$0xff]
    %v895 = vld [vmem:[#allocation8 + $0x270] sm:$0xff]
    %v896 = vld [vmem:[#allocation8 + $0x278] sm:$0xff]
    %v897 = vld [vmem:[#allocation8 + $0x280] sm:$0xff]
    %v898 = vld [vmem:[#allocation8 + $0x288] sm:$0xff]
    %v899 = vld [vmem:[#allocation8 + $0x290] sm:$0xff]
    %v900 = vld [vmem:[#allocation8 + $0x298] sm:$0xff]
    %v901 = vld [vmem:[#allocation8 + $0x2a0] sm:$0xff]
    %v902 = vld [vmem:[#allocation8 + $0x2a8] sm:$0xff]
    %v903 = vld [vmem:[#allocation8 + $0x2b0] sm:$0xff]
    %v904 = vld [vmem:[#allocation8 + $0x2b8] sm:$0xff]
    %v905 = vld [vmem:[#allocation8 + $0x2c0] sm:$0xff]
    %v906 = vld [vmem:[#allocation8 + $0x2c8] sm:$0xff]
    %v907 = vld [vmem:[#allocation8 + $0x2d0] sm:$0xff]
    %v908 = vld [vmem:[#allocation8 + $0x2d8] sm:$0xff]
    %v909 = vld [vmem:[#allocation8 + $0x2e0] sm:$0xff]
    %v910 = vld [vmem:[#allocation8 + $0x2e8] sm:$0xff]
    %v911 = vld [vmem:[#allocation8 + $0x2f0] sm:$0xff]
    %v912 = vld [vmem:[#allocation8 + $0x2f8] sm:$0xff]
    %v913 = vld [vmem:[#allocation8 + $0x300] sm:$0xff]
    %v914 = vld [vmem:[#allocation8 + $0x308] sm:$0xff]
    %v915 = vld [vmem:[#allocation8 + $0x310] sm:$0xff]
    %v916 = vld [vmem:[#allocation8 + $0x318] sm:$0xff]
    %v917 = vld [vmem:[#allocation8 + $0x320] sm:$0xff]
    %v918 = vld [vmem:[#allocation8 + $0x328] sm:$0xff]
    %v919 = vld [vmem:[#allocation8 + $0x330] sm:$0xff]
    %v920 = vld [vmem:[#allocation8 + $0x338] sm:$0xff]
    %v921 = vld [vmem:[#allocation8 + $0x340] sm:$0xff]
    %v922 = vld [vmem:[#allocation8 + $0x348] sm:$0xff]
    %v923 = vld [vmem:[#allocation8 + $0x350] sm:$0xff]
    %v924 = vld [vmem:[#allocation8 + $0x358] sm:$0xff]
    %v925 = vld [vmem:[#allocation8 + $0x360] sm:$0xff]
    %v926 = vld [vmem:[#allocation8 + $0x368] sm:$0xff]
    %v927 = vld [vmem:[#allocation8 + $0x370] sm:$0xff]
    %v928 = vld [vmem:[#allocation8 + $0x378] sm:$0xff]
    %v929 = vld [vmem:[#allocation8 + $0x380] sm:$0xff]
    %v930 = vld [vmem:[#allocation8 + $0x388] sm:$0xff]
    %v931 = vld [vmem:[#allocation8 + $0x390] sm:$0xff]
    %v932 = vld [vmem:[#allocation8 + $0x398] sm:$0xff]
    %v933 = vld [vmem:[#allocation8 + $0x3a0] sm:$0xff]
    %v934 = vld [vmem:[#allocation8 + $0x3a8] sm:$0xff]
    %v935 = vld [vmem:[#allocation8 + $0x3b0] sm:$0xff]
    %v936 = vld [vmem:[#allocation8 + $0x3b8] sm:$0xff]
    %v937 = vld [vmem:[#allocation8 + $0x3c0] sm:$0xff]
    %v938 = vld [vmem:[#allocation8 + $0x3c8] sm:$0xff]
    %v939 = vld [vmem:[#allocation8 + $0x3d0] sm:$0xff]
    %v940 = vld [vmem:[#allocation8 + $0x3d8] sm:$0xff]
    %v941 = vld [vmem:[#allocation8 + $0x3e0] sm:$0xff]
    %v942 = vld [vmem:[#allocation8 + $0x3e8] sm:$0xff]
    %v943 = vld [vmem:[#allocation8 + $0x3f0] sm:$0xff]
    %v944 = vld [vmem:[#allocation8 + $0x3f8] sm:$0xff]
    %v945 = vld [vmem:[#allocation8 + $0x400] sm:$0xff]
    %v946 = vld [vmem:[#allocation8 + $0x408] sm:$0xff]
    %v947 = vld [vmem:[#allocation8 + $0x410] sm:$0xff]
    %v948 = vld [vmem:[#allocation8 + $0x418] sm:$0xff]
    %v949 = vld [vmem:[#allocation8 + $0x420] sm:$0xff]
    %v950 = vld [vmem:[#allocation8 + $0x428] sm:$0xff]
    %v951 = vld [vmem:[#allocation8 + $0x430] sm:$0xff]
    %v952 = vld [vmem:[#allocation8 + $0x438] sm:$0xff]
    %v953 = vld [vmem:[#allocation8 + $0x440] sm:$0xff]
    %v954 = vld [vmem:[#allocation8 + $0x448] sm:$0xff]
    %v955 = vld [vmem:[#allocation8 + $0x450] sm:$0xff]
    %v956 = vld [vmem:[#allocation8 + $0x458] sm:$0xff]
    %v957 = vld [vmem:[#allocation8 + $0x460] sm:$0xff]
    %v958 = vld [vmem:[#allocation8 + $0x468] sm:$0xff]
    %v959 = vld [vmem:[#allocation8 + $0x470] sm:$0xff]
    %v960 = vld [vmem:[#allocation8 + $0x478] sm:$0xff]
    %v961 = vld [vmem:[#allocation8 + $0x480] sm:$0xff]
    %v962 = vld [vmem:[#allocation8 + $0x488] sm:$0xff]
    %v963 = vld [vmem:[#allocation8 + $0x490] sm:$0xff]
    %v964 = vld [vmem:[#allocation8 + $0x498] sm:$0xff]
    %v965 = vld [vmem:[#allocation8 + $0x4a0] sm:$0xff]
    %v966 = vld [vmem:[#allocation8 + $0x4a8] sm:$0xff]
    %v967 = vld [vmem:[#allocation8 + $0x4b0] sm:$0xff]
    %v968 = vld [vmem:[#allocation8 + $0x4b8] sm:$0xff]
    %v969 = vld [vmem:[#allocation8 + $0x4c0] sm:$0xff]
    %v970 = vld [vmem:[#allocation8 + $0x4c8] sm:$0xff]
    %v971 = vld [vmem:[#allocation8 + $0x4d0] sm:$0xff]
    %v972 = vld [vmem:[#allocation8 + $0x4d8] sm:$0xff]
    %v973 = vld [vmem:[#allocation8 + $0x4e0] sm:$0xff]
    %v974 = vld [vmem:[#allocation8 + $0x4e8] sm:$0xff]
    %v975 = vld [vmem:[#allocation8 + $0x4f0] sm:$0xff]
    %v976 = vld [vmem:[#allocation8 + $0x4f8] sm:$0xff]
    %v977 = vld [vmem:[#allocation8 + $0x500] sm:$0xff]
    %v978 = vld [vmem:[#allocation8 + $0x508] sm:$0xff]
    %v979 = vld [vmem:[#allocation8 + $0x510] sm:$0xff]
    %v980 = vld [vmem:[#allocation8 + $0x518] sm:$0xff]
    %v981 = vld [vmem:[#allocation8 + $0x520] sm:$0xff]
    %v982 = vld [vmem:[#allocation8 + $0x528] sm:$0xff]
    %v983 = vld [vmem:[#allocation8 + $0x530] sm:$0xff]
    %v984 = vld [vmem:[#allocation8 + $0x538] sm:$0xff]
    %v985 = vld [vmem:[#allocation8 + $0x540] sm:$0xff]
    %v986 = vld [vmem:[#allocation8 + $0x548] sm:$0xff]
    %v987 = vld [vmem:[#allocation8 + $0x550] sm:$0xff]
    %v988 = vld [vmem:[#allocation8 + $0x558] sm:$0xff]
    %v989 = vld [vmem:[#allocation8 + $0x560] sm:$0xff]
    %v990 = vld [vmem:[#allocation8 + $0x568] sm:$0xff]
    %v991 = vld [vmem:[#allocation8 + $0x570] sm:$0xff]
    %v992 = vld [vmem:[#allocation8 + $0x578] sm:$0xff]
    %v993 = vld [vmem:[#allocation8 + $0x580] sm:$0xff]
    %v994 = vld [vmem:[#allocation8 + $0x588] sm:$0xff]
    %v995 = vld [vmem:[#allocation8 + $0x590] sm:$0xff]
    %v996 = vld [vmem:[#allocation8 + $0x598] sm:$0xff]
    %v997 = vld [vmem:[#allocation8 + $0x5a0] sm:$0xff]
    %v998 = vld [vmem:[#allocation8 + $0x5a8] sm:$0xff]
    %v999 = vld [vmem:[#allocation8 + $0x5b0] sm:$0xff]
    %v1000 = vld [vmem:[#allocation8 + $0x5b8] sm:$0xff]
    %v1001 = vld [vmem:[#allocation8 + $0x5c0] sm:$0xff]
    %v1002 = vld [vmem:[#allocation8 + $0x5c8] sm:$0xff]
    %v1003 = vld [vmem:[#allocation8 + $0x5d0] sm:$0xff]
    %v1004 = vld [vmem:[#allocation8 + $0x5d8] sm:$0xff]
    %v1005 = vld [vmem:[#allocation8 + $0x5e0] sm:$0xff]
    %v1006 = vld [vmem:[#allocation8 + $0x5e8] sm:$0xff]
    %v1007 = vld [vmem:[#allocation8 + $0x5f0] sm:$0xff]
    %v1008 = vld [vmem:[#allocation8 + $0x5f8] sm:$0xff]
    %v1009 = vld [vmem:[#allocation8 + $0x600] sm:$0xff]
    %v1010 = vld [vmem:[#allocation8 + $0x608] sm:$0xff]
    %v1011 = vld [vmem:[#allocation8 + $0x610] sm:$0xff]
    %v1012 = vld [vmem:[#allocation8 + $0x618] sm:$0xff]
    %v1013 = vld [vmem:[#allocation8 + $0x620] sm:$0xff]
    %v1014 = vld [vmem:[#allocation8 + $0x628] sm:$0xff]
    %v1015 = vld [vmem:[#allocation8 + $0x630] sm:$0xff]
    %v1016 = vld [vmem:[#allocation8 + $0x638] sm:$0xff]
    %v1017 = vld [vmem:[#allocation8 + $0x640] sm:$0xff]
    %v1018 = vld [vmem:[#allocation8 + $0x648] sm:$0xff]
    %v1019 = vld [vmem:[#allocation8 + $0x650] sm:$0xff]
    %v1020 = vld [vmem:[#allocation8 + $0x658] sm:$0xff]
    %v1021 = vld [vmem:[#allocation8 + $0x660] sm:$0xff]
    %v1022 = vld [vmem:[#allocation8 + $0x668] sm:$0xff]
    %v1023 = vld [vmem:[#allocation8 + $0x670] sm:$0xff]
    %v1024 = vld [vmem:[#allocation8 + $0x678] sm:$0xff]
    %v1025 = vld [vmem:[#allocation8 + $0x680] sm:$0xff]
    %v1026 = vld [vmem:[#allocation8 + $0x688] sm:$0xff]
    %v1027 = vld [vmem:[#allocation8 + $0x690] sm:$0xff]
    %v1028 = vld [vmem:[#allocation8 + $0x698] sm:$0xff]
    %v1029 = vld [vmem:[#allocation8 + $0x6a0] sm:$0xff]
    %v1030 = vld [vmem:[#allocation8 + $0x6a8] sm:$0xff]
    %v1031 = vld [vmem:[#allocation8 + $0x6b0] sm:$0xff]
    %v1032 = vld [vmem:[#allocation8 + $0x6b8] sm:$0xff]
    %v1033 = vld [vmem:[#allocation8 + $0x6c0] sm:$0xff]
    %v1034 = vld [vmem:[#allocation8 + $0x6c8] sm:$0xff]
    %v1035 = vld [vmem:[#allocation8 + $0x6d0] sm:$0xff]
    %v1036 = vld [vmem:[#allocation8 + $0x6d8] sm:$0xff]
    %v1037 = vld [vmem:[#allocation8 + $0x6e0] sm:$0xff]
    %v1038 = vld [vmem:[#allocation8 + $0x6e8] sm:$0xff]
    %v1039 = vld [vmem:[#allocation8 + $0x6f0] sm:$0xff]
    %v1040 = vld [vmem:[#allocation8 + $0x6f8] sm:$0xff]
    %v1041 = vld [vmem:[#allocation8 + $0x700] sm:$0xff]
    %v1042 = vld [vmem:[#allocation8 + $0x708] sm:$0xff]
    %v1043 = vld [vmem:[#allocation8 + $0x710] sm:$0xff]
    %v1044 = vld [vmem:[#allocation8 + $0x718] sm:$0xff]
    %v1045 = vld [vmem:[#allocation8 + $0x720] sm:$0xff]
    %v1046 = vld [vmem:[#allocation8 + $0x728] sm:$0xff]
    %v1047 = vld [vmem:[#allocation8 + $0x730] sm:$0xff]
    %v1048 = vld [vmem:[#allocation8 + $0x738] sm:$0xff]
    %v1049 = vld [vmem:[#allocation8 + $0x740] sm:$0xff]
    %v1050 = vld [vmem:[#allocation8 + $0x748] sm:$0xff]
    %v1051 = vld [vmem:[#allocation8 + $0x750] sm:$0xff]
    %v1052 = vld [vmem:[#allocation8 + $0x758] sm:$0xff]
    %v1053 = vld [vmem:[#allocation8 + $0x760] sm:$0xff]
    %v1054 = vld [vmem:[#allocation8 + $0x768] sm:$0xff]
    %v1055 = vld [vmem:[#allocation8 + $0x770] sm:$0xff]
    %v1056 = vld [vmem:[#allocation8 + $0x778] sm:$0xff]
    %v1057 = vld [vmem:[#allocation8 + $0x780] sm:$0xff]
    %v1058 = vld [vmem:[#allocation8 + $0x788] sm:$0xff]
    %v1059 = vld [vmem:[#allocation8 + $0x790] sm:$0xff]
    %v1060 = vld [vmem:[#allocation8 + $0x798] sm:$0xff]
    %v1061 = vld [vmem:[#allocation8 + $0x7a0] sm:$0xff]
    %v1062 = vld [vmem:[#allocation8 + $0x7a8] sm:$0xff]
    %v1063 = vld [vmem:[#allocation8 + $0x7b0] sm:$0xff]
    %v1064 = vld [vmem:[#allocation8 + $0x7b8] sm:$0xff]
    %v1065 = vld [vmem:[#allocation8 + $0x7c0] sm:$0xff]
    %v1066 = vld [vmem:[#allocation8 + $0x7c8] sm:$0xff]
    %v1067 = vld [vmem:[#allocation8 + $0x7d0] sm:$0xff]
    %v1068 = vld [vmem:[#allocation8 + $0x7d8] sm:$0xff]
    %v1069 = vld [vmem:[#allocation8 + $0x7e0] sm:$0xff]
    %v1070 = vld [vmem:[#allocation8 + $0x7e8] sm:$0xff]
    %v1071 = vld [vmem:[#allocation8 + $0x7f0] sm:$0xff]
    %v1072 = vld [vmem:[#allocation8 + $0x7f8] sm:$0xff]
    %v1073 = vld [vmem:[#allocation8 + $0x800] sm:$0xff]
    %v1074 = vld [vmem:[#allocation8 + $0x808] sm:$0xff]
    %v1075 = vld [vmem:[#allocation8 + $0x810] sm:$0xff]
    %v1076 = vld [vmem:[#allocation8 + $0x818] sm:$0xff]
    %v1077 = vld [vmem:[#allocation8 + $0x820] sm:$0xff]
    %v1078 = vld [vmem:[#allocation8 + $0x828] sm:$0xff]
    %v1079 = vld [vmem:[#allocation8 + $0x830] sm:$0xff]
    %v1080 = vld [vmem:[#allocation8 + $0x838] sm:$0xff]
    %v1081 = vld [vmem:[#allocation8 + $0x840] sm:$0xff]
    %v1082 = vld [vmem:[#allocation8 + $0x848] sm:$0xff]
    %v1083 = vld [vmem:[#allocation8 + $0x850] sm:$0xff]
    %v1084 = vld [vmem:[#allocation8 + $0x858] sm:$0xff]
    %v1085 = vld [vmem:[#allocation8 + $0x860] sm:$0xff]
    %v1086 = vld [vmem:[#allocation8 + $0x868] sm:$0xff]
    %v1087 = vld [vmem:[#allocation8 + $0x870] sm:$0xff]
    %v1088 = vld [vmem:[#allocation8 + $0x878] sm:$0xff]
    %v1089 = vld [vmem:[#allocation8 + $0x880] sm:$0xff]
    %v1090 = vld [vmem:[#allocation8 + $0x888] sm:$0xff]
    %v1091 = vld [vmem:[#allocation8 + $0x890] sm:$0xff]
    %v1092 = vld [vmem:[#allocation8 + $0x898] sm:$0xff]
    %v1093 = vld [vmem:[#allocation8 + $0x8a0] sm:$0xff]
    %v1094 = vld [vmem:[#allocation8 + $0x8a8] sm:$0xff]
    %v1095 = vld [vmem:[#allocation8 + $0x8b0] sm:$0xff]
    %v1096 = vld [vmem:[#allocation8 + $0x8b8] sm:$0xff]
    %v1097 = vld [vmem:[#allocation8 + $0x8c0] sm:$0xff]
    %v1098 = vld [vmem:[#allocation8 + $0x8c8] sm:$0xff]
    %v1099 = vld [vmem:[#allocation8 + $0x8d0] sm:$0xff]
    %v1100 = vld [vmem:[#allocation8 + $0x8d8] sm:$0xff]
    %v1101 = vld [vmem:[#allocation8 + $0x8e0] sm:$0xff]
    %v1102 = vld [vmem:[#allocation8 + $0x8e8] sm:$0xff]
    %v1103 = vld [vmem:[#allocation8 + $0x8f0] sm:$0xff]
    %v1104 = vld [vmem:[#allocation8 + $0x8f8] sm:$0xff]
    %v1105 = vld [vmem:[#allocation8 + $0x900] sm:$0xff]
    %v1106 = vld [vmem:[#allocation8 + $0x908] sm:$0xff]
    %v1107 = vld [vmem:[#allocation8 + $0x910] sm:$0xff]
    %v1108 = vld [vmem:[#allocation8 + $0x918] sm:$0xff]
    %v1109 = vld [vmem:[#allocation8 + $0x920] sm:$0xff]
    %v1110 = vld [vmem:[#allocation8 + $0x928] sm:$0xff]
    %v1111 = vld [vmem:[#allocation8 + $0x930] sm:$0xff]
    %v1112 = vld [vmem:[#allocation8 + $0x938] sm:$0xff]
    %v1113 = vld [vmem:[#allocation8 + $0x940] sm:$0xff]
    %v1114 = vld [vmem:[#allocation8 + $0x948] sm:$0xff]
    %v1115 = vld [vmem:[#allocation8 + $0x950] sm:$0xff]
    %v1116 = vld [vmem:[#allocation8 + $0x958] sm:$0xff]
    %v1117 = vld [vmem:[#allocation8 + $0x960] sm:$0xff]
    %v1118 = vld [vmem:[#allocation8 + $0x968] sm:$0xff]
    %v1119 = vld [vmem:[#allocation8 + $0x970] sm:$0xff]
    %v1120 = vld [vmem:[#allocation8 + $0x978] sm:$0xff]
    %v1121 = vld [vmem:[#allocation8 + $0x980] sm:$0xff]
    %v1122 = vld [vmem:[#allocation8 + $0x988] sm:$0xff]
    %v1123 = vld [vmem:[#allocation8 + $0x990] sm:$0xff]
    %v1124 = vld [vmem:[#allocation8 + $0x998] sm:$0xff]
    %v1125 = vld [vmem:[#allocation8 + $0x9a0] sm:$0xff]
    %v1126 = vld [vmem:[#allocation8 + $0x9a8] sm:$0xff]
    %v1127 = vld [vmem:[#allocation8 + $0x9b0] sm:$0xff]
    %v1128 = vld [vmem:[#allocation8 + $0x9b8] sm:$0xff]
    %v1129 = vld [vmem:[#allocation8 + $0x9c0] sm:$0xff]
    %v1130 = vld [vmem:[#allocation8 + $0x9c8] sm:$0xff]
    %v1131 = vld [vmem:[#allocation8 + $0x9d0] sm:$0xff]
    %v1132 = vld [vmem:[#allocation8 + $0x9d8] sm:$0xff]
    %v1133 = vld [vmem:[#allocation8 + $0x9e0] sm:$0xff]
    %v1134 = vld [vmem:[#allocation8 + $0x9e8] sm:$0xff]
    %v1135 = vld [vmem:[#allocation8 + $0x9f0] sm:$0xff]
    %v1136 = vld [vmem:[#allocation8 + $0x9f8] sm:$0xff]
    %v1137 = vld [vmem:[#allocation8 + $0xa00] sm:$0xff]
    %v1138 = vld [vmem:[#allocation8 + $0xa08] sm:$0xff]
    %v1139 = vld [vmem:[#allocation8 + $0xa10] sm:$0xff]
    %v1140 = vld [vmem:[#allocation8 + $0xa18] sm:$0xff]
    %v1141 = vld [vmem:[#allocation8 + $0xa20] sm:$0xff]
    %v1142 = vld [vmem:[#allocation8 + $0xa28] sm:$0xff]
    %v1143 = vld [vmem:[#allocation8 + $0xa30] sm:$0xff]
    %v1144 = vld [vmem:[#allocation8 + $0xa38] sm:$0xff]
    %v1145 = vld [vmem:[#allocation8 + $0xa40] sm:$0xff]
    %v1146 = vld [vmem:[#allocation8 + $0xa48] sm:$0xff]
    %v1147 = vld [vmem:[#allocation8 + $0xa50] sm:$0xff]
    %v1148 = vld [vmem:[#allocation8 + $0xa58] sm:$0xff]
    %v1149 = vld [vmem:[#allocation8 + $0xa60] sm:$0xff]
    %v1150 = vld [vmem:[#allocation8 + $0xa68] sm:$0xff]
    %v1151 = vld [vmem:[#allocation8 + $0xa70] sm:$0xff]
    %v1152 = vld [vmem:[#allocation8 + $0xa78] sm:$0xff]
    %v1153 = vld [vmem:[#allocation8 + $0xa80] sm:$0xff]
    %v1154 = vld [vmem:[#allocation8 + $0xa88] sm:$0xff]
    %v1155 = vld [vmem:[#allocation8 + $0xa90] sm:$0xff]
    %v1156 = vld [vmem:[#allocation8 + $0xa98] sm:$0xff]
    %v1157 = vld [vmem:[#allocation8 + $0xaa0] sm:$0xff]
    %v1158 = vld [vmem:[#allocation8 + $0xaa8] sm:$0xff]
    %v1159 = vld [vmem:[#allocation8 + $0xab0] sm:$0xff]
    %v1160 = vld [vmem:[#allocation8 + $0xab8] sm:$0xff]
    %v1161 = vld [vmem:[#allocation8 + $0xac0] sm:$0xff]
    %v1162 = vld [vmem:[#allocation8 + $0xac8] sm:$0xff]
    %v1163 = vld [vmem:[#allocation8 + $0xad0] sm:$0xff]
    %v1164 = vld [vmem:[#allocation8 + $0xad8] sm:$0xff]
    %v1165 = vld [vmem:[#allocation8 + $0xae0] sm:$0xff]
    %v1166 = vld [vmem:[#allocation8 + $0xae8] sm:$0xff]
    %v1167 = vld [vmem:[#allocation8 + $0xaf0] sm:$0xff]
    %v1168 = vld [vmem:[#allocation8 + $0xaf8] sm:$0xff]
    %v1169 = vld [vmem:[#allocation8 + $0xb00] sm:$0xff]
    %v1170 = vld [vmem:[#allocation8 + $0xb08] sm:$0xff]
    %v1171 = vld [vmem:[#allocation8 + $0xb10] sm:$0xff]
    %v1172 = vld [vmem:[#allocation8 + $0xb18] sm:$0xff]
    %v1173 = vld [vmem:[#allocation8 + $0xb20] sm:$0xff]
    %v1174 = vld [vmem:[#allocation8 + $0xb28] sm:$0xff]
    %v1175 = vld [vmem:[#allocation8 + $0xb30] sm:$0xff]
    %v1176 = vld [vmem:[#allocation8 + $0xb38] sm:$0xff]
    %v1177 = vld [vmem:[#allocation8 + $0xb40] sm:$0xff]
    %v1178 = vld [vmem:[#allocation8 + $0xb48] sm:$0xff]
    %v1179 = vld [vmem:[#allocation8 + $0xb50] sm:$0xff]
    %v1180 = vld [vmem:[#allocation8 + $0xb58] sm:$0xff]
    %v1181 = vld [vmem:[#allocation8 + $0xb60] sm:$0xff]
    %v1182 = vld [vmem:[#allocation8 + $0xb68] sm:$0xff]
    %v1183 = vld [vmem:[#allocation8 + $0xb70] sm:$0xff]
    %v1184 = vld [vmem:[#allocation8 + $0xb78] sm:$0xff]
    %v1185 = vld [vmem:[#allocation8 + $0xb80] sm:$0xff]
    %v1186 = vld [vmem:[#allocation8 + $0xb88] sm:$0xff]
    %v1187 = vld [vmem:[#allocation8 + $0xb90] sm:$0xff]
    %v1188 = vld [vmem:[#allocation8 + $0xb98] sm:$0xff]
    %v1189 = vld [vmem:[#allocation8 + $0xba0] sm:$0xff]
    %v1190 = vld [vmem:[#allocation8 + $0xba8] sm:$0xff]
    %v1191 = vld [vmem:[#allocation8 + $0xbb0] sm:$0xff]
    %v1192 = vld [vmem:[#allocation8 + $0xbb8] sm:$0xff]
    %v1193 = vld [vmem:[#allocation8 + $0xbc0] sm:$0xff]
    %v1194 = vld [vmem:[#allocation8 + $0xbc8] sm:$0xff]
    %v1195 = vld [vmem:[#allocation8 + $0xbd0] sm:$0xff]
    %v1196 = vld [vmem:[#allocation8 + $0xbd8] sm:$0xff]
    %v1197 = vld [vmem:[#allocation8 + $0xbe0] sm:$0xff]
    %v1198 = vld [vmem:[#allocation8 + $0xbe8] sm:$0xff]
    %v1199 = vld [vmem:[#allocation8 + $0xbf0] sm:$0xff]
    %v1200 = vld [vmem:[#allocation8 + $0xbf8] sm:$0xff]
    %v1201 = vld [vmem:[#allocation8 + $0xc00] sm:$0xff]
    %v1202 = vld [vmem:[#allocation8 + $0xc08] sm:$0xff]
    %v1203 = vld [vmem:[#allocation8 + $0xc10] sm:$0xff]
    %v1204 = vld [vmem:[#allocation8 + $0xc18] sm:$0xff]
    %v1205 = vld [vmem:[#allocation8 + $0xc20] sm:$0xff]
    %v1206 = vld [vmem:[#allocation8 + $0xc28] sm:$0xff]
    %v1207 = vld [vmem:[#allocation8 + $0xc30] sm:$0xff]
    %v1208 = vld [vmem:[#allocation8 + $0xc38] sm:$0xff]
    %v1209 = vld [vmem:[#allocation8 + $0xc40] sm:$0xff]
    %v1210 = vld [vmem:[#allocation8 + $0xc48] sm:$0xff]
    %v1211 = vld [vmem:[#allocation8 + $0xc50] sm:$0xff]
    %v1212 = vld [vmem:[#allocation8 + $0xc58] sm:$0xff]
    %v1213 = vld [vmem:[#allocation8 + $0xc60] sm:$0xff]
    %v1214 = vld [vmem:[#allocation8 + $0xc68] sm:$0xff]
    %v1215 = vld [vmem:[#allocation8 + $0xc70] sm:$0xff]
    %v1216 = vld [vmem:[#allocation8 + $0xc78] sm:$0xff]
    %v1217 = vld [vmem:[#allocation8 + $0xc80] sm:$0xff]
    %v1218 = vld [vmem:[#allocation8 + $0xc88] sm:$0xff]
    %v1219 = vld [vmem:[#allocation8 + $0xc90] sm:$0xff]
    %v1220 = vld [vmem:[#allocation8 + $0xc98] sm:$0xff]
    %v1221 = vld [vmem:[#allocation8 + $0xca0] sm:$0xff]
    %v1222 = vld [vmem:[#allocation8 + $0xca8] sm:$0xff]
    %v1223 = vld [vmem:[#allocation8 + $0xcb0] sm:$0xff]
    %v1224 = vld [vmem:[#allocation8 + $0xcb8] sm:$0xff]
    %v1225 = vld [vmem:[#allocation8 + $0xcc0] sm:$0xff]
    %v1226 = vld [vmem:[#allocation8 + $0xcc8] sm:$0xff]
    %v1227 = vld [vmem:[#allocation8 + $0xcd0] sm:$0xff]
    %v1228 = vld [vmem:[#allocation8 + $0xcd8] sm:$0xff]
    %v1229 = vld [vmem:[#allocation8 + $0xce0] sm:$0xff]
    %v1230 = vld [vmem:[#allocation8 + $0xce8] sm:$0xff]
    %v1231 = vld [vmem:[#allocation8 + $0xcf0] sm:$0xff]
    %v1232 = vld [vmem:[#allocation8 + $0xcf8] sm:$0xff]
    %v1233 = vld [vmem:[#allocation8 + $0xd00] sm:$0xff]
    %v1234 = vld [vmem:[#allocation8 + $0xd08] sm:$0xff]
    %v1235 = vld [vmem:[#allocation8 + $0xd10] sm:$0xff]
    %v1236 = vld [vmem:[#allocation8 + $0xd18] sm:$0xff]
    %v1237 = vld [vmem:[#allocation8 + $0xd20] sm:$0xff]
    %v1238 = vld [vmem:[#allocation8 + $0xd28] sm:$0xff]
    %v1239 = vld [vmem:[#allocation8 + $0xd30] sm:$0xff]
    %v1240 = vld [vmem:[#allocation8 + $0xd38] sm:$0xff]
    %v1241 = vld [vmem:[#allocation8 + $0xd40] sm:$0xff]
    %v1242 = vld [vmem:[#allocation8 + $0xd48] sm:$0xff]
    %v1243 = vld [vmem:[#allocation8 + $0xd50] sm:$0xff]
    %v1244 = vld [vmem:[#allocation8 + $0xd58] sm:$0xff]
    %v1245 = vld [vmem:[#allocation8 + $0xd60] sm:$0xff]
    %v1246 = vld [vmem:[#allocation8 + $0xd68] sm:$0xff]
    %v1247 = vld [vmem:[#allocation8 + $0xd70] sm:$0xff]
    %v1248 = vld [vmem:[#allocation8 + $0xd78] sm:$0xff]
    %v1249 = vld [vmem:[#allocation8 + $0xd80] sm:$0xff]
    %v1250 = vld [vmem:[#allocation8 + $0xd88] sm:$0xff]
    %v1251 = vld [vmem:[#allocation8 + $0xd90] sm:$0xff]
    %v1252 = vld [vmem:[#allocation8 + $0xd98] sm:$0xff]
    %v1253 = vld [vmem:[#allocation8 + $0xda0] sm:$0xff]
    %v1254 = vld [vmem:[#allocation8 + $0xda8] sm:$0xff]
    %v1255 = vld [vmem:[#allocation8 + $0xdb0] sm:$0xff]
    %v1256 = vld [vmem:[#allocation8 + $0xdb8] sm:$0xff]
    %v1257 = vld [vmem:[#allocation8 + $0xdc0] sm:$0xff]
    %v1258 = vld [vmem:[#allocation8 + $0xdc8] sm:$0xff]
    %v1259 = vld [vmem:[#allocation8 + $0xdd0] sm:$0xff]
    %v1260 = vld [vmem:[#allocation8 + $0xdd8] sm:$0xff]
    %v1261 = vld [vmem:[#allocation8 + $0xde0] sm:$0xff]
    %v1262 = vld [vmem:[#allocation8 + $0xde8] sm:$0xff]
    %v1263 = vld [vmem:[#allocation8 + $0xdf0] sm:$0xff]
    %v1264 = vld [vmem:[#allocation8 + $0xdf8] sm:$0xff]
    %v1265 = vld [vmem:[#allocation8 + $0xe00] sm:$0xff]
    %v1266 = vld [vmem:[#allocation8 + $0xe08] sm:$0xff]
    %v1267 = vld [vmem:[#allocation8 + $0xe10] sm:$0xff]
    %v1268 = vld [vmem:[#allocation8 + $0xe18] sm:$0xff]
    %v1269 = vld [vmem:[#allocation8 + $0xe20] sm:$0xff]
    %v1270 = vld [vmem:[#allocation8 + $0xe28] sm:$0xff]
    %v1271 = vld [vmem:[#allocation8 + $0xe30] sm:$0xff]
    %v1272 = vld [vmem:[#allocation8 + $0xe38] sm:$0xff]
    %v1273 = vld [vmem:[#allocation8 + $0xe40] sm:$0xff]
    %v1274 = vld [vmem:[#allocation8 + $0xe48] sm:$0xff]
    %v1275 = vld [vmem:[#allocation8 + $0xe50] sm:$0xff]
    %v1276 = vld [vmem:[#allocation8 + $0xe58] sm:$0xff]
    %v1277 = vld [vmem:[#allocation8 + $0xe60] sm:$0xff]
    %v1278 = vld [vmem:[#allocation8 + $0xe68] sm:$0xff]
    %v1279 = vld [vmem:[#allocation8 + $0xe70] sm:$0xff]
    %v1280 = vld [vmem:[#allocation8 + $0xe78] sm:$0xff]
    %v1281 = vld [vmem:[#allocation8 + $0xe80] sm:$0xff]
    %v1282 = vld [vmem:[#allocation8 + $0xe88] sm:$0xff]
    %v1283 = vld [vmem:[#allocation8 + $0xe90] sm:$0xff]
    %v1284 = vld [vmem:[#allocation8 + $0xe98] sm:$0xff]
    %v1285 = vld [vmem:[#allocation8 + $0xea0] sm:$0xff]
    %v1286 = vld [vmem:[#allocation8 + $0xea8] sm:$0xff]
    %v1287 = vld [vmem:[#allocation8 + $0xeb0] sm:$0xff]
    %v1288 = vld [vmem:[#allocation8 + $0xeb8] sm:$0xff]
    %v1289 = vld [vmem:[#allocation8 + $0xec0] sm:$0xff]
    %v1290 = vld [vmem:[#allocation8 + $0xec8] sm:$0xff]
    %v1291 = vld [vmem:[#allocation8 + $0xed0] sm:$0xff]
    %v1292 = vld [vmem:[#allocation8 + $0xed8] sm:$0xff]
    %v1293 = vld [vmem:[#allocation8 + $0xee0] sm:$0xff]
    %v1294 = vld [vmem:[#allocation8 + $0xee8] sm:$0xff]
    %v1295 = vld [vmem:[#allocation8 + $0xef0] sm:$0xff]
    %v1296 = vld [vmem:[#allocation8 + $0xef8] sm:$0xff]
    %v1297 = vunpack.c.l.s8.bf16 %v817
    %v1298 = vunpack.c.l.s8.bf16 %v818
    %v1299 = vunpack.c.l.s8.bf16 %v819
    %v1300 = vunpack.c.l.s8.bf16 %v820
    %v1301 = vunpack.c.l.s8.bf16 %v821
    %v1302 = vunpack.c.l.s8.bf16 %v822
    %v1303 = vunpack.c.l.s8.bf16 %v823
    %v1304 = vunpack.c.l.s8.bf16 %v824
    %v1305 = vunpack.c.l.s8.bf16 %v825
    %v1306 = vunpack.c.l.s8.bf16 %v826
    %v1307 = vunpack.c.h.s8.bf16 %v817
    %v1308 = vunpack.c.h.s8.bf16 %v818
    %v1309 = vunpack.c.h.s8.bf16 %v819
    %v1310 = vunpack.c.h.s8.bf16 %v820
    %v1311 = vunpack.c.h.s8.bf16 %v821
    %v1312 = vunpack.c.h.s8.bf16 %v822
    %v1313 = vunpack.c.h.s8.bf16 %v823
    %v1314 = vunpack.c.h.s8.bf16 %v824
    %v1315 = vunpack.c.h.s8.bf16 %v825
    %v1316 = vunpack.c.h.s8.bf16 %v826
    %v1317 = vunpack.c.l.s8.bf16 %v827
    %v1318 = vunpack.c.l.s8.bf16 %v828
    %v1319 = vunpack.c.l.s8.bf16 %v829
    %v1320 = vunpack.c.l.s8.bf16 %v830
    %v1321 = vunpack.c.l.s8.bf16 %v831
    %v1322 = vunpack.c.l.s8.bf16 %v832
    %v1323 = vunpack.c.l.s8.bf16 %v833
    %v1324 = vunpack.c.l.s8.bf16 %v834
    %v1325 = vunpack.c.l.s8.bf16 %v835
    %v1326 = vunpack.c.l.s8.bf16 %v836
    %v1327 = vunpack.c.h.s8.bf16 %v827
    %v1328 = vunpack.c.h.s8.bf16 %v828
    %v1329 = vunpack.c.h.s8.bf16 %v829
    %v1330 = vunpack.c.h.s8.bf16 %v830
    %v1331 = vunpack.c.h.s8.bf16 %v831
    %v1332 = vunpack.c.h.s8.bf16 %v832
    %v1333 = vunpack.c.h.s8.bf16 %v833
    %v1334 = vunpack.c.h.s8.bf16 %v834
    %v1335 = vunpack.c.h.s8.bf16 %v835
    %v1336 = vunpack.c.h.s8.bf16 %v836
    %v1337 = vunpack.c.l.s8.bf16 %v837
    %v1338 = vunpack.c.l.s8.bf16 %v838
    %v1339 = vunpack.c.l.s8.bf16 %v839
    %v1340 = vunpack.c.l.s8.bf16 %v840
    %v1341 = vunpack.c.l.s8.bf16 %v841
    %v1342 = vunpack.c.l.s8.bf16 %v842
    %v1343 = vunpack.c.l.s8.bf16 %v843
    %v1344 = vunpack.c.l.s8.bf16 %v844
    %v1345 = vunpack.c.l.s8.bf16 %v845
    %v1346 = vunpack.c.l.s8.bf16 %v846
    %v1347 = vunpack.c.h.s8.bf16 %v837
    %v1348 = vunpack.c.h.s8.bf16 %v838
    %v1349 = vunpack.c.h.s8.bf16 %v839
    %v1350 = vunpack.c.h.s8.bf16 %v840
    %v1351 = vunpack.c.h.s8.bf16 %v841
    %v1352 = vunpack.c.h.s8.bf16 %v842
    %v1353 = vunpack.c.h.s8.bf16 %v843
    %v1354 = vunpack.c.h.s8.bf16 %v844
    %v1355 = vunpack.c.h.s8.bf16 %v845
    %v1356 = vunpack.c.h.s8.bf16 %v846
    %v1357 = vunpack.c.l.s8.bf16 %v847
    %v1358 = vunpack.c.l.s8.bf16 %v848
    %v1359 = vunpack.c.l.s8.bf16 %v849
    %v1360 = vunpack.c.l.s8.bf16 %v850
    %v1361 = vunpack.c.l.s8.bf16 %v851
    %v1362 = vunpack.c.l.s8.bf16 %v852
    %v1363 = vunpack.c.l.s8.bf16 %v853
    %v1364 = vunpack.c.l.s8.bf16 %v854
    %v1365 = vunpack.c.l.s8.bf16 %v855
    %v1366 = vunpack.c.l.s8.bf16 %v856
    %v1367 = vunpack.c.h.s8.bf16 %v847
    %v1368 = vunpack.c.h.s8.bf16 %v848
    %v1369 = vunpack.c.h.s8.bf16 %v849
    %v1370 = vunpack.c.h.s8.bf16 %v850
    %v1371 = vunpack.c.h.s8.bf16 %v851
    %v1372 = vunpack.c.h.s8.bf16 %v852
    %v1373 = vunpack.c.h.s8.bf16 %v853
    %v1374 = vunpack.c.h.s8.bf16 %v854
    %v1375 = vunpack.c.h.s8.bf16 %v855
    %v1376 = vunpack.c.h.s8.bf16 %v856
    %v1377 = vunpack.c.l.s8.bf16 %v857
    %v1378 = vunpack.c.l.s8.bf16 %v858
    %v1379 = vunpack.c.l.s8.bf16 %v859
    %v1380 = vunpack.c.l.s8.bf16 %v860
    %v1381 = vunpack.c.l.s8.bf16 %v861
    %v1382 = vunpack.c.l.s8.bf16 %v862
    %v1383 = vunpack.c.l.s8.bf16 %v863
    %v1384 = vunpack.c.l.s8.bf16 %v864
    %v1385 = vunpack.c.l.s8.bf16 %v865
    %v1386 = vunpack.c.l.s8.bf16 %v866
    %v1387 = vunpack.c.h.s8.bf16 %v857
    %v1388 = vunpack.c.h.s8.bf16 %v858
    %v1389 = vunpack.c.h.s8.bf16 %v859
    %v1390 = vunpack.c.h.s8.bf16 %v860
    %v1391 = vunpack.c.h.s8.bf16 %v861
    %v1392 = vunpack.c.h.s8.bf16 %v862
    %v1393 = vunpack.c.h.s8.bf16 %v863
    %v1394 = vunpack.c.h.s8.bf16 %v864
    %v1395 = vunpack.c.h.s8.bf16 %v865
    %v1396 = vunpack.c.h.s8.bf16 %v866
    %v1397 = vunpack.c.l.s8.bf16 %v867
    %v1398 = vunpack.c.l.s8.bf16 %v868
    %v1399 = vunpack.c.l.s8.bf16 %v869
    %v1400 = vunpack.c.l.s8.bf16 %v870
    %v1401 = vunpack.c.l.s8.bf16 %v871
    %v1402 = vunpack.c.l.s8.bf16 %v872
    %v1403 = vunpack.c.l.s8.bf16 %v873
    %v1404 = vunpack.c.l.s8.bf16 %v874
    %v1405 = vunpack.c.l.s8.bf16 %v875
    %v1406 = vunpack.c.l.s8.bf16 %v876
    %v1407 = vunpack.c.h.s8.bf16 %v867
    %v1408 = vunpack.c.h.s8.bf16 %v868
    %v1409 = vunpack.c.h.s8.bf16 %v869
    %v1410 = vunpack.c.h.s8.bf16 %v870
    %v1411 = vunpack.c.h.s8.bf16 %v871
    %v1412 = vunpack.c.h.s8.bf16 %v872
    %v1413 = vunpack.c.h.s8.bf16 %v873
    %v1414 = vunpack.c.h.s8.bf16 %v874
    %v1415 = vunpack.c.h.s8.bf16 %v875
    %v1416 = vunpack.c.h.s8.bf16 %v876
    %v1417 = vunpack.c.l.s8.bf16 %v877
    %v1418 = vunpack.c.l.s8.bf16 %v878
    %v1419 = vunpack.c.l.s8.bf16 %v879
    %v1420 = vunpack.c.l.s8.bf16 %v880
    %v1421 = vunpack.c.l.s8.bf16 %v881
    %v1422 = vunpack.c.l.s8.bf16 %v882
    %v1423 = vunpack.c.l.s8.bf16 %v883
    %v1424 = vunpack.c.l.s8.bf16 %v884
    %v1425 = vunpack.c.l.s8.bf16 %v885
    %v1426 = vunpack.c.l.s8.bf16 %v886
    %v1427 = vunpack.c.h.s8.bf16 %v877
    %v1428 = vunpack.c.h.s8.bf16 %v878
    %v1429 = vunpack.c.h.s8.bf16 %v879
    %v1430 = vunpack.c.h.s8.bf16 %v880
    %v1431 = vunpack.c.h.s8.bf16 %v881
    %v1432 = vunpack.c.h.s8.bf16 %v882
    %v1433 = vunpack.c.h.s8.bf16 %v883
    %v1434 = vunpack.c.h.s8.bf16 %v884
    %v1435 = vunpack.c.h.s8.bf16 %v885
    %v1436 = vunpack.c.h.s8.bf16 %v886
    %v1437 = vunpack.c.l.s8.bf16 %v887
    %v1438 = vunpack.c.l.s8.bf16 %v888
    %v1439 = vunpack.c.l.s8.bf16 %v889
    %v1440 = vunpack.c.l.s8.bf16 %v890
    %v1441 = vunpack.c.l.s8.bf16 %v891
    %v1442 = vunpack.c.l.s8.bf16 %v892
    %v1443 = vunpack.c.l.s8.bf16 %v893
    %v1444 = vunpack.c.l.s8.bf16 %v894
    %v1445 = vunpack.c.l.s8.bf16 %v895
    %v1446 = vunpack.c.l.s8.bf16 %v896
    %v1447 = vunpack.c.h.s8.bf16 %v887
    %v1448 = vunpack.c.h.s8.bf16 %v888
    %v1449 = vunpack.c.h.s8.bf16 %v889
    %v1450 = vunpack.c.h.s8.bf16 %v890
    %v1451 = vunpack.c.h.s8.bf16 %v891
    %v1452 = vunpack.c.h.s8.bf16 %v892
    %v1453 = vunpack.c.h.s8.bf16 %v893
    %v1454 = vunpack.c.h.s8.bf16 %v894
    %v1455 = vunpack.c.h.s8.bf16 %v895
    %v1456 = vunpack.c.h.s8.bf16 %v896
    %v1457 = vunpack.c.l.s8.bf16 %v897
    %v1458 = vunpack.c.l.s8.bf16 %v898
    %v1459 = vunpack.c.l.s8.bf16 %v899
    %v1460 = vunpack.c.l.s8.bf16 %v900
    %v1461 = vunpack.c.l.s8.bf16 %v901
    %v1462 = vunpack.c.l.s8.bf16 %v902
    %v1463 = vunpack.c.l.s8.bf16 %v903
    %v1464 = vunpack.c.l.s8.bf16 %v904
    %v1465 = vunpack.c.l.s8.bf16 %v905
    %v1466 = vunpack.c.l.s8.bf16 %v906
    %v1467 = vunpack.c.h.s8.bf16 %v897
    %v1468 = vunpack.c.h.s8.bf16 %v898
    %v1469 = vunpack.c.h.s8.bf16 %v899
    %v1470 = vunpack.c.h.s8.bf16 %v900
    %v1471 = vunpack.c.h.s8.bf16 %v901
    %v1472 = vunpack.c.h.s8.bf16 %v902
    %v1473 = vunpack.c.h.s8.bf16 %v903
    %v1474 = vunpack.c.h.s8.bf16 %v904
    %v1475 = vunpack.c.h.s8.bf16 %v905
    %v1476 = vunpack.c.h.s8.bf16 %v906
    %v1477 = vunpack.c.l.s8.bf16 %v907
    %v1478 = vunpack.c.l.s8.bf16 %v908
    %v1479 = vunpack.c.l.s8.bf16 %v909
    %v1480 = vunpack.c.l.s8.bf16 %v910
    %v1481 = vunpack.c.l.s8.bf16 %v911
    %v1482 = vunpack.c.l.s8.bf16 %v912
    %v1483 = vunpack.c.l.s8.bf16 %v913
    %v1484 = vunpack.c.l.s8.bf16 %v914
    %v1485 = vunpack.c.l.s8.bf16 %v915
    %v1486 = vunpack.c.l.s8.bf16 %v916
    %v1487 = vunpack.c.h.s8.bf16 %v907
    %v1488 = vunpack.c.h.s8.bf16 %v908
    %v1489 = vunpack.c.h.s8.bf16 %v909
    %v1490 = vunpack.c.h.s8.bf16 %v910
    %v1491 = vunpack.c.h.s8.bf16 %v911
    %v1492 = vunpack.c.h.s8.bf16 %v912
    %v1493 = vunpack.c.h.s8.bf16 %v913
    %v1494 = vunpack.c.h.s8.bf16 %v914
    %v1495 = vunpack.c.h.s8.bf16 %v915
    %v1496 = vunpack.c.h.s8.bf16 %v916
    %v1497 = vunpack.c.l.s8.bf16 %v917
    %v1498 = vunpack.c.l.s8.bf16 %v918
    %v1499 = vunpack.c.l.s8.bf16 %v919
    %v1500 = vunpack.c.l.s8.bf16 %v920
    %v1501 = vunpack.c.l.s8.bf16 %v921
    %v1502 = vunpack.c.l.s8.bf16 %v922
    %v1503 = vunpack.c.l.s8.bf16 %v923
    %v1504 = vunpack.c.l.s8.bf16 %v924
    %v1505 = vunpack.c.l.s8.bf16 %v925
    %v1506 = vunpack.c.l.s8.bf16 %v926
    %v1507 = vunpack.c.h.s8.bf16 %v917
    %v1508 = vunpack.c.h.s8.bf16 %v918
    %v1509 = vunpack.c.h.s8.bf16 %v919
    %v1510 = vunpack.c.h.s8.bf16 %v920
    %v1511 = vunpack.c.h.s8.bf16 %v921
    %v1512 = vunpack.c.h.s8.bf16 %v922
    %v1513 = vunpack.c.h.s8.bf16 %v923
    %v1514 = vunpack.c.h.s8.bf16 %v924
    %v1515 = vunpack.c.h.s8.bf16 %v925
    %v1516 = vunpack.c.h.s8.bf16 %v926
    %v1517 = vunpack.c.l.s8.bf16 %v927
    %v1518 = vunpack.c.l.s8.bf16 %v928
    %v1519 = vunpack.c.l.s8.bf16 %v929
    %v1520 = vunpack.c.l.s8.bf16 %v930
    %v1521 = vunpack.c.l.s8.bf16 %v931
    %v1522 = vunpack.c.l.s8.bf16 %v932
    %v1523 = vunpack.c.l.s8.bf16 %v933
    %v1524 = vunpack.c.l.s8.bf16 %v934
    %v1525 = vunpack.c.l.s8.bf16 %v935
    %v1526 = vunpack.c.l.s8.bf16 %v936
    %v1527 = vunpack.c.h.s8.bf16 %v927
    %v1528 = vunpack.c.h.s8.bf16 %v928
    %v1529 = vunpack.c.h.s8.bf16 %v929
    %v1530 = vunpack.c.h.s8.bf16 %v930
    %v1531 = vunpack.c.h.s8.bf16 %v931
    %v1532 = vunpack.c.h.s8.bf16 %v932
    %v1533 = vunpack.c.h.s8.bf16 %v933
    %v1534 = vunpack.c.h.s8.bf16 %v934
    %v1535 = vunpack.c.h.s8.bf16 %v935
    %v1536 = vunpack.c.h.s8.bf16 %v936
    %v1537 = vunpack.c.l.s8.bf16 %v937
    %v1538 = vunpack.c.l.s8.bf16 %v938
    %v1539 = vunpack.c.l.s8.bf16 %v939
    %v1540 = vunpack.c.l.s8.bf16 %v940
    %v1541 = vunpack.c.l.s8.bf16 %v941
    %v1542 = vunpack.c.l.s8.bf16 %v942
    %v1543 = vunpack.c.l.s8.bf16 %v943
    %v1544 = vunpack.c.l.s8.bf16 %v944
    %v1545 = vunpack.c.l.s8.bf16 %v945
    %v1546 = vunpack.c.l.s8.bf16 %v946
    %v1547 = vunpack.c.h.s8.bf16 %v937
    %v1548 = vunpack.c.h.s8.bf16 %v938
    %v1549 = vunpack.c.h.s8.bf16 %v939
    %v1550 = vunpack.c.h.s8.bf16 %v940
    %v1551 = vunpack.c.h.s8.bf16 %v941
    %v1552 = vunpack.c.h.s8.bf16 %v942
    %v1553 = vunpack.c.h.s8.bf16 %v943
    %v1554 = vunpack.c.h.s8.bf16 %v944
    %v1555 = vunpack.c.h.s8.bf16 %v945
    %v1556 = vunpack.c.h.s8.bf16 %v946
    %v1557 = vunpack.c.l.s8.bf16 %v947
    %v1558 = vunpack.c.l.s8.bf16 %v948
    %v1559 = vunpack.c.l.s8.bf16 %v949
    %v1560 = vunpack.c.l.s8.bf16 %v950
    %v1561 = vunpack.c.l.s8.bf16 %v951
    %v1562 = vunpack.c.l.s8.bf16 %v952
    %v1563 = vunpack.c.l.s8.bf16 %v953
    %v1564 = vunpack.c.l.s8.bf16 %v954
    %v1565 = vunpack.c.l.s8.bf16 %v955
    %v1566 = vunpack.c.l.s8.bf16 %v956
    %v1567 = vunpack.c.h.s8.bf16 %v947
    %v1568 = vunpack.c.h.s8.bf16 %v948
    %v1569 = vunpack.c.h.s8.bf16 %v949
    %v1570 = vunpack.c.h.s8.bf16 %v950
    %v1571 = vunpack.c.h.s8.bf16 %v951
    %v1572 = vunpack.c.h.s8.bf16 %v952
    %v1573 = vunpack.c.h.s8.bf16 %v953
    %v1574 = vunpack.c.h.s8.bf16 %v954
    %v1575 = vunpack.c.h.s8.bf16 %v955
    %v1576 = vunpack.c.h.s8.bf16 %v956
    %v1577 = vunpack.c.l.s8.bf16 %v957
    %v1578 = vunpack.c.l.s8.bf16 %v958
    %v1579 = vunpack.c.l.s8.bf16 %v959
    %v1580 = vunpack.c.l.s8.bf16 %v960
    %v1581 = vunpack.c.l.s8.bf16 %v961
    %v1582 = vunpack.c.l.s8.bf16 %v962
    %v1583 = vunpack.c.l.s8.bf16 %v963
    %v1584 = vunpack.c.l.s8.bf16 %v964
    %v1585 = vunpack.c.l.s8.bf16 %v965
    %v1586 = vunpack.c.l.s8.bf16 %v966
    %v1587 = vunpack.c.h.s8.bf16 %v957
    %v1588 = vunpack.c.h.s8.bf16 %v958
    %v1589 = vunpack.c.h.s8.bf16 %v959
    %v1590 = vunpack.c.h.s8.bf16 %v960
    %v1591 = vunpack.c.h.s8.bf16 %v961
    %v1592 = vunpack.c.h.s8.bf16 %v962
    %v1593 = vunpack.c.h.s8.bf16 %v963
    %v1594 = vunpack.c.h.s8.bf16 %v964
    %v1595 = vunpack.c.h.s8.bf16 %v965
    %v1596 = vunpack.c.h.s8.bf16 %v966
    %v1597 = vunpack.c.l.s8.bf16 %v967
    %v1598 = vunpack.c.l.s8.bf16 %v968
    %v1599 = vunpack.c.l.s8.bf16 %v969
    %v1600 = vunpack.c.l.s8.bf16 %v970
    %v1601 = vunpack.c.l.s8.bf16 %v971
    %v1602 = vunpack.c.l.s8.bf16 %v972
    %v1603 = vunpack.c.l.s8.bf16 %v973
    %v1604 = vunpack.c.l.s8.bf16 %v974
    %v1605 = vunpack.c.l.s8.bf16 %v975
    %v1606 = vunpack.c.l.s8.bf16 %v976
    %v1607 = vunpack.c.h.s8.bf16 %v967
    %v1608 = vunpack.c.h.s8.bf16 %v968
    %v1609 = vunpack.c.h.s8.bf16 %v969
    %v1610 = vunpack.c.h.s8.bf16 %v970
    %v1611 = vunpack.c.h.s8.bf16 %v971
    %v1612 = vunpack.c.h.s8.bf16 %v972
    %v1613 = vunpack.c.h.s8.bf16 %v973
    %v1614 = vunpack.c.h.s8.bf16 %v974
    %v1615 = vunpack.c.h.s8.bf16 %v975
    %v1616 = vunpack.c.h.s8.bf16 %v976
    %v1617 = vunpack.c.l.s8.bf16 %v977
    %v1618 = vunpack.c.l.s8.bf16 %v978
    %v1619 = vunpack.c.l.s8.bf16 %v979
    %v1620 = vunpack.c.l.s8.bf16 %v980
    %v1621 = vunpack.c.l.s8.bf16 %v981
    %v1622 = vunpack.c.l.s8.bf16 %v982
    %v1623 = vunpack.c.l.s8.bf16 %v983
    %v1624 = vunpack.c.l.s8.bf16 %v984
    %v1625 = vunpack.c.l.s8.bf16 %v985
    %v1626 = vunpack.c.l.s8.bf16 %v986
    %v1627 = vunpack.c.h.s8.bf16 %v977
    %v1628 = vunpack.c.h.s8.bf16 %v978
    %v1629 = vunpack.c.h.s8.bf16 %v979
    %v1630 = vunpack.c.h.s8.bf16 %v980
    %v1631 = vunpack.c.h.s8.bf16 %v981
    %v1632 = vunpack.c.h.s8.bf16 %v982
    %v1633 = vunpack.c.h.s8.bf16 %v983
    %v1634 = vunpack.c.h.s8.bf16 %v984
    %v1635 = vunpack.c.h.s8.bf16 %v985
    %v1636 = vunpack.c.h.s8.bf16 %v986
    %v1637 = vunpack.c.l.s8.bf16 %v987
    %v1638 = vunpack.c.l.s8.bf16 %v988
    %v1639 = vunpack.c.l.s8.bf16 %v989
    %v1640 = vunpack.c.l.s8.bf16 %v990
    %v1641 = vunpack.c.l.s8.bf16 %v991
    %v1642 = vunpack.c.l.s8.bf16 %v992
    %v1643 = vunpack.c.l.s8.bf16 %v993
    %v1644 = vunpack.c.l.s8.bf16 %v994
    %v1645 = vunpack.c.l.s8.bf16 %v995
    %v1646 = vunpack.c.l.s8.bf16 %v996
    %v1647 = vunpack.c.h.s8.bf16 %v987
    %v1648 = vunpack.c.h.s8.bf16 %v988
    %v1649 = vunpack.c.h.s8.bf16 %v989
    %v1650 = vunpack.c.h.s8.bf16 %v990
    %v1651 = vunpack.c.h.s8.bf16 %v991
    %v1652 = vunpack.c.h.s8.bf16 %v992
    %v1653 = vunpack.c.h.s8.bf16 %v993
    %v1654 = vunpack.c.h.s8.bf16 %v994
    %v1655 = vunpack.c.h.s8.bf16 %v995
    %v1656 = vunpack.c.h.s8.bf16 %v996
    %v1657 = vunpack.c.l.s8.bf16 %v997
    %v1658 = vunpack.c.l.s8.bf16 %v998
    %v1659 = vunpack.c.l.s8.bf16 %v999
    %v1660 = vunpack.c.l.s8.bf16 %v1000
    %v1661 = vunpack.c.l.s8.bf16 %v1001
    %v1662 = vunpack.c.l.s8.bf16 %v1002
    %v1663 = vunpack.c.l.s8.bf16 %v1003
    %v1664 = vunpack.c.l.s8.bf16 %v1004
    %v1665 = vunpack.c.l.s8.bf16 %v1005
    %v1666 = vunpack.c.l.s8.bf16 %v1006
    %v1667 = vunpack.c.h.s8.bf16 %v997
    %v1668 = vunpack.c.h.s8.bf16 %v998
    %v1669 = vunpack.c.h.s8.bf16 %v999
    %v1670 = vunpack.c.h.s8.bf16 %v1000
    %v1671 = vunpack.c.h.s8.bf16 %v1001
    %v1672 = vunpack.c.h.s8.bf16 %v1002
    %v1673 = vunpack.c.h.s8.bf16 %v1003
    %v1674 = vunpack.c.h.s8.bf16 %v1004
    %v1675 = vunpack.c.h.s8.bf16 %v1005
    %v1676 = vunpack.c.h.s8.bf16 %v1006
    %v1677 = vunpack.c.l.s8.bf16 %v1007
    %v1678 = vunpack.c.l.s8.bf16 %v1008
    %v1679 = vunpack.c.l.s8.bf16 %v1009
    %v1680 = vunpack.c.l.s8.bf16 %v1010
    %v1681 = vunpack.c.l.s8.bf16 %v1011
    %v1682 = vunpack.c.l.s8.bf16 %v1012
    %v1683 = vunpack.c.l.s8.bf16 %v1013
    %v1684 = vunpack.c.l.s8.bf16 %v1014
    %v1685 = vunpack.c.l.s8.bf16 %v1015
    %v1686 = vunpack.c.l.s8.bf16 %v1016
    %v1687 = vunpack.c.h.s8.bf16 %v1007
    %v1688 = vunpack.c.h.s8.bf16 %v1008
    %v1689 = vunpack.c.h.s8.bf16 %v1009
    %v1690 = vunpack.c.h.s8.bf16 %v1010
    %v1691 = vunpack.c.h.s8.bf16 %v1011
    %v1692 = vunpack.c.h.s8.bf16 %v1012
    %v1693 = vunpack.c.h.s8.bf16 %v1013
    %v1694 = vunpack.c.h.s8.bf16 %v1014
    %v1695 = vunpack.c.h.s8.bf16 %v1015
    %v1696 = vunpack.c.h.s8.bf16 %v1016
    %v1697 = vunpack.c.l.s8.bf16 %v1017
    %v1698 = vunpack.c.l.s8.bf16 %v1018
    %v1699 = vunpack.c.l.s8.bf16 %v1019
    %v1700 = vunpack.c.l.s8.bf16 %v1020
    %v1701 = vunpack.c.l.s8.bf16 %v1021
    %v1702 = vunpack.c.l.s8.bf16 %v1022
    %v1703 = vunpack.c.l.s8.bf16 %v1023
    %v1704 = vunpack.c.l.s8.bf16 %v1024
    %v1705 = vunpack.c.l.s8.bf16 %v1025
    %v1706 = vunpack.c.l.s8.bf16 %v1026
    %v1707 = vunpack.c.h.s8.bf16 %v1017
    %v1708 = vunpack.c.h.s8.bf16 %v1018
    %v1709 = vunpack.c.h.s8.bf16 %v1019
    %v1710 = vunpack.c.h.s8.bf16 %v1020
    %v1711 = vunpack.c.h.s8.bf16 %v1021
    %v1712 = vunpack.c.h.s8.bf16 %v1022
    %v1713 = vunpack.c.h.s8.bf16 %v1023
    %v1714 = vunpack.c.h.s8.bf16 %v1024
    %v1715 = vunpack.c.h.s8.bf16 %v1025
    %v1716 = vunpack.c.h.s8.bf16 %v1026
    %v1717 = vunpack.c.l.s8.bf16 %v1027
    %v1718 = vunpack.c.l.s8.bf16 %v1028
    %v1719 = vunpack.c.l.s8.bf16 %v1029
    %v1720 = vunpack.c.l.s8.bf16 %v1030
    %v1721 = vunpack.c.l.s8.bf16 %v1031
    %v1722 = vunpack.c.l.s8.bf16 %v1032
    %v1723 = vunpack.c.l.s8.bf16 %v1033
    %v1724 = vunpack.c.l.s8.bf16 %v1034
    %v1725 = vunpack.c.l.s8.bf16 %v1035
    %v1726 = vunpack.c.l.s8.bf16 %v1036
    %v1727 = vunpack.c.h.s8.bf16 %v1027
    %v1728 = vunpack.c.h.s8.bf16 %v1028
    %v1729 = vunpack.c.h.s8.bf16 %v1029
    %v1730 = vunpack.c.h.s8.bf16 %v1030
    %v1731 = vunpack.c.h.s8.bf16 %v1031
    %v1732 = vunpack.c.h.s8.bf16 %v1032
    %v1733 = vunpack.c.h.s8.bf16 %v1033
    %v1734 = vunpack.c.h.s8.bf16 %v1034
    %v1735 = vunpack.c.h.s8.bf16 %v1035
    %v1736 = vunpack.c.h.s8.bf16 %v1036
    %v1737 = vunpack.c.l.s8.bf16 %v1037
    %v1738 = vunpack.c.l.s8.bf16 %v1038
    %v1739 = vunpack.c.l.s8.bf16 %v1039
    %v1740 = vunpack.c.l.s8.bf16 %v1040
    %v1741 = vunpack.c.l.s8.bf16 %v1041
    %v1742 = vunpack.c.l.s8.bf16 %v1042
    %v1743 = vunpack.c.l.s8.bf16 %v1043
    %v1744 = vunpack.c.l.s8.bf16 %v1044
    %v1745 = vunpack.c.l.s8.bf16 %v1045
    %v1746 = vunpack.c.l.s8.bf16 %v1046
    %v1747 = vunpack.c.h.s8.bf16 %v1037
    %v1748 = vunpack.c.h.s8.bf16 %v1038
    %v1749 = vunpack.c.h.s8.bf16 %v1039
    %v1750 = vunpack.c.h.s8.bf16 %v1040
    %v1751 = vunpack.c.h.s8.bf16 %v1041
    %v1752 = vunpack.c.h.s8.bf16 %v1042
    %v1753 = vunpack.c.h.s8.bf16 %v1043
    %v1754 = vunpack.c.h.s8.bf16 %v1044
    %v1755 = vunpack.c.h.s8.bf16 %v1045
    %v1756 = vunpack.c.h.s8.bf16 %v1046
    %v1757 = vunpack.c.l.s8.bf16 %v1047
    %v1758 = vunpack.c.l.s8.bf16 %v1048
    %v1759 = vunpack.c.l.s8.bf16 %v1049
    %v1760 = vunpack.c.l.s8.bf16 %v1050
    %v1761 = vunpack.c.l.s8.bf16 %v1051
    %v1762 = vunpack.c.l.s8.bf16 %v1052
    %v1763 = vunpack.c.l.s8.bf16 %v1053
    %v1764 = vunpack.c.l.s8.bf16 %v1054
    %v1765 = vunpack.c.l.s8.bf16 %v1055
    %v1766 = vunpack.c.l.s8.bf16 %v1056
    %v1767 = vunpack.c.h.s8.bf16 %v1047
    %v1768 = vunpack.c.h.s8.bf16 %v1048
    %v1769 = vunpack.c.h.s8.bf16 %v1049
    %v1770 = vunpack.c.h.s8.bf16 %v1050
    %v1771 = vunpack.c.h.s8.bf16 %v1051
    %v1772 = vunpack.c.h.s8.bf16 %v1052
    %v1773 = vunpack.c.h.s8.bf16 %v1053
    %v1774 = vunpack.c.h.s8.bf16 %v1054
    %v1775 = vunpack.c.h.s8.bf16 %v1055
    %v1776 = vunpack.c.h.s8.bf16 %v1056
    %v1777 = vunpack.c.l.s8.bf16 %v1057
    %v1778 = vunpack.c.l.s8.bf16 %v1058
    %v1779 = vunpack.c.l.s8.bf16 %v1059
    %v1780 = vunpack.c.l.s8.bf16 %v1060
    %v1781 = vunpack.c.l.s8.bf16 %v1061
    %v1782 = vunpack.c.l.s8.bf16 %v1062
    %v1783 = vunpack.c.l.s8.bf16 %v1063
    %v1784 = vunpack.c.l.s8.bf16 %v1064
    %v1785 = vunpack.c.l.s8.bf16 %v1065
    %v1786 = vunpack.c.l.s8.bf16 %v1066
    %v1787 = vunpack.c.h.s8.bf16 %v1057
    %v1788 = vunpack.c.h.s8.bf16 %v1058
    %v1789 = vunpack.c.h.s8.bf16 %v1059
    %v1790 = vunpack.c.h.s8.bf16 %v1060
    %v1791 = vunpack.c.h.s8.bf16 %v1061
    %v1792 = vunpack.c.h.s8.bf16 %v1062
    %v1793 = vunpack.c.h.s8.bf16 %v1063
    %v1794 = vunpack.c.h.s8.bf16 %v1064
    %v1795 = vunpack.c.h.s8.bf16 %v1065
    %v1796 = vunpack.c.h.s8.bf16 %v1066
    %v1797 = vunpack.c.l.s8.bf16 %v1067
    %v1798 = vunpack.c.l.s8.bf16 %v1068
    %v1799 = vunpack.c.l.s8.bf16 %v1069
    %v1800 = vunpack.c.l.s8.bf16 %v1070
    %v1801 = vunpack.c.l.s8.bf16 %v1071
    %v1802 = vunpack.c.l.s8.bf16 %v1072
    %v1803 = vunpack.c.l.s8.bf16 %v1073
    %v1804 = vunpack.c.l.s8.bf16 %v1074
    %v1805 = vunpack.c.l.s8.bf16 %v1075
    %v1806 = vunpack.c.l.s8.bf16 %v1076
    %v1807 = vunpack.c.h.s8.bf16 %v1067
    %v1808 = vunpack.c.h.s8.bf16 %v1068
    %v1809 = vunpack.c.h.s8.bf16 %v1069
    %v1810 = vunpack.c.h.s8.bf16 %v1070
    %v1811 = vunpack.c.h.s8.bf16 %v1071
    %v1812 = vunpack.c.h.s8.bf16 %v1072
    %v1813 = vunpack.c.h.s8.bf16 %v1073
    %v1814 = vunpack.c.h.s8.bf16 %v1074
    %v1815 = vunpack.c.h.s8.bf16 %v1075
    %v1816 = vunpack.c.h.s8.bf16 %v1076
    %v1817 = vunpack.c.l.s8.bf16 %v1077
    %v1818 = vunpack.c.l.s8.bf16 %v1078
    %v1819 = vunpack.c.l.s8.bf16 %v1079
    %v1820 = vunpack.c.l.s8.bf16 %v1080
    %v1821 = vunpack.c.l.s8.bf16 %v1081
    %v1822 = vunpack.c.l.s8.bf16 %v1082
    %v1823 = vunpack.c.l.s8.bf16 %v1083
    %v1824 = vunpack.c.l.s8.bf16 %v1084
    %v1825 = vunpack.c.l.s8.bf16 %v1085
    %v1826 = vunpack.c.l.s8.bf16 %v1086
    %v1827 = vunpack.c.h.s8.bf16 %v1077
    %v1828 = vunpack.c.h.s8.bf16 %v1078
    %v1829 = vunpack.c.h.s8.bf16 %v1079
    %v1830 = vunpack.c.h.s8.bf16 %v1080
    %v1831 = vunpack.c.h.s8.bf16 %v1081
    %v1832 = vunpack.c.h.s8.bf16 %v1082
    %v1833 = vunpack.c.h.s8.bf16 %v1083
    %v1834 = vunpack.c.h.s8.bf16 %v1084
    %v1835 = vunpack.c.h.s8.bf16 %v1085
    %v1836 = vunpack.c.h.s8.bf16 %v1086
    %v1837 = vunpack.c.l.s8.bf16 %v1087
    %v1838 = vunpack.c.l.s8.bf16 %v1088
    %v1839 = vunpack.c.l.s8.bf16 %v1089
    %v1840 = vunpack.c.l.s8.bf16 %v1090
    %v1841 = vunpack.c.l.s8.bf16 %v1091
    %v1842 = vunpack.c.l.s8.bf16 %v1092
    %v1843 = vunpack.c.l.s8.bf16 %v1093
    %v1844 = vunpack.c.l.s8.bf16 %v1094
    %v1845 = vunpack.c.l.s8.bf16 %v1095
    %v1846 = vunpack.c.l.s8.bf16 %v1096
    %v1847 = vunpack.c.h.s8.bf16 %v1087
    %v1848 = vunpack.c.h.s8.bf16 %v1088
    %v1849 = vunpack.c.h.s8.bf16 %v1089
    %v1850 = vunpack.c.h.s8.bf16 %v1090
    %v1851 = vunpack.c.h.s8.bf16 %v1091
    %v1852 = vunpack.c.h.s8.bf16 %v1092
    %v1853 = vunpack.c.h.s8.bf16 %v1093
    %v1854 = vunpack.c.h.s8.bf16 %v1094
    %v1855 = vunpack.c.h.s8.bf16 %v1095
    %v1856 = vunpack.c.h.s8.bf16 %v1096
    %v1857 = vunpack.c.l.s8.bf16 %v1097
    %v1858 = vunpack.c.l.s8.bf16 %v1098
    %v1859 = vunpack.c.l.s8.bf16 %v1099
    %v1860 = vunpack.c.l.s8.bf16 %v1100
    %v1861 = vunpack.c.l.s8.bf16 %v1101
    %v1862 = vunpack.c.l.s8.bf16 %v1102
    %v1863 = vunpack.c.l.s8.bf16 %v1103
    %v1864 = vunpack.c.l.s8.bf16 %v1104
    %v1865 = vunpack.c.l.s8.bf16 %v1105
    %v1866 = vunpack.c.l.s8.bf16 %v1106
    %v1867 = vunpack.c.h.s8.bf16 %v1097
    %v1868 = vunpack.c.h.s8.bf16 %v1098
    %v1869 = vunpack.c.h.s8.bf16 %v1099
    %v1870 = vunpack.c.h.s8.bf16 %v1100
    %v1871 = vunpack.c.h.s8.bf16 %v1101
    %v1872 = vunpack.c.h.s8.bf16 %v1102
    %v1873 = vunpack.c.h.s8.bf16 %v1103
    %v1874 = vunpack.c.h.s8.bf16 %v1104
    %v1875 = vunpack.c.h.s8.bf16 %v1105
    %v1876 = vunpack.c.h.s8.bf16 %v1106
    %v1877 = vunpack.c.l.s8.bf16 %v1107
    %v1878 = vunpack.c.l.s8.bf16 %v1108
    %v1879 = vunpack.c.l.s8.bf16 %v1109
    %v1880 = vunpack.c.l.s8.bf16 %v1110
    %v1881 = vunpack.c.l.s8.bf16 %v1111
    %v1882 = vunpack.c.l.s8.bf16 %v1112
    %v1883 = vunpack.c.l.s8.bf16 %v1113
    %v1884 = vunpack.c.l.s8.bf16 %v1114
    %v1885 = vunpack.c.l.s8.bf16 %v1115
    %v1886 = vunpack.c.l.s8.bf16 %v1116
    %v1887 = vunpack.c.h.s8.bf16 %v1107
    %v1888 = vunpack.c.h.s8.bf16 %v1108
    %v1889 = vunpack.c.h.s8.bf16 %v1109
    %v1890 = vunpack.c.h.s8.bf16 %v1110
    %v1891 = vunpack.c.h.s8.bf16 %v1111
    %v1892 = vunpack.c.h.s8.bf16 %v1112
    %v1893 = vunpack.c.h.s8.bf16 %v1113
    %v1894 = vunpack.c.h.s8.bf16 %v1114
    %v1895 = vunpack.c.h.s8.bf16 %v1115
    %v1896 = vunpack.c.h.s8.bf16 %v1116
    %v1897 = vunpack.c.l.s8.bf16 %v1117
    %v1898 = vunpack.c.l.s8.bf16 %v1118
    %v1899 = vunpack.c.l.s8.bf16 %v1119
    %v1900 = vunpack.c.l.s8.bf16 %v1120
    %v1901 = vunpack.c.l.s8.bf16 %v1121
    %v1902 = vunpack.c.l.s8.bf16 %v1122
    %v1903 = vunpack.c.l.s8.bf16 %v1123
    %v1904 = vunpack.c.l.s8.bf16 %v1124
    %v1905 = vunpack.c.l.s8.bf16 %v1125
    %v1906 = vunpack.c.l.s8.bf16 %v1126
    %v1907 = vunpack.c.h.s8.bf16 %v1117
    %v1908 = vunpack.c.h.s8.bf16 %v1118
    %v1909 = vunpack.c.h.s8.bf16 %v1119
    %v1910 = vunpack.c.h.s8.bf16 %v1120
    %v1911 = vunpack.c.h.s8.bf16 %v1121
    %v1912 = vunpack.c.h.s8.bf16 %v1122
    %v1913 = vunpack.c.h.s8.bf16 %v1123
    %v1914 = vunpack.c.h.s8.bf16 %v1124
    %v1915 = vunpack.c.h.s8.bf16 %v1125
    %v1916 = vunpack.c.h.s8.bf16 %v1126
    %v1917 = vunpack.c.l.s8.bf16 %v1127
    %v1918 = vunpack.c.l.s8.bf16 %v1128
    %v1919 = vunpack.c.l.s8.bf16 %v1129
    %v1920 = vunpack.c.l.s8.bf16 %v1130
    %v1921 = vunpack.c.l.s8.bf16 %v1131
    %v1922 = vunpack.c.l.s8.bf16 %v1132
    %v1923 = vunpack.c.l.s8.bf16 %v1133
    %v1924 = vunpack.c.l.s8.bf16 %v1134
    %v1925 = vunpack.c.l.s8.bf16 %v1135
    %v1926 = vunpack.c.l.s8.bf16 %v1136
    %v1927 = vunpack.c.h.s8.bf16 %v1127
    %v1928 = vunpack.c.h.s8.bf16 %v1128
    %v1929 = vunpack.c.h.s8.bf16 %v1129
    %v1930 = vunpack.c.h.s8.bf16 %v1130
    %v1931 = vunpack.c.h.s8.bf16 %v1131
    %v1932 = vunpack.c.h.s8.bf16 %v1132
    %v1933 = vunpack.c.h.s8.bf16 %v1133
    %v1934 = vunpack.c.h.s8.bf16 %v1134
    %v1935 = vunpack.c.h.s8.bf16 %v1135
    %v1936 = vunpack.c.h.s8.bf16 %v1136
    %v1937 = vunpack.c.l.s8.bf16 %v1137
    %v1938 = vunpack.c.l.s8.bf16 %v1138
    %v1939 = vunpack.c.l.s8.bf16 %v1139
    %v1940 = vunpack.c.l.s8.bf16 %v1140
    %v1941 = vunpack.c.l.s8.bf16 %v1141
    %v1942 = vunpack.c.l.s8.bf16 %v1142
    %v1943 = vunpack.c.l.s8.bf16 %v1143
    %v1944 = vunpack.c.l.s8.bf16 %v1144
    %v1945 = vunpack.c.l.s8.bf16 %v1145
    %v1946 = vunpack.c.l.s8.bf16 %v1146
    %v1947 = vunpack.c.h.s8.bf16 %v1137
    %v1948 = vunpack.c.h.s8.bf16 %v1138
    %v1949 = vunpack.c.h.s8.bf16 %v1139
    %v1950 = vunpack.c.h.s8.bf16 %v1140
    %v1951 = vunpack.c.h.s8.bf16 %v1141
    %v1952 = vunpack.c.h.s8.bf16 %v1142
    %v1953 = vunpack.c.h.s8.bf16 %v1143
    %v1954 = vunpack.c.h.s8.bf16 %v1144
    %v1955 = vunpack.c.h.s8.bf16 %v1145
    %v1956 = vunpack.c.h.s8.bf16 %v1146
    %v1957 = vunpack.c.l.s8.bf16 %v1147
    %v1958 = vunpack.c.l.s8.bf16 %v1148
    %v1959 = vunpack.c.l.s8.bf16 %v1149
    %v1960 = vunpack.c.l.s8.bf16 %v1150
    %v1961 = vunpack.c.l.s8.bf16 %v1151
    %v1962 = vunpack.c.l.s8.bf16 %v1152
    %v1963 = vunpack.c.l.s8.bf16 %v1153
    %v1964 = vunpack.c.l.s8.bf16 %v1154
    %v1965 = vunpack.c.l.s8.bf16 %v1155
    %v1966 = vunpack.c.l.s8.bf16 %v1156
    %v1967 = vunpack.c.h.s8.bf16 %v1147
    %v1968 = vunpack.c.h.s8.bf16 %v1148
    %v1969 = vunpack.c.h.s8.bf16 %v1149
    %v1970 = vunpack.c.h.s8.bf16 %v1150
    %v1971 = vunpack.c.h.s8.bf16 %v1151
    %v1972 = vunpack.c.h.s8.bf16 %v1152
    %v1973 = vunpack.c.h.s8.bf16 %v1153
    %v1974 = vunpack.c.h.s8.bf16 %v1154
    %v1975 = vunpack.c.h.s8.bf16 %v1155
    %v1976 = vunpack.c.h.s8.bf16 %v1156
    %v1977 = vunpack.c.l.s8.bf16 %v1157
    %v1978 = vunpack.c.l.s8.bf16 %v1158
    %v1979 = vunpack.c.l.s8.bf16 %v1159
    %v1980 = vunpack.c.l.s8.bf16 %v1160
    %v1981 = vunpack.c.l.s8.bf16 %v1161
    %v1982 = vunpack.c.l.s8.bf16 %v1162
    %v1983 = vunpack.c.l.s8.bf16 %v1163
    %v1984 = vunpack.c.l.s8.bf16 %v1164
    %v1985 = vunpack.c.l.s8.bf16 %v1165
    %v1986 = vunpack.c.l.s8.bf16 %v1166
    %v1987 = vunpack.c.h.s8.bf16 %v1157
    %v1988 = vunpack.c.h.s8.bf16 %v1158
    %v1989 = vunpack.c.h.s8.bf16 %v1159
    %v1990 = vunpack.c.h.s8.bf16 %v1160
    %v1991 = vunpack.c.h.s8.bf16 %v1161
    %v1992 = vunpack.c.h.s8.bf16 %v1162
    %v1993 = vunpack.c.h.s8.bf16 %v1163
    %v1994 = vunpack.c.h.s8.bf16 %v1164
    %v1995 = vunpack.c.h.s8.bf16 %v1165
    %v1996 = vunpack.c.h.s8.bf16 %v1166
    %v1997 = vunpack.c.l.s8.bf16 %v1167
    %v1998 = vunpack.c.l.s8.bf16 %v1168
    %v1999 = vunpack.c.l.s8.bf16 %v1169
    %v2000 = vunpack.c.l.s8.bf16 %v1170
    %v2001 = vunpack.c.l.s8.bf16 %v1171
    %v2002 = vunpack.c.l.s8.bf16 %v1172
    %v2003 = vunpack.c.l.s8.bf16 %v1173
    %v2004 = vunpack.c.l.s8.bf16 %v1174
    %v2005 = vunpack.c.l.s8.bf16 %v1175
    %v2006 = vunpack.c.l.s8.bf16 %v1176
    %v2007 = vunpack.c.h.s8.bf16 %v1167
    %v2008 = vunpack.c.h.s8.bf16 %v1168
    %v2009 = vunpack.c.h.s8.bf16 %v1169
    %v2010 = vunpack.c.h.s8.bf16 %v1170
    %v2011 = vunpack.c.h.s8.bf16 %v1171
    %v2012 = vunpack.c.h.s8.bf16 %v1172
    %v2013 = vunpack.c.h.s8.bf16 %v1173
    %v2014 = vunpack.c.h.s8.bf16 %v1174
    %v2015 = vunpack.c.h.s8.bf16 %v1175
    %v2016 = vunpack.c.h.s8.bf16 %v1176
    %v2017 = vunpack.c.l.s8.bf16 %v1177
    %v2018 = vunpack.c.l.s8.bf16 %v1178
    %v2019 = vunpack.c.l.s8.bf16 %v1179
    %v2020 = vunpack.c.l.s8.bf16 %v1180
    %v2021 = vunpack.c.l.s8.bf16 %v1181
    %v2022 = vunpack.c.l.s8.bf16 %v1182
    %v2023 = vunpack.c.l.s8.bf16 %v1183
    %v2024 = vunpack.c.l.s8.bf16 %v1184
    %v2025 = vunpack.c.l.s8.bf16 %v1185
    %v2026 = vunpack.c.l.s8.bf16 %v1186
    %v2027 = vunpack.c.h.s8.bf16 %v1177
    %v2028 = vunpack.c.h.s8.bf16 %v1178
    %v2029 = vunpack.c.h.s8.bf16 %v1179
    %v2030 = vunpack.c.h.s8.bf16 %v1180
    %v2031 = vunpack.c.h.s8.bf16 %v1181
    %v2032 = vunpack.c.h.s8.bf16 %v1182
    %v2033 = vunpack.c.h.s8.bf16 %v1183
    %v2034 = vunpack.c.h.s8.bf16 %v1184
    %v2035 = vunpack.c.h.s8.bf16 %v1185
    %v2036 = vunpack.c.h.s8.bf16 %v1186
    %v2037 = vunpack.c.l.s8.bf16 %v1187
    %v2038 = vunpack.c.l.s8.bf16 %v1188
    %v2039 = vunpack.c.l.s8.bf16 %v1189
    %v2040 = vunpack.c.l.s8.bf16 %v1190
    %v2041 = vunpack.c.l.s8.bf16 %v1191
    %v2042 = vunpack.c.l.s8.bf16 %v1192
    %v2043 = vunpack.c.l.s8.bf16 %v1193
    %v2044 = vunpack.c.l.s8.bf16 %v1194
    %v2045 = vunpack.c.l.s8.bf16 %v1195
    %v2046 = vunpack.c.l.s8.bf16 %v1196
    %v2047 = vunpack.c.h.s8.bf16 %v1187
    %v2048 = vunpack.c.h.s8.bf16 %v1188
    %v2049 = vunpack.c.h.s8.bf16 %v1189
    %v2050 = vunpack.c.h.s8.bf16 %v1190
    %v2051 = vunpack.c.h.s8.bf16 %v1191
    %v2052 = vunpack.c.h.s8.bf16 %v1192
    %v2053 = vunpack.c.h.s8.bf16 %v1193
    %v2054 = vunpack.c.h.s8.bf16 %v1194
    %v2055 = vunpack.c.h.s8.bf16 %v1195
    %v2056 = vunpack.c.h.s8.bf16 %v1196
    %v2057 = vunpack.c.l.s8.bf16 %v1197
    %v2058 = vunpack.c.l.s8.bf16 %v1198
    %v2059 = vunpack.c.l.s8.bf16 %v1199
    %v2060 = vunpack.c.l.s8.bf16 %v1200
    %v2061 = vunpack.c.l.s8.bf16 %v1201
    %v2062 = vunpack.c.l.s8.bf16 %v1202
    %v2063 = vunpack.c.l.s8.bf16 %v1203
    %v2064 = vunpack.c.l.s8.bf16 %v1204
    %v2065 = vunpack.c.l.s8.bf16 %v1205
    %v2066 = vunpack.c.l.s8.bf16 %v1206
    %v2067 = vunpack.c.h.s8.bf16 %v1197
    %v2068 = vunpack.c.h.s8.bf16 %v1198
    %v2069 = vunpack.c.h.s8.bf16 %v1199
    %v2070 = vunpack.c.h.s8.bf16 %v1200
    %v2071 = vunpack.c.h.s8.bf16 %v1201
    %v2072 = vunpack.c.h.s8.bf16 %v1202
    %v2073 = vunpack.c.h.s8.bf16 %v1203
    %v2074 = vunpack.c.h.s8.bf16 %v1204
    %v2075 = vunpack.c.h.s8.bf16 %v1205
    %v2076 = vunpack.c.h.s8.bf16 %v1206
    %v2077 = vunpack.c.l.s8.bf16 %v1207
    %v2078 = vunpack.c.l.s8.bf16 %v1208
    %v2079 = vunpack.c.l.s8.bf16 %v1209
    %v2080 = vunpack.c.l.s8.bf16 %v1210
    %v2081 = vunpack.c.l.s8.bf16 %v1211
    %v2082 = vunpack.c.l.s8.bf16 %v1212
    %v2083 = vunpack.c.l.s8.bf16 %v1213
    %v2084 = vunpack.c.l.s8.bf16 %v1214
    %v2085 = vunpack.c.l.s8.bf16 %v1215
    %v2086 = vunpack.c.l.s8.bf16 %v1216
    %v2087 = vunpack.c.h.s8.bf16 %v1207
    %v2088 = vunpack.c.h.s8.bf16 %v1208
    %v2089 = vunpack.c.h.s8.bf16 %v1209
    %v2090 = vunpack.c.h.s8.bf16 %v1210
    %v2091 = vunpack.c.h.s8.bf16 %v1211
    %v2092 = vunpack.c.h.s8.bf16 %v1212
    %v2093 = vunpack.c.h.s8.bf16 %v1213
    %v2094 = vunpack.c.h.s8.bf16 %v1214
    %v2095 = vunpack.c.h.s8.bf16 %v1215
    %v2096 = vunpack.c.h.s8.bf16 %v1216
    %v2097 = vunpack.c.l.s8.bf16 %v1217
    %v2098 = vunpack.c.l.s8.bf16 %v1218
    %v2099 = vunpack.c.l.s8.bf16 %v1219
    %v2100 = vunpack.c.l.s8.bf16 %v1220
    %v2101 = vunpack.c.l.s8.bf16 %v1221
    %v2102 = vunpack.c.l.s8.bf16 %v1222
    %v2103 = vunpack.c.l.s8.bf16 %v1223
    %v2104 = vunpack.c.l.s8.bf16 %v1224
    %v2105 = vunpack.c.l.s8.bf16 %v1225
    %v2106 = vunpack.c.l.s8.bf16 %v1226
    %v2107 = vunpack.c.h.s8.bf16 %v1217
    %v2108 = vunpack.c.h.s8.bf16 %v1218
    %v2109 = vunpack.c.h.s8.bf16 %v1219
    %v2110 = vunpack.c.h.s8.bf16 %v1220
    %v2111 = vunpack.c.h.s8.bf16 %v1221
    %v2112 = vunpack.c.h.s8.bf16 %v1222
    %v2113 = vunpack.c.h.s8.bf16 %v1223
    %v2114 = vunpack.c.h.s8.bf16 %v1224
    %v2115 = vunpack.c.h.s8.bf16 %v1225
    %v2116 = vunpack.c.h.s8.bf16 %v1226
    %v2117 = vunpack.c.l.s8.bf16 %v1227
    %v2118 = vunpack.c.l.s8.bf16 %v1228
    %v2119 = vunpack.c.l.s8.bf16 %v1229
    %v2120 = vunpack.c.l.s8.bf16 %v1230
    %v2121 = vunpack.c.l.s8.bf16 %v1231
    %v2122 = vunpack.c.l.s8.bf16 %v1232
    %v2123 = vunpack.c.l.s8.bf16 %v1233
    %v2124 = vunpack.c.l.s8.bf16 %v1234
    %v2125 = vunpack.c.l.s8.bf16 %v1235
    %v2126 = vunpack.c.l.s8.bf16 %v1236
    %v2127 = vunpack.c.h.s8.bf16 %v1227
    %v2128 = vunpack.c.h.s8.bf16 %v1228
    %v2129 = vunpack.c.h.s8.bf16 %v1229
    %v2130 = vunpack.c.h.s8.bf16 %v1230
    %v2131 = vunpack.c.h.s8.bf16 %v1231
    %v2132 = vunpack.c.h.s8.bf16 %v1232
    %v2133 = vunpack.c.h.s8.bf16 %v1233
    %v2134 = vunpack.c.h.s8.bf16 %v1234
    %v2135 = vunpack.c.h.s8.bf16 %v1235
    %v2136 = vunpack.c.h.s8.bf16 %v1236
    %v2137 = vunpack.c.l.s8.bf16 %v1237
    %v2138 = vunpack.c.l.s8.bf16 %v1238
    %v2139 = vunpack.c.l.s8.bf16 %v1239
    %v2140 = vunpack.c.l.s8.bf16 %v1240
    %v2141 = vunpack.c.l.s8.bf16 %v1241
    %v2142 = vunpack.c.l.s8.bf16 %v1242
    %v2143 = vunpack.c.l.s8.bf16 %v1243
    %v2144 = vunpack.c.l.s8.bf16 %v1244
    %v2145 = vunpack.c.l.s8.bf16 %v1245
    %v2146 = vunpack.c.l.s8.bf16 %v1246
    %v2147 = vunpack.c.h.s8.bf16 %v1237
    %v2148 = vunpack.c.h.s8.bf16 %v1238
    %v2149 = vunpack.c.h.s8.bf16 %v1239
    %v2150 = vunpack.c.h.s8.bf16 %v1240
    %v2151 = vunpack.c.h.s8.bf16 %v1241
    %v2152 = vunpack.c.h.s8.bf16 %v1242
    %v2153 = vunpack.c.h.s8.bf16 %v1243
    %v2154 = vunpack.c.h.s8.bf16 %v1244
    %v2155 = vunpack.c.h.s8.bf16 %v1245
    %v2156 = vunpack.c.h.s8.bf16 %v1246
    %v2157 = vunpack.c.l.s8.bf16 %v1247
    %v2158 = vunpack.c.l.s8.bf16 %v1248
    %v2159 = vunpack.c.l.s8.bf16 %v1249
    %v2160 = vunpack.c.l.s8.bf16 %v1250
    %v2161 = vunpack.c.l.s8.bf16 %v1251
    %v2162 = vunpack.c.l.s8.bf16 %v1252
    %v2163 = vunpack.c.l.s8.bf16 %v1253
    %v2164 = vunpack.c.l.s8.bf16 %v1254
    %v2165 = vunpack.c.l.s8.bf16 %v1255
    %v2166 = vunpack.c.l.s8.bf16 %v1256
    %v2167 = vunpack.c.h.s8.bf16 %v1247
    %v2168 = vunpack.c.h.s8.bf16 %v1248
    %v2169 = vunpack.c.h.s8.bf16 %v1249
    %v2170 = vunpack.c.h.s8.bf16 %v1250
    %v2171 = vunpack.c.h.s8.bf16 %v1251
    %v2172 = vunpack.c.h.s8.bf16 %v1252
    %v2173 = vunpack.c.h.s8.bf16 %v1253
    %v2174 = vunpack.c.h.s8.bf16 %v1254
    %v2175 = vunpack.c.h.s8.bf16 %v1255
    %v2176 = vunpack.c.h.s8.bf16 %v1256
    %v2177 = vunpack.c.l.s8.bf16 %v1257
    %v2178 = vunpack.c.l.s8.bf16 %v1258
    %v2179 = vunpack.c.l.s8.bf16 %v1259
    %v2180 = vunpack.c.l.s8.bf16 %v1260
    %v2181 = vunpack.c.l.s8.bf16 %v1261
    %v2182 = vunpack.c.l.s8.bf16 %v1262
    %v2183 = vunpack.c.l.s8.bf16 %v1263
    %v2184 = vunpack.c.l.s8.bf16 %v1264
    %v2185 = vunpack.c.l.s8.bf16 %v1265
    %v2186 = vunpack.c.l.s8.bf16 %v1266
    %v2187 = vunpack.c.h.s8.bf16 %v1257
    %v2188 = vunpack.c.h.s8.bf16 %v1258
    %v2189 = vunpack.c.h.s8.bf16 %v1259
    %v2190 = vunpack.c.h.s8.bf16 %v1260
    %v2191 = vunpack.c.h.s8.bf16 %v1261
    %v2192 = vunpack.c.h.s8.bf16 %v1262
    %v2193 = vunpack.c.h.s8.bf16 %v1263
    %v2194 = vunpack.c.h.s8.bf16 %v1264
    %v2195 = vunpack.c.h.s8.bf16 %v1265
    %v2196 = vunpack.c.h.s8.bf16 %v1266
    %v2197 = vunpack.c.l.s8.bf16 %v1267
    %v2198 = vunpack.c.l.s8.bf16 %v1268
    %v2199 = vunpack.c.l.s8.bf16 %v1269
    %v2200 = vunpack.c.l.s8.bf16 %v1270
    %v2201 = vunpack.c.l.s8.bf16 %v1271
    %v2202 = vunpack.c.l.s8.bf16 %v1272
    %v2203 = vunpack.c.l.s8.bf16 %v1273
    %v2204 = vunpack.c.l.s8.bf16 %v1274
    %v2205 = vunpack.c.l.s8.bf16 %v1275
    %v2206 = vunpack.c.l.s8.bf16 %v1276
    %v2207 = vunpack.c.h.s8.bf16 %v1267
    %v2208 = vunpack.c.h.s8.bf16 %v1268
    %v2209 = vunpack.c.h.s8.bf16 %v1269
    %v2210 = vunpack.c.h.s8.bf16 %v1270
    %v2211 = vunpack.c.h.s8.bf16 %v1271
    %v2212 = vunpack.c.h.s8.bf16 %v1272
    %v2213 = vunpack.c.h.s8.bf16 %v1273
    %v2214 = vunpack.c.h.s8.bf16 %v1274
    %v2215 = vunpack.c.h.s8.bf16 %v1275
    %v2216 = vunpack.c.h.s8.bf16 %v1276
    %v2217 = vunpack.c.l.s8.bf16 %v1277
    %v2218 = vunpack.c.l.s8.bf16 %v1278
    %v2219 = vunpack.c.l.s8.bf16 %v1279
    %v2220 = vunpack.c.l.s8.bf16 %v1280
    %v2221 = vunpack.c.l.s8.bf16 %v1281
    %v2222 = vunpack.c.l.s8.bf16 %v1282
    %v2223 = vunpack.c.l.s8.bf16 %v1283
    %v2224 = vunpack.c.l.s8.bf16 %v1284
    %v2225 = vunpack.c.l.s8.bf16 %v1285
    %v2226 = vunpack.c.l.s8.bf16 %v1286
    %v2227 = vunpack.c.h.s8.bf16 %v1277
    %v2228 = vunpack.c.h.s8.bf16 %v1278
    %v2229 = vunpack.c.h.s8.bf16 %v1279
    %v2230 = vunpack.c.h.s8.bf16 %v1280
    %v2231 = vunpack.c.h.s8.bf16 %v1281
    %v2232 = vunpack.c.h.s8.bf16 %v1282
    %v2233 = vunpack.c.h.s8.bf16 %v1283
    %v2234 = vunpack.c.h.s8.bf16 %v1284
    %v2235 = vunpack.c.h.s8.bf16 %v1285
    %v2236 = vunpack.c.h.s8.bf16 %v1286
    %v2237 = vunpack.c.l.s8.bf16 %v1287
    %v2238 = vunpack.c.l.s8.bf16 %v1288
    %v2239 = vunpack.c.l.s8.bf16 %v1289
    %v2240 = vunpack.c.l.s8.bf16 %v1290
    %v2241 = vunpack.c.l.s8.bf16 %v1291
    %v2242 = vunpack.c.l.s8.bf16 %v1292
    %v2243 = vunpack.c.l.s8.bf16 %v1293
    %v2244 = vunpack.c.l.s8.bf16 %v1294
    %v2245 = vunpack.c.l.s8.bf16 %v1295
    %v2246 = vunpack.c.l.s8.bf16 %v1296
    %v2247 = vunpack.c.h.s8.bf16 %v1287
    %v2248 = vunpack.c.h.s8.bf16 %v1288
    %v2249 = vunpack.c.h.s8.bf16 %v1289
    %v2250 = vunpack.c.h.s8.bf16 %v1290
    %v2251 = vunpack.c.h.s8.bf16 %v1291
    %v2252 = vunpack.c.h.s8.bf16 %v1292
    %v2253 = vunpack.c.h.s8.bf16 %v1293
    %v2254 = vunpack.c.h.s8.bf16 %v1294
    %v2255 = vunpack.c.h.s8.bf16 %v1295
    %v2256 = vunpack.c.h.s8.bf16 %v1296
    %2257 = vmatprep.subr.bf16.mxu0 %v1298
    %2258 = vmatpush1.bf16.msra.mxu0 %v1297
    %2259 = vmatprep.subr.bf16.mxu0 %v1308
    %2260 = vmatpush1.bf16.msra.mxu0 %v1307
    %2261 = vmatprep.subr.bf16.mxu0 %v1318
    %2262 = vmatpush1.bf16.msra.mxu0 %v1317
    %2263 = vmatprep.subr.bf16.mxu0 %v1328
    %2264 = vmatpush1.bf16.msra.mxu0 %v1327
    %2265 = vmatprep.subr.bf16.mxu0 %v1338
    %2266 = vmatpush1.bf16.msra.mxu0 %v1337
    %2267 = vmatprep.subr.bf16.mxu0 %v1348
    %2268 = vmatpush1.bf16.msra.mxu0 %v1347
    %2269 = vmatprep.subr.bf16.mxu0 %v1358
    %2270 = vmatpush1.bf16.msra.mxu0 %v1357
    %2271 = vmatprep.subr.bf16.mxu0 %v1368
    %2272 = vmatpush1.bf16.msra.mxu0 %v1367
    %2273 = vmatprep.subr.bf16.mxu0 %v1378
    %2274 = vmatpush1.bf16.msra.mxu0 %v1377
    %2275 = vmatprep.subr.bf16.mxu0 %v1388
    %2276 = vmatpush1.bf16.msra.mxu0 %v1387
    %2277 = vmatprep.subr.bf16.mxu0 %v1398
    %2278 = vmatpush1.bf16.msra.mxu0 %v1397
    %2279 = vmatprep.subr.bf16.mxu0 %v1408
    %2280 = vmatpush1.bf16.msra.mxu0 %v1407
    %2281 = vmatprep.subr.bf16.mxu0 %v1418
    %2282 = vmatpush1.bf16.msra.mxu0 %v1417
    %2283 = vmatprep.subr.bf16.mxu0 %v1428
    %2284 = vmatpush1.bf16.msra.mxu0 %v1427
    %2285 = vmatprep.subr.bf16.mxu0 %v1438
    %2286 = vmatpush1.bf16.msra.mxu0 %v1437
    %2287 = vmatprep.subr.bf16.mxu0 %v1448
    %2288 = vmatpush1.bf16.msra.mxu0 %v1447
    %2289 = vmatprep.mubr.bf16.mxu0 %v806
    %2290 = vmatmul.mubr.bf16.gmra.mrb[0].mxu0 %v805
    %v2291 = vpop.f32.mrb[0].mxu0
    %v2292 = vadd.f32 0.0, %v2291
    %v2293 = vpop.f32.mrb[0].mxu0
    %v2294 = vadd.f32 0.0, %v2293
    %v2295 = vpop.f32.mrb[0].mxu0
    %v2296 = vpop.f32.mrb[0].mxu0
    %2297 = vdwg.mxu0
    %2298 = vmatprep.subr.bf16.mxu0 %v1458
    %2299 = vmatpush1.bf16.msra.mxu0 %v1457
    %2300 = vmatprep.subr.bf16.mxu0 %v1468
    %2301 = vmatpush1.bf16.msra.mxu0 %v1467
    %2302 = vmatprep.subr.bf16.mxu0 %v1478
    %2303 = vmatpush1.bf16.msra.mxu0 %v1477
    %2304 = vmatprep.subr.bf16.mxu0 %v1488
    %2305 = vmatpush1.bf16.msra.mxu0 %v1487
    %2306 = vmatprep.subr.bf16.mxu0 %v1498
    %2307 = vmatpush1.bf16.msra.mxu0 %v1497
    %2308 = vmatprep.subr.bf16.mxu0 %v1508
    %2309 = vmatpush1.bf16.msra.mxu0 %v1507
    %2310 = vmatprep.subr.bf16.mxu0 %v1518
    %2311 = vmatpush1.bf16.msra.mxu0 %v1517
    %2312 = vmatprep.subr.bf16.mxu0 %v1528
    %2313 = vmatpush1.bf16.msra.mxu0 %v1527
    %2314 = vmatprep.subr.bf16.mxu0 %v1538
    %2315 = vmatpush1.bf16.msra.mxu0 %v1537
    %2316 = vmatprep.subr.bf16.mxu0 %v1548
    %2317 = vmatpush1.bf16.msra.mxu0 %v1547
    %2318 = vmatprep.subr.bf16.mxu0 %v1558
    %2319 = vmatpush1.bf16.msra.mxu0 %v1557
    %2320 = vmatprep.subr.bf16.mxu0 %v1568
    %2321 = vmatpush1.bf16.msra.mxu0 %v1567
    %2322 = vmatprep.subr.bf16.mxu0 %v1578
    %2323 = vmatpush1.bf16.msra.mxu0 %v1577
    %2324 = vmatprep.subr.bf16.mxu0 %v1588
    %2325 = vmatpush1.bf16.msra.mxu0 %v1587
    %2326 = vmatprep.subr.bf16.mxu0 %v1598
    %2327 = vmatpush1.bf16.msra.mxu0 %v1597
    %2328 = vmatprep.subr.bf16.mxu0 %v1608
    %2329 = vmatpush1.bf16.msra.mxu0 %v1607
    %2330 = vmatprep.mubr.bf16.mxu0 %v808
    %2331 = vmatmul.mubr.bf16.gmra.mrb[0].mxu0 %v807
    %v2332 = vpop.f32.mrb[0].mxu0
    %v2333 = vadd.f32 %v2292, %v2332
    %v2334 = vpop.f32.mrb[0].mxu0
    %v2335 = vadd.f32 %v2294, %v2334
    %v2336 = vpop.f32.mrb[0].mxu0
    %v2337 = vpop.f32.mrb[0].mxu0
    %2338 = vdwg.mxu0
    %2339 = vmatprep.subr.bf16.mxu0 %v1618
    %2340 = vmatpush1.bf16.msra.mxu0 %v1617
    %2341 = vmatprep.subr.bf16.mxu0 %v1628
    %2342 = vmatpush1.bf16.msra.mxu0 %v1627
    %2343 = vmatprep.subr.bf16.mxu0 %v1638
    %2344 = vmatpush1.bf16.msra.mxu0 %v1637
    %2345 = vmatprep.subr.bf16.mxu0 %v1648
    %2346 = vmatpush1.bf16.msra.mxu0 %v1647
    %2347 = vmatprep.subr.bf16.mxu0 %v1658
    %2348 = vmatpush1.bf16.msra.mxu0 %v1657
    %2349 = vmatprep.subr.bf16.mxu0 %v1668
    %2350 = vmatpush1.bf16.msra.mxu0 %v1667
    %2351 = vmatprep.subr.bf16.mxu0 %v1678
    %2352 = vmatpush1.bf16.msra.mxu0 %v1677
    %2353 = vmatprep.subr.bf16.mxu0 %v1688
    %2354 = vmatpush1.bf16.msra.mxu0 %v1687
    %2355 = vmatprep.subr.bf16.mxu0 %v1698
    %2356 = vmatpush1.bf16.msra.mxu0 %v1697
    %2357 = vmatprep.subr.bf16.mxu0 %v1708
    %2358 = vmatpush1.bf16.msra.mxu0 %v1707
    %2359 = vmatprep.subr.bf16.mxu0 %v1718
    %2360 = vmatpush1.bf16.msra.mxu0 %v1717
    %2361 = vmatprep.subr.bf16.mxu0 %v1728
    %2362 = vmatpush1.bf16.msra.mxu0 %v1727
    %2363 = vmatprep.subr.bf16.mxu0 %v1738
    %2364 = vmatpush1.bf16.msra.mxu0 %v1737
    %2365 = vmatprep.subr.bf16.mxu0 %v1748
    %2366 = vmatpush1.bf16.msra.mxu0 %v1747
    %2367 = vmatprep.subr.bf16.mxu0 %v1758
    %2368 = vmatpush1.bf16.msra.mxu0 %v1757
    %2369 = vmatprep.subr.bf16.mxu0 %v1768
    %2370 = vmatpush1.bf16.msra.mxu0 %v1767
    %2371 = vmatprep.mubr.bf16.mxu0 %v810
    %2372 = vmatmul.mubr.bf16.gmra.mrb[0].mxu0 %v809
    %v2373 = vpop.f32.mrb[0].mxu0
    %v2374 = vadd.f32 %v2333, %v2373
    %v2375 = vpop.f32.mrb[0].mxu0
    %v2376 = vadd.f32 %v2335, %v2375
    %v2377 = vpop.f32.mrb[0].mxu0
    %v2378 = vpop.f32.mrb[0].mxu0
    %2379 = vdwg.mxu0
    %2380 = vmatprep.subr.bf16.mxu0 %v1778
    %2381 = vmatpush1.bf16.msra.mxu0 %v1777
    %2382 = vmatprep.subr.bf16.mxu0 %v1788
    %2383 = vmatpush1.bf16.msra.mxu0 %v1787
    %2384 = vmatprep.subr.bf16.mxu0 %v1798
    %2385 = vmatpush1.bf16.msra.mxu0 %v1797
    %2386 = vmatprep.subr.bf16.mxu0 %v1808
    %2387 = vmatpush1.bf16.msra.mxu0 %v1807
    %2388 = vmatprep.subr.bf16.mxu0 %v1818
    %2389 = vmatpush1.bf16.msra.mxu0 %v1817
    %2390 = vmatprep.subr.bf16.mxu0 %v1828
    %2391 = vmatpush1.bf16.msra.mxu0 %v1827
    %2392 = vmatprep.subr.bf16.mxu0 %v1838
    %2393 = vmatpush1.bf16.msra.mxu0 %v1837
    %2394 = vmatprep.subr.bf16.mxu0 %v1848
    %2395 = vmatpush1.bf16.msra.mxu0 %v1847
    %2396 = vmatprep.subr.bf16.mxu0 %v1858
    %2397 = vmatpush1.bf16.msra.mxu0 %v1857
    %2398 = vmatprep.subr.bf16.mxu0 %v1868
    %2399 = vmatpush1.bf16.msra.mxu0 %v1867
    %2400 = vmatprep.subr.bf16.mxu0 %v1878
    %2401 = vmatpush1.bf16.msra.mxu0 %v1877
    %2402 = vmatprep.subr.bf16.mxu0 %v1888
    %2403 = vmatpush1.bf16.msra.mxu0 %v1887
    %2404 = vmatprep.subr.bf16.mxu0 %v1898
    %2405 = vmatpush1.bf16.msra.mxu0 %v1897
    %2406 = vmatprep.subr.bf16.mxu0 %v1908
    %2407 = vmatpush1.bf16.msra.mxu0 %v1907
    %2408 = vmatprep.subr.bf16.mxu0 %v1918
    %2409 = vmatpush1.bf16.msra.mxu0 %v1917
    %2410 = vmatprep.subr.bf16.mxu0 %v1928
    %2411 = vmatpush1.bf16.msra.mxu0 %v1927
    %2412 = vmatprep.mubr.bf16.mxu0 %v812
    %2413 = vmatmul.mubr.bf16.gmra.mrb[0].mxu0 %v811
    %v2414 = vpop.f32.mrb[0].mxu0
    %v2415 = vadd.f32 %v2374, %v2414
    %v2416 = vpop.f32.mrb[0].mxu0
    %v2417 = vadd.f32 %v2376, %v2416
    %v2418 = vpop.f32.mrb[0].mxu0
    %v2419 = vpop.f32.mrb[0].mxu0
    %2420 = vdwg.mxu0
    %2421 = vmatprep.subr.bf16.mxu0 %v1938
    %2422 = vmatpush1.bf16.msra.mxu0 %v1937
    %2423 = vmatprep.subr.bf16.mxu0 %v1948
    %2424 = vmatpush1.bf16.msra.mxu0 %v1947
    %2425 = vmatprep.subr.bf16.mxu0 %v1958
    %2426 = vmatpush1.bf16.msra.mxu0 %v1957
    %2427 = vmatprep.subr.bf16.mxu0 %v1968
    %2428 = vmatpush1.bf16.msra.mxu0 %v1967
    %2429 = vmatprep.subr.bf16.mxu0 %v1978
    %2430 = vmatpush1.bf16.msra.mxu0 %v1977
    %2431 = vmatprep.subr.bf16.mxu0 %v1988
    %2432 = vmatpush1.bf16.msra.mxu0 %v1987
    %2433 = vmatprep.subr.bf16.mxu0 %v1998
    %2434 = vmatpush1.bf16.msra.mxu0 %v1997
    %2435 = vmatprep.subr.bf16.mxu0 %v2008
    %2436 = vmatpush1.bf16.msra.mxu0 %v2007
    %2437 = vmatprep.subr.bf16.mxu0 %v2018
    %2438 = vmatpush1.bf16.msra.mxu0 %v2017
    %2439 = vmatprep.subr.bf16.mxu0 %v2028
    %2440 = vmatpush1.bf16.msra.mxu0 %v2027
    %2441 = vmatprep.subr.bf16.mxu0 %v2038
    %2442 = vmatpush1.bf16.msra.mxu0 %v2037
    %2443 = vmatprep.subr.bf16.mxu0 %v2048
    %2444 = vmatpush1.bf16.msra.mxu0 %v2047
    %2445 = vmatprep.subr.bf16.mxu0 %v2058
    %2446 = vmatpush1.bf16.msra.mxu0 %v2057
    %2447 = vmatprep.subr.bf16.mxu0 %v2068
    %2448 = vmatpush1.bf16.msra.mxu0 %v2067
    %2449 = vmatprep.subr.bf16.mxu0 %v2078
    %2450 = vmatpush1.bf16.msra.mxu0 %v2077
    %2451 = vmatprep.subr.bf16.mxu0 %v2088
    %2452 = vmatpush1.bf16.msra.mxu0 %v2087
    %2453 = vmatprep.mubr.bf16.mxu0 %v814
    %2454 = vmatmul.mubr.bf16.gmra.mrb[0].mxu0 %v813
    %v2455 = vpop.f32.mrb[0].mxu0
    %v2456 = vadd.f32 %v2415, %v2455
    %v2457 = vpop.f32.mrb[0].mxu0
    %v2458 = vadd.f32 %v2417, %v2457
    %v2459 = vpop.f32.mrb[0].mxu0
    %v2460 = vpop.f32.mrb[0].mxu0
    %2461 = vdwg.mxu0
    %2462 = vmatprep.subr.bf16.mxu0 %v2098
    %2463 = vmatpush1.bf16.msra.mxu0 %v2097
    %2464 = vmatprep.subr.bf16.mxu0 %v2108
    %2465 = vmatpush1.bf16.msra.mxu0 %v2107
    %2466 = vmatprep.subr.bf16.mxu0 %v2118
    %2467 = vmatpush1.bf16.msra.mxu0 %v2117
    %2468 = vmatprep.subr.bf16.mxu0 %v2128
    %2469 = vmatpush1.bf16.msra.mxu0 %v2127
    %2470 = vmatprep.subr.bf16.mxu0 %v2138
    %2471 = vmatpush1.bf16.msra.mxu0 %v2137
    %2472 = vmatprep.subr.bf16.mxu0 %v2148
    %2473 = vmatpush1.bf16.msra.mxu0 %v2147
    %2474 = vmatprep.subr.bf16.mxu0 %v2158
    %2475 = vmatpush1.bf16.msra.mxu0 %v2157
    %2476 = vmatprep.subr.bf16.mxu0 %v2168
    %2477 = vmatpush1.bf16.msra.mxu0 %v2167
    %2478 = vmatprep.subr.bf16.mxu0 %v2178
    %2479 = vmatpush1.bf16.msra.mxu0 %v2177
    %2480 = vmatprep.subr.bf16.mxu0 %v2188
    %2481 = vmatpush1.bf16.msra.mxu0 %v2187
    %2482 = vmatprep.subr.bf16.mxu0 %v2198
    %2483 = vmatpush1.bf16.msra.mxu0 %v2197
    %2484 = vmatprep.subr.bf16.mxu0 %v2208
    %2485 = vmatpush1.bf16.msra.mxu0 %v2207
    %2486 = vmatprep.subr.bf16.mxu0 %v2218
    %2487 = vmatpush1.bf16.msra.mxu0 %v2217
    %2488 = vmatprep.subr.bf16.mxu0 %v2228
    %2489 = vmatpush1.bf16.msra.mxu0 %v2227
    %2490 = vmatprep.subr.bf16.mxu0 %v2238
    %2491 = vmatpush1.bf16.msra.mxu0 %v2237
    %2492 = vmatprep.subr.bf16.mxu0 %v2248
    %2493 = vmatpush1.bf16.msra.mxu0 %v2247
    %2494 = vmatprep.mubr.bf16.mxu0 %v816
    %2495 = vmatmul.mubr.bf16.gmra.mrb[0].mxu0 %v815
    %v2496 = vpop.f32.mrb[0].mxu0
    %v2497 = vadd.f32 %v2456, %v2496
    %v2498 = vpop.f32.mrb[0].mxu0
    %v2499 = vadd.f32 %v2458, %v2498
    %v2500 = vpop.f32.mrb[0].mxu0
    %v2501 = vpop.f32.mrb[0].mxu0
    %2502 = vdwg.mxu0
    %2503 = vmatprep.subr.bf16.mxu0 %v1300
    %2504 = vmatpush1.bf16.msra.mxu0 %v1299
    %2505 = vmatprep.subr.bf16.mxu0 %v1310
    %2506 = vmatpush1.bf16.msra.mxu0 %v1309
    %2507 = vmatprep.subr.bf16.mxu0 %v1320
    %2508 = vmatpush1.bf16.msra.mxu0 %v1319
    %2509 = vmatprep.subr.bf16.mxu0 %v1330
    %2510 = vmatpush1.bf16.msra.mxu0 %v1329
    %2511 = vmatprep.subr.bf16.mxu0 %v1340
    %2512 = vmatpush1.bf16.msra.mxu0 %v1339
    %2513 = vmatprep.subr.bf16.mxu0 %v1350
    %2514 = vmatpush1.bf16.msra.mxu0 %v1349
    %2515 = vmatprep.subr.bf16.mxu0 %v1360
    %2516 = vmatpush1.bf16.msra.mxu0 %v1359
    %2517 = vmatprep.subr.bf16.mxu0 %v1370
    %2518 = vmatpush1.bf16.msra.mxu0 %v1369
    %2519 = vmatprep.subr.bf16.mxu0 %v1380
    %2520 = vmatpush1.bf16.msra.mxu0 %v1379
    %2521 = vmatprep.subr.bf16.mxu0 %v1390
    %2522 = vmatpush1.bf16.msra.mxu0 %v1389
    %2523 = vmatprep.subr.bf16.mxu0 %v1400
    %2524 = vmatpush1.bf16.msra.mxu0 %v1399
    %2525 = vmatprep.subr.bf16.mxu0 %v1410
    %2526 = vmatpush1.bf16.msra.mxu0 %v1409
    %2527 = vmatprep.subr.bf16.mxu0 %v1420
    %2528 = vmatpush1.bf16.msra.mxu0 %v1419
    %2529 = vmatprep.subr.bf16.mxu0 %v1430
    %2530 = vmatpush1.bf16.msra.mxu0 %v1429
    %2531 = vmatprep.subr.bf16.mxu0 %v1440
    %2532 = vmatpush1.bf16.msra.mxu0 %v1439
    %2533 = vmatprep.subr.bf16.mxu0 %v1450
    %2534 = vmatpush1.bf16.msra.mxu0 %v1449
    %2535 = vmatprep.mubr.bf16.mxu0 %v806
    %2536 = vmatmul.mubr.bf16.gmra.mrb[0].mxu0 %v805
    %v2537 = vpop.f32.mrb[0].mxu0
    %v2538 = vadd.f32 0.0, %v2537
    %v2539 = vpop.f32.mrb[0].mxu0
    %v2540 = vadd.f32 0.0, %v2539
    %v2541 = vpop.f32.mrb[0].mxu0
    %v2542 = vpop.f32.mrb[0].mxu0
    %2543 = vdwg.mxu0
    %2544 = vmatprep.subr.bf16.mxu0 %v1460
    %2545 = vmatpush1.bf16.msra.mxu0 %v1459
    %2546 = vmatprep.subr.bf16.mxu0 %v1470
    %2547 = vmatpush1.bf16.msra.mxu0 %v1469
    %2548 = vmatprep.subr.bf16.mxu0 %v1480
    %2549 = vmatpush1.bf16.msra.mxu0 %v1479
    %2550 = vmatprep.subr.bf16.mxu0 %v1490
    %2551 = vmatpush1.bf16.msra.mxu0 %v1489
    %2552 = vmatprep.subr.bf16.mxu0 %v1500
    %2553 = vmatpush1.bf16.msra.mxu0 %v1499
    %2554 = vmatprep.subr.bf16.mxu0 %v1510
    %2555 = vmatpush1.bf16.msra.mxu0 %v1509
    %2556 = vmatprep.subr.bf16.mxu0 %v1520
    %2557 = vmatpush1.bf16.msra.mxu0 %v1519
    %2558 = vmatprep.subr.bf16.mxu0 %v1530
    %2559 = vmatpush1.bf16.msra.mxu0 %v1529
    %2560 = vmatprep.subr.bf16.mxu0 %v1540
    %2561 = vmatpush1.bf16.msra.mxu0 %v1539
    %2562 = vmatprep.subr.bf16.mxu0 %v1550
    %2563 = vmatpush1.bf16.msra.mxu0 %v1549
    %2564 = vmatprep.subr.bf16.mxu0 %v1560
    %2565 = vmatpush1.bf16.msra.mxu0 %v1559
    %2566 = vmatprep.subr.bf16.mxu0 %v1570
    %2567 = vmatpush1.bf16.msra.mxu0 %v1569
    %2568 = vmatprep.subr.bf16.mxu0 %v1580
    %2569 = vmatpush1.bf16.msra.mxu0 %v1579
    %2570 = vmatprep.subr.bf16.mxu0 %v1590
    %2571 = vmatpush1.bf16.msra.mxu0 %v1589
    %2572 = vmatprep.subr.bf16.mxu0 %v1600
    %2573 = vmatpush1.bf16.msra.mxu0 %v1599
    %2574 = vmatprep.subr.bf16.mxu0 %v1610
    %2575 = vmatpush1.bf16.msra.mxu0 %v1609
    %2576 = vmatprep.mubr.bf16.mxu0 %v808
    %2577 = vmatmul.mubr.bf16.gmra.mrb[0].mxu0 %v807
    %v2578 = vpop.f32.mrb[0].mxu0
    %v2579 = vadd.f32 %v2538, %v2578
    %v2580 = vpop.f32.mrb[0].mxu0
    %v2581 = vadd.f32 %v2540, %v2580
    %v2582 = vpop.f32.mrb[0].mxu0
    %v2583 = vpop.f32.mrb[0].mxu0
    %2584 = vdwg.mxu0
    %2585 = vmatprep.subr.bf16.mxu0 %v1620
    %2586 = vmatpush1.bf16.msra.mxu0 %v1619
    %2587 = vmatprep.subr.bf16.mxu0 %v1630
    %2588 = vmatpush1.bf16.msra.mxu0 %v1629
    %2589 = vmatprep.subr.bf16.mxu0 %v1640
    %2590 = vmatpush1.bf16.msra.mxu0 %v1639
    %2591 = vmatprep.subr.bf16.mxu0 %v1650
    %2592 = vmatpush1.bf16.msra.mxu0 %v1649
    %2593 = vmatprep.subr.bf16.mxu0 %v1660
    %2594 = vmatpush1.bf16.msra.mxu0 %v1659
    %2595 = vmatprep.subr.bf16.mxu0 %v1670
    %2596 = vmatpush1.bf16.msra.mxu0 %v1669
    %2597 = vmatprep.subr.bf16.mxu0 %v1680
    %2598 = vmatpush1.bf16.msra.mxu0 %v1679
    %2599 = vmatprep.subr.bf16.mxu0 %v1690
    %2600 = vmatpush1.bf16.msra.mxu0 %v1689
    %2601 = vmatprep.subr.bf16.mxu0 %v1700
    %2602 = vmatpush1.bf16.msra.mxu0 %v1699
    %2603 = vmatprep.subr.bf16.mxu0 %v1710
    %2604 = vmatpush1.bf16.msra.mxu0 %v1709
    %2605 = vmatprep.subr.bf16.mxu0 %v1720
    %2606 = vmatpush1.bf16.msra.mxu0 %v1719
    %2607 = vmatprep.subr.bf16.mxu0 %v1730
    %2608 = vmatpush1.bf16.msra.mxu0 %v1729
    %2609 = vmatprep.subr.bf16.mxu0 %v1740
    %2610 = vmatpush1.bf16.msra.mxu0 %v1739
    %2611 = vmatprep.subr.bf16.mxu0 %v1750
    %2612 = vmatpush1.bf16.msra.mxu0 %v1749
    %2613 = vmatprep.subr.bf16.mxu0 %v1760
    %2614 = vmatpush1.bf16.msra.mxu0 %v1759
    %2615 = vmatprep.subr.bf16.mxu0 %v1770
    %2616 = vmatpush1.bf16.msra.mxu0 %v1769
    %2617 = vmatprep.mubr.bf16.mxu0 %v810
    %2618 = vmatmul.mubr.bf16.gmra.mrb[0].mxu0 %v809
    %v2619 = vpop.f32.mrb[0].mxu0
    %v2620 = vadd.f32 %v2579, %v2619
    %v2621 = vpop.f32.mrb[0].mxu0
    %v2622 = vadd.f32 %v2581, %v2621
    %v2623 = vpop.f32.mrb[0].mxu0
    %v2624 = vpop.f32.mrb[0].mxu0
    %2625 = vdwg.mxu0
    %2626 = vmatprep.subr.bf16.mxu0 %v1780
    %2627 = vmatpush1.bf16.msra.mxu0 %v1779
    %2628 = vmatprep.subr.bf16.mxu0 %v1790
    %2629 = vmatpush1.bf16.msra.mxu0 %v1789
    %2630 = vmatprep.subr.bf16.mxu0 %v1800
    %2631 = vmatpush1.bf16.msra.mxu0 %v1799
    %2632 = vmatprep.subr.bf16.mxu0 %v1810
    %2633 = vmatpush1.bf16.msra.mxu0 %v1809
    %2634 = vmatprep.subr.bf16.mxu0 %v1820
    %2635 = vmatpush1.bf16.msra.mxu0 %v1819
    %2636 = vmatprep.subr.bf16.mxu0 %v1830
    %2637 = vmatpush1.bf16.msra.mxu0 %v1829
    %2638 = vmatprep.subr.bf16.mxu0 %v1840
    %2639 = vmatpush1.bf16.msra.mxu0 %v1839
    %2640 = vmatprep.subr.bf16.mxu0 %v1850
    %2641 = vmatpush1.bf16.msra.mxu0 %v1849
    %2642 = vmatprep.subr.bf16.mxu0 %v1860
    %2643 = vmatpush1.bf16.msra.mxu0 %v1859
    %2644 = vmatprep.subr.bf16.mxu0 %v1870
    %2645 = vmatpush1.bf16.msra.mxu0 %v1869
    %2646 = vmatprep.subr.bf16.mxu0 %v1880
    %2647 = vmatpush1.bf16.msra.mxu0 %v1879
    %2648 = vmatprep.subr.bf16.mxu0 %v1890
    %2649 = vmatpush1.bf16.msra.mxu0 %v1889
    %2650 = vmatprep.subr.bf16.mxu0 %v1900
    %2651 = vmatpush1.bf16.msra.mxu0 %v1899
    %2652 = vmatprep.subr.bf16.mxu0 %v1910
    %2653 = vmatpush1.bf16.msra.mxu0 %v1909
    %2654 = vmatprep.subr.bf16.mxu0 %v1920
    %2655 = vmatpush1.bf16.msra.mxu0 %v1919
    %2656 = vmatprep.subr.bf16.mxu0 %v1930
    %2657 = vmatpush1.bf16.msra.mxu0 %v1929
    %2658 = vmatprep.mubr.bf16.mxu0 %v812
    %2659 = vmatmul.mubr.bf16.gmra.mrb[0].mxu0 %v811
    %v2660 = vpop.f32.mrb[0].mxu0
    %v2661 = vadd.f32 %v2620, %v2660
    %v2662 = vpop.f32.mrb[0].mxu0
    %v2663 = vadd.f32 %v2622, %v2662
    %v2664 = vpop.f32.mrb[0].mxu0
    %v2665 = vpop.f32.mrb[0].mxu0
    %2666 = vdwg.mxu0
    %2667 = vmatprep.subr.bf16.mxu0 %v1940
    %2668 = vmatpush1.bf16.msra.mxu0 %v1939
    %2669 = vmatprep.subr.bf16.mxu0 %v1950
    %2670 = vmatpush1.bf16.msra.mxu0 %v1949
    %2671 = vmatprep.subr.bf16.mxu0 %v1960
    %2672 = vmatpush1.bf16.msra.mxu0 %v1959
    %2673 = vmatprep.subr.bf16.mxu0 %v1970
    %2674 = vmatpush1.bf16.msra.mxu0 %v1969
    %2675 = vmatprep.subr.bf16.mxu0 %v1980
    %2676 = vmatpush1.bf16.msra.mxu0 %v1979
    %2677 = vmatprep.subr.bf16.mxu0 %v1990
    %2678 = vmatpush1.bf16.msra.mxu0 %v1989
    %2679 = vmatprep.subr.bf16.mxu0 %v2000
    %2680 = vmatpush1.bf16.msra.mxu0 %v1999
    %2681 = vmatprep.subr.bf16.mxu0 %v2010
    %2682 = vmatpush1.bf16.msra.mxu0 %v2009
    %2683 = vmatprep.subr.bf16.mxu0 %v2020
    %2684 = vmatpush1.bf16.msra.mxu0 %v2019
    %2685 = vmatprep.subr.bf16.mxu0 %v2030
    %2686 = vmatpush1.bf16.msra.mxu0 %v2029
    %2687 = vmatprep.subr.bf16.mxu0 %v2040
    %2688 = vmatpush1.bf16.msra.mxu0 %v2039
    %2689 = vmatprep.subr.bf16.mxu0 %v2050
    %2690 = vmatpush1.bf16.msra.mxu0 %v2049
    %2691 = vmatprep.subr.bf16.mxu0 %v2060
    %2692 = vmatpush1.bf16.msra.mxu0 %v2059
    %2693 = vmatprep.subr.bf16.mxu0 %v2070
    %2694 = vmatpush1.bf16.msra.mxu0 %v2069
    %2695 = vmatprep.subr.bf16.mxu0 %v2080
    %2696 = vmatpush1.bf16.msra.mxu0 %v2079
    %2697 = vmatprep.subr.bf16.mxu0 %v2090
    %2698 = vmatpush1.bf16.msra.mxu0 %v2089
    %2699 = vmatprep.mubr.bf16.mxu0 %v814
    %2700 = vmatmul.mubr.bf16.gmra.mrb[0].mxu0 %v813
    %v2701 = vpop.f32.mrb[0].mxu0
    %v2702 = vadd.f32 %v2661, %v2701
    %v2703 = vpop.f32.mrb[0].mxu0
    %v2704 = vadd.f32 %v2663, %v2703
    %v2705 = vpop.f32.mrb[0].mxu0
    %v2706 = vpop.f32.mrb[0].mxu0
    %2707 = vdwg.mxu0
    %2708 = vmatprep.subr.bf16.mxu0 %v2100
    %2709 = vmatpush1.bf16.msra.mxu0 %v2099
    %2710 = vmatprep.subr.bf16.mxu0 %v2110
    %2711 = vmatpush1.bf16.msra.mxu0 %v2109
    %2712 = vmatprep.subr.bf16.mxu0 %v2120
    %2713 = vmatpush1.bf16.msra.mxu0 %v2119
    %2714 = vmatprep.subr.bf16.mxu0 %v2130
    %2715 = vmatpush1.bf16.msra.mxu0 %v2129
    %2716 = vmatprep.subr.bf16.mxu0 %v2140
    %2717 = vmatpush1.bf16.msra.mxu0 %v2139
    %2718 = vmatprep.subr.bf16.mxu0 %v2150
    %2719 = vmatpush1.bf16.msra.mxu0 %v2149
    %2720 = vmatprep.subr.bf16.mxu0 %v2160
    %2721 = vmatpush1.bf16.msra.mxu0 %v2159
    %2722 = vmatprep.subr.bf16.mxu0 %v2170
    %2723 = vmatpush1.bf16.msra.mxu0 %v2169
    %2724 = vmatprep.subr.bf16.mxu0 %v2180
    %2725 = vmatpush1.bf16.msra.mxu0 %v2179
    %2726 = vmatprep.subr.bf16.mxu0 %v2190
    %2727 = vmatpush1.bf16.msra.mxu0 %v2189
    %2728 = vmatprep.subr.bf16.mxu0 %v2200
    %2729 = vmatpush1.bf16.msra.mxu0 %v2199
    %2730 = vmatprep.subr.bf16.mxu0 %v2210
    %2731 = vmatpush1.bf16.msra.mxu0 %v2209
    %2732 = vmatprep.subr.bf16.mxu0 %v2220
    %2733 = vmatpush1.bf16.msra.mxu0 %v2219
    %2734 = vmatprep.subr.bf16.mxu0 %v2230
    %2735 = vmatpush1.bf16.msra.mxu0 %v2229
    %2736 = vmatprep.subr.bf16.mxu0 %v2240
    %2737 = vmatpush1.bf16.msra.mxu0 %v2239
    %2738 = vmatprep.subr.bf16.mxu0 %v2250
    %2739 = vmatpush1.bf16.msra.mxu0 %v2249
    %2740 = vmatprep.mubr.bf16.mxu0 %v816
    %2741 = vmatmul.mubr.bf16.gmra.mrb[0].mxu0 %v815
    %v2742 = vpop.f32.mrb[0].mxu0
    %v2743 = vadd.f32 %v2702, %v2742
    %v2744 = vpop.f32.mrb[0].mxu0
    %v2745 = vadd.f32 %v2704, %v2744
    %v2746 = vpop.f32.mrb[0].mxu0
    %v2747 = vpop.f32.mrb[0].mxu0
    %2748 = vdwg.mxu0
    %2749 = vmatprep.subr.bf16.mxu0 %v1302
    %2750 = vmatpush1.bf16.msra.mxu0 %v1301
    %2751 = vmatprep.subr.bf16.mxu0 %v1312
    %2752 = vmatpush1.bf16.msra.mxu0 %v1311
    %2753 = vmatprep.subr.bf16.mxu0 %v1322
    %2754 = vmatpush1.bf16.msra.mxu0 %v1321
    %2755 = vmatprep.subr.bf16.mxu0 %v1332
    %2756 = vmatpush1.bf16.msra.mxu0 %v1331
    %2757 = vmatprep.subr.bf16.mxu0 %v1342
    %2758 = vmatpush1.bf16.msra.mxu0 %v1341
    %2759 = vmatprep.subr.bf16.mxu0 %v1352
    %2760 = vmatpush1.bf16.msra.mxu0 %v1351
    %2761 = vmatprep.subr.bf16.mxu0 %v1362
    %2762 = vmatpush1.bf16.msra.mxu0 %v1361
    %2763 = vmatprep.subr.bf16.mxu0 %v1372
    %2764 = vmatpush1.bf16.msra.mxu0 %v1371
    %2765 = vmatprep.subr.bf16.mxu0 %v1382
    %2766 = vmatpush1.bf16.msra.mxu0 %v1381
    %2767 = vmatprep.subr.bf16.mxu0 %v1392
    %2768 = vmatpush1.bf16.msra.mxu0 %v1391
    %2769 = vmatprep.subr.bf16.mxu0 %v1402
    %2770 = vmatpush1.bf16.msra.mxu0 %v1401
    %2771 = vmatprep.subr.bf16.mxu0 %v1412
    %2772 = vmatpush1.bf16.msra.mxu0 %v1411
    %2773 = vmatprep.subr.bf16.mxu0 %v1422
    %2774 = vmatpush1.bf16.msra.mxu0 %v1421
    %2775 = vmatprep.subr.bf16.mxu0 %v1432
    %2776 = vmatpush1.bf16.msra.mxu0 %v1431
    %2777 = vmatprep.subr.bf16.mxu0 %v1442
    %2778 = vmatpush1.bf16.msra.mxu0 %v1441
    %2779 = vmatprep.subr.bf16.mxu0 %v1452
    %2780 = vmatpush1.bf16.msra.mxu0 %v1451
    %2781 = vmatprep.mubr.bf16.mxu0 %v806
    %2782 = vmatmul.mubr.bf16.gmra.mrb[0].mxu0 %v805
    %v2783 = vpop.f32.mrb[0].mxu0
    %v2784 = vadd.f32 0.0, %v2783
    %v2785 = vpop.f32.mrb[0].mxu0
    %v2786 = vadd.f32 0.0, %v2785
    %v2787 = vpop.f32.mrb[0].mxu0
    %v2788 = vpop.f32.mrb[0].mxu0
    %2789 = vdwg.mxu0
    %2790 = vmatprep.subr.bf16.mxu0 %v1462
    %2791 = vmatpush1.bf16.msra.mxu0 %v1461
    %2792 = vmatprep.subr.bf16.mxu0 %v1472
    %2793 = vmatpush1.bf16.msra.mxu0 %v1471
    %2794 = vmatprep.subr.bf16.mxu0 %v1482
    %2795 = vmatpush1.bf16.msra.mxu0 %v1481
    %2796 = vmatprep.subr.bf16.mxu0 %v1492
    %2797 = vmatpush1.bf16.msra.mxu0 %v1491
    %2798 = vmatprep.subr.bf16.mxu0 %v1502
    %2799 = vmatpush1.bf16.msra.mxu0 %v1501
    %2800 = vmatprep.subr.bf16.mxu0 %v1512
    %2801 = vmatpush1.bf16.msra.mxu0 %v1511
    %2802 = vmatprep.subr.bf16.mxu0 %v1522
    %2803 = vmatpush1.bf16.msra.mxu0 %v1521
    %2804 = vmatprep.subr.bf16.mxu0 %v1532
    %2805 = vmatpush1.bf16.msra.mxu0 %v1531
    %2806 = vmatprep.subr.bf16.mxu0 %v1542
    %2807 = vmatpush1.bf16.msra.mxu0 %v1541
    %2808 = vmatprep.subr.bf16.mxu0 %v1552
    %2809 = vmatpush1.bf16.msra.mxu0 %v1551
    %2810 = vmatprep.subr.bf16.mxu0 %v1562
    %2811 = vmatpush1.bf16.msra.mxu0 %v1561
    %2812 = vmatprep.subr.bf16.mxu0 %v1572
    %2813 = vmatpush1.bf16.msra.mxu0 %v1571
    %2814 = vmatprep.subr.bf16.mxu0 %v1582
    %2815 = vmatpush1.bf16.msra.mxu0 %v1581
    %2816 = vmatprep.subr.bf16.mxu0 %v1592
    %2817 = vmatpush1.bf16.msra.mxu0 %v1591
    %2818 = vmatprep.subr.bf16.mxu0 %v1602
    %2819 = vmatpush1.bf16.msra.mxu0 %v1601
    %2820 = vmatprep.subr.bf16.mxu0 %v1612
    %2821 = vmatpush1.bf16.msra.mxu0 %v1611
    %2822 = vmatprep.mubr.bf16.mxu0 %v808
    %2823 = vmatmul.mubr.bf16.gmra.mrb[0].mxu0 %v807
    %v2824 = vpop.f32.mrb[0].mxu0
    %v2825 = vadd.f32 %v2784, %v2824
    %v2826 = vpop.f32.mrb[0].mxu0
    %v2827 = vadd.f32 %v2786, %v2826
    %v2828 = vpop.f32.mrb[0].mxu0
    %v2829 = vpop.f32.mrb[0].mxu0
    %2830 = vdwg.mxu0
    %2831 = vmatprep.subr.bf16.mxu0 %v1622
    %2832 = vmatpush1.bf16.msra.mxu0 %v1621
    %2833 = vmatprep.subr.bf16.mxu0 %v1632
    %2834 = vmatpush1.bf16.msra.mxu0 %v1631
    %2835 = vmatprep.subr.bf16.mxu0 %v1642
    %2836 = vmatpush1.bf16.msra.mxu0 %v1641
    %2837 = vmatprep.subr.bf16.mxu0 %v1652
    %2838 = vmatpush1.bf16.msra.mxu0 %v1651
    %2839 = vmatprep.subr.bf16.mxu0 %v1662
    %2840 = vmatpush1.bf16.msra.mxu0 %v1661
    %2841 = vmatprep.subr.bf16.mxu0 %v1672
    %2842 = vmatpush1.bf16.msra.mxu0 %v1671
    %2843 = vmatprep.subr.bf16.mxu0 %v1682
    %2844 = vmatpush1.bf16.msra.mxu0 %v1681
    %2845 = vmatprep.subr.bf16.mxu0 %v1692
    %2846 = vmatpush1.bf16.msra.mxu0 %v1691
    %2847 = vmatprep.subr.bf16.mxu0 %v1702
    %2848 = vmatpush1.bf16.msra.mxu0 %v1701
    %2849 = vmatprep.subr.bf16.mxu0 %v1712
    %2850 = vmatpush1.bf16.msra.mxu0 %v1711
    %2851 = vmatprep.subr.bf16.mxu0 %v1722
    %2852 = vmatpush1.bf16.msra.mxu0 %v1721
    %2853 = vmatprep.subr.bf16.mxu0 %v1732
    %2854 = vmatpush1.bf16.msra.mxu0 %v1731
    %2855 = vmatprep.subr.bf16.mxu0 %v1742
    %2856 = vmatpush1.bf16.msra.mxu0 %v1741
    %2857 = vmatprep.subr.bf16.mxu0 %v1752
    %2858 = vmatpush1.bf16.msra.mxu0 %v1751
    %2859 = vmatprep.subr.bf16.mxu0 %v1762
    %2860 = vmatpush1.bf16.msra.mxu0 %v1761
    %2861 = vmatprep.subr.bf16.mxu0 %v1772
    %2862 = vmatpush1.bf16.msra.mxu0 %v1771
    %2863 = vmatprep.mubr.bf16.mxu0 %v810
    %2864 = vmatmul.mubr.bf16.gmra.mrb[0].mxu0 %v809
    %v2865 = vpop.f32.mrb[0].mxu0
    %v2866 = vadd.f32 %v2825, %v2865
    %v2867 = vpop.f32.mrb[0].mxu0
    %v2868 = vadd.f32 %v2827, %v2867
    %v2869 = vpop.f32.mrb[0].mxu0
    %v2870 = vpop.f32.mrb[0].mxu0
    %2871 = vdwg.mxu0
    %2872 = vmatprep.subr.bf16.mxu0 %v1782
    %2873 = vmatpush1.bf16.msra.mxu0 %v1781
    %2874 = vmatprep.subr.bf16.mxu0 %v1792
    %2875 = vmatpush1.bf16.msra.mxu0 %v1791
    %2876 = vmatprep.subr.bf16.mxu0 %v1802
    %2877 = vmatpush1.bf16.msra.mxu0 %v1801
    %2878 = vmatprep.subr.bf16.mxu0 %v1812
    %2879 = vmatpush1.bf16.msra.mxu0 %v1811
    %2880 = vmatprep.subr.bf16.mxu0 %v1822
    %2881 = vmatpush1.bf16.msra.mxu0 %v1821
    %2882 = vmatprep.subr.bf16.mxu0 %v1832
    %2883 = vmatpush1.bf16.msra.mxu0 %v1831
    %2884 = vmatprep.subr.bf16.mxu0 %v1842
    %2885 = vmatpush1.bf16.msra.mxu0 %v1841
    %2886 = vmatprep.subr.bf16.mxu0 %v1852
    %2887 = vmatpush1.bf16.msra.mxu0 %v1851
    %2888 = vmatprep.subr.bf16.mxu0 %v1862
    %2889 = vmatpush1.bf16.msra.mxu0 %v1861
    %2890 = vmatprep.subr.bf16.mxu0 %v1872
    %2891 = vmatpush1.bf16.msra.mxu0 %v1871
    %2892 = vmatprep.subr.bf16.mxu0 %v1882
    %2893 = vmatpush1.bf16.msra.mxu0 %v1881
    %2894 = vmatprep.subr.bf16.mxu0 %v1892
    %2895 = vmatpush1.bf16.msra.mxu0 %v1891
    %2896 = vmatprep.subr.bf16.mxu0 %v1902
    %2897 = vmatpush1.bf16.msra.mxu0 %v1901
    %2898 = vmatprep.subr.bf16.mxu0 %v1912
    %2899 = vmatpush1.bf16.msra.mxu0 %v1911
    %2900 = vmatprep.subr.bf16.mxu0 %v1922
    %2901 = vmatpush1.bf16.msra.mxu0 %v1921
    %2902 = vmatprep.subr.bf16.mxu0 %v1932
    %2903 = vmatpush1.bf16.msra.mxu0 %v1931
    %2904 = vmatprep.mubr.bf16.mxu0 %v812
    %2905 = vmatmul.mubr.bf16.gmra.mrb[0].mxu0 %v811
    %v2906 = vpop.f32.mrb[0].mxu0
    %v2907 = vadd.f32 %v2866, %v2906
    %v2908 = vpop.f32.mrb[0].mxu0
    %v2909 = vadd.f32 %v2868, %v2908
    %v2910 = vpop.f32.mrb[0].mxu0
    %v2911 = vpop.f32.mrb[0].mxu0
    %2912 = vdwg.mxu0
    %2913 = vmatprep.subr.bf16.mxu0 %v1942
    %2914 = vmatpush1.bf16.msra.mxu0 %v1941
    %2915 = vmatprep.subr.bf16.mxu0 %v1952
    %2916 = vmatpush1.bf16.msra.mxu0 %v1951
    %2917 = vmatprep.subr.bf16.mxu0 %v1962
    %2918 = vmatpush1.bf16.msra.mxu0 %v1961
    %2919 = vmatprep.subr.bf16.mxu0 %v1972
    %2920 = vmatpush1.bf16.msra.mxu0 %v1971
    %2921 = vmatprep.subr.bf16.mxu0 %v1982
    %2922 = vmatpush1.bf16.msra.mxu0 %v1981
    %2923 = vmatprep.subr.bf16.mxu0 %v1992
    %2924 = vmatpush1.bf16.msra.mxu0 %v1991
    %2925 = vmatprep.subr.bf16.mxu0 %v2002
    %2926 = vmatpush1.bf16.msra.mxu0 %v2001
    %2927 = vmatprep.subr.bf16.mxu0 %v2012
    %2928 = vmatpush1.bf16.msra.mxu0 %v2011
    %2929 = vmatprep.subr.bf16.mxu0 %v2022
    %2930 = vmatpush1.bf16.msra.mxu0 %v2021
    %2931 = vmatprep.subr.bf16.mxu0 %v2032
    %2932 = vmatpush1.bf16.msra.mxu0 %v2031
    %2933 = vmatprep.subr.bf16.mxu0 %v2042
    %2934 = vmatpush1.bf16.msra.mxu0 %v2041
    %2935 = vmatprep.subr.bf16.mxu0 %v2052
    %2936 = vmatpush1.bf16.msra.mxu0 %v2051
    %2937 = vmatprep.subr.bf16.mxu0 %v2062
    %2938 = vmatpush1.bf16.msra.mxu0 %v2061
    %2939 = vmatprep.subr.bf16.mxu0 %v2072
    %2940 = vmatpush1.bf16.msra.mxu0 %v2071
    %2941 = vmatprep.subr.bf16.mxu0 %v2082
    %2942 = vmatpush1.bf16.msra.mxu0 %v2081
    %2943 = vmatprep.subr.bf16.mxu0 %v2092
    %2944 = vmatpush1.bf16.msra.mxu0 %v2091
    %2945 = vmatprep.mubr.bf16.mxu0 %v814
    %2946 = vmatmul.mubr.bf16.gmra.mrb[0].mxu0 %v813
    %v2947 = vpop.f32.mrb[0].mxu0
    %v2948 = vadd.f32 %v2907, %v2947
    %v2949 = vpop.f32.mrb[0].mxu0
    %v2950 = vadd.f32 %v2909, %v2949
    %v2951 = vpop.f32.mrb[0].mxu0
    %v2952 = vpop.f32.mrb[0].mxu0
    %2953 = vdwg.mxu0
    %2954 = vmatprep.subr.bf16.mxu0 %v2102
    %2955 = vmatpush1.bf16.msra.mxu0 %v2101
    %2956 = vmatprep.subr.bf16.mxu0 %v2112
    %2957 = vmatpush1.bf16.msra.mxu0 %v2111
    %2958 = vmatprep.subr.bf16.mxu0 %v2122
    %2959 = vmatpush1.bf16.msra.mxu0 %v2121
    %2960 = vmatprep.subr.bf16.mxu0 %v2132
    %2961 = vmatpush1.bf16.msra.mxu0 %v2131
    %2962 = vmatprep.subr.bf16.mxu0 %v2142
    %2963 = vmatpush1.bf16.msra.mxu0 %v2141
    %2964 = vmatprep.subr.bf16.mxu0 %v2152
    %2965 = vmatpush1.bf16.msra.mxu0 %v2151
    %2966 = vmatprep.subr.bf16.mxu0 %v2162
    %2967 = vmatpush1.bf16.msra.mxu0 %v2161
    %2968 = vmatprep.subr.bf16.mxu0 %v2172
    %2969 = vmatpush1.bf16.msra.mxu0 %v2171
    %2970 = vmatprep.subr.bf16.mxu0 %v2182
    %2971 = vmatpush1.bf16.msra.mxu0 %v2181
    %2972 = vmatprep.subr.bf16.mxu0 %v2192
    %2973 = vmatpush1.bf16.msra.mxu0 %v2191
    %2974 = vmatprep.subr.bf16.mxu0 %v2202
    %2975 = vmatpush1.bf16.msra.mxu0 %v2201
    %2976 = vmatprep.subr.bf16.mxu0 %v2212
    %2977 = vmatpush1.bf16.msra.mxu0 %v2211
    %2978 = vmatprep.subr.bf16.mxu0 %v2222
    %2979 = vmatpush1.bf16.msra.mxu0 %v2221
    %2980 = vmatprep.subr.bf16.mxu0 %v2232
    %2981 = vmatpush1.bf16.msra.mxu0 %v2231
    %2982 = vmatprep.subr.bf16.mxu0 %v2242
    %2983 = vmatpush1.bf16.msra.mxu0 %v2241
    %2984 = vmatprep.subr.bf16.mxu0 %v2252
    %2985 = vmatpush1.bf16.msra.mxu0 %v2251
    %2986 = vmatprep.mubr.bf16.mxu0 %v816
    %2987 = vmatmul.mubr.bf16.gmra.mrb[0].mxu0 %v815
    %v2988 = vpop.f32.mrb[0].mxu0
    %v2989 = vadd.f32 %v2948, %v2988
    %v2990 = vpop.f32.mrb[0].mxu0
    %v2991 = vadd.f32 %v2950, %v2990
    %v2992 = vpop.f32.mrb[0].mxu0
    %v2993 = vpop.f32.mrb[0].mxu0
    %2994 = vdwg.mxu0
    %2995 = vmatprep.subr.bf16.mxu0 %v1304
    %2996 = vmatpush1.bf16.msra.mxu0 %v1303
    %2997 = vmatprep.subr.bf16.mxu0 %v1314
    %2998 = vmatpush1.bf16.msra.mxu0 %v1313
    %2999 = vmatprep.subr.bf16.mxu0 %v1324
    %3000 = vmatpush1.bf16.msra.mxu0 %v1323
    %3001 = vmatprep.subr.bf16.mxu0 %v1334
    %3002 = vmatpush1.bf16.msra.mxu0 %v1333
    %3003 = vmatprep.subr.bf16.mxu0 %v1344
    %3004 = vmatpush1.bf16.msra.mxu0 %v1343
    %3005 = vmatprep.subr.bf16.mxu0 %v1354
    %3006 = vmatpush1.bf16.msra.mxu0 %v1353
    %3007 = vmatprep.subr.bf16.mxu0 %v1364
    %3008 = vmatpush1.bf16.msra.mxu0 %v1363
    %3009 = vmatprep.subr.bf16.mxu0 %v1374
    %3010 = vmatpush1.bf16.msra.mxu0 %v1373
    %3011 = vmatprep.subr.bf16.mxu0 %v1384
    %3012 = vmatpush1.bf16.msra.mxu0 %v1383
    %3013 = vmatprep.subr.bf16.mxu0 %v1394
    %3014 = vmatpush1.bf16.msra.mxu0 %v1393
    %3015 = vmatprep.subr.bf16.mxu0 %v1404
    %3016 = vmatpush1.bf16.msra.mxu0 %v1403
    %3017 = vmatprep.subr.bf16.mxu0 %v1414
    %3018 = vmatpush1.bf16.msra.mxu0 %v1413
    %3019 = vmatprep.subr.bf16.mxu0 %v1424
    %3020 = vmatpush1.bf16.msra.mxu0 %v1423
    %3021 = vmatprep.subr.bf16.mxu0 %v1434
    %3022 = vmatpush1.bf16.msra.mxu0 %v1433
    %3023 = vmatprep.subr.bf16.mxu0 %v1444
    %3024 = vmatpush1.bf16.msra.mxu0 %v1443
    %3025 = vmatprep.subr.bf16.mxu0 %v1454
    %3026 = vmatpush1.bf16.msra.mxu0 %v1453
    %3027 = vmatprep.mubr.bf16.mxu0 %v806
    %3028 = vmatmul.mubr.bf16.gmra.mrb[0].mxu0 %v805
    %v3029 = vpop.f32.mrb[0].mxu0
    %v3030 = vadd.f32 0.0, %v3029
    %v3031 = vpop.f32.mrb[0].mxu0
    %v3032 = vadd.f32 0.0, %v3031
    %v3033 = vpop.f32.mrb[0].mxu0
    %v3034 = vpop.f32.mrb[0].mxu0
    %3035 = vdwg.mxu0
    %3036 = vmatprep.subr.bf16.mxu0 %v1464
    %3037 = vmatpush1.bf16.msra.mxu0 %v1463
    %3038 = vmatprep.subr.bf16.mxu0 %v1474
    %3039 = vmatpush1.bf16.msra.mxu0 %v1473
    %3040 = vmatprep.subr.bf16.mxu0 %v1484
    %3041 = vmatpush1.bf16.msra.mxu0 %v1483
    %3042 = vmatprep.subr.bf16.mxu0 %v1494
    %3043 = vmatpush1.bf16.msra.mxu0 %v1493
    %3044 = vmatprep.subr.bf16.mxu0 %v1504
    %3045 = vmatpush1.bf16.msra.mxu0 %v1503
    %3046 = vmatprep.subr.bf16.mxu0 %v1514
    %3047 = vmatpush1.bf16.msra.mxu0 %v1513
    %3048 = vmatprep.subr.bf16.mxu0 %v1524
    %3049 = vmatpush1.bf16.msra.mxu0 %v1523
    %3050 = vmatprep.subr.bf16.mxu0 %v1534
    %3051 = vmatpush1.bf16.msra.mxu0 %v1533
    %3052 = vmatprep.subr.bf16.mxu0 %v1544
    %3053 = vmatpush1.bf16.msra.mxu0 %v1543
    %3054 = vmatprep.subr.bf16.mxu0 %v1554
    %3055 = vmatpush1.bf16.msra.mxu0 %v1553
    %3056 = vmatprep.subr.bf16.mxu0 %v1564
    %3057 = vmatpush1.bf16.msra.mxu0 %v1563
    %3058 = vmatprep.subr.bf16.mxu0 %v1574
    %3059 = vmatpush1.bf16.msra.mxu0 %v1573
    %3060 = vmatprep.subr.bf16.mxu0 %v1584
    %3061 = vmatpush1.bf16.msra.mxu0 %v1583
    %3062 = vmatprep.subr.bf16.mxu0 %v1594
    %3063 = vmatpush1.bf16.msra.mxu0 %v1593
    %3064 = vmatprep.subr.bf16.mxu0 %v1604
    %3065 = vmatpush1.bf16.msra.mxu0 %v1603
    %3066 = vmatprep.subr.bf16.mxu0 %v1614
    %3067 = vmatpush1.bf16.msra.mxu0 %v1613
    %3068 = vmatprep.mubr.bf16.mxu0 %v808
    %3069 = vmatmul.mubr.bf16.gmra.mrb[0].mxu0 %v807
    %v3070 = vpop.f32.mrb[0].mxu0
    %v3071 = vadd.f32 %v3030, %v3070
    %v3072 = vpop.f32.mrb[0].mxu0
    %v3073 = vadd.f32 %v3032, %v3072
    %v3074 = vpop.f32.mrb[0].mxu0
    %v3075 = vpop.f32.mrb[0].mxu0
    %3076 = vdwg.mxu0
    %3077 = vmatprep.subr.bf16.mxu0 %v1624
    %3078 = vmatpush1.bf16.msra.mxu0 %v1623
    %3079 = vmatprep.subr.bf16.mxu0 %v1634
    %3080 = vmatpush1.bf16.msra.mxu0 %v1633
    %3081 = vmatprep.subr.bf16.mxu0 %v1644
    %3082 = vmatpush1.bf16.msra.mxu0 %v1643
    %3083 = vmatprep.subr.bf16.mxu0 %v1654
    %3084 = vmatpush1.bf16.msra.mxu0 %v1653
    %3085 = vmatprep.subr.bf16.mxu0 %v1664
    %3086 = vmatpush1.bf16.msra.mxu0 %v1663
    %3087 = vmatprep.subr.bf16.mxu0 %v1674
    %3088 = vmatpush1.bf16.msra.mxu0 %v1673
    %3089 = vmatprep.subr.bf16.mxu0 %v1684
    %3090 = vmatpush1.bf16.msra.mxu0 %v1683
    %3091 = vmatprep.subr.bf16.mxu0 %v1694
    %3092 = vmatpush1.bf16.msra.mxu0 %v1693
    %3093 = vmatprep.subr.bf16.mxu0 %v1704
    %3094 = vmatpush1.bf16.msra.mxu0 %v1703
    %3095 = vmatprep.subr.bf16.mxu0 %v1714
    %3096 = vmatpush1.bf16.msra.mxu0 %v1713
    %3097 = vmatprep.subr.bf16.mxu0 %v1724
    %3098 = vmatpush1.bf16.msra.mxu0 %v1723
    %3099 = vmatprep.subr.bf16.mxu0 %v1734
    %3100 = vmatpush1.bf16.msra.mxu0 %v1733
    %3101 = vmatprep.subr.bf16.mxu0 %v1744
    %3102 = vmatpush1.bf16.msra.mxu0 %v1743
    %3103 = vmatprep.subr.bf16.mxu0 %v1754
    %3104 = vmatpush1.bf16.msra.mxu0 %v1753
    %3105 = vmatprep.subr.bf16.mxu0 %v1764
    %3106 = vmatpush1.bf16.msra.mxu0 %v1763
    %3107 = vmatprep.subr.bf16.mxu0 %v1774
    %3108 = vmatpush1.bf16.msra.mxu0 %v1773
    %3109 = vmatprep.mubr.bf16.mxu0 %v810
    %3110 = vmatmul.mubr.bf16.gmra.mrb[0].mxu0 %v809
    %v3111 = vpop.f32.mrb[0].mxu0
    %v3112 = vadd.f32 %v3071, %v3111
    %v3113 = vpop.f32.mrb[0].mxu0
    %v3114 = vadd.f32 %v3073, %v3113
    %v3115 = vpop.f32.mrb[0].mxu0
    %v3116 = vpop.f32.mrb[0].mxu0
    %3117 = vdwg.mxu0
    %3118 = vmatprep.subr.bf16.mxu0 %v1784
    %3119 = vmatpush1.bf16.msra.mxu0 %v1783
    %3120 = vmatprep.subr.bf16.mxu0 %v1794
    %3121 = vmatpush1.bf16.msra.mxu0 %v1793
    %3122 = vmatprep.subr.bf16.mxu0 %v1804
    %3123 = vmatpush1.bf16.msra.mxu0 %v1803
    %3124 = vmatprep.subr.bf16.mxu0 %v1814
    %3125 = vmatpush1.bf16.msra.mxu0 %v1813
    %3126 = vmatprep.subr.bf16.mxu0 %v1824
    %3127 = vmatpush1.bf16.msra.mxu0 %v1823
    %3128 = vmatprep.subr.bf16.mxu0 %v1834
    %3129 = vmatpush1.bf16.msra.mxu0 %v1833
    %3130 = vmatprep.subr.bf16.mxu0 %v1844
    %3131 = vmatpush1.bf16.msra.mxu0 %v1843
    %3132 = vmatprep.subr.bf16.mxu0 %v1854
    %3133 = vmatpush1.bf16.msra.mxu0 %v1853
    %3134 = vmatprep.subr.bf16.mxu0 %v1864
    %3135 = vmatpush1.bf16.msra.mxu0 %v1863
    %3136 = vmatprep.subr.bf16.mxu0 %v1874
    %3137 = vmatpush1.bf16.msra.mxu0 %v1873
    %3138 = vmatprep.subr.bf16.mxu0 %v1884
    %3139 = vmatpush1.bf16.msra.mxu0 %v1883
    %3140 = vmatprep.subr.bf16.mxu0 %v1894
    %3141 = vmatpush1.bf16.msra.mxu0 %v1893
    %3142 = vmatprep.subr.bf16.mxu0 %v1904
    %3143 = vmatpush1.bf16.msra.mxu0 %v1903
    %3144 = vmatprep.subr.bf16.mxu0 %v1914
    %3145 = vmatpush1.bf16.msra.mxu0 %v1913
    %3146 = vmatprep.subr.bf16.mxu0 %v1924
    %3147 = vmatpush1.bf16.msra.mxu0 %v1923
    %3148 = vmatprep.subr.bf16.mxu0 %v1934
    %3149 = vmatpush1.bf16.msra.mxu0 %v1933
    %3150 = vmatprep.mubr.bf16.mxu0 %v812
    %3151 = vmatmul.mubr.bf16.gmra.mrb[0].mxu0 %v811
    %v3152 = vpop.f32.mrb[0].mxu0
    %v3153 = vadd.f32 %v3112, %v3152
    %v3154 = vpop.f32.mrb[0].mxu0
    %v3155 = vadd.f32 %v3114, %v3154
    %v3156 = vpop.f32.mrb[0].mxu0
    %v3157 = vpop.f32.mrb[0].mxu0
    %3158 = vdwg.mxu0
    %3159 = vmatprep.subr.bf16.mxu0 %v1944
    %3160 = vmatpush1.bf16.msra.mxu0 %v1943
    %3161 = vmatprep.subr.bf16.mxu0 %v1954
    %3162 = vmatpush1.bf16.msra.mxu0 %v1953
    %3163 = vmatprep.subr.bf16.mxu0 %v1964
    %3164 = vmatpush1.bf16.msra.mxu0 %v1963
    %3165 = vmatprep.subr.bf16.mxu0 %v1974
    %3166 = vmatpush1.bf16.msra.mxu0 %v1973
    %3167 = vmatprep.subr.bf16.mxu0 %v1984
    %3168 = vmatpush1.bf16.msra.mxu0 %v1983
    %3169 = vmatprep.subr.bf16.mxu0 %v1994
    %3170 = vmatpush1.bf16.msra.mxu0 %v1993
    %3171 = vmatprep.subr.bf16.mxu0 %v2004
    %3172 = vmatpush1.bf16.msra.mxu0 %v2003
    %3173 = vmatprep.subr.bf16.mxu0 %v2014
    %3174 = vmatpush1.bf16.msra.mxu0 %v2013
    %3175 = vmatprep.subr.bf16.mxu0 %v2024
    %3176 = vmatpush1.bf16.msra.mxu0 %v2023
    %3177 = vmatprep.subr.bf16.mxu0 %v2034
    %3178 = vmatpush1.bf16.msra.mxu0 %v2033
    %3179 = vmatprep.subr.bf16.mxu0 %v2044
    %3180 = vmatpush1.bf16.msra.mxu0 %v2043
    %3181 = vmatprep.subr.bf16.mxu0 %v2054
    %3182 = vmatpush1.bf16.msra.mxu0 %v2053
    %3183 = vmatprep.subr.bf16.mxu0 %v2064
    %3184 = vmatpush1.bf16.msra.mxu0 %v2063
    %3185 = vmatprep.subr.bf16.mxu0 %v2074
    %3186 = vmatpush1.bf16.msra.mxu0 %v2073
    %3187 = vmatprep.subr.bf16.mxu0 %v2084
    %3188 = vmatpush1.bf16.msra.mxu0 %v2083
    %3189 = vmatprep.subr.bf16.mxu0 %v2094
    %3190 = vmatpush1.bf16.msra.mxu0 %v2093
    %3191 = vmatprep.mubr.bf16.mxu0 %v814
    %3192 = vmatmul.mubr.bf16.gmra.mrb[0].mxu0 %v813
    %v3193 = vpop.f32.mrb[0].mxu0
    %v3194 = vadd.f32 %v3153, %v3193
    %v3195 = vpop.f32.mrb[0].mxu0
    %v3196 = vadd.f32 %v3155, %v3195
    %v3197 = vpop.f32.mrb[0].mxu0
    %v3198 = vpop.f32.mrb[0].mxu0
    %3199 = vdwg.mxu0
    %3200 = vmatprep.subr.bf16.mxu0 %v2104
    %3201 = vmatpush1.bf16.msra.mxu0 %v2103
    %3202 = vmatprep.subr.bf16.mxu0 %v2114
    %3203 = vmatpush1.bf16.msra.mxu0 %v2113
    %3204 = vmatprep.subr.bf16.mxu0 %v2124
    %3205 = vmatpush1.bf16.msra.mxu0 %v2123
    %3206 = vmatprep.subr.bf16.mxu0 %v2134
    %3207 = vmatpush1.bf16.msra.mxu0 %v2133
    %3208 = vmatprep.subr.bf16.mxu0 %v2144
    %3209 = vmatpush1.bf16.msra.mxu0 %v2143
    %3210 = vmatprep.subr.bf16.mxu0 %v2154
    %3211 = vmatpush1.bf16.msra.mxu0 %v2153
    %3212 = vmatprep.subr.bf16.mxu0 %v2164
    %3213 = vmatpush1.bf16.msra.mxu0 %v2163
    %3214 = vmatprep.subr.bf16.mxu0 %v2174
    %3215 = vmatpush1.bf16.msra.mxu0 %v2173
    %3216 = vmatprep.subr.bf16.mxu0 %v2184
    %3217 = vmatpush1.bf16.msra.mxu0 %v2183
    %3218 = vmatprep.subr.bf16.mxu0 %v2194
    %3219 = vmatpush1.bf16.msra.mxu0 %v2193
    %3220 = vmatprep.subr.bf16.mxu0 %v2204
    %3221 = vmatpush1.bf16.msra.mxu0 %v2203
    %3222 = vmatprep.subr.bf16.mxu0 %v2214
    %3223 = vmatpush1.bf16.msra.mxu0 %v2213
    %3224 = vmatprep.subr.bf16.mxu0 %v2224
    %3225 = vmatpush1.bf16.msra.mxu0 %v2223
    %3226 = vmatprep.subr.bf16.mxu0 %v2234
    %3227 = vmatpush1.bf16.msra.mxu0 %v2233
    %3228 = vmatprep.subr.bf16.mxu0 %v2244
    %3229 = vmatpush1.bf16.msra.mxu0 %v2243
    %3230 = vmatprep.subr.bf16.mxu0 %v2254
    %3231 = vmatpush1.bf16.msra.mxu0 %v2253
    %3232 = vmatprep.mubr.bf16.mxu0 %v816
    %3233 = vmatmul.mubr.bf16.gmra.mrb[0].mxu0 %v815
    %v3234 = vpop.f32.mrb[0].mxu0
    %v3235 = vadd.f32 %v3194, %v3234
    %v3236 = vpop.f32.mrb[0].mxu0
    %v3237 = vadd.f32 %v3196, %v3236
    %v3238 = vpop.f32.mrb[0].mxu0
    %v3239 = vpop.f32.mrb[0].mxu0
    %3240 = vdwg.mxu0
    %3241 = vmatprep.subr.bf16.mxu0 %v1306
    %3242 = vmatpush1.bf16.msra.mxu0 %v1305
    %3243 = vmatprep.subr.bf16.mxu0 %v1316
    %3244 = vmatpush1.bf16.msra.mxu0 %v1315
    %3245 = vmatprep.subr.bf16.mxu0 %v1326
    %3246 = vmatpush1.bf16.msra.mxu0 %v1325
    %3247 = vmatprep.subr.bf16.mxu0 %v1336
    %3248 = vmatpush1.bf16.msra.mxu0 %v1335
    %3249 = vmatprep.subr.bf16.mxu0 %v1346
    %3250 = vmatpush1.bf16.msra.mxu0 %v1345
    %3251 = vmatprep.subr.bf16.mxu0 %v1356
    %3252 = vmatpush1.bf16.msra.mxu0 %v1355
    %3253 = vmatprep.subr.bf16.mxu0 %v1366
    %3254 = vmatpush1.bf16.msra.mxu0 %v1365
    %3255 = vmatprep.subr.bf16.mxu0 %v1376
    %3256 = vmatpush1.bf16.msra.mxu0 %v1375
    %3257 = vmatprep.subr.bf16.mxu0 %v1386
    %3258 = vmatpush1.bf16.msra.mxu0 %v1385
    %3259 = vmatprep.subr.bf16.mxu0 %v1396
    %3260 = vmatpush1.bf16.msra.mxu0 %v1395
    %3261 = vmatprep.subr.bf16.mxu0 %v1406
    %3262 = vmatpush1.bf16.msra.mxu0 %v1405
    %3263 = vmatprep.subr.bf16.mxu0 %v1416
    %3264 = vmatpush1.bf16.msra.mxu0 %v1415
    %3265 = vmatprep.subr.bf16.mxu0 %v1426
    %3266 = vmatpush1.bf16.msra.mxu0 %v1425
    %3267 = vmatprep.subr.bf16.mxu0 %v1436
    %3268 = vmatpush1.bf16.msra.mxu0 %v1435
    %3269 = vmatprep.subr.bf16.mxu0 %v1446
    %3270 = vmatpush1.bf16.msra.mxu0 %v1445
    %3271 = vmatprep.subr.bf16.mxu0 %v1456
    %3272 = vmatpush1.bf16.msra.mxu0 %v1455
    %3273 = vmatprep.mubr.bf16.mxu0 %v806
    %3274 = vmatmul.mubr.bf16.gmra.mrb[0].mxu0 %v805
    %v3275 = vpop.f32.mrb[0].mxu0
    %v3276 = vadd.f32 0.0, %v3275
    %v3277 = vpop.f32.mrb[0].mxu0
    %v3278 = vadd.f32 0.0, %v3277
    %v3279 = vpop.f32.mrb[0].mxu0
    %v3280 = vpop.f32.mrb[0].mxu0
    %3281 = vdwg.mxu0
    %3282 = vmatprep.subr.bf16.mxu0 %v1466
    %3283 = vmatpush1.bf16.msra.mxu0 %v1465
    %3284 = vmatprep.subr.bf16.mxu0 %v1476
    %3285 = vmatpush1.bf16.msra.mxu0 %v1475
    %3286 = vmatprep.subr.bf16.mxu0 %v1486
    %3287 = vmatpush1.bf16.msra.mxu0 %v1485
    %3288 = vmatprep.subr.bf16.mxu0 %v1496
    %3289 = vmatpush1.bf16.msra.mxu0 %v1495
    %3290 = vmatprep.subr.bf16.mxu0 %v1506
    %3291 = vmatpush1.bf16.msra.mxu0 %v1505
    %3292 = vmatprep.subr.bf16.mxu0 %v1516
    %3293 = vmatpush1.bf16.msra.mxu0 %v1515
    %3294 = vmatprep.subr.bf16.mxu0 %v1526
    %3295 = vmatpush1.bf16.msra.mxu0 %v1525
    %3296 = vmatprep.subr.bf16.mxu0 %v1536
    %3297 = vmatpush1.bf16.msra.mxu0 %v1535
    %3298 = vmatprep.subr.bf16.mxu0 %v1546
    %3299 = vmatpush1.bf16.msra.mxu0 %v1545
    %3300 = vmatprep.subr.bf16.mxu0 %v1556
    %3301 = vmatpush1.bf16.msra.mxu0 %v1555
    %3302 = vmatprep.subr.bf16.mxu0 %v1566
    %3303 = vmatpush1.bf16.msra.mxu0 %v1565
    %3304 = vmatprep.subr.bf16.mxu0 %v1576
    %3305 = vmatpush1.bf16.msra.mxu0 %v1575
    %3306 = vmatprep.subr.bf16.mxu0 %v1586
    %3307 = vmatpush1.bf16.msra.mxu0 %v1585
    %3308 = vmatprep.subr.bf16.mxu0 %v1596
    %3309 = vmatpush1.bf16.msra.mxu0 %v1595
    %3310 = vmatprep.subr.bf16.mxu0 %v1606
    %3311 = vmatpush1.bf16.msra.mxu0 %v1605
    %3312 = vmatprep.subr.bf16.mxu0 %v1616
    %3313 = vmatpush1.bf16.msra.mxu0 %v1615
    %3314 = vmatprep.mubr.bf16.mxu0 %v808
    %3315 = vmatmul.mubr.bf16.gmra.mrb[0].mxu0 %v807
    %v3316 = vpop.f32.mrb[0].mxu0
    %v3317 = vadd.f32 %v3276, %v3316
    %v3318 = vpop.f32.mrb[0].mxu0
    %v3319 = vadd.f32 %v3278, %v3318
    %v3320 = vpop.f32.mrb[0].mxu0
    %v3321 = vpop.f32.mrb[0].mxu0
    %3322 = vdwg.mxu0
    %3323 = vmatprep.subr.bf16.mxu0 %v1626
    %3324 = vmatpush1.bf16.msra.mxu0 %v1625
    %3325 = vmatprep.subr.bf16.mxu0 %v1636
    %3326 = vmatpush1.bf16.msra.mxu0 %v1635
    %3327 = vmatprep.subr.bf16.mxu0 %v1646
    %3328 = vmatpush1.bf16.msra.mxu0 %v1645
    %3329 = vmatprep.subr.bf16.mxu0 %v1656
    %3330 = vmatpush1.bf16.msra.mxu0 %v1655
    %3331 = vmatprep.subr.bf16.mxu0 %v1666
    %3332 = vmatpush1.bf16.msra.mxu0 %v1665
    %3333 = vmatprep.subr.bf16.mxu0 %v1676
    %3334 = vmatpush1.bf16.msra.mxu0 %v1675
    %3335 = vmatprep.subr.bf16.mxu0 %v1686
    %3336 = vmatpush1.bf16.msra.mxu0 %v1685
    %3337 = vmatprep.subr.bf16.mxu0 %v1696
    %3338 = vmatpush1.bf16.msra.mxu0 %v1695
    %3339 = vmatprep.subr.bf16.mxu0 %v1706
    %3340 = vmatpush1.bf16.msra.mxu0 %v1705
    %3341 = vmatprep.subr.bf16.mxu0 %v1716
    %3342 = vmatpush1.bf16.msra.mxu0 %v1715
    %3343 = vmatprep.subr.bf16.mxu0 %v1726
    %3344 = vmatpush1.bf16.msra.mxu0 %v1725
    %3345 = vmatprep.subr.bf16.mxu0 %v1736
    %3346 = vmatpush1.bf16.msra.mxu0 %v1735
    %3347 = vmatprep.subr.bf16.mxu0 %v1746
    %3348 = vmatpush1.bf16.msra.mxu0 %v1745
    %3349 = vmatprep.subr.bf16.mxu0 %v1756
    %3350 = vmatpush1.bf16.msra.mxu0 %v1755
    %3351 = vmatprep.subr.bf16.mxu0 %v1766
    %3352 = vmatpush1.bf16.msra.mxu0 %v1765
    %3353 = vmatprep.subr.bf16.mxu0 %v1776
    %3354 = vmatpush1.bf16.msra.mxu0 %v1775
    %3355 = vmatprep.mubr.bf16.mxu0 %v810
    %3356 = vmatmul.mubr.bf16.gmra.mrb[0].mxu0 %v809
    %v3357 = vpop.f32.mrb[0].mxu0
    %v3358 = vadd.f32 %v3317, %v3357
    %v3359 = vpop.f32.mrb[0].mxu0
    %v3360 = vadd.f32 %v3319, %v3359
    %v3361 = vpop.f32.mrb[0].mxu0
    %v3362 = vpop.f32.mrb[0].mxu0
    %3363 = vdwg.mxu0
    %3364 = vmatprep.subr.bf16.mxu0 %v1786
    %3365 = vmatpush1.bf16.msra.mxu0 %v1785
    %3366 = vmatprep.subr.bf16.mxu0 %v1796
    %3367 = vmatpush1.bf16.msra.mxu0 %v1795
    %3368 = vmatprep.subr.bf16.mxu0 %v1806
    %3369 = vmatpush1.bf16.msra.mxu0 %v1805
    %3370 = vmatprep.subr.bf16.mxu0 %v1816
    %3371 = vmatpush1.bf16.msra.mxu0 %v1815
    %3372 = vmatprep.subr.bf16.mxu0 %v1826
    %3373 = vmatpush1.bf16.msra.mxu0 %v1825
    %3374 = vmatprep.subr.bf16.mxu0 %v1836
    %3375 = vmatpush1.bf16.msra.mxu0 %v1835
    %3376 = vmatprep.subr.bf16.mxu0 %v1846
    %3377 = vmatpush1.bf16.msra.mxu0 %v1845
    %3378 = vmatprep.subr.bf16.mxu0 %v1856
    %3379 = vmatpush1.bf16.msra.mxu0 %v1855
    %3380 = vmatprep.subr.bf16.mxu0 %v1866
    %3381 = vmatpush1.bf16.msra.mxu0 %v1865
    %3382 = vmatprep.subr.bf16.mxu0 %v1876
    %3383 = vmatpush1.bf16.msra.mxu0 %v1875
    %3384 = vmatprep.subr.bf16.mxu0 %v1886
    %3385 = vmatpush1.bf16.msra.mxu0 %v1885
    %3386 = vmatprep.subr.bf16.mxu0 %v1896
    %3387 = vmatpush1.bf16.msra.mxu0 %v1895
    %3388 = vmatprep.subr.bf16.mxu0 %v1906
    %3389 = vmatpush1.bf16.msra.mxu0 %v1905
    %3390 = vmatprep.subr.bf16.mxu0 %v1916
    %3391 = vmatpush1.bf16.msra.mxu0 %v1915
    %3392 = vmatprep.subr.bf16.mxu0 %v1926
    %3393 = vmatpush1.bf16.msra.mxu0 %v1925
    %3394 = vmatprep.subr.bf16.mxu0 %v1936
    %3395 = vmatpush1.bf16.msra.mxu0 %v1935
    %3396 = vmatprep.mubr.bf16.mxu0 %v812
    %3397 = vmatmul.mubr.bf16.gmra.mrb[0].mxu0 %v811
    %v3398 = vpop.f32.mrb[0].mxu0
    %v3399 = vadd.f32 %v3358, %v3398
    %v3400 = vpop.f32.mrb[0].mxu0
    %v3401 = vadd.f32 %v3360, %v3400
    %v3402 = vpop.f32.mrb[0].mxu0
    %v3403 = vpop.f32.mrb[0].mxu0
    %3404 = vdwg.mxu0
    %3405 = vmatprep.subr.bf16.mxu0 %v1946
    %3406 = vmatpush1.bf16.msra.mxu0 %v1945
    %3407 = vmatprep.subr.bf16.mxu0 %v1956
    %3408 = vmatpush1.bf16.msra.mxu0 %v1955
    %3409 = vmatprep.subr.bf16.mxu0 %v1966
    %3410 = vmatpush1.bf16.msra.mxu0 %v1965
    %3411 = vmatprep.subr.bf16.mxu0 %v1976
    %3412 = vmatpush1.bf16.msra.mxu0 %v1975
    %3413 = vmatprep.subr.bf16.mxu0 %v1986
    %3414 = vmatpush1.bf16.msra.mxu0 %v1985
    %3415 = vmatprep.subr.bf16.mxu0 %v1996
    %3416 = vmatpush1.bf16.msra.mxu0 %v1995
    %3417 = vmatprep.subr.bf16.mxu0 %v2006
    %3418 = vmatpush1.bf16.msra.mxu0 %v2005
    %3419 = vmatprep.subr.bf16.mxu0 %v2016
    %3420 = vmatpush1.bf16.msra.mxu0 %v2015
    %3421 = vmatprep.subr.bf16.mxu0 %v2026
    %3422 = vmatpush1.bf16.msra.mxu0 %v2025
    %3423 = vmatprep.subr.bf16.mxu0 %v2036
    %3424 = vmatpush1.bf16.msra.mxu0 %v2035
    %3425 = vmatprep.subr.bf16.mxu0 %v2046
    %3426 = vmatpush1.bf16.msra.mxu0 %v2045
    %3427 = vmatprep.subr.bf16.mxu0 %v2056
    %3428 = vmatpush1.bf16.msra.mxu0 %v2055
    %3429 = vmatprep.subr.bf16.mxu0 %v2066
    %3430 = vmatpush1.bf16.msra.mxu0 %v2065
    %3431 = vmatprep.subr.bf16.mxu0 %v2076
    %3432 = vmatpush1.bf16.msra.mxu0 %v2075
    %3433 = vmatprep.subr.bf16.mxu0 %v2086
    %3434 = vmatpush1.bf16.msra.mxu0 %v2085
    %3435 = vmatprep.subr.bf16.mxu0 %v2096
    %3436 = vmatpush1.bf16.msra.mxu0 %v2095
    %3437 = vmatprep.mubr.bf16.mxu0 %v814
    %3438 = vmatmul.mubr.bf16.gmra.mrb[0].mxu0 %v813
    %v3439 = vpop.f32.mrb[0].mxu0
    %v3440 = vadd.f32 %v3399, %v3439
    %v3441 = vpop.f32.mrb[0].mxu0
    %v3442 = vadd.f32 %v3401, %v3441
    %v3443 = vpop.f32.mrb[0].mxu0
    %v3444 = vpop.f32.mrb[0].mxu0
    %3445 = vdwg.mxu0
    %3446 = vmatprep.subr.bf16.mxu0 %v2106
    %3447 = vmatpush1.bf16.msra.mxu0 %v2105
    %3448 = vmatprep.subr.bf16.mxu0 %v2116
    %3449 = vmatpush1.bf16.msra.mxu0 %v2115
    %3450 = vmatprep.subr.bf16.mxu0 %v2126
    %3451 = vmatpush1.bf16.msra.mxu0 %v2125
    %3452 = vmatprep.subr.bf16.mxu0 %v2136
    %3453 = vmatpush1.bf16.msra.mxu0 %v2135
    %3454 = vmatprep.subr.bf16.mxu0 %v2146
    %3455 = vmatpush1.bf16.msra.mxu0 %v2145
    %3456 = vmatprep.subr.bf16.mxu0 %v2156
    %3457 = vmatpush1.bf16.msra.mxu0 %v2155
    %3458 = vmatprep.subr.bf16.mxu0 %v2166
    %3459 = vmatpush1.bf16.msra.mxu0 %v2165
    %3460 = vmatprep.subr.bf16.mxu0 %v2176
    %3461 = vmatpush1.bf16.msra.mxu0 %v2175
    %3462 = vmatprep.subr.bf16.mxu0 %v2186
    %3463 = vmatpush1.bf16.msra.mxu0 %v2185
    %3464 = vmatprep.subr.bf16.mxu0 %v2196
    %3465 = vmatpush1.bf16.msra.mxu0 %v2195
    %3466 = vmatprep.subr.bf16.mxu0 %v2206
    %3467 = vmatpush1.bf16.msra.mxu0 %v2205
    %3468 = vmatprep.subr.bf16.mxu0 %v2216
    %3469 = vmatpush1.bf16.msra.mxu0 %v2215
    %3470 = vmatprep.subr.bf16.mxu0 %v2226
    %3471 = vmatpush1.bf16.msra.mxu0 %v2225
    %3472 = vmatprep.subr.bf16.mxu0 %v2236
    %3473 = vmatpush1.bf16.msra.mxu0 %v2235
    %3474 = vmatprep.subr.bf16.mxu0 %v2246
    %3475 = vmatpush1.bf16.msra.mxu0 %v2245
    %3476 = vmatprep.subr.bf16.mxu0 %v2256
    %3477 = vmatpush1.bf16.msra.mxu0 %v2255
    %3478 = vmatprep.mubr.bf16.mxu0 %v816
    %3479 = vmatmul.mubr.bf16.gmra.mrb[0].mxu0 %v815
    %v3480 = vpop.f32.mrb[0].mxu0
    %v3481 = vadd.f32 %v3440, %v3480
    %v3482 = vpop.f32.mrb[0].mxu0
    %v3483 = vadd.f32 %v3442, %v3482
    %v3484 = vpop.f32.mrb[0].mxu0
    %v3485 = vpop.f32.mrb[0].mxu0
    %3486 = vdwg.mxu0
    %v3487 = vld [vmem:[#allocation10] sm:$0xff]
    %v3488 = vld [vmem:[#allocation10 + $0x8] sm:$0x3]
    %v3491 = vlaneseq
    %v3492 = vshrl.u32 %v3491, 7
    %v3493 = vsub.s32 0, %v3492
    %v3494 = vrot.slane %v3487, %v3493
    %v3495 = vlaneseq
    %v3496 = vshrl.u32 %v3495, 7
    %v3497 = vsub.s32 1, %v3496
    %v3498 = vrot.slane %v3487, %v3497
    %v3499 = vlaneseq
    %v3500 = vshrl.u32 %v3499, 7
    %v3501 = vsub.s32 2, %v3500
    %v3502 = vrot.slane %v3487, %v3501
    %v3503 = vlaneseq
    %v3504 = vshrl.u32 %v3503, 7
    %v3505 = vsub.s32 3, %v3504
    %v3506 = vrot.slane %v3487, %v3505
    %v3507 = vlaneseq
    %v3508 = vshrl.u32 %v3507, 7
    %v3509 = vsub.s32 4, %v3508
    %v3510 = vrot.slane %v3487, %v3509
    %v3511 = vlaneseq
    %v3512 = vshrl.u32 %v3511, 7
    %v3513 = vsub.s32 5, %v3512
    %v3514 = vrot.slane %v3487, %v3513
    %v3515 = vlaneseq
    %v3516 = vshrl.u32 %v3515, 7
    %v3517 = vsub.s32 6, %v3516
    %v3518 = vrot.slane %v3487, %v3517
    %v3519 = vlaneseq
    %v3520 = vshrl.u32 %v3519, 7
    %v3521 = vsub.s32 7, %v3520
    %v3522 = vrot.slane %v3487, %v3521
    %v3523 = vlaneseq
    %v3524 = vshrl.u32 %v3523, 7
    %v3525 = vsub.s32 0, %v3524
    %v3526 = vrot.slane %v3488, %v3525
    %v3527 = vlaneseq
    %v3528 = vshrl.u32 %v3527, 7
    %v3529 = vsub.s32 1, %v3528
    %v3530 = vrot.slane %v3488, %v3529
    %v3541 = vmul.f32 %v2497, %v3494
    %v3542 = vmul.f32 %v2499, %v3498
    %v3543 = vmul.f32 %v2743, %v3502
    %v3544 = vmul.f32 %v2745, %v3506
    %v3545 = vmul.f32 %v2989, %v3510
    %v3546 = vmul.f32 %v2991, %v3514
    %v3547 = vmul.f32 %v3235, %v3518
    %v3548 = vmul.f32 %v3237, %v3522
    %v3549 = vmul.f32 %v3481, %v3526
    %v3550 = vmul.f32 %v3483, %v3530
    %v3551 = vld [vmem:[#allocation11] sm:$0xff]
    %v3552 = vld [vmem:[#allocation11 + $0x8] sm:$0x3]
    %v3555 = vlaneseq
    %v3556 = vshrl.u32 %v3555, 7
    %v3557 = vsub.s32 0, %v3556
    %v3558 = vrot.slane %v3551, %v3557
    %v3559 = vlaneseq
    %v3560 = vshrl.u32 %v3559, 7
    %v3561 = vsub.s32 1, %v3560
    %v3562 = vrot.slane %v3551, %v3561
    %v3563 = vlaneseq
    %v3564 = vshrl.u32 %v3563, 7
    %v3565 = vsub.s32 2, %v3564
    %v3566 = vrot.slane %v3551, %v3565
    %v3567 = vlaneseq
    %v3568 = vshrl.u32 %v3567, 7
    %v3569 = vsub.s32 3, %v3568
    %v3570 = vrot.slane %v3551, %v3569
    %v3571 = vlaneseq
    %v3572 = vshrl.u32 %v3571, 7
    %v3573 = vsub.s32 4, %v3572
    %v3574 = vrot.slane %v3551, %v3573
    %v3575 = vlaneseq
    %v3576 = vshrl.u32 %v3575, 7
    %v3577 = vsub.s32 5, %v3576
    %v3578 = vrot.slane %v3551, %v3577
    %v3579 = vlaneseq
    %v3580 = vshrl.u32 %v3579, 7
    %v3581 = vsub.s32 6, %v3580
    %v3582 = vrot.slane %v3551, %v3581
    %v3583 = vlaneseq
    %v3584 = vshrl.u32 %v3583, 7
    %v3585 = vsub.s32 7, %v3584
    %v3586 = vrot.slane %v3551, %v3585
    %v3587 = vlaneseq
    %v3588 = vshrl.u32 %v3587, 7
    %v3589 = vsub.s32 0, %v3588
    %v3590 = vrot.slane %v3552, %v3589
    %v3591 = vlaneseq
    %v3592 = vshrl.u32 %v3591, 7
    %v3593 = vsub.s32 1, %v3592
    %v3594 = vrot.slane %v3552, %v3593
    %v3605 = vadd.f32 %v3541, %v3558
    %v3606 = vadd.f32 %v3542, %v3562
    %v3607 = vadd.f32 %v3543, %v3566
    %v3608 = vadd.f32 %v3544, %v3570
    %v3609 = vadd.f32 %v3545, %v3574
    %v3610 = vadd.f32 %v3546, %v3578
    %v3611 = vadd.f32 %v3547, %v3582
    %v3612 = vadd.f32 %v3548, %v3586
    %v3613 = vadd.f32 %v3549, %v3590
    %v3614 = vadd.f32 %v3550, %v3594
    %v3615 = vmul.f32 %v3605, 0.01
    %v3616 = vmul.f32 %v3606, 0.01
    %v3617 = vmul.f32 %v3607, 0.01
    %v3618 = vmul.f32 %v3608, 0.01
    %v3619 = vmul.f32 %v3609, 0.01
    %v3620 = vmul.f32 %v3610, 0.01
    %v3621 = vmul.f32 %v3611, 0.01
    %v3622 = vmul.f32 %v3612, 0.01
    %v3623 = vmul.f32 %v3613, 0.01
    %v3624 = vmul.f32 %v3614, 0.01
    %v3625 = vmax.f32 %v3605, %v3615
    %v3626 = vmax.f32 %v3606, %v3616
    %v3627 = vmax.f32 %v3607, %v3617
    %v3628 = vmax.f32 %v3608, %v3618
    %v3629 = vmax.f32 %v3609, %v3619
    %v3630 = vmax.f32 %v3610, %v3620
    %v3631 = vmax.f32 %v3611, %v3621
    %v3632 = vmax.f32 %v3612, %v3622
    %v3633 = vmax.f32 %v3613, %v3623
    %v3634 = vmax.f32 %v3614, %v3624
    %v3635 = vpack.c.bf16 %v3625, %v3625
    %v3636 = vpack.c.bf16 %v3626, %v3626
    %v3637 = vpack.c.bf16 %v3627, %v3627
    %v3638 = vpack.c.bf16 %v3628, %v3628
    %v3639 = vpack.c.bf16 %v3629, %v3629
    %v3640 = vpack.c.bf16 %v3630, %v3630
    %v3641 = vpack.c.bf16 %v3631, %v3631
    %v3642 = vpack.c.bf16 %v3632, %v3632
    %v3643 = vpack.c.bf16 %v3633, %v3633
    %v3644 = vpack.c.bf16 %v3634, %v3634
    %v3645 = vld [vmem:[#allocation13] sm:$0xff]
    %v3646 = vld [vmem:[#allocation13 + $0x8] sm:$0xff]
    %v3647 = vld [vmem:[#allocation13 + $0x10] sm:$0xff]
    %v3648 = vld [vmem:[#allocation13 + $0x18] sm:$0xff]
    %v3649 = vld [vmem:[#allocation13 + $0x20] sm:$0xff]
    %v3650 = vld [vmem:[#allocation13 + $0x28] sm:$0xff]
    %v3651 = vld [vmem:[#allocation13 + $0x30] sm:$0xff]
    %v3652 = vld [vmem:[#allocation13 + $0x38] sm:$0xff]
    %v3653 = vld [vmem:[#allocation13 + $0x40] sm:$0xff]
    %v3654 = vld [vmem:[#allocation13 + $0x48] sm:$0xff]
    %v3655 = vld [vmem:[#allocation13 + $0x50] sm:$0xff]
    %v3656 = vld [vmem:[#allocation13 + $0x58] sm:$0xff]
    %v3657 = vld [vmem:[#allocation13 + $0x60] sm:$0xff]
    %v3658 = vld [vmem:[#allocation13 + $0x68] sm:$0xff]
    %v3659 = vld [vmem:[#allocation13 + $0x70] sm:$0xff]
    %v3660 = vld [vmem:[#allocation13 + $0x78] sm:$0xff]
    %v3661 = vld [vmem:[#allocation13 + $0x80] sm:$0xff]
    %v3662 = vld [vmem:[#allocation13 + $0x88] sm:$0xff]
    %v3663 = vld [vmem:[#allocation13 + $0x90] sm:$0xff]
    %v3664 = vld [vmem:[#allocation13 + $0x98] sm:$0xff]
    %v3665 = vld [vmem:[#allocation13 + $0xa0] sm:$0xff]
    %v3666 = vld [vmem:[#allocation13 + $0xa8] sm:$0xff]
    %v3667 = vld [vmem:[#allocation13 + $0xb0] sm:$0xff]
    %v3668 = vld [vmem:[#allocation13 + $0xb8] sm:$0xff]
    %v3669 = vld [vmem:[#allocation13 + $0xc0] sm:$0xff]
    %v3670 = vld [vmem:[#allocation13 + $0xc8] sm:$0xff]
    %v3671 = vld [vmem:[#allocation13 + $0xd0] sm:$0xff]
    %v3672 = vld [vmem:[#allocation13 + $0xd8] sm:$0xff]
    %v3673 = vld [vmem:[#allocation13 + $0xe0] sm:$0xff]
    %v3674 = vld [vmem:[#allocation13 + $0xe8] sm:$0xff]
    %v3675 = vld [vmem:[#allocation13 + $0xf0] sm:$0xff]
    %v3676 = vld [vmem:[#allocation13 + $0xf8] sm:$0xff]
    %v3677 = vld [vmem:[#allocation13 + $0x100] sm:$0xff]
    %v3678 = vld [vmem:[#allocation13 + $0x108] sm:$0xff]
    %v3679 = vld [vmem:[#allocation13 + $0x110] sm:$0xff]
    %v3680 = vld [vmem:[#allocation13 + $0x118] sm:$0xff]
    %v3681 = vld [vmem:[#allocation13 + $0x120] sm:$0xff]
    %v3682 = vld [vmem:[#allocation13 + $0x128] sm:$0xff]
    %v3683 = vld [vmem:[#allocation13 + $0x130] sm:$0xff]
    %v3684 = vld [vmem:[#allocation13 + $0x138] sm:$0xff]
    %v3685 = vld [vmem:[#allocation13 + $0x140] sm:$0xff]
    %v3686 = vld [vmem:[#allocation13 + $0x148] sm:$0xff]
    %v3687 = vld [vmem:[#allocation13 + $0x150] sm:$0xff]
    %v3688 = vld [vmem:[#allocation13 + $0x158] sm:$0xff]
    %v3689 = vld [vmem:[#allocation13 + $0x160] sm:$0xff]
    %v3690 = vld [vmem:[#allocation13 + $0x168] sm:$0xff]
    %v3691 = vld [vmem:[#allocation13 + $0x170] sm:$0xff]
    %v3692 = vld [vmem:[#allocation13 + $0x178] sm:$0xff]
    %v3693 = vld [vmem:[#allocation13 + $0x180] sm:$0xff]
    %v3694 = vld [vmem:[#allocation13 + $0x188] sm:$0xff]
    %v3695 = vld [vmem:[#allocation13 + $0x190] sm:$0xff]
    %v3696 = vld [vmem:[#allocation13 + $0x198] sm:$0xff]
    %v3697 = vld [vmem:[#allocation13 + $0x1a0] sm:$0xff]
    %v3698 = vld [vmem:[#allocation13 + $0x1a8] sm:$0xff]
    %v3699 = vld [vmem:[#allocation13 + $0x1b0] sm:$0xff]
    %v3700 = vld [vmem:[#allocation13 + $0x1b8] sm:$0xff]
    %v3701 = vld [vmem:[#allocation13 + $0x1c0] sm:$0xff]
    %v3702 = vld [vmem:[#allocation13 + $0x1c8] sm:$0xff]
    %v3703 = vld [vmem:[#allocation13 + $0x1d0] sm:$0xff]
    %v3704 = vld [vmem:[#allocation13 + $0x1d8] sm:$0xff]
    %v3705 = vld [vmem:[#allocation13 + $0x1e0] sm:$0xff]
    %v3706 = vld [vmem:[#allocation13 + $0x1e8] sm:$0xff]
    %v3707 = vld [vmem:[#allocation13 + $0x1f0] sm:$0xff]
    %v3708 = vld [vmem:[#allocation13 + $0x1f8] sm:$0xff]
    %v3709 = vld [vmem:[#allocation13 + $0x200] sm:$0xff]
    %v3710 = vld [vmem:[#allocation13 + $0x208] sm:$0xff]
    %v3711 = vld [vmem:[#allocation13 + $0x210] sm:$0xff]
    %v3712 = vld [vmem:[#allocation13 + $0x218] sm:$0xff]
    %v3713 = vld [vmem:[#allocation13 + $0x220] sm:$0xff]
    %v3714 = vld [vmem:[#allocation13 + $0x228] sm:$0xff]
    %v3715 = vld [vmem:[#allocation13 + $0x230] sm:$0xff]
    %v3716 = vld [vmem:[#allocation13 + $0x238] sm:$0xff]
    %v3717 = vld [vmem:[#allocation13 + $0x240] sm:$0xff]
    %v3718 = vld [vmem:[#allocation13 + $0x248] sm:$0xff]
    %v3719 = vld [vmem:[#allocation13 + $0x250] sm:$0xff]
    %v3720 = vld [vmem:[#allocation13 + $0x258] sm:$0xff]
    %v3721 = vld [vmem:[#allocation13 + $0x260] sm:$0xff]
    %v3722 = vld [vmem:[#allocation13 + $0x268] sm:$0xff]
    %v3723 = vld [vmem:[#allocation13 + $0x270] sm:$0xff]
    %v3724 = vld [vmem:[#allocation13 + $0x278] sm:$0xff]
    %v3725 = vld [vmem:[#allocation13 + $0x280] sm:$0xff]
    %v3726 = vld [vmem:[#allocation13 + $0x288] sm:$0xff]
    %v3727 = vld [vmem:[#allocation13 + $0x290] sm:$0xff]
    %v3728 = vld [vmem:[#allocation13 + $0x298] sm:$0xff]
    %v3729 = vld [vmem:[#allocation13 + $0x2a0] sm:$0xff]
    %v3730 = vld [vmem:[#allocation13 + $0x2a8] sm:$0xff]
    %v3731 = vld [vmem:[#allocation13 + $0x2b0] sm:$0xff]
    %v3732 = vld [vmem:[#allocation13 + $0x2b8] sm:$0xff]
    %v3733 = vld [vmem:[#allocation13 + $0x2c0] sm:$0xff]
    %v3734 = vld [vmem:[#allocation13 + $0x2c8] sm:$0xff]
    %v3735 = vld [vmem:[#allocation13 + $0x2d0] sm:$0xff]
    %v3736 = vld [vmem:[#allocation13 + $0x2d8] sm:$0xff]
    %v3737 = vld [vmem:[#allocation13 + $0x2e0] sm:$0xff]
    %v3738 = vld [vmem:[#allocation13 + $0x2e8] sm:$0xff]
    %v3739 = vld [vmem:[#allocation13 + $0x2f0] sm:$0xff]
    %v3740 = vld [vmem:[#allocation13 + $0x2f8] sm:$0xff]
    %v3741 = vld [vmem:[#allocation13 + $0x300] sm:$0xff]
    %v3742 = vld [vmem:[#allocation13 + $0x308] sm:$0xff]
    %v3743 = vld [vmem:[#allocation13 + $0x310] sm:$0xff]
    %v3744 = vld [vmem:[#allocation13 + $0x318] sm:$0xff]
    %v3745 = vld [vmem:[#allocation13 + $0x320] sm:$0xff]
    %v3746 = vld [vmem:[#allocation13 + $0x328] sm:$0xff]
    %v3747 = vld [vmem:[#allocation13 + $0x330] sm:$0xff]
    %v3748 = vld [vmem:[#allocation13 + $0x338] sm:$0xff]
    %v3749 = vld [vmem:[#allocation13 + $0x340] sm:$0xff]
    %v3750 = vld [vmem:[#allocation13 + $0x348] sm:$0xff]
    %v3751 = vld [vmem:[#allocation13 + $0x350] sm:$0xff]
    %v3752 = vld [vmem:[#allocation13 + $0x358] sm:$0xff]
    %v3753 = vld [vmem:[#allocation13 + $0x360] sm:$0xff]
    %v3754 = vld [vmem:[#allocation13 + $0x368] sm:$0xff]
    %v3755 = vld [vmem:[#allocation13 + $0x370] sm:$0xff]
    %v3756 = vld [vmem:[#allocation13 + $0x378] sm:$0xff]
    %v3757 = vld [vmem:[#allocation13 + $0x380] sm:$0xff]
    %v3758 = vld [vmem:[#allocation13 + $0x388] sm:$0xff]
    %v3759 = vld [vmem:[#allocation13 + $0x390] sm:$0xff]
    %v3760 = vld [vmem:[#allocation13 + $0x398] sm:$0xff]
    %v3761 = vld [vmem:[#allocation13 + $0x3a0] sm:$0xff]
    %v3762 = vld [vmem:[#allocation13 + $0x3a8] sm:$0xff]
    %v3763 = vld [vmem:[#allocation13 + $0x3b0] sm:$0xff]
    %v3764 = vld [vmem:[#allocation13 + $0x3b8] sm:$0xff]
    %v3765 = vld [vmem:[#allocation13 + $0x3c0] sm:$0xff]
    %v3766 = vld [vmem:[#allocation13 + $0x3c8] sm:$0xff]
    %v3767 = vld [vmem:[#allocation13 + $0x3d0] sm:$0xff]
    %v3768 = vld [vmem:[#allocation13 + $0x3d8] sm:$0xff]
    %v3769 = vld [vmem:[#allocation13 + $0x3e0] sm:$0xff]
    %v3770 = vld [vmem:[#allocation13 + $0x3e8] sm:$0xff]
    %v3771 = vld [vmem:[#allocation13 + $0x3f0] sm:$0xff]
    %v3772 = vld [vmem:[#allocation13 + $0x3f8] sm:$0xff]
    %v3773 = vld [vmem:[#allocation13 + $0x400] sm:$0xff]
    %v3774 = vld [vmem:[#allocation13 + $0x408] sm:$0xff]
    %v3775 = vld [vmem:[#allocation13 + $0x410] sm:$0xff]
    %v3776 = vld [vmem:[#allocation13 + $0x418] sm:$0xff]
    %v3777 = vld [vmem:[#allocation13 + $0x420] sm:$0xff]
    %v3778 = vld [vmem:[#allocation13 + $0x428] sm:$0xff]
    %v3779 = vld [vmem:[#allocation13 + $0x430] sm:$0xff]
    %v3780 = vld [vmem:[#allocation13 + $0x438] sm:$0xff]
    %v3781 = vld [vmem:[#allocation13 + $0x440] sm:$0xff]
    %v3782 = vld [vmem:[#allocation13 + $0x448] sm:$0xff]
    %v3783 = vld [vmem:[#allocation13 + $0x450] sm:$0xff]
    %v3784 = vld [vmem:[#allocation13 + $0x458] sm:$0xff]
    %v3785 = vld [vmem:[#allocation13 + $0x460] sm:$0xff]
    %v3786 = vld [vmem:[#allocation13 + $0x468] sm:$0xff]
    %v3787 = vld [vmem:[#allocation13 + $0x470] sm:$0xff]
    %v3788 = vld [vmem:[#allocation13 + $0x478] sm:$0xff]
    %v3789 = vld [vmem:[#allocation13 + $0x480] sm:$0xff]
    %v3790 = vld [vmem:[#allocation13 + $0x488] sm:$0xff]
    %v3791 = vld [vmem:[#allocation13 + $0x490] sm:$0xff]
    %v3792 = vld [vmem:[#allocation13 + $0x498] sm:$0xff]
    %v3793 = vld [vmem:[#allocation13 + $0x4a0] sm:$0xff]
    %v3794 = vld [vmem:[#allocation13 + $0x4a8] sm:$0xff]
    %v3795 = vld [vmem:[#allocation13 + $0x4b0] sm:$0xff]
    %v3796 = vld [vmem:[#allocation13 + $0x4b8] sm:$0xff]
    %v3797 = vld [vmem:[#allocation13 + $0x4c0] sm:$0xff]
    %v3798 = vld [vmem:[#allocation13 + $0x4c8] sm:$0xff]
    %v3799 = vld [vmem:[#allocation13 + $0x4d0] sm:$0xff]
    %v3800 = vld [vmem:[#allocation13 + $0x4d8] sm:$0xff]
    %v3801 = vld [vmem:[#allocation13 + $0x4e0] sm:$0xff]
    %v3802 = vld [vmem:[#allocation13 + $0x4e8] sm:$0xff]
    %v3803 = vld [vmem:[#allocation13 + $0x4f0] sm:$0xff]
    %v3804 = vld [vmem:[#allocation13 + $0x4f8] sm:$0xff]
    %v3805 = vld [vmem:[#allocation13 + $0x500] sm:$0xff]
    %v3806 = vld [vmem:[#allocation13 + $0x508] sm:$0xff]
    %v3807 = vld [vmem:[#allocation13 + $0x510] sm:$0xff]
    %v3808 = vld [vmem:[#allocation13 + $0x518] sm:$0xff]
    %v3809 = vld [vmem:[#allocation13 + $0x520] sm:$0xff]
    %v3810 = vld [vmem:[#allocation13 + $0x528] sm:$0xff]
    %v3811 = vld [vmem:[#allocation13 + $0x530] sm:$0xff]
    %v3812 = vld [vmem:[#allocation13 + $0x538] sm:$0xff]
    %v3813 = vld [vmem:[#allocation13 + $0x540] sm:$0xff]
    %v3814 = vld [vmem:[#allocation13 + $0x548] sm:$0xff]
    %v3815 = vld [vmem:[#allocation13 + $0x550] sm:$0xff]
    %v3816 = vld [vmem:[#allocation13 + $0x558] sm:$0xff]
    %v3817 = vld [vmem:[#allocation13 + $0x560] sm:$0xff]
    %v3818 = vld [vmem:[#allocation13 + $0x568] sm:$0xff]
    %v3819 = vld [vmem:[#allocation13 + $0x570] sm:$0xff]
    %v3820 = vld [vmem:[#allocation13 + $0x578] sm:$0xff]
    %v3821 = vld [vmem:[#allocation13 + $0x580] sm:$0xff]
    %v3822 = vld [vmem:[#allocation13 + $0x588] sm:$0xff]
    %v3823 = vld [vmem:[#allocation13 + $0x590] sm:$0xff]
    %v3824 = vld [vmem:[#allocation13 + $0x598] sm:$0xff]
    %v3825 = vld [vmem:[#allocation13 + $0x5a0] sm:$0xff]
    %v3826 = vld [vmem:[#allocation13 + $0x5a8] sm:$0xff]
    %v3827 = vld [vmem:[#allocation13 + $0x5b0] sm:$0xff]
    %v3828 = vld [vmem:[#allocation13 + $0x5b8] sm:$0xff]
    %v3829 = vld [vmem:[#allocation13 + $0x5c0] sm:$0xff]
    %v3830 = vld [vmem:[#allocation13 + $0x5c8] sm:$0xff]
    %v3831 = vld [vmem:[#allocation13 + $0x5d0] sm:$0xff]
    %v3832 = vld [vmem:[#allocation13 + $0x5d8] sm:$0xff]
    %v3833 = vld [vmem:[#allocation13 + $0x5e0] sm:$0xff]
    %v3834 = vld [vmem:[#allocation13 + $0x5e8] sm:$0xff]
    %v3835 = vld [vmem:[#allocation13 + $0x5f0] sm:$0xff]
    %v3836 = vld [vmem:[#allocation13 + $0x5f8] sm:$0xff]
    %v3837 = vld [vmem:[#allocation13 + $0x600] sm:$0xff]
    %v3838 = vld [vmem:[#allocation13 + $0x608] sm:$0xff]
    %v3839 = vld [vmem:[#allocation13 + $0x610] sm:$0xff]
    %v3840 = vld [vmem:[#allocation13 + $0x618] sm:$0xff]
    %v3841 = vld [vmem:[#allocation13 + $0x620] sm:$0xff]
    %v3842 = vld [vmem:[#allocation13 + $0x628] sm:$0xff]
    %v3843 = vld [vmem:[#allocation13 + $0x630] sm:$0xff]
    %v3844 = vld [vmem:[#allocation13 + $0x638] sm:$0xff]
    %v3845 = vld [vmem:[#allocation13 + $0x640] sm:$0xff]
    %v3846 = vld [vmem:[#allocation13 + $0x648] sm:$0xff]
    %v3847 = vld [vmem:[#allocation13 + $0x650] sm:$0xff]
    %v3848 = vld [vmem:[#allocation13 + $0x658] sm:$0xff]
    %v3849 = vld [vmem:[#allocation13 + $0x660] sm:$0xff]
    %v3850 = vld [vmem:[#allocation13 + $0x668] sm:$0xff]
    %v3851 = vld [vmem:[#allocation13 + $0x670] sm:$0xff]
    %v3852 = vld [vmem:[#allocation13 + $0x678] sm:$0xff]
    %v3853 = vld [vmem:[#allocation13 + $0x680] sm:$0xff]
    %v3854 = vld [vmem:[#allocation13 + $0x688] sm:$0xff]
    %v3855 = vld [vmem:[#allocation13 + $0x690] sm:$0xff]
    %v3856 = vld [vmem:[#allocation13 + $0x698] sm:$0xff]
    %v3857 = vld [vmem:[#allocation13 + $0x6a0] sm:$0xff]
    %v3858 = vld [vmem:[#allocation13 + $0x6a8] sm:$0xff]
    %v3859 = vld [vmem:[#allocation13 + $0x6b0] sm:$0xff]
    %v3860 = vld [vmem:[#allocation13 + $0x6b8] sm:$0xff]
    %v3861 = vld [vmem:[#allocation13 + $0x6c0] sm:$0xff]
    %v3862 = vld [vmem:[#allocation13 + $0x6c8] sm:$0xff]
    %v3863 = vld [vmem:[#allocation13 + $0x6d0] sm:$0xff]
    %v3864 = vld [vmem:[#allocation13 + $0x6d8] sm:$0xff]
    %v3865 = vld [vmem:[#allocation13 + $0x6e0] sm:$0xff]
    %v3866 = vld [vmem:[#allocation13 + $0x6e8] sm:$0xff]
    %v3867 = vld [vmem:[#allocation13 + $0x6f0] sm:$0xff]
    %v3868 = vld [vmem:[#allocation13 + $0x6f8] sm:$0xff]
    %v3869 = vld [vmem:[#allocation13 + $0x700] sm:$0xff]
    %v3870 = vld [vmem:[#allocation13 + $0x708] sm:$0xff]
    %v3871 = vld [vmem:[#allocation13 + $0x710] sm:$0xff]
    %v3872 = vld [vmem:[#allocation13 + $0x718] sm:$0xff]
    %v3873 = vld [vmem:[#allocation13 + $0x720] sm:$0xff]
    %v3874 = vld [vmem:[#allocation13 + $0x728] sm:$0xff]
    %v3875 = vld [vmem:[#allocation13 + $0x730] sm:$0xff]
    %v3876 = vld [vmem:[#allocation13 + $0x738] sm:$0xff]
    %v3877 = vld [vmem:[#allocation13 + $0x740] sm:$0xff]
    %v3878 = vld [vmem:[#allocation13 + $0x748] sm:$0xff]
    %v3879 = vld [vmem:[#allocation13 + $0x750] sm:$0xff]
    %v3880 = vld [vmem:[#allocation13 + $0x758] sm:$0xff]
    %v3881 = vld [vmem:[#allocation13 + $0x760] sm:$0xff]
    %v3882 = vld [vmem:[#allocation13 + $0x768] sm:$0xff]
    %v3883 = vld [vmem:[#allocation13 + $0x770] sm:$0xff]
    %v3884 = vld [vmem:[#allocation13 + $0x778] sm:$0xff]
    %v3885 = vld [vmem:[#allocation13 + $0x780] sm:$0xff]
    %v3886 = vld [vmem:[#allocation13 + $0x788] sm:$0xff]
    %v3887 = vld [vmem:[#allocation13 + $0x790] sm:$0xff]
    %v3888 = vld [vmem:[#allocation13 + $0x798] sm:$0xff]
    %v3889 = vld [vmem:[#allocation13 + $0x7a0] sm:$0xff]
    %v3890 = vld [vmem:[#allocation13 + $0x7a8] sm:$0xff]
    %v3891 = vld [vmem:[#allocation13 + $0x7b0] sm:$0xff]
    %v3892 = vld [vmem:[#allocation13 + $0x7b8] sm:$0xff]
    %v3893 = vld [vmem:[#allocation13 + $0x7c0] sm:$0xff]
    %v3894 = vld [vmem:[#allocation13 + $0x7c8] sm:$0xff]
    %v3895 = vld [vmem:[#allocation13 + $0x7d0] sm:$0xff]
    %v3896 = vld [vmem:[#allocation13 + $0x7d8] sm:$0xff]
    %v3897 = vld [vmem:[#allocation13 + $0x7e0] sm:$0xff]
    %v3898 = vld [vmem:[#allocation13 + $0x7e8] sm:$0xff]
    %v3899 = vld [vmem:[#allocation13 + $0x7f0] sm:$0xff]
    %v3900 = vld [vmem:[#allocation13 + $0x7f8] sm:$0xff]
    %v3901 = vld [vmem:[#allocation13 + $0x800] sm:$0xff]
    %v3902 = vld [vmem:[#allocation13 + $0x808] sm:$0xff]
    %v3903 = vld [vmem:[#allocation13 + $0x810] sm:$0xff]
    %v3904 = vld [vmem:[#allocation13 + $0x818] sm:$0xff]
    %v3905 = vld [vmem:[#allocation13 + $0x820] sm:$0xff]
    %v3906 = vld [vmem:[#allocation13 + $0x828] sm:$0xff]
    %v3907 = vld [vmem:[#allocation13 + $0x830] sm:$0xff]
    %v3908 = vld [vmem:[#allocation13 + $0x838] sm:$0xff]
    %v3909 = vld [vmem:[#allocation13 + $0x840] sm:$0xff]
    %v3910 = vld [vmem:[#allocation13 + $0x848] sm:$0xff]
    %v3911 = vld [vmem:[#allocation13 + $0x850] sm:$0xff]
    %v3912 = vld [vmem:[#allocation13 + $0x858] sm:$0xff]
    %v3913 = vld [vmem:[#allocation13 + $0x860] sm:$0xff]
    %v3914 = vld [vmem:[#allocation13 + $0x868] sm:$0xff]
    %v3915 = vld [vmem:[#allocation13 + $0x870] sm:$0xff]
    %v3916 = vld [vmem:[#allocation13 + $0x878] sm:$0xff]
    %v3917 = vld [vmem:[#allocation13 + $0x880] sm:$0xff]
    %v3918 = vld [vmem:[#allocation13 + $0x888] sm:$0xff]
    %v3919 = vld [vmem:[#allocation13 + $0x890] sm:$0xff]
    %v3920 = vld [vmem:[#allocation13 + $0x898] sm:$0xff]
    %v3921 = vld [vmem:[#allocation13 + $0x8a0] sm:$0xff]
    %v3922 = vld [vmem:[#allocation13 + $0x8a8] sm:$0xff]
    %v3923 = vld [vmem:[#allocation13 + $0x8b0] sm:$0xff]
    %v3924 = vld [vmem:[#allocation13 + $0x8b8] sm:$0xff]
    %v3925 = vld [vmem:[#allocation13 + $0x8c0] sm:$0xff]
    %v3926 = vld [vmem:[#allocation13 + $0x8c8] sm:$0xff]
    %v3927 = vld [vmem:[#allocation13 + $0x8d0] sm:$0xff]
    %v3928 = vld [vmem:[#allocation13 + $0x8d8] sm:$0xff]
    %v3929 = vld [vmem:[#allocation13 + $0x8e0] sm:$0xff]
    %v3930 = vld [vmem:[#allocation13 + $0x8e8] sm:$0xff]
    %v3931 = vld [vmem:[#allocation13 + $0x8f0] sm:$0xff]
    %v3932 = vld [vmem:[#allocation13 + $0x8f8] sm:$0xff]
    %v3933 = vld [vmem:[#allocation13 + $0x900] sm:$0xff]
    %v3934 = vld [vmem:[#allocation13 + $0x908] sm:$0xff]
    %v3935 = vld [vmem:[#allocation13 + $0x910] sm:$0xff]
    %v3936 = vld [vmem:[#allocation13 + $0x918] sm:$0xff]
    %v3937 = vld [vmem:[#allocation13 + $0x920] sm:$0xff]
    %v3938 = vld [vmem:[#allocation13 + $0x928] sm:$0xff]
    %v3939 = vld [vmem:[#allocation13 + $0x930] sm:$0xff]
    %v3940 = vld [vmem:[#allocation13 + $0x938] sm:$0xff]
    %v3941 = vld [vmem:[#allocation13 + $0x940] sm:$0xff]
    %v3942 = vld [vmem:[#allocation13 + $0x948] sm:$0xff]
    %v3943 = vld [vmem:[#allocation13 + $0x950] sm:$0xff]
    %v3944 = vld [vmem:[#allocation13 + $0x958] sm:$0xff]
    %v3945 = vld [vmem:[#allocation13 + $0x960] sm:$0xff]
    %v3946 = vld [vmem:[#allocation13 + $0x968] sm:$0xff]
    %v3947 = vld [vmem:[#allocation13 + $0x970] sm:$0xff]
    %v3948 = vld [vmem:[#allocation13 + $0x978] sm:$0xff]
    %v3949 = vld [vmem:[#allocation13 + $0x980] sm:$0xff]
    %v3950 = vld [vmem:[#allocation13 + $0x988] sm:$0xff]
    %v3951 = vld [vmem:[#allocation13 + $0x990] sm:$0xff]
    %v3952 = vld [vmem:[#allocation13 + $0x998] sm:$0xff]
    %v3953 = vld [vmem:[#allocation13 + $0x9a0] sm:$0xff]
    %v3954 = vld [vmem:[#allocation13 + $0x9a8] sm:$0xff]
    %v3955 = vld [vmem:[#allocation13 + $0x9b0] sm:$0xff]
    %v3956 = vld [vmem:[#allocation13 + $0x9b8] sm:$0xff]
    %v3957 = vld [vmem:[#allocation13 + $0x9c0] sm:$0xff]
    %v3958 = vld [vmem:[#allocation13 + $0x9c8] sm:$0xff]
    %v3959 = vld [vmem:[#allocation13 + $0x9d0] sm:$0xff]
    %v3960 = vld [vmem:[#allocation13 + $0x9d8] sm:$0xff]
    %v3961 = vld [vmem:[#allocation13 + $0x9e0] sm:$0xff]
    %v3962 = vld [vmem:[#allocation13 + $0x9e8] sm:$0xff]
    %v3963 = vld [vmem:[#allocation13 + $0x9f0] sm:$0xff]
    %v3964 = vld [vmem:[#allocation13 + $0x9f8] sm:$0xff]
    %v3965 = vunpack.c.l.s8.bf16 %v3645
    %v3966 = vunpack.c.l.s8.bf16 %v3646
    %v3967 = vunpack.c.l.s8.bf16 %v3647
    %v3968 = vunpack.c.l.s8.bf16 %v3648
    %v3969 = vunpack.c.l.s8.bf16 %v3649
    %v3970 = vunpack.c.l.s8.bf16 %v3650
    %v3971 = vunpack.c.l.s8.bf16 %v3651
    %v3972 = vunpack.c.l.s8.bf16 %v3652
    %v3973 = vunpack.c.h.s8.bf16 %v3645
    %v3974 = vunpack.c.h.s8.bf16 %v3646
    %v3975 = vunpack.c.h.s8.bf16 %v3647
    %v3976 = vunpack.c.h.s8.bf16 %v3648
    %v3977 = vunpack.c.h.s8.bf16 %v3649
    %v3978 = vunpack.c.h.s8.bf16 %v3650
    %v3979 = vunpack.c.h.s8.bf16 %v3651
    %v3980 = vunpack.c.h.s8.bf16 %v3652
    %v3981 = vunpack.c.l.s8.bf16 %v3653
    %v3982 = vunpack.c.l.s8.bf16 %v3654
    %v3983 = vunpack.c.l.s8.bf16 %v3655
    %v3984 = vunpack.c.l.s8.bf16 %v3656
    %v3985 = vunpack.c.l.s8.bf16 %v3657
    %v3986 = vunpack.c.l.s8.bf16 %v3658
    %v3987 = vunpack.c.l.s8.bf16 %v3659
    %v3988 = vunpack.c.l.s8.bf16 %v3660
    %v3989 = vunpack.c.h.s8.bf16 %v3653
    %v3990 = vunpack.c.h.s8.bf16 %v3654
    %v3991 = vunpack.c.h.s8.bf16 %v3655
    %v3992 = vunpack.c.h.s8.bf16 %v3656
    %v3993 = vunpack.c.h.s8.bf16 %v3657
    %v3994 = vunpack.c.h.s8.bf16 %v3658
    %v3995 = vunpack.c.h.s8.bf16 %v3659
    %v3996 = vunpack.c.h.s8.bf16 %v3660
    %v3997 = vunpack.c.l.s8.bf16 %v3661
    %v3998 = vunpack.c.l.s8.bf16 %v3662
    %v3999 = vunpack.c.l.s8.bf16 %v3663
    %v4000 = vunpack.c.l.s8.bf16 %v3664
    %v4001 = vunpack.c.l.s8.bf16 %v3665
    %v4002 = vunpack.c.l.s8.bf16 %v3666
    %v4003 = vunpack.c.l.s8.bf16 %v3667
    %v4004 = vunpack.c.l.s8.bf16 %v3668
    %v4005 = vunpack.c.h.s8.bf16 %v3661
    %v4006 = vunpack.c.h.s8.bf16 %v3662
    %v4007 = vunpack.c.h.s8.bf16 %v3663
    %v4008 = vunpack.c.h.s8.bf16 %v3664
    %v4009 = vunpack.c.h.s8.bf16 %v3665
    %v4010 = vunpack.c.h.s8.bf16 %v3666
    %v4011 = vunpack.c.h.s8.bf16 %v3667
    %v4012 = vunpack.c.h.s8.bf16 %v3668
    %v4013 = vunpack.c.l.s8.bf16 %v3669
    %v4014 = vunpack.c.l.s8.bf16 %v3670
    %v4015 = vunpack.c.l.s8.bf16 %v3671
    %v4016 = vunpack.c.l.s8.bf16 %v3672
    %v4017 = vunpack.c.l.s8.bf16 %v3673
    %v4018 = vunpack.c.l.s8.bf16 %v3674
    %v4019 = vunpack.c.l.s8.bf16 %v3675
    %v4020 = vunpack.c.l.s8.bf16 %v3676
    %v4021 = vunpack.c.h.s8.bf16 %v3669
    %v4022 = vunpack.c.h.s8.bf16 %v3670
    %v4023 = vunpack.c.h.s8.bf16 %v3671
    %v4024 = vunpack.c.h.s8.bf16 %v3672
    %v4025 = vunpack.c.h.s8.bf16 %v3673
    %v4026 = vunpack.c.h.s8.bf16 %v3674
    %v4027 = vunpack.c.h.s8.bf16 %v3675
    %v4028 = vunpack.c.h.s8.bf16 %v3676
    %v4029 = vunpack.c.l.s8.bf16 %v3677
    %v4030 = vunpack.c.l.s8.bf16 %v3678
    %v4031 = vunpack.c.l.s8.bf16 %v3679
    %v4032 = vunpack.c.l.s8.bf16 %v3680
    %v4033 = vunpack.c.l.s8.bf16 %v3681
    %v4034 = vunpack.c.l.s8.bf16 %v3682
    %v4035 = vunpack.c.l.s8.bf16 %v3683
    %v4036 = vunpack.c.l.s8.bf16 %v3684
    %v4037 = vunpack.c.h.s8.bf16 %v3677
    %v4038 = vunpack.c.h.s8.bf16 %v3678
    %v4039 = vunpack.c.h.s8.bf16 %v3679
    %v4040 = vunpack.c.h.s8.bf16 %v3680
    %v4041 = vunpack.c.h.s8.bf16 %v3681
    %v4042 = vunpack.c.h.s8.bf16 %v3682
    %v4043 = vunpack.c.h.s8.bf16 %v3683
    %v4044 = vunpack.c.h.s8.bf16 %v3684
    %v4045 = vunpack.c.l.s8.bf16 %v3685
    %v4046 = vunpack.c.l.s8.bf16 %v3686
    %v4047 = vunpack.c.l.s8.bf16 %v3687
    %v4048 = vunpack.c.l.s8.bf16 %v3688
    %v4049 = vunpack.c.l.s8.bf16 %v3689
    %v4050 = vunpack.c.l.s8.bf16 %v3690
    %v4051 = vunpack.c.l.s8.bf16 %v3691
    %v4052 = vunpack.c.l.s8.bf16 %v3692
    %v4053 = vunpack.c.h.s8.bf16 %v3685
    %v4054 = vunpack.c.h.s8.bf16 %v3686
    %v4055 = vunpack.c.h.s8.bf16 %v3687
    %v4056 = vunpack.c.h.s8.bf16 %v3688
    %v4057 = vunpack.c.h.s8.bf16 %v3689
    %v4058 = vunpack.c.h.s8.bf16 %v3690
    %v4059 = vunpack.c.h.s8.bf16 %v3691
    %v4060 = vunpack.c.h.s8.bf16 %v3692
    %v4061 = vunpack.c.l.s8.bf16 %v3693
    %v4062 = vunpack.c.l.s8.bf16 %v3694
    %v4063 = vunpack.c.l.s8.bf16 %v3695
    %v4064 = vunpack.c.l.s8.bf16 %v3696
    %v4065 = vunpack.c.l.s8.bf16 %v3697
    %v4066 = vunpack.c.l.s8.bf16 %v3698
    %v4067 = vunpack.c.l.s8.bf16 %v3699
    %v4068 = vunpack.c.l.s8.bf16 %v3700
    %v4069 = vunpack.c.h.s8.bf16 %v3693
    %v4070 = vunpack.c.h.s8.bf16 %v3694
    %v4071 = vunpack.c.h.s8.bf16 %v3695
    %v4072 = vunpack.c.h.s8.bf16 %v3696
    %v4073 = vunpack.c.h.s8.bf16 %v3697
    %v4074 = vunpack.c.h.s8.bf16 %v3698
    %v4075 = vunpack.c.h.s8.bf16 %v3699
    %v4076 = vunpack.c.h.s8.bf16 %v3700
    %v4077 = vunpack.c.l.s8.bf16 %v3701
    %v4078 = vunpack.c.l.s8.bf16 %v3702
    %v4079 = vunpack.c.l.s8.bf16 %v3703
    %v4080 = vunpack.c.l.s8.bf16 %v3704
    %v4081 = vunpack.c.l.s8.bf16 %v3705
    %v4082 = vunpack.c.l.s8.bf16 %v3706
    %v4083 = vunpack.c.l.s8.bf16 %v3707
    %v4084 = vunpack.c.l.s8.bf16 %v3708
    %v4085 = vunpack.c.h.s8.bf16 %v3701
    %v4086 = vunpack.c.h.s8.bf16 %v3702
    %v4087 = vunpack.c.h.s8.bf16 %v3703
    %v4088 = vunpack.c.h.s8.bf16 %v3704
    %v4089 = vunpack.c.h.s8.bf16 %v3705
    %v4090 = vunpack.c.h.s8.bf16 %v3706
    %v4091 = vunpack.c.h.s8.bf16 %v3707
    %v4092 = vunpack.c.h.s8.bf16 %v3708
    %v4093 = vunpack.c.l.s8.bf16 %v3709
    %v4094 = vunpack.c.l.s8.bf16 %v3710
    %v4095 = vunpack.c.l.s8.bf16 %v3711
    %v4096 = vunpack.c.l.s8.bf16 %v3712
    %v4097 = vunpack.c.l.s8.bf16 %v3713
    %v4098 = vunpack.c.l.s8.bf16 %v3714
    %v4099 = vunpack.c.l.s8.bf16 %v3715
    %v4100 = vunpack.c.l.s8.bf16 %v3716
    %v4101 = vunpack.c.h.s8.bf16 %v3709
    %v4102 = vunpack.c.h.s8.bf16 %v3710
    %v4103 = vunpack.c.h.s8.bf16 %v3711
    %v4104 = vunpack.c.h.s8.bf16 %v3712
    %v4105 = vunpack.c.h.s8.bf16 %v3713
    %v4106 = vunpack.c.h.s8.bf16 %v3714
    %v4107 = vunpack.c.h.s8.bf16 %v3715
    %v4108 = vunpack.c.h.s8.bf16 %v3716
    %v4109 = vunpack.c.l.s8.bf16 %v3717
    %v4110 = vunpack.c.l.s8.bf16 %v3718
    %v4111 = vunpack.c.l.s8.bf16 %v3719
    %v4112 = vunpack.c.l.s8.bf16 %v3720
    %v4113 = vunpack.c.l.s8.bf16 %v3721
    %v4114 = vunpack.c.l.s8.bf16 %v3722
    %v4115 = vunpack.c.l.s8.bf16 %v3723
    %v4116 = vunpack.c.l.s8.bf16 %v3724
    %v4117 = vunpack.c.h.s8.bf16 %v3717
    %v4118 = vunpack.c.h.s8.bf16 %v3718
    %v4119 = vunpack.c.h.s8.bf16 %v3719
    %v4120 = vunpack.c.h.s8.bf16 %v3720
    %v4121 = vunpack.c.h.s8.bf16 %v3721
    %v4122 = vunpack.c.h.s8.bf16 %v3722
    %v4123 = vunpack.c.h.s8.bf16 %v3723
    %v4124 = vunpack.c.h.s8.bf16 %v3724
    %v4125 = vunpack.c.l.s8.bf16 %v3725
    %v4126 = vunpack.c.l.s8.bf16 %v3726
    %v4127 = vunpack.c.l.s8.bf16 %v3727
    %v4128 = vunpack.c.l.s8.bf16 %v3728
    %v4129 = vunpack.c.l.s8.bf16 %v3729
    %v4130 = vunpack.c.l.s8.bf16 %v3730
    %v4131 = vunpack.c.l.s8.bf16 %v3731
    %v4132 = vunpack.c.l.s8.bf16 %v3732
    %v4133 = vunpack.c.h.s8.bf16 %v3725
    %v4134 = vunpack.c.h.s8.bf16 %v3726
    %v4135 = vunpack.c.h.s8.bf16 %v3727
    %v4136 = vunpack.c.h.s8.bf16 %v3728
    %v4137 = vunpack.c.h.s8.bf16 %v3729
    %v4138 = vunpack.c.h.s8.bf16 %v3730
    %v4139 = vunpack.c.h.s8.bf16 %v3731
    %v4140 = vunpack.c.h.s8.bf16 %v3732
    %v4141 = vunpack.c.l.s8.bf16 %v3733
    %v4142 = vunpack.c.l.s8.bf16 %v3734
    %v4143 = vunpack.c.l.s8.bf16 %v3735
    %v4144 = vunpack.c.l.s8.bf16 %v3736
    %v4145 = vunpack.c.l.s8.bf16 %v3737
    %v4146 = vunpack.c.l.s8.bf16 %v3738
    %v4147 = vunpack.c.l.s8.bf16 %v3739
    %v4148 = vunpack.c.l.s8.bf16 %v3740
    %v4149 = vunpack.c.h.s8.bf16 %v3733
    %v4150 = vunpack.c.h.s8.bf16 %v3734
    %v4151 = vunpack.c.h.s8.bf16 %v3735
    %v4152 = vunpack.c.h.s8.bf16 %v3736
    %v4153 = vunpack.c.h.s8.bf16 %v3737
    %v4154 = vunpack.c.h.s8.bf16 %v3738
    %v4155 = vunpack.c.h.s8.bf16 %v3739
    %v4156 = vunpack.c.h.s8.bf16 %v3740
    %v4157 = vunpack.c.l.s8.bf16 %v3741
    %v4158 = vunpack.c.l.s8.bf16 %v3742
    %v4159 = vunpack.c.l.s8.bf16 %v3743
    %v4160 = vunpack.c.l.s8.bf16 %v3744
    %v4161 = vunpack.c.l.s8.bf16 %v3745
    %v4162 = vunpack.c.l.s8.bf16 %v3746
    %v4163 = vunpack.c.l.s8.bf16 %v3747
    %v4164 = vunpack.c.l.s8.bf16 %v3748
    %v4165 = vunpack.c.h.s8.bf16 %v3741
    %v4166 = vunpack.c.h.s8.bf16 %v3742
    %v4167 = vunpack.c.h.s8.bf16 %v3743
    %v4168 = vunpack.c.h.s8.bf16 %v3744
    %v4169 = vunpack.c.h.s8.bf16 %v3745
    %v4170 = vunpack.c.h.s8.bf16 %v3746
    %v4171 = vunpack.c.h.s8.bf16 %v3747
    %v4172 = vunpack.c.h.s8.bf16 %v3748
    %v4173 = vunpack.c.l.s8.bf16 %v3749
    %v4174 = vunpack.c.l.s8.bf16 %v3750
    %v4175 = vunpack.c.l.s8.bf16 %v3751
    %v4176 = vunpack.c.l.s8.bf16 %v3752
    %v4177 = vunpack.c.l.s8.bf16 %v3753
    %v4178 = vunpack.c.l.s8.bf16 %v3754
    %v4179 = vunpack.c.l.s8.bf16 %v3755
    %v4180 = vunpack.c.l.s8.bf16 %v3756
    %v4181 = vunpack.c.h.s8.bf16 %v3749
    %v4182 = vunpack.c.h.s8.bf16 %v3750
    %v4183 = vunpack.c.h.s8.bf16 %v3751
    %v4184 = vunpack.c.h.s8.bf16 %v3752
    %v4185 = vunpack.c.h.s8.bf16 %v3753
    %v4186 = vunpack.c.h.s8.bf16 %v3754
    %v4187 = vunpack.c.h.s8.bf16 %v3755
    %v4188 = vunpack.c.h.s8.bf16 %v3756
    %v4189 = vunpack.c.l.s8.bf16 %v3757
    %v4190 = vunpack.c.l.s8.bf16 %v3758
    %v4191 = vunpack.c.l.s8.bf16 %v3759
    %v4192 = vunpack.c.l.s8.bf16 %v3760
    %v4193 = vunpack.c.l.s8.bf16 %v3761
    %v4194 = vunpack.c.l.s8.bf16 %v3762
    %v4195 = vunpack.c.l.s8.bf16 %v3763
    %v4196 = vunpack.c.l.s8.bf16 %v3764
    %v4197 = vunpack.c.h.s8.bf16 %v3757
    %v4198 = vunpack.c.h.s8.bf16 %v3758
    %v4199 = vunpack.c.h.s8.bf16 %v3759
    %v4200 = vunpack.c.h.s8.bf16 %v3760
    %v4201 = vunpack.c.h.s8.bf16 %v3761
    %v4202 = vunpack.c.h.s8.bf16 %v3762
    %v4203 = vunpack.c.h.s8.bf16 %v3763
    %v4204 = vunpack.c.h.s8.bf16 %v3764
    %v4205 = vunpack.c.l.s8.bf16 %v3765
    %v4206 = vunpack.c.l.s8.bf16 %v3766
    %v4207 = vunpack.c.l.s8.bf16 %v3767
    %v4208 = vunpack.c.l.s8.bf16 %v3768
    %v4209 = vunpack.c.l.s8.bf16 %v3769
    %v4210 = vunpack.c.l.s8.bf16 %v3770
    %v4211 = vunpack.c.l.s8.bf16 %v3771
    %v4212 = vunpack.c.l.s8.bf16 %v3772
    %v4213 = vunpack.c.h.s8.bf16 %v3765
    %v4214 = vunpack.c.h.s8.bf16 %v3766
    %v4215 = vunpack.c.h.s8.bf16 %v3767
    %v4216 = vunpack.c.h.s8.bf16 %v3768
    %v4217 = vunpack.c.h.s8.bf16 %v3769
    %v4218 = vunpack.c.h.s8.bf16 %v3770
    %v4219 = vunpack.c.h.s8.bf16 %v3771
    %v4220 = vunpack.c.h.s8.bf16 %v3772
    %v4221 = vunpack.c.l.s8.bf16 %v3773
    %v4222 = vunpack.c.l.s8.bf16 %v3774
    %v4223 = vunpack.c.l.s8.bf16 %v3775
    %v4224 = vunpack.c.l.s8.bf16 %v3776
    %v4225 = vunpack.c.l.s8.bf16 %v3777
    %v4226 = vunpack.c.l.s8.bf16 %v3778
    %v4227 = vunpack.c.l.s8.bf16 %v3779
    %v4228 = vunpack.c.l.s8.bf16 %v3780
    %v4229 = vunpack.c.h.s8.bf16 %v3773
    %v4230 = vunpack.c.h.s8.bf16 %v3774
    %v4231 = vunpack.c.h.s8.bf16 %v3775
    %v4232 = vunpack.c.h.s8.bf16 %v3776
    %v4233 = vunpack.c.h.s8.bf16 %v3777
    %v4234 = vunpack.c.h.s8.bf16 %v3778
    %v4235 = vunpack.c.h.s8.bf16 %v3779
    %v4236 = vunpack.c.h.s8.bf16 %v3780
    %v4237 = vunpack.c.l.s8.bf16 %v3781
    %v4238 = vunpack.c.l.s8.bf16 %v3782
    %v4239 = vunpack.c.l.s8.bf16 %v3783
    %v4240 = vunpack.c.l.s8.bf16 %v3784
    %v4241 = vunpack.c.l.s8.bf16 %v3785
    %v4242 = vunpack.c.l.s8.bf16 %v3786
    %v4243 = vunpack.c.l.s8.bf16 %v3787
    %v4244 = vunpack.c.l.s8.bf16 %v3788
    %v4245 = vunpack.c.h.s8.bf16 %v3781
    %v4246 = vunpack.c.h.s8.bf16 %v3782
    %v4247 = vunpack.c.h.s8.bf16 %v3783
    %v4248 = vunpack.c.h.s8.bf16 %v3784
    %v4249 = vunpack.c.h.s8.bf16 %v3785
    %v4250 = vunpack.c.h.s8.bf16 %v3786
    %v4251 = vunpack.c.h.s8.bf16 %v3787
    %v4252 = vunpack.c.h.s8.bf16 %v3788
    %v4253 = vunpack.c.l.s8.bf16 %v3789
    %v4254 = vunpack.c.l.s8.bf16 %v3790
    %v4255 = vunpack.c.l.s8.bf16 %v3791
    %v4256 = vunpack.c.l.s8.bf16 %v3792
    %v4257 = vunpack.c.l.s8.bf16 %v3793
    %v4258 = vunpack.c.l.s8.bf16 %v3794
    %v4259 = vunpack.c.l.s8.bf16 %v3795
    %v4260 = vunpack.c.l.s8.bf16 %v3796
    %v4261 = vunpack.c.h.s8.bf16 %v3789
    %v4262 = vunpack.c.h.s8.bf16 %v3790
    %v4263 = vunpack.c.h.s8.bf16 %v3791
    %v4264 = vunpack.c.h.s8.bf16 %v3792
    %v4265 = vunpack.c.h.s8.bf16 %v3793
    %v4266 = vunpack.c.h.s8.bf16 %v3794
    %v4267 = vunpack.c.h.s8.bf16 %v3795
    %v4268 = vunpack.c.h.s8.bf16 %v3796
    %v4269 = vunpack.c.l.s8.bf16 %v3797
    %v4270 = vunpack.c.l.s8.bf16 %v3798
    %v4271 = vunpack.c.l.s8.bf16 %v3799
    %v4272 = vunpack.c.l.s8.bf16 %v3800
    %v4273 = vunpack.c.l.s8.bf16 %v3801
    %v4274 = vunpack.c.l.s8.bf16 %v3802
    %v4275 = vunpack.c.l.s8.bf16 %v3803
    %v4276 = vunpack.c.l.s8.bf16 %v3804
    %v4277 = vunpack.c.h.s8.bf16 %v3797
    %v4278 = vunpack.c.h.s8.bf16 %v3798
    %v4279 = vunpack.c.h.s8.bf16 %v3799
    %v4280 = vunpack.c.h.s8.bf16 %v3800
    %v4281 = vunpack.c.h.s8.bf16 %v3801
    %v4282 = vunpack.c.h.s8.bf16 %v3802
    %v4283 = vunpack.c.h.s8.bf16 %v3803
    %v4284 = vunpack.c.h.s8.bf16 %v3804
    %v4285 = vunpack.c.l.s8.bf16 %v3805
    %v4286 = vunpack.c.l.s8.bf16 %v3806
    %v4287 = vunpack.c.l.s8.bf16 %v3807
    %v4288 = vunpack.c.l.s8.bf16 %v3808
    %v4289 = vunpack.c.l.s8.bf16 %v3809
    %v4290 = vunpack.c.l.s8.bf16 %v3810
    %v4291 = vunpack.c.l.s8.bf16 %v3811
    %v4292 = vunpack.c.l.s8.bf16 %v3812
    %v4293 = vunpack.c.h.s8.bf16 %v3805
    %v4294 = vunpack.c.h.s8.bf16 %v3806
    %v4295 = vunpack.c.h.s8.bf16 %v3807
    %v4296 = vunpack.c.h.s8.bf16 %v3808
    %v4297 = vunpack.c.h.s8.bf16 %v3809
    %v4298 = vunpack.c.h.s8.bf16 %v3810
    %v4299 = vunpack.c.h.s8.bf16 %v3811
    %v4300 = vunpack.c.h.s8.bf16 %v3812
    %v4301 = vunpack.c.l.s8.bf16 %v3813
    %v4302 = vunpack.c.l.s8.bf16 %v3814
    %v4303 = vunpack.c.l.s8.bf16 %v3815
    %v4304 = vunpack.c.l.s8.bf16 %v3816
    %v4305 = vunpack.c.l.s8.bf16 %v3817
    %v4306 = vunpack.c.l.s8.bf16 %v3818
    %v4307 = vunpack.c.l.s8.bf16 %v3819
    %v4308 = vunpack.c.l.s8.bf16 %v3820
    %v4309 = vunpack.c.h.s8.bf16 %v3813
    %v4310 = vunpack.c.h.s8.bf16 %v3814
    %v4311 = vunpack.c.h.s8.bf16 %v3815
    %v4312 = vunpack.c.h.s8.bf16 %v3816
    %v4313 = vunpack.c.h.s8.bf16 %v3817
    %v4314 = vunpack.c.h.s8.bf16 %v3818
    %v4315 = vunpack.c.h.s8.bf16 %v3819
    %v4316 = vunpack.c.h.s8.bf16 %v3820
    %v4317 = vunpack.c.l.s8.bf16 %v3821
    %v4318 = vunpack.c.l.s8.bf16 %v3822
    %v4319 = vunpack.c.l.s8.bf16 %v3823
    %v4320 = vunpack.c.l.s8.bf16 %v3824
    %v4321 = vunpack.c.l.s8.bf16 %v3825
    %v4322 = vunpack.c.l.s8.bf16 %v3826
    %v4323 = vunpack.c.l.s8.bf16 %v3827
    %v4324 = vunpack.c.l.s8.bf16 %v3828
    %v4325 = vunpack.c.h.s8.bf16 %v3821
    %v4326 = vunpack.c.h.s8.bf16 %v3822
    %v4327 = vunpack.c.h.s8.bf16 %v3823
    %v4328 = vunpack.c.h.s8.bf16 %v3824
    %v4329 = vunpack.c.h.s8.bf16 %v3825
    %v4330 = vunpack.c.h.s8.bf16 %v3826
    %v4331 = vunpack.c.h.s8.bf16 %v3827
    %v4332 = vunpack.c.h.s8.bf16 %v3828
    %v4333 = vunpack.c.l.s8.bf16 %v3829
    %v4334 = vunpack.c.l.s8.bf16 %v3830
    %v4335 = vunpack.c.l.s8.bf16 %v3831
    %v4336 = vunpack.c.l.s8.bf16 %v3832
    %v4337 = vunpack.c.l.s8.bf16 %v3833
    %v4338 = vunpack.c.l.s8.bf16 %v3834
    %v4339 = vunpack.c.l.s8.bf16 %v3835
    %v4340 = vunpack.c.l.s8.bf16 %v3836
    %v4341 = vunpack.c.h.s8.bf16 %v3829
    %v4342 = vunpack.c.h.s8.bf16 %v3830
    %v4343 = vunpack.c.h.s8.bf16 %v3831
    %v4344 = vunpack.c.h.s8.bf16 %v3832
    %v4345 = vunpack.c.h.s8.bf16 %v3833
    %v4346 = vunpack.c.h.s8.bf16 %v3834
    %v4347 = vunpack.c.h.s8.bf16 %v3835
    %v4348 = vunpack.c.h.s8.bf16 %v3836
    %v4349 = vunpack.c.l.s8.bf16 %v3837
    %v4350 = vunpack.c.l.s8.bf16 %v3838
    %v4351 = vunpack.c.l.s8.bf16 %v3839
    %v4352 = vunpack.c.l.s8.bf16 %v3840
    %v4353 = vunpack.c.l.s8.bf16 %v3841
    %v4354 = vunpack.c.l.s8.bf16 %v3842
    %v4355 = vunpack.c.l.s8.bf16 %v3843
    %v4356 = vunpack.c.l.s8.bf16 %v3844
    %v4357 = vunpack.c.h.s8.bf16 %v3837
    %v4358 = vunpack.c.h.s8.bf16 %v3838
    %v4359 = vunpack.c.h.s8.bf16 %v3839
    %v4360 = vunpack.c.h.s8.bf16 %v3840
    %v4361 = vunpack.c.h.s8.bf16 %v3841
    %v4362 = vunpack.c.h.s8.bf16 %v3842
    %v4363 = vunpack.c.h.s8.bf16 %v3843
    %v4364 = vunpack.c.h.s8.bf16 %v3844
    %v4365 = vunpack.c.l.s8.bf16 %v3845
    %v4366 = vunpack.c.l.s8.bf16 %v3846
    %v4367 = vunpack.c.l.s8.bf16 %v3847
    %v4368 = vunpack.c.l.s8.bf16 %v3848
    %v4369 = vunpack.c.l.s8.bf16 %v3849
    %v4370 = vunpack.c.l.s8.bf16 %v3850
    %v4371 = vunpack.c.l.s8.bf16 %v3851
    %v4372 = vunpack.c.l.s8.bf16 %v3852
    %v4373 = vunpack.c.h.s8.bf16 %v3845
    %v4374 = vunpack.c.h.s8.bf16 %v3846
    %v4375 = vunpack.c.h.s8.bf16 %v3847
    %v4376 = vunpack.c.h.s8.bf16 %v3848
    %v4377 = vunpack.c.h.s8.bf16 %v3849
    %v4378 = vunpack.c.h.s8.bf16 %v3850
    %v4379 = vunpack.c.h.s8.bf16 %v3851
    %v4380 = vunpack.c.h.s8.bf16 %v3852
    %v4381 = vunpack.c.l.s8.bf16 %v3853
    %v4382 = vunpack.c.l.s8.bf16 %v3854
    %v4383 = vunpack.c.l.s8.bf16 %v3855
    %v4384 = vunpack.c.l.s8.bf16 %v3856
    %v4385 = vunpack.c.l.s8.bf16 %v3857
    %v4386 = vunpack.c.l.s8.bf16 %v3858
    %v4387 = vunpack.c.l.s8.bf16 %v3859
    %v4388 = vunpack.c.l.s8.bf16 %v3860
    %v4389 = vunpack.c.h.s8.bf16 %v3853
    %v4390 = vunpack.c.h.s8.bf16 %v3854
    %v4391 = vunpack.c.h.s8.bf16 %v3855
    %v4392 = vunpack.c.h.s8.bf16 %v3856
    %v4393 = vunpack.c.h.s8.bf16 %v3857
    %v4394 = vunpack.c.h.s8.bf16 %v3858
    %v4395 = vunpack.c.h.s8.bf16 %v3859
    %v4396 = vunpack.c.h.s8.bf16 %v3860
    %v4397 = vunpack.c.l.s8.bf16 %v3861
    %v4398 = vunpack.c.l.s8.bf16 %v3862
    %v4399 = vunpack.c.l.s8.bf16 %v3863
    %v4400 = vunpack.c.l.s8.bf16 %v3864
    %v4401 = vunpack.c.l.s8.bf16 %v3865
    %v4402 = vunpack.c.l.s8.bf16 %v3866
    %v4403 = vunpack.c.l.s8.bf16 %v3867
    %v4404 = vunpack.c.l.s8.bf16 %v3868
    %v4405 = vunpack.c.h.s8.bf16 %v3861
    %v4406 = vunpack.c.h.s8.bf16 %v3862
    %v4407 = vunpack.c.h.s8.bf16 %v3863
    %v4408 = vunpack.c.h.s8.bf16 %v3864
    %v4409 = vunpack.c.h.s8.bf16 %v3865
    %v4410 = vunpack.c.h.s8.bf16 %v3866
    %v4411 = vunpack.c.h.s8.bf16 %v3867
    %v4412 = vunpack.c.h.s8.bf16 %v3868
    %v4413 = vunpack.c.l.s8.bf16 %v3869
    %v4414 = vunpack.c.l.s8.bf16 %v3870
    %v4415 = vunpack.c.l.s8.bf16 %v3871
    %v4416 = vunpack.c.l.s8.bf16 %v3872
    %v4417 = vunpack.c.l.s8.bf16 %v3873
    %v4418 = vunpack.c.l.s8.bf16 %v3874
    %v4419 = vunpack.c.l.s8.bf16 %v3875
    %v4420 = vunpack.c.l.s8.bf16 %v3876
    %v4421 = vunpack.c.h.s8.bf16 %v3869
    %v4422 = vunpack.c.h.s8.bf16 %v3870
    %v4423 = vunpack.c.h.s8.bf16 %v3871
    %v4424 = vunpack.c.h.s8.bf16 %v3872
    %v4425 = vunpack.c.h.s8.bf16 %v3873
    %v4426 = vunpack.c.h.s8.bf16 %v3874
    %v4427 = vunpack.c.h.s8.bf16 %v3875
    %v4428 = vunpack.c.h.s8.bf16 %v3876
    %v4429 = vunpack.c.l.s8.bf16 %v3877
    %v4430 = vunpack.c.l.s8.bf16 %v3878
    %v4431 = vunpack.c.l.s8.bf16 %v3879
    %v4432 = vunpack.c.l.s8.bf16 %v3880
    %v4433 = vunpack.c.l.s8.bf16 %v3881
    %v4434 = vunpack.c.l.s8.bf16 %v3882
    %v4435 = vunpack.c.l.s8.bf16 %v3883
    %v4436 = vunpack.c.l.s8.bf16 %v3884
    %v4437 = vunpack.c.h.s8.bf16 %v3877
    %v4438 = vunpack.c.h.s8.bf16 %v3878
    %v4439 = vunpack.c.h.s8.bf16 %v3879
    %v4440 = vunpack.c.h.s8.bf16 %v3880
    %v4441 = vunpack.c.h.s8.bf16 %v3881
    %v4442 = vunpack.c.h.s8.bf16 %v3882
    %v4443 = vunpack.c.h.s8.bf16 %v3883
    %v4444 = vunpack.c.h.s8.bf16 %v3884
    %v4445 = vunpack.c.l.s8.bf16 %v3885
    %v4446 = vunpack.c.l.s8.bf16 %v3886
    %v4447 = vunpack.c.l.s8.bf16 %v3887
    %v4448 = vunpack.c.l.s8.bf16 %v3888
    %v4449 = vunpack.c.l.s8.bf16 %v3889
    %v4450 = vunpack.c.l.s8.bf16 %v3890
    %v4451 = vunpack.c.l.s8.bf16 %v3891
    %v4452 = vunpack.c.l.s8.bf16 %v3892
    %v4453 = vunpack.c.h.s8.bf16 %v3885
    %v4454 = vunpack.c.h.s8.bf16 %v3886
    %v4455 = vunpack.c.h.s8.bf16 %v3887
    %v4456 = vunpack.c.h.s8.bf16 %v3888
    %v4457 = vunpack.c.h.s8.bf16 %v3889
    %v4458 = vunpack.c.h.s8.bf16 %v3890
    %v4459 = vunpack.c.h.s8.bf16 %v3891
    %v4460 = vunpack.c.h.s8.bf16 %v3892
    %v4461 = vunpack.c.l.s8.bf16 %v3893
    %v4462 = vunpack.c.l.s8.bf16 %v3894
    %v4463 = vunpack.c.l.s8.bf16 %v3895
    %v4464 = vunpack.c.l.s8.bf16 %v3896
    %v4465 = vunpack.c.l.s8.bf16 %v3897
    %v4466 = vunpack.c.l.s8.bf16 %v3898
    %v4467 = vunpack.c.l.s8.bf16 %v3899
    %v4468 = vunpack.c.l.s8.bf16 %v3900
    %v4469 = vunpack.c.h.s8.bf16 %v3893
    %v4470 = vunpack.c.h.s8.bf16 %v3894
    %v4471 = vunpack.c.h.s8.bf16 %v3895
    %v4472 = vunpack.c.h.s8.bf16 %v3896
    %v4473 = vunpack.c.h.s8.bf16 %v3897
    %v4474 = vunpack.c.h.s8.bf16 %v3898
    %v4475 = vunpack.c.h.s8.bf16 %v3899
    %v4476 = vunpack.c.h.s8.bf16 %v3900
    %v4477 = vunpack.c.l.s8.bf16 %v3901
    %v4478 = vunpack.c.l.s8.bf16 %v3902
    %v4479 = vunpack.c.l.s8.bf16 %v3903
    %v4480 = vunpack.c.l.s8.bf16 %v3904
    %v4481 = vunpack.c.l.s8.bf16 %v3905
    %v4482 = vunpack.c.l.s8.bf16 %v3906
    %v4483 = vunpack.c.l.s8.bf16 %v3907
    %v4484 = vunpack.c.l.s8.bf16 %v3908
    %v4485 = vunpack.c.h.s8.bf16 %v3901
    %v4486 = vunpack.c.h.s8.bf16 %v3902
    %v4487 = vunpack.c.h.s8.bf16 %v3903
    %v4488 = vunpack.c.h.s8.bf16 %v3904
    %v4489 = vunpack.c.h.s8.bf16 %v3905
    %v4490 = vunpack.c.h.s8.bf16 %v3906
    %v4491 = vunpack.c.h.s8.bf16 %v3907
    %v4492 = vunpack.c.h.s8.bf16 %v3908
    %v4493 = vunpack.c.l.s8.bf16 %v3909
    %v4494 = vunpack.c.l.s8.bf16 %v3910
    %v4495 = vunpack.c.l.s8.bf16 %v3911
    %v4496 = vunpack.c.l.s8.bf16 %v3912
    %v4497 = vunpack.c.l.s8.bf16 %v3913
    %v4498 = vunpack.c.l.s8.bf16 %v3914
    %v4499 = vunpack.c.l.s8.bf16 %v3915
    %v4500 = vunpack.c.l.s8.bf16 %v3916
    %v4501 = vunpack.c.h.s8.bf16 %v3909
    %v4502 = vunpack.c.h.s8.bf16 %v3910
    %v4503 = vunpack.c.h.s8.bf16 %v3911
    %v4504 = vunpack.c.h.s8.bf16 %v3912
    %v4505 = vunpack.c.h.s8.bf16 %v3913
    %v4506 = vunpack.c.h.s8.bf16 %v3914
    %v4507 = vunpack.c.h.s8.bf16 %v3915
    %v4508 = vunpack.c.h.s8.bf16 %v3916
    %v4509 = vunpack.c.l.s8.bf16 %v3917
    %v4510 = vunpack.c.l.s8.bf16 %v3918
    %v4511 = vunpack.c.l.s8.bf16 %v3919
    %v4512 = vunpack.c.l.s8.bf16 %v3920
    %v4513 = vunpack.c.l.s8.bf16 %v3921
    %v4514 = vunpack.c.l.s8.bf16 %v3922
    %v4515 = vunpack.c.l.s8.bf16 %v3923
    %v4516 = vunpack.c.l.s8.bf16 %v3924
    %v4517 = vunpack.c.h.s8.bf16 %v3917
    %v4518 = vunpack.c.h.s8.bf16 %v3918
    %v4519 = vunpack.c.h.s8.bf16 %v3919
    %v4520 = vunpack.c.h.s8.bf16 %v3920
    %v4521 = vunpack.c.h.s8.bf16 %v3921
    %v4522 = vunpack.c.h.s8.bf16 %v3922
    %v4523 = vunpack.c.h.s8.bf16 %v3923
    %v4524 = vunpack.c.h.s8.bf16 %v3924
    %v4525 = vunpack.c.l.s8.bf16 %v3925
    %v4526 = vunpack.c.l.s8.bf16 %v3926
    %v4527 = vunpack.c.l.s8.bf16 %v3927
    %v4528 = vunpack.c.l.s8.bf16 %v3928
    %v4529 = vunpack.c.l.s8.bf16 %v3929
    %v4530 = vunpack.c.l.s8.bf16 %v3930
    %v4531 = vunpack.c.l.s8.bf16 %v3931
    %v4532 = vunpack.c.l.s8.bf16 %v3932
    %v4533 = vunpack.c.h.s8.bf16 %v3925
    %v4534 = vunpack.c.h.s8.bf16 %v3926
    %v4535 = vunpack.c.h.s8.bf16 %v3927
    %v4536 = vunpack.c.h.s8.bf16 %v3928
    %v4537 = vunpack.c.h.s8.bf16 %v3929
    %v4538 = vunpack.c.h.s8.bf16 %v3930
    %v4539 = vunpack.c.h.s8.bf16 %v3931
    %v4540 = vunpack.c.h.s8.bf16 %v3932
    %v4541 = vunpack.c.l.s8.bf16 %v3933
    %v4542 = vunpack.c.l.s8.bf16 %v3934
    %v4543 = vunpack.c.l.s8.bf16 %v3935
    %v4544 = vunpack.c.l.s8.bf16 %v3936
    %v4545 = vunpack.c.l.s8.bf16 %v3937
    %v4546 = vunpack.c.l.s8.bf16 %v3938
    %v4547 = vunpack.c.l.s8.bf16 %v3939
    %v4548 = vunpack.c.l.s8.bf16 %v3940
    %v4549 = vunpack.c.h.s8.bf16 %v3933
    %v4550 = vunpack.c.h.s8.bf16 %v3934
    %v4551 = vunpack.c.h.s8.bf16 %v3935
    %v4552 = vunpack.c.h.s8.bf16 %v3936
    %v4553 = vunpack.c.h.s8.bf16 %v3937
    %v4554 = vunpack.c.h.s8.bf16 %v3938
    %v4555 = vunpack.c.h.s8.bf16 %v3939
    %v4556 = vunpack.c.h.s8.bf16 %v3940
    %v4557 = vunpack.c.l.s8.bf16 %v3941
    %v4558 = vunpack.c.l.s8.bf16 %v3942
    %v4559 = vunpack.c.l.s8.bf16 %v3943
    %v4560 = vunpack.c.l.s8.bf16 %v3944
    %v4561 = vunpack.c.l.s8.bf16 %v3945
    %v4562 = vunpack.c.l.s8.bf16 %v3946
    %v4563 = vunpack.c.l.s8.bf16 %v3947
    %v4564 = vunpack.c.l.s8.bf16 %v3948
    %v4565 = vunpack.c.h.s8.bf16 %v3941
    %v4566 = vunpack.c.h.s8.bf16 %v3942
    %v4567 = vunpack.c.h.s8.bf16 %v3943
    %v4568 = vunpack.c.h.s8.bf16 %v3944
    %v4569 = vunpack.c.h.s8.bf16 %v3945
    %v4570 = vunpack.c.h.s8.bf16 %v3946
    %v4571 = vunpack.c.h.s8.bf16 %v3947
    %v4572 = vunpack.c.h.s8.bf16 %v3948
    %v4573 = vunpack.c.l.s8.bf16 %v3949
    %v4574 = vunpack.c.l.s8.bf16 %v3950
    %v4575 = vunpack.c.l.s8.bf16 %v3951
    %v4576 = vunpack.c.l.s8.bf16 %v3952
    %v4577 = vunpack.c.l.s8.bf16 %v3953
    %v4578 = vunpack.c.l.s8.bf16 %v3954
    %v4579 = vunpack.c.l.s8.bf16 %v3955
    %v4580 = vunpack.c.l.s8.bf16 %v3956
    %v4581 = vunpack.c.h.s8.bf16 %v3949
    %v4582 = vunpack.c.h.s8.bf16 %v3950
    %v4583 = vunpack.c.h.s8.bf16 %v3951
    %v4584 = vunpack.c.h.s8.bf16 %v3952
    %v4585 = vunpack.c.h.s8.bf16 %v3953
    %v4586 = vunpack.c.h.s8.bf16 %v3954
    %v4587 = vunpack.c.h.s8.bf16 %v3955
    %v4588 = vunpack.c.h.s8.bf16 %v3956
    %v4589 = vunpack.c.l.s8.bf16 %v3957
    %v4590 = vunpack.c.l.s8.bf16 %v3958
    %v4591 = vunpack.c.l.s8.bf16 %v3959
    %v4592 = vunpack.c.l.s8.bf16 %v3960
    %v4593 = vunpack.c.l.s8.bf16 %v3961
    %v4594 = vunpack.c.l.s8.bf16 %v3962
    %v4595 = vunpack.c.l.s8.bf16 %v3963
    %v4596 = vunpack.c.l.s8.bf16 %v3964
    %v4597 = vunpack.c.h.s8.bf16 %v3957
    %v4598 = vunpack.c.h.s8.bf16 %v3958
    %v4599 = vunpack.c.h.s8.bf16 %v3959
    %v4600 = vunpack.c.h.s8.bf16 %v3960
    %v4601 = vunpack.c.h.s8.bf16 %v3961
    %v4602 = vunpack.c.h.s8.bf16 %v3962
    %v4603 = vunpack.c.h.s8.bf16 %v3963
    %v4604 = vunpack.c.h.s8.bf16 %v3964
    %4605 = vmatprep.subr.bf16.mxu0 %v3966
    %4606 = vmatpush1.bf16.msra.mxu0 %v3965
    %4607 = vmatprep.subr.bf16.mxu0 %v3974
    %4608 = vmatpush1.bf16.msra.mxu0 %v3973
    %4609 = vmatprep.subr.bf16.mxu0 %v3982
    %4610 = vmatpush1.bf16.msra.mxu0 %v3981
    %4611 = vmatprep.subr.bf16.mxu0 %v3990
    %4612 = vmatpush1.bf16.msra.mxu0 %v3989
    %4613 = vmatprep.subr.bf16.mxu0 %v3998
    %4614 = vmatpush1.bf16.msra.mxu0 %v3997
    %4615 = vmatprep.subr.bf16.mxu0 %v4006
    %4616 = vmatpush1.bf16.msra.mxu0 %v4005
    %4617 = vmatprep.subr.bf16.mxu0 %v4014
    %4618 = vmatpush1.bf16.msra.mxu0 %v4013
    %4619 = vmatprep.subr.bf16.mxu0 %v4022
    %4620 = vmatpush1.bf16.msra.mxu0 %v4021
    %4621 = vmatprep.subr.bf16.mxu0 %v4030
    %4622 = vmatpush1.bf16.msra.mxu0 %v4029
    %4623 = vmatprep.subr.bf16.mxu0 %v4038
    %4624 = vmatpush1.bf16.msra.mxu0 %v4037
    %4625 = vmatprep.subr.bf16.mxu0 %v4046
    %4626 = vmatpush1.bf16.msra.mxu0 %v4045
    %4627 = vmatprep.subr.bf16.mxu0 %v4054
    %4628 = vmatpush1.bf16.msra.mxu0 %v4053
    %4629 = vmatprep.subr.bf16.mxu0 %v4062
    %4630 = vmatpush1.bf16.msra.mxu0 %v4061
    %4631 = vmatprep.subr.bf16.mxu0 %v4070
    %4632 = vmatpush1.bf16.msra.mxu0 %v4069
    %4633 = vmatprep.subr.bf16.mxu0 %v4078
    %4634 = vmatpush1.bf16.msra.mxu0 %v4077
    %4635 = vmatprep.subr.bf16.mxu0 %v4086
    %4636 = vmatpush1.bf16.msra.mxu0 %v4085
    %4637 = vmatprep.mubr.bf16.mxu0 %v3636
    %4638 = vmatmul.mubr.bf16.gmra.mrb[0].mxu0 %v3635
    %v4639 = vpop.f32.mrb[0].mxu0
    %v4640 = vadd.f32 0.0, %v4639
    %v4641 = vpop.f32.mrb[0].mxu0
    %v4642 = vadd.f32 0.0, %v4641
    %v4643 = vpop.f32.mrb[0].mxu0
    %v4644 = vpop.f32.mrb[0].mxu0
    %4645 = vdwg.mxu0
    %4646 = vmatprep.subr.bf16.mxu0 %v4094
    %4647 = vmatpush1.bf16.msra.mxu0 %v4093
    %4648 = vmatprep.subr.bf16.mxu0 %v4102
    %4649 = vmatpush1.bf16.msra.mxu0 %v4101
    %4650 = vmatprep.subr.bf16.mxu0 %v4110
    %4651 = vmatpush1.bf16.msra.mxu0 %v4109
    %4652 = vmatprep.subr.bf16.mxu0 %v4118
    %4653 = vmatpush1.bf16.msra.mxu0 %v4117
    %4654 = vmatprep.subr.bf16.mxu0 %v4126
    %4655 = vmatpush1.bf16.msra.mxu0 %v4125
    %4656 = vmatprep.subr.bf16.mxu0 %v4134
    %4657 = vmatpush1.bf16.msra.mxu0 %v4133
    %4658 = vmatprep.subr.bf16.mxu0 %v4142
    %4659 = vmatpush1.bf16.msra.mxu0 %v4141
    %4660 = vmatprep.subr.bf16.mxu0 %v4150
    %4661 = vmatpush1.bf16.msra.mxu0 %v4149
    %4662 = vmatprep.subr.bf16.mxu0 %v4158
    %4663 = vmatpush1.bf16.msra.mxu0 %v4157
    %4664 = vmatprep.subr.bf16.mxu0 %v4166
    %4665 = vmatpush1.bf16.msra.mxu0 %v4165
    %4666 = vmatprep.subr.bf16.mxu0 %v4174
    %4667 = vmatpush1.bf16.msra.mxu0 %v4173
    %4668 = vmatprep.subr.bf16.mxu0 %v4182
    %4669 = vmatpush1.bf16.msra.mxu0 %v4181
    %4670 = vmatprep.subr.bf16.mxu0 %v4190
    %4671 = vmatpush1.bf16.msra.mxu0 %v4189
    %4672 = vmatprep.subr.bf16.mxu0 %v4198
    %4673 = vmatpush1.bf16.msra.mxu0 %v4197
    %4674 = vmatprep.subr.bf16.mxu0 %v4206
    %4675 = vmatpush1.bf16.msra.mxu0 %v4205
    %4676 = vmatprep.subr.bf16.mxu0 %v4214
    %4677 = vmatpush1.bf16.msra.mxu0 %v4213
    %4678 = vmatprep.mubr.bf16.mxu0 %v3638
    %4679 = vmatmul.mubr.bf16.gmra.mrb[0].mxu0 %v3637
    %v4680 = vpop.f32.mrb[0].mxu0
    %v4681 = vadd.f32 %v4640, %v4680
    %v4682 = vpop.f32.mrb[0].mxu0
    %v4683 = vadd.f32 %v4642, %v4682
    %v4684 = vpop.f32.mrb[0].mxu0
    %v4685 = vpop.f32.mrb[0].mxu0
    %4686 = vdwg.mxu0
    %4687 = vmatprep.subr.bf16.mxu0 %v4222
    %4688 = vmatpush1.bf16.msra.mxu0 %v4221
    %4689 = vmatprep.subr.bf16.mxu0 %v4230
    %4690 = vmatpush1.bf16.msra.mxu0 %v4229
    %4691 = vmatprep.subr.bf16.mxu0 %v4238
    %4692 = vmatpush1.bf16.msra.mxu0 %v4237
    %4693 = vmatprep.subr.bf16.mxu0 %v4246
    %4694 = vmatpush1.bf16.msra.mxu0 %v4245
    %4695 = vmatprep.subr.bf16.mxu0 %v4254
    %4696 = vmatpush1.bf16.msra.mxu0 %v4253
    %4697 = vmatprep.subr.bf16.mxu0 %v4262
    %4698 = vmatpush1.bf16.msra.mxu0 %v4261
    %4699 = vmatprep.subr.bf16.mxu0 %v4270
    %4700 = vmatpush1.bf16.msra.mxu0 %v4269
    %4701 = vmatprep.subr.bf16.mxu0 %v4278
    %4702 = vmatpush1.bf16.msra.mxu0 %v4277
    %4703 = vmatprep.subr.bf16.mxu0 %v4286
    %4704 = vmatpush1.bf16.msra.mxu0 %v4285
    %4705 = vmatprep.subr.bf16.mxu0 %v4294
    %4706 = vmatpush1.bf16.msra.mxu0 %v4293
    %4707 = vmatprep.subr.bf16.mxu0 %v4302
    %4708 = vmatpush1.bf16.msra.mxu0 %v4301
    %4709 = vmatprep.subr.bf16.mxu0 %v4310
    %4710 = vmatpush1.bf16.msra.mxu0 %v4309
    %4711 = vmatprep.subr.bf16.mxu0 %v4318
    %4712 = vmatpush1.bf16.msra.mxu0 %v4317
    %4713 = vmatprep.subr.bf16.mxu0 %v4326
    %4714 = vmatpush1.bf16.msra.mxu0 %v4325
    %4715 = vmatprep.subr.bf16.mxu0 %v4334
    %4716 = vmatpush1.bf16.msra.mxu0 %v4333
    %4717 = vmatprep.subr.bf16.mxu0 %v4342
    %4718 = vmatpush1.bf16.msra.mxu0 %v4341
    %4719 = vmatprep.mubr.bf16.mxu0 %v3640
    %4720 = vmatmul.mubr.bf16.gmra.mrb[0].mxu0 %v3639
    %v4721 = vpop.f32.mrb[0].mxu0
    %v4722 = vadd.f32 %v4681, %v4721
    %v4723 = vpop.f32.mrb[0].mxu0
    %v4724 = vadd.f32 %v4683, %v4723
    %v4725 = vpop.f32.mrb[0].mxu0
    %v4726 = vpop.f32.mrb[0].mxu0
    %4727 = vdwg.mxu0
    %4728 = vmatprep.subr.bf16.mxu0 %v4350
    %4729 = vmatpush1.bf16.msra.mxu0 %v4349
    %4730 = vmatprep.subr.bf16.mxu0 %v4358
    %4731 = vmatpush1.bf16.msra.mxu0 %v4357
    %4732 = vmatprep.subr.bf16.mxu0 %v4366
    %4733 = vmatpush1.bf16.msra.mxu0 %v4365
    %4734 = vmatprep.subr.bf16.mxu0 %v4374
    %4735 = vmatpush1.bf16.msra.mxu0 %v4373
    %4736 = vmatprep.subr.bf16.mxu0 %v4382
    %4737 = vmatpush1.bf16.msra.mxu0 %v4381
    %4738 = vmatprep.subr.bf16.mxu0 %v4390
    %4739 = vmatpush1.bf16.msra.mxu0 %v4389
    %4740 = vmatprep.subr.bf16.mxu0 %v4398
    %4741 = vmatpush1.bf16.msra.mxu0 %v4397
    %4742 = vmatprep.subr.bf16.mxu0 %v4406
    %4743 = vmatpush1.bf16.msra.mxu0 %v4405
    %4744 = vmatprep.subr.bf16.mxu0 %v4414
    %4745 = vmatpush1.bf16.msra.mxu0 %v4413
    %4746 = vmatprep.subr.bf16.mxu0 %v4422
    %4747 = vmatpush1.bf16.msra.mxu0 %v4421
    %4748 = vmatprep.subr.bf16.mxu0 %v4430
    %4749 = vmatpush1.bf16.msra.mxu0 %v4429
    %4750 = vmatprep.subr.bf16.mxu0 %v4438
    %4751 = vmatpush1.bf16.msra.mxu0 %v4437
    %4752 = vmatprep.subr.bf16.mxu0 %v4446
    %4753 = vmatpush1.bf16.msra.mxu0 %v4445
    %4754 = vmatprep.subr.bf16.mxu0 %v4454
    %4755 = vmatpush1.bf16.msra.mxu0 %v4453
    %4756 = vmatprep.subr.bf16.mxu0 %v4462
    %4757 = vmatpush1.bf16.msra.mxu0 %v4461
    %4758 = vmatprep.subr.bf16.mxu0 %v4470
    %4759 = vmatpush1.bf16.msra.mxu0 %v4469
    %4760 = vmatprep.mubr.bf16.mxu0 %v3642
    %4761 = vmatmul.mubr.bf16.gmra.mrb[0].mxu0 %v3641
    %v4762 = vpop.f32.mrb[0].mxu0
    %v4763 = vadd.f32 %v4722, %v4762
    %v4764 = vpop.f32.mrb[0].mxu0
    %v4765 = vadd.f32 %v4724, %v4764
    %v4766 = vpop.f32.mrb[0].mxu0
    %v4767 = vpop.f32.mrb[0].mxu0
    %4768 = vdwg.mxu0
    %4769 = vmatprep.subr.bf16.mxu0 %v4478
    %4770 = vmatpush1.bf16.msra.mxu0 %v4477
    %4771 = vmatprep.subr.bf16.mxu0 %v4486
    %4772 = vmatpush1.bf16.msra.mxu0 %v4485
    %4773 = vmatprep.subr.bf16.mxu0 %v4494
    %4774 = vmatpush1.bf16.msra.mxu0 %v4493
    %4775 = vmatprep.subr.bf16.mxu0 %v4502
    %4776 = vmatpush1.bf16.msra.mxu0 %v4501
    %4777 = vmatprep.subr.bf16.mxu0 %v4510
    %4778 = vmatpush1.bf16.msra.mxu0 %v4509
    %4779 = vmatprep.subr.bf16.mxu0 %v4518
    %4780 = vmatpush1.bf16.msra.mxu0 %v4517
    %4781 = vmatprep.subr.bf16.mxu0 %v4526
    %4782 = vmatpush1.bf16.msra.mxu0 %v4525
    %4783 = vmatprep.subr.bf16.mxu0 %v4534
    %4784 = vmatpush1.bf16.msra.mxu0 %v4533
    %4785 = vmatprep.subr.bf16.mxu0 %v4542
    %4786 = vmatpush1.bf16.msra.mxu0 %v4541
    %4787 = vmatprep.subr.bf16.mxu0 %v4550
    %4788 = vmatpush1.bf16.msra.mxu0 %v4549
    %4789 = vmatprep.subr.bf16.mxu0 %v4558
    %4790 = vmatpush1.bf16.msra.mxu0 %v4557
    %4791 = vmatprep.subr.bf16.mxu0 %v4566
    %4792 = vmatpush1.bf16.msra.mxu0 %v4565
    %4793 = vmatprep.subr.bf16.mxu0 %v4574
    %4794 = vmatpush1.bf16.msra.mxu0 %v4573
    %4795 = vmatprep.subr.bf16.mxu0 %v4582
    %4796 = vmatpush1.bf16.msra.mxu0 %v4581
    %4797 = vmatprep.subr.bf16.mxu0 %v4590
    %4798 = vmatpush1.bf16.msra.mxu0 %v4589
    %4799 = vmatprep.subr.bf16.mxu0 %v4598
    %4800 = vmatpush1.bf16.msra.mxu0 %v4597
    %4801 = vmatprep.mubr.bf16.mxu0 %v3644
    %4802 = vmatmul.mubr.bf16.gmra.mrb[0].mxu0 %v3643
    %v4803 = vpop.f32.mrb[0].mxu0
    %v4804 = vadd.f32 %v4763, %v4803
    %v4805 = vpop.f32.mrb[0].mxu0
    %v4806 = vadd.f32 %v4765, %v4805
    %v4807 = vpop.f32.mrb[0].mxu0
    %v4808 = vpop.f32.mrb[0].mxu0
    %4809 = vdwg.mxu0
    %4810 = vmatprep.subr.bf16.mxu0 %v3968
    %4811 = vmatpush1.bf16.msra.mxu0 %v3967
    %4812 = vmatprep.subr.bf16.mxu0 %v3976
    %4813 = vmatpush1.bf16.msra.mxu0 %v3975
    %4814 = vmatprep.subr.bf16.mxu0 %v3984
    %4815 = vmatpush1.bf16.msra.mxu0 %v3983
    %4816 = vmatprep.subr.bf16.mxu0 %v3992
    %4817 = vmatpush1.bf16.msra.mxu0 %v3991
    %4818 = vmatprep.subr.bf16.mxu0 %v4000
    %4819 = vmatpush1.bf16.msra.mxu0 %v3999
    %4820 = vmatprep.subr.bf16.mxu0 %v4008
    %4821 = vmatpush1.bf16.msra.mxu0 %v4007
    %4822 = vmatprep.subr.bf16.mxu0 %v4016
    %4823 = vmatpush1.bf16.msra.mxu0 %v4015
    %4824 = vmatprep.subr.bf16.mxu0 %v4024
    %4825 = vmatpush1.bf16.msra.mxu0 %v4023
    %4826 = vmatprep.subr.bf16.mxu0 %v4032
    %4827 = vmatpush1.bf16.msra.mxu0 %v4031
    %4828 = vmatprep.subr.bf16.mxu0 %v4040
    %4829 = vmatpush1.bf16.msra.mxu0 %v4039
    %4830 = vmatprep.subr.bf16.mxu0 %v4048
    %4831 = vmatpush1.bf16.msra.mxu0 %v4047
    %4832 = vmatprep.subr.bf16.mxu0 %v4056
    %4833 = vmatpush1.bf16.msra.mxu0 %v4055
    %4834 = vmatprep.subr.bf16.mxu0 %v4064
    %4835 = vmatpush1.bf16.msra.mxu0 %v4063
    %4836 = vmatprep.subr.bf16.mxu0 %v4072
    %4837 = vmatpush1.bf16.msra.mxu0 %v4071
    %4838 = vmatprep.subr.bf16.mxu0 %v4080
    %4839 = vmatpush1.bf16.msra.mxu0 %v4079
    %4840 = vmatprep.subr.bf16.mxu0 %v4088
    %4841 = vmatpush1.bf16.msra.mxu0 %v4087
    %4842 = vmatprep.mubr.bf16.mxu0 %v3636
    %4843 = vmatmul.mubr.bf16.gmra.mrb[0].mxu0 %v3635
    %v4844 = vpop.f32.mrb[0].mxu0
    %v4845 = vadd.f32 0.0, %v4844
    %v4846 = vpop.f32.mrb[0].mxu0
    %v4847 = vadd.f32 0.0, %v4846
    %v4848 = vpop.f32.mrb[0].mxu0
    %v4849 = vpop.f32.mrb[0].mxu0
    %4850 = vdwg.mxu0
    %4851 = vmatprep.subr.bf16.mxu0 %v4096
    %4852 = vmatpush1.bf16.msra.mxu0 %v4095
    %4853 = vmatprep.subr.bf16.mxu0 %v4104
    %4854 = vmatpush1.bf16.msra.mxu0 %v4103
    %4855 = vmatprep.subr.bf16.mxu0 %v4112
    %4856 = vmatpush1.bf16.msra.mxu0 %v4111
    %4857 = vmatprep.subr.bf16.mxu0 %v4120
    %4858 = vmatpush1.bf16.msra.mxu0 %v4119
    %4859 = vmatprep.subr.bf16.mxu0 %v4128
    %4860 = vmatpush1.bf16.msra.mxu0 %v4127
    %4861 = vmatprep.subr.bf16.mxu0 %v4136
    %4862 = vmatpush1.bf16.msra.mxu0 %v4135
    %4863 = vmatprep.subr.bf16.mxu0 %v4144
    %4864 = vmatpush1.bf16.msra.mxu0 %v4143
    %4865 = vmatprep.subr.bf16.mxu0 %v4152
    %4866 = vmatpush1.bf16.msra.mxu0 %v4151
    %4867 = vmatprep.subr.bf16.mxu0 %v4160
    %4868 = vmatpush1.bf16.msra.mxu0 %v4159
    %4869 = vmatprep.subr.bf16.mxu0 %v4168
    %4870 = vmatpush1.bf16.msra.mxu0 %v4167
    %4871 = vmatprep.subr.bf16.mxu0 %v4176
    %4872 = vmatpush1.bf16.msra.mxu0 %v4175
    %4873 = vmatprep.subr.bf16.mxu0 %v4184
    %4874 = vmatpush1.bf16.msra.mxu0 %v4183
    %4875 = vmatprep.subr.bf16.mxu0 %v4192
    %4876 = vmatpush1.bf16.msra.mxu0 %v4191
    %4877 = vmatprep.subr.bf16.mxu0 %v4200
    %4878 = vmatpush1.bf16.msra.mxu0 %v4199
    %4879 = vmatprep.subr.bf16.mxu0 %v4208
    %4880 = vmatpush1.bf16.msra.mxu0 %v4207
    %4881 = vmatprep.subr.bf16.mxu0 %v4216
    %4882 = vmatpush1.bf16.msra.mxu0 %v4215
    %4883 = vmatprep.mubr.bf16.mxu0 %v3638
    %4884 = vmatmul.mubr.bf16.gmra.mrb[0].mxu0 %v3637
    %v4885 = vpop.f32.mrb[0].mxu0
    %v4886 = vadd.f32 %v4845, %v4885
    %v4887 = vpop.f32.mrb[0].mxu0
    %v4888 = vadd.f32 %v4847, %v4887
    %v4889 = vpop.f32.mrb[0].mxu0
    %v4890 = vpop.f32.mrb[0].mxu0
    %4891 = vdwg.mxu0
    %4892 = vmatprep.subr.bf16.mxu0 %v4224
    %4893 = vmatpush1.bf16.msra.mxu0 %v4223
    %4894 = vmatprep.subr.bf16.mxu0 %v4232
    %4895 = vmatpush1.bf16.msra.mxu0 %v4231
    %4896 = vmatprep.subr.bf16.mxu0 %v4240
    %4897 = vmatpush1.bf16.msra.mxu0 %v4239
    %4898 = vmatprep.subr.bf16.mxu0 %v4248
    %4899 = vmatpush1.bf16.msra.mxu0 %v4247
    %4900 = vmatprep.subr.bf16.mxu0 %v4256
    %4901 = vmatpush1.bf16.msra.mxu0 %v4255
    %4902 = vmatprep.subr.bf16.mxu0 %v4264
    %4903 = vmatpush1.bf16.msra.mxu0 %v4263
    %4904 = vmatprep.subr.bf16.mxu0 %v4272
    %4905 = vmatpush1.bf16.msra.mxu0 %v4271
    %4906 = vmatprep.subr.bf16.mxu0 %v4280
    %4907 = vmatpush1.bf16.msra.mxu0 %v4279
    %4908 = vmatprep.subr.bf16.mxu0 %v4288
    %4909 = vmatpush1.bf16.msra.mxu0 %v4287
    %4910 = vmatprep.subr.bf16.mxu0 %v4296
    %4911 = vmatpush1.bf16.msra.mxu0 %v4295
    %4912 = vmatprep.subr.bf16.mxu0 %v4304
    %4913 = vmatpush1.bf16.msra.mxu0 %v4303
    %4914 = vmatprep.subr.bf16.mxu0 %v4312
    %4915 = vmatpush1.bf16.msra.mxu0 %v4311
    %4916 = vmatprep.subr.bf16.mxu0 %v4320
    %4917 = vmatpush1.bf16.msra.mxu0 %v4319
    %4918 = vmatprep.subr.bf16.mxu0 %v4328
    %4919 = vmatpush1.bf16.msra.mxu0 %v4327
    %4920 = vmatprep.subr.bf16.mxu0 %v4336
    %4921 = vmatpush1.bf16.msra.mxu0 %v4335
    %4922 = vmatprep.subr.bf16.mxu0 %v4344
    %4923 = vmatpush1.bf16.msra.mxu0 %v4343
    %4924 = vmatprep.mubr.bf16.mxu0 %v3640
    %4925 = vmatmul.mubr.bf16.gmra.mrb[0].mxu0 %v3639
    %v4926 = vpop.f32.mrb[0].mxu0
    %v4927 = vadd.f32 %v4886, %v4926
    %v4928 = vpop.f32.mrb[0].mxu0
    %v4929 = vadd.f32 %v4888, %v4928
    %v4930 = vpop.f32.mrb[0].mxu0
    %v4931 = vpop.f32.mrb[0].mxu0
    %4932 = vdwg.mxu0
    %4933 = vmatprep.subr.bf16.mxu0 %v4352
    %4934 = vmatpush1.bf16.msra.mxu0 %v4351
    %4935 = vmatprep.subr.bf16.mxu0 %v4360
    %4936 = vmatpush1.bf16.msra.mxu0 %v4359
    %4937 = vmatprep.subr.bf16.mxu0 %v4368
    %4938 = vmatpush1.bf16.msra.mxu0 %v4367
    %4939 = vmatprep.subr.bf16.mxu0 %v4376
    %4940 = vmatpush1.bf16.msra.mxu0 %v4375
    %4941 = vmatprep.subr.bf16.mxu0 %v4384
    %4942 = vmatpush1.bf16.msra.mxu0 %v4383
    %4943 = vmatprep.subr.bf16.mxu0 %v4392
    %4944 = vmatpush1.bf16.msra.mxu0 %v4391
    %4945 = vmatprep.subr.bf16.mxu0 %v4400
    %4946 = vmatpush1.bf16.msra.mxu0 %v4399
    %4947 = vmatprep.subr.bf16.mxu0 %v4408
    %4948 = vmatpush1.bf16.msra.mxu0 %v4407
    %4949 = vmatprep.subr.bf16.mxu0 %v4416
    %4950 = vmatpush1.bf16.msra.mxu0 %v4415
    %4951 = vmatprep.subr.bf16.mxu0 %v4424
    %4952 = vmatpush1.bf16.msra.mxu0 %v4423
    %4953 = vmatprep.subr.bf16.mxu0 %v4432
    %4954 = vmatpush1.bf16.msra.mxu0 %v4431
    %4955 = vmatprep.subr.bf16.mxu0 %v4440
    %4956 = vmatpush1.bf16.msra.mxu0 %v4439
    %4957 = vmatprep.subr.bf16.mxu0 %v4448
    %4958 = vmatpush1.bf16.msra.mxu0 %v4447
    %4959 = vmatprep.subr.bf16.mxu0 %v4456
    %4960 = vmatpush1.bf16.msra.mxu0 %v4455
    %4961 = vmatprep.subr.bf16.mxu0 %v4464
    %4962 = vmatpush1.bf16.msra.mxu0 %v4463
    %4963 = vmatprep.subr.bf16.mxu0 %v4472
    %4964 = vmatpush1.bf16.msra.mxu0 %v4471
    %4965 = vmatprep.mubr.bf16.mxu0 %v3642
    %4966 = vmatmul.mubr.bf16.gmra.mrb[0].mxu0 %v3641
    %v4967 = vpop.f32.mrb[0].mxu0
    %v4968 = vadd.f32 %v4927, %v4967
    %v4969 = vpop.f32.mrb[0].mxu0
    %v4970 = vadd.f32 %v4929, %v4969
    %v4971 = vpop.f32.mrb[0].mxu0
    %v4972 = vpop.f32.mrb[0].mxu0
    %4973 = vdwg.mxu0
    %4974 = vmatprep.subr.bf16.mxu0 %v4480
    %4975 = vmatpush1.bf16.msra.mxu0 %v4479
    %4976 = vmatprep.subr.bf16.mxu0 %v4488
    %4977 = vmatpush1.bf16.msra.mxu0 %v4487
    %4978 = vmatprep.subr.bf16.mxu0 %v4496
    %4979 = vmatpush1.bf16.msra.mxu0 %v4495
    %4980 = vmatprep.subr.bf16.mxu0 %v4504
    %4981 = vmatpush1.bf16.msra.mxu0 %v4503
    %4982 = vmatprep.subr.bf16.mxu0 %v4512
    %4983 = vmatpush1.bf16.msra.mxu0 %v4511
    %4984 = vmatprep.subr.bf16.mxu0 %v4520
    %4985 = vmatpush1.bf16.msra.mxu0 %v4519
    %4986 = vmatprep.subr.bf16.mxu0 %v4528
    %4987 = vmatpush1.bf16.msra.mxu0 %v4527
    %4988 = vmatprep.subr.bf16.mxu0 %v4536
    %4989 = vmatpush1.bf16.msra.mxu0 %v4535
    %4990 = vmatprep.subr.bf16.mxu0 %v4544
    %4991 = vmatpush1.bf16.msra.mxu0 %v4543
    %4992 = vmatprep.subr.bf16.mxu0 %v4552
    %4993 = vmatpush1.bf16.msra.mxu0 %v4551
    %4994 = vmatprep.subr.bf16.mxu0 %v4560
    %4995 = vmatpush1.bf16.msra.mxu0 %v4559
    %4996 = vmatprep.subr.bf16.mxu0 %v4568
    %4997 = vmatpush1.bf16.msra.mxu0 %v4567
    %4998 = vmatprep.subr.bf16.mxu0 %v4576
    %4999 = vmatpush1.bf16.msra.mxu0 %v4575
    %5000 = vmatprep.subr.bf16.mxu0 %v4584
    %5001 = vmatpush1.bf16.msra.mxu0 %v4583
    %5002 = vmatprep.subr.bf16.mxu0 %v4592
    %5003 = vmatpush1.bf16.msra.mxu0 %v4591
    %5004 = vmatprep.subr.bf16.mxu0 %v4600
    %5005 = vmatpush1.bf16.msra.mxu0 %v4599
    %5006 = vmatprep.mubr.bf16.mxu0 %v3644
    %5007 = vmatmul.mubr.bf16.gmra.mrb[0].mxu0 %v3643
    %v5008 = vpop.f32.mrb[0].mxu0
    %v5009 = vadd.f32 %v4968, %v5008
    %v5010 = vpop.f32.mrb[0].mxu0
    %v5011 = vadd.f32 %v4970, %v5010
    %v5012 = vpop.f32.mrb[0].mxu0
    %v5013 = vpop.f32.mrb[0].mxu0
    %5014 = vdwg.mxu0
    %5015 = vmatprep.subr.bf16.mxu0 %v3970
    %5016 = vmatpush1.bf16.msra.mxu0 %v3969
    %5017 = vmatprep.subr.bf16.mxu0 %v3978
    %5018 = vmatpush1.bf16.msra.mxu0 %v3977
    %5019 = vmatprep.subr.bf16.mxu0 %v3986
    %5020 = vmatpush1.bf16.msra.mxu0 %v3985
    %5021 = vmatprep.subr.bf16.mxu0 %v3994
    %5022 = vmatpush1.bf16.msra.mxu0 %v3993
    %5023 = vmatprep.subr.bf16.mxu0 %v4002
    %5024 = vmatpush1.bf16.msra.mxu0 %v4001
    %5025 = vmatprep.subr.bf16.mxu0 %v4010
    %5026 = vmatpush1.bf16.msra.mxu0 %v4009
    %5027 = vmatprep.subr.bf16.mxu0 %v4018
    %5028 = vmatpush1.bf16.msra.mxu0 %v4017
    %5029 = vmatprep.subr.bf16.mxu0 %v4026
    %5030 = vmatpush1.bf16.msra.mxu0 %v4025
    %5031 = vmatprep.subr.bf16.mxu0 %v4034
    %5032 = vmatpush1.bf16.msra.mxu0 %v4033
    %5033 = vmatprep.subr.bf16.mxu0 %v4042
    %5034 = vmatpush1.bf16.msra.mxu0 %v4041
    %5035 = vmatprep.subr.bf16.mxu0 %v4050
    %5036 = vmatpush1.bf16.msra.mxu0 %v4049
    %5037 = vmatprep.subr.bf16.mxu0 %v4058
    %5038 = vmatpush1.bf16.msra.mxu0 %v4057
    %5039 = vmatprep.subr.bf16.mxu0 %v4066
    %5040 = vmatpush1.bf16.msra.mxu0 %v4065
    %5041 = vmatprep.subr.bf16.mxu0 %v4074
    %5042 = vmatpush1.bf16.msra.mxu0 %v4073
    %5043 = vmatprep.subr.bf16.mxu0 %v4082
    %5044 = vmatpush1.bf16.msra.mxu0 %v4081
    %5045 = vmatprep.subr.bf16.mxu0 %v4090
    %5046 = vmatpush1.bf16.msra.mxu0 %v4089
    %5047 = vmatprep.mubr.bf16.mxu0 %v3636
    %5048 = vmatmul.mubr.bf16.gmra.mrb[0].mxu0 %v3635
    %v5049 = vpop.f32.mrb[0].mxu0
    %v5050 = vadd.f32 0.0, %v5049
    %v5051 = vpop.f32.mrb[0].mxu0
    %v5052 = vadd.f32 0.0, %v5051
    %v5053 = vpop.f32.mrb[0].mxu0
    %v5054 = vpop.f32.mrb[0].mxu0
    %5055 = vdwg.mxu0
    %5056 = vmatprep.subr.bf16.mxu0 %v4098
    %5057 = vmatpush1.bf16.msra.mxu0 %v4097
    %5058 = vmatprep.subr.bf16.mxu0 %v4106
    %5059 = vmatpush1.bf16.msra.mxu0 %v4105
    %5060 = vmatprep.subr.bf16.mxu0 %v4114
    %5061 = vmatpush1.bf16.msra.mxu0 %v4113
    %5062 = vmatprep.subr.bf16.mxu0 %v4122
    %5063 = vmatpush1.bf16.msra.mxu0 %v4121
    %5064 = vmatprep.subr.bf16.mxu0 %v4130
    %5065 = vmatpush1.bf16.msra.mxu0 %v4129
    %5066 = vmatprep.subr.bf16.mxu0 %v4138
    %5067 = vmatpush1.bf16.msra.mxu0 %v4137
    %5068 = vmatprep.subr.bf16.mxu0 %v4146
    %5069 = vmatpush1.bf16.msra.mxu0 %v4145
    %5070 = vmatprep.subr.bf16.mxu0 %v4154
    %5071 = vmatpush1.bf16.msra.mxu0 %v4153
    %5072 = vmatprep.subr.bf16.mxu0 %v4162
    %5073 = vmatpush1.bf16.msra.mxu0 %v4161
    %5074 = vmatprep.subr.bf16.mxu0 %v4170
    %5075 = vmatpush1.bf16.msra.mxu0 %v4169
    %5076 = vmatprep.subr.bf16.mxu0 %v4178
    %5077 = vmatpush1.bf16.msra.mxu0 %v4177
    %5078 = vmatprep.subr.bf16.mxu0 %v4186
    %5079 = vmatpush1.bf16.msra.mxu0 %v4185
    %5080 = vmatprep.subr.bf16.mxu0 %v4194
    %5081 = vmatpush1.bf16.msra.mxu0 %v4193
    %5082 = vmatprep.subr.bf16.mxu0 %v4202
    %5083 = vmatpush1.bf16.msra.mxu0 %v4201
    %5084 = vmatprep.subr.bf16.mxu0 %v4210
    %5085 = vmatpush1.bf16.msra.mxu0 %v4209
    %5086 = vmatprep.subr.bf16.mxu0 %v4218
    %5087 = vmatpush1.bf16.msra.mxu0 %v4217
    %5088 = vmatprep.mubr.bf16.mxu0 %v3638
    %5089 = vmatmul.mubr.bf16.gmra.mrb[0].mxu0 %v3637
    %v5090 = vpop.f32.mrb[0].mxu0
    %v5091 = vadd.f32 %v5050, %v5090
    %v5092 = vpop.f32.mrb[0].mxu0
    %v5093 = vadd.f32 %v5052, %v5092
    %v5094 = vpop.f32.mrb[0].mxu0
    %v5095 = vpop.f32.mrb[0].mxu0
    %5096 = vdwg.mxu0
    %5097 = vmatprep.subr.bf16.mxu0 %v4226
    %5098 = vmatpush1.bf16.msra.mxu0 %v4225
    %5099 = vmatprep.subr.bf16.mxu0 %v4234
    %5100 = vmatpush1.bf16.msra.mxu0 %v4233
    %5101 = vmatprep.subr.bf16.mxu0 %v4242
    %5102 = vmatpush1.bf16.msra.mxu0 %v4241
    %5103 = vmatprep.subr.bf16.mxu0 %v4250
    %5104 = vmatpush1.bf16.msra.mxu0 %v4249
    %5105 = vmatprep.subr.bf16.mxu0 %v4258
    %5106 = vmatpush1.bf16.msra.mxu0 %v4257
    %5107 = vmatprep.subr.bf16.mxu0 %v4266
    %5108 = vmatpush1.bf16.msra.mxu0 %v4265
    %5109 = vmatprep.subr.bf16.mxu0 %v4274
    %5110 = vmatpush1.bf16.msra.mxu0 %v4273
    %5111 = vmatprep.subr.bf16.mxu0 %v4282
    %5112 = vmatpush1.bf16.msra.mxu0 %v4281
    %5113 = vmatprep.subr.bf16.mxu0 %v4290
    %5114 = vmatpush1.bf16.msra.mxu0 %v4289
    %5115 = vmatprep.subr.bf16.mxu0 %v4298
    %5116 = vmatpush1.bf16.msra.mxu0 %v4297
    %5117 = vmatprep.subr.bf16.mxu0 %v4306
    %5118 = vmatpush1.bf16.msra.mxu0 %v4305
    %5119 = vmatprep.subr.bf16.mxu0 %v4314
    %5120 = vmatpush1.bf16.msra.mxu0 %v4313
    %5121 = vmatprep.subr.bf16.mxu0 %v4322
    %5122 = vmatpush1.bf16.msra.mxu0 %v4321
    %5123 = vmatprep.subr.bf16.mxu0 %v4330
    %5124 = vmatpush1.bf16.msra.mxu0 %v4329
    %5125 = vmatprep.subr.bf16.mxu0 %v4338
    %5126 = vmatpush1.bf16.msra.mxu0 %v4337
    %5127 = vmatprep.subr.bf16.mxu0 %v4346
    %5128 = vmatpush1.bf16.msra.mxu0 %v4345
    %5129 = vmatprep.mubr.bf16.mxu0 %v3640
    %5130 = vmatmul.mubr.bf16.gmra.mrb[0].mxu0 %v3639
    %v5131 = vpop.f32.mrb[0].mxu0
    %v5132 = vadd.f32 %v5091, %v5131
    %v5133 = vpop.f32.mrb[0].mxu0
    %v5134 = vadd.f32 %v5093, %v5133
    %v5135 = vpop.f32.mrb[0].mxu0
    %v5136 = vpop.f32.mrb[0].mxu0
    %5137 = vdwg.mxu0
    %5138 = vmatprep.subr.bf16.mxu0 %v4354
    %5139 = vmatpush1.bf16.msra.mxu0 %v4353
    %5140 = vmatprep.subr.bf16.mxu0 %v4362
    %5141 = vmatpush1.bf16.msra.mxu0 %v4361
    %5142 = vmatprep.subr.bf16.mxu0 %v4370
    %5143 = vmatpush1.bf16.msra.mxu0 %v4369
    %5144 = vmatprep.subr.bf16.mxu0 %v4378
    %5145 = vmatpush1.bf16.msra.mxu0 %v4377
    %5146 = vmatprep.subr.bf16.mxu0 %v4386
    %5147 = vmatpush1.bf16.msra.mxu0 %v4385
    %5148 = vmatprep.subr.bf16.mxu0 %v4394
    %5149 = vmatpush1.bf16.msra.mxu0 %v4393
    %5150 = vmatprep.subr.bf16.mxu0 %v4402
    %5151 = vmatpush1.bf16.msra.mxu0 %v4401
    %5152 = vmatprep.subr.bf16.mxu0 %v4410
    %5153 = vmatpush1.bf16.msra.mxu0 %v4409
    %5154 = vmatprep.subr.bf16.mxu0 %v4418
    %5155 = vmatpush1.bf16.msra.mxu0 %v4417
    %5156 = vmatprep.subr.bf16.mxu0 %v4426
    %5157 = vmatpush1.bf16.msra.mxu0 %v4425
    %5158 = vmatprep.subr.bf16.mxu0 %v4434
    %5159 = vmatpush1.bf16.msra.mxu0 %v4433
    %5160 = vmatprep.subr.bf16.mxu0 %v4442
    %5161 = vmatpush1.bf16.msra.mxu0 %v4441
    %5162 = vmatprep.subr.bf16.mxu0 %v4450
    %5163 = vmatpush1.bf16.msra.mxu0 %v4449
    %5164 = vmatprep.subr.bf16.mxu0 %v4458
    %5165 = vmatpush1.bf16.msra.mxu0 %v4457
    %5166 = vmatprep.subr.bf16.mxu0 %v4466
    %5167 = vmatpush1.bf16.msra.mxu0 %v4465
    %5168 = vmatprep.subr.bf16.mxu0 %v4474
    %5169 = vmatpush1.bf16.msra.mxu0 %v4473
    %5170 = vmatprep.mubr.bf16.mxu0 %v3642
    %5171 = vmatmul.mubr.bf16.gmra.mrb[0].mxu0 %v3641
    %v5172 = vpop.f32.mrb[0].mxu0
    %v5173 = vadd.f32 %v5132, %v5172
    %v5174 = vpop.f32.mrb[0].mxu0
    %v5175 = vadd.f32 %v5134, %v5174
    %v5176 = vpop.f32.mrb[0].mxu0
    %v5177 = vpop.f32.mrb[0].mxu0
    %5178 = vdwg.mxu0
    %5179 = vmatprep.subr.bf16.mxu0 %v4482
    %5180 = vmatpush1.bf16.msra.mxu0 %v4481
    %5181 = vmatprep.subr.bf16.mxu0 %v4490
    %5182 = vmatpush1.bf16.msra.mxu0 %v4489
    %5183 = vmatprep.subr.bf16.mxu0 %v4498
    %5184 = vmatpush1.bf16.msra.mxu0 %v4497
    %5185 = vmatprep.subr.bf16.mxu0 %v4506
    %5186 = vmatpush1.bf16.msra.mxu0 %v4505
    %5187 = vmatprep.subr.bf16.mxu0 %v4514
    %5188 = vmatpush1.bf16.msra.mxu0 %v4513
    %5189 = vmatprep.subr.bf16.mxu0 %v4522
    %5190 = vmatpush1.bf16.msra.mxu0 %v4521
    %5191 = vmatprep.subr.bf16.mxu0 %v4530
    %5192 = vmatpush1.bf16.msra.mxu0 %v4529
    %5193 = vmatprep.subr.bf16.mxu0 %v4538
    %5194 = vmatpush1.bf16.msra.mxu0 %v4537
    %5195 = vmatprep.subr.bf16.mxu0 %v4546
    %5196 = vmatpush1.bf16.msra.mxu0 %v4545
    %5197 = vmatprep.subr.bf16.mxu0 %v4554
    %5198 = vmatpush1.bf16.msra.mxu0 %v4553
    %5199 = vmatprep.subr.bf16.mxu0 %v4562
    %5200 = vmatpush1.bf16.msra.mxu0 %v4561
    %5201 = vmatprep.subr.bf16.mxu0 %v4570
    %5202 = vmatpush1.bf16.msra.mxu0 %v4569
    %5203 = vmatprep.subr.bf16.mxu0 %v4578
    %5204 = vmatpush1.bf16.msra.mxu0 %v4577
    %5205 = vmatprep.subr.bf16.mxu0 %v4586
    %5206 = vmatpush1.bf16.msra.mxu0 %v4585
    %5207 = vmatprep.subr.bf16.mxu0 %v4594
    %5208 = vmatpush1.bf16.msra.mxu0 %v4593
    %5209 = vmatprep.subr.bf16.mxu0 %v4602
    %5210 = vmatpush1.bf16.msra.mxu0 %v4601
    %5211 = vmatprep.mubr.bf16.mxu0 %v3644
    %5212 = vmatmul.mubr.bf16.gmra.mrb[0].mxu0 %v3643
    %v5213 = vpop.f32.mrb[0].mxu0
    %v5214 = vadd.f32 %v5173, %v5213
    %v5215 = vpop.f32.mrb[0].mxu0
    %v5216 = vadd.f32 %v5175, %v5215
    %v5217 = vpop.f32.mrb[0].mxu0
    %v5218 = vpop.f32.mrb[0].mxu0
    %5219 = vdwg.mxu0
    %5220 = vmatprep.subr.bf16.mxu0 %v3972
    %5221 = vmatpush1.bf16.msra.mxu0 %v3971
    %5222 = vmatprep.subr.bf16.mxu0 %v3980
    %5223 = vmatpush1.bf16.msra.mxu0 %v3979
    %5224 = vmatprep.subr.bf16.mxu0 %v3988
    %5225 = vmatpush1.bf16.msra.mxu0 %v3987
    %5226 = vmatprep.subr.bf16.mxu0 %v3996
    %5227 = vmatpush1.bf16.msra.mxu0 %v3995
    %5228 = vmatprep.subr.bf16.mxu0 %v4004
    %5229 = vmatpush1.bf16.msra.mxu0 %v4003
    %5230 = vmatprep.subr.bf16.mxu0 %v4012
    %5231 = vmatpush1.bf16.msra.mxu0 %v4011
    %5232 = vmatprep.subr.bf16.mxu0 %v4020
    %5233 = vmatpush1.bf16.msra.mxu0 %v4019
    %5234 = vmatprep.subr.bf16.mxu0 %v4028
    %5235 = vmatpush1.bf16.msra.mxu0 %v4027
    %5236 = vmatprep.subr.bf16.mxu0 %v4036
    %5237 = vmatpush1.bf16.msra.mxu0 %v4035
    %5238 = vmatprep.subr.bf16.mxu0 %v4044
    %5239 = vmatpush1.bf16.msra.mxu0 %v4043
    %5240 = vmatprep.subr.bf16.mxu0 %v4052
    %5241 = vmatpush1.bf16.msra.mxu0 %v4051
    %5242 = vmatprep.subr.bf16.mxu0 %v4060
    %5243 = vmatpush1.bf16.msra.mxu0 %v4059
    %5244 = vmatprep.subr.bf16.mxu0 %v4068
    %5245 = vmatpush1.bf16.msra.mxu0 %v4067
    %5246 = vmatprep.subr.bf16.mxu0 %v4076
    %5247 = vmatpush1.bf16.msra.mxu0 %v4075
    %5248 = vmatprep.subr.bf16.mxu0 %v4084
    %5249 = vmatpush1.bf16.msra.mxu0 %v4083
    %5250 = vmatprep.subr.bf16.mxu0 %v4092
    %5251 = vmatpush1.bf16.msra.mxu0 %v4091
    %5252 = vmatprep.mubr.bf16.mxu0 %v3636
    %5253 = vmatmul.mubr.bf16.gmra.mrb[0].mxu0 %v3635
    %v5254 = vpop.f32.mrb[0].mxu0
    %v5255 = vadd.f32 0.0, %v5254
    %v5256 = vpop.f32.mrb[0].mxu0
    %v5257 = vadd.f32 0.0, %v5256
    %v5258 = vpop.f32.mrb[0].mxu0
    %v5259 = vpop.f32.mrb[0].mxu0
    %5260 = vdwg.mxu0
    %5261 = vmatprep.subr.bf16.mxu0 %v4100
    %5262 = vmatpush1.bf16.msra.mxu0 %v4099
    %5263 = vmatprep.subr.bf16.mxu0 %v4108
    %5264 = vmatpush1.bf16.msra.mxu0 %v4107
    %5265 = vmatprep.subr.bf16.mxu0 %v4116
    %5266 = vmatpush1.bf16.msra.mxu0 %v4115
    %5267 = vmatprep.subr.bf16.mxu0 %v4124
    %5268 = vmatpush1.bf16.msra.mxu0 %v4123
    %5269 = vmatprep.subr.bf16.mxu0 %v4132
    %5270 = vmatpush1.bf16.msra.mxu0 %v4131
    %5271 = vmatprep.subr.bf16.mxu0 %v4140
    %5272 = vmatpush1.bf16.msra.mxu0 %v4139
    %5273 = vmatprep.subr.bf16.mxu0 %v4148
    %5274 = vmatpush1.bf16.msra.mxu0 %v4147
    %5275 = vmatprep.subr.bf16.mxu0 %v4156
    %5276 = vmatpush1.bf16.msra.mxu0 %v4155
    %5277 = vmatprep.subr.bf16.mxu0 %v4164
    %5278 = vmatpush1.bf16.msra.mxu0 %v4163
    %5279 = vmatprep.subr.bf16.mxu0 %v4172
    %5280 = vmatpush1.bf16.msra.mxu0 %v4171
    %5281 = vmatprep.subr.bf16.mxu0 %v4180
    %5282 = vmatpush1.bf16.msra.mxu0 %v4179
    %5283 = vmatprep.subr.bf16.mxu0 %v4188
    %5284 = vmatpush1.bf16.msra.mxu0 %v4187
    %5285 = vmatprep.subr.bf16.mxu0 %v4196
    %5286 = vmatpush1.bf16.msra.mxu0 %v4195
    %5287 = vmatprep.subr.bf16.mxu0 %v4204
    %5288 = vmatpush1.bf16.msra.mxu0 %v4203
    %5289 = vmatprep.subr.bf16.mxu0 %v4212
    %5290 = vmatpush1.bf16.msra.mxu0 %v4211
    %5291 = vmatprep.subr.bf16.mxu0 %v4220
    %5292 = vmatpush1.bf16.msra.mxu0 %v4219
    %5293 = vmatprep.mubr.bf16.mxu0 %v3638
    %5294 = vmatmul.mubr.bf16.gmra.mrb[0].mxu0 %v3637
    %v5295 = vpop.f32.mrb[0].mxu0
    %v5296 = vadd.f32 %v5255, %v5295
    %v5297 = vpop.f32.mrb[0].mxu0
    %v5298 = vadd.f32 %v5257, %v5297
    %v5299 = vpop.f32.mrb[0].mxu0
    %v5300 = vpop.f32.mrb[0].mxu0
    %5301 = vdwg.mxu0
    %5302 = vmatprep.subr.bf16.mxu0 %v4228
    %5303 = vmatpush1.bf16.msra.mxu0 %v4227
    %5304 = vmatprep.subr.bf16.mxu0 %v4236
    %5305 = vmatpush1.bf16.msra.mxu0 %v4235
    %5306 = vmatprep.subr.bf16.mxu0 %v4244
    %5307 = vmatpush1.bf16.msra.mxu0 %v4243
    %5308 = vmatprep.subr.bf16.mxu0 %v4252
    %5309 = vmatpush1.bf16.msra.mxu0 %v4251
    %5310 = vmatprep.subr.bf16.mxu0 %v4260
    %5311 = vmatpush1.bf16.msra.mxu0 %v4259
    %5312 = vmatprep.subr.bf16.mxu0 %v4268
    %5313 = vmatpush1.bf16.msra.mxu0 %v4267
    %5314 = vmatprep.subr.bf16.mxu0 %v4276
    %5315 = vmatpush1.bf16.msra.mxu0 %v4275
    %5316 = vmatprep.subr.bf16.mxu0 %v4284
    %5317 = vmatpush1.bf16.msra.mxu0 %v4283
    %5318 = vmatprep.subr.bf16.mxu0 %v4292
    %5319 = vmatpush1.bf16.msra.mxu0 %v4291
    %5320 = vmatprep.subr.bf16.mxu0 %v4300
    %5321 = vmatpush1.bf16.msra.mxu0 %v4299
    %5322 = vmatprep.subr.bf16.mxu0 %v4308
    %5323 = vmatpush1.bf16.msra.mxu0 %v4307
    %5324 = vmatprep.subr.bf16.mxu0 %v4316
    %5325 = vmatpush1.bf16.msra.mxu0 %v4315
    %5326 = vmatprep.subr.bf16.mxu0 %v4324
    %5327 = vmatpush1.bf16.msra.mxu0 %v4323
    %5328 = vmatprep.subr.bf16.mxu0 %v4332
    %5329 = vmatpush1.bf16.msra.mxu0 %v4331
    %5330 = vmatprep.subr.bf16.mxu0 %v4340
    %5331 = vmatpush1.bf16.msra.mxu0 %v4339
    %5332 = vmatprep.subr.bf16.mxu0 %v4348
    %5333 = vmatpush1.bf16.msra.mxu0 %v4347
    %5334 = vmatprep.mubr.bf16.mxu0 %v3640
    %5335 = vmatmul.mubr.bf16.gmra.mrb[0].mxu0 %v3639
    %v5336 = vpop.f32.mrb[0].mxu0
    %v5337 = vadd.f32 %v5296, %v5336
    %v5338 = vpop.f32.mrb[0].mxu0
    %v5339 = vadd.f32 %v5298, %v5338
    %v5340 = vpop.f32.mrb[0].mxu0
    %v5341 = vpop.f32.mrb[0].mxu0
    %5342 = vdwg.mxu0
    %5343 = vmatprep.subr.bf16.mxu0 %v4356
    %5344 = vmatpush1.bf16.msra.mxu0 %v4355
    %5345 = vmatprep.subr.bf16.mxu0 %v4364
    %5346 = vmatpush1.bf16.msra.mxu0 %v4363
    %5347 = vmatprep.subr.bf16.mxu0 %v4372
    %5348 = vmatpush1.bf16.msra.mxu0 %v4371
    %5349 = vmatprep.subr.bf16.mxu0 %v4380
    %5350 = vmatpush1.bf16.msra.mxu0 %v4379
    %5351 = vmatprep.subr.bf16.mxu0 %v4388
    %5352 = vmatpush1.bf16.msra.mxu0 %v4387
    %5353 = vmatprep.subr.bf16.mxu0 %v4396
    %5354 = vmatpush1.bf16.msra.mxu0 %v4395
    %5355 = vmatprep.subr.bf16.mxu0 %v4404
    %5356 = vmatpush1.bf16.msra.mxu0 %v4403
    %5357 = vmatprep.subr.bf16.mxu0 %v4412
    %5358 = vmatpush1.bf16.msra.mxu0 %v4411
    %5359 = vmatprep.subr.bf16.mxu0 %v4420
    %5360 = vmatpush1.bf16.msra.mxu0 %v4419
    %5361 = vmatprep.subr.bf16.mxu0 %v4428
    %5362 = vmatpush1.bf16.msra.mxu0 %v4427
    %5363 = vmatprep.subr.bf16.mxu0 %v4436
    %5364 = vmatpush1.bf16.msra.mxu0 %v4435
    %5365 = vmatprep.subr.bf16.mxu0 %v4444
    %5366 = vmatpush1.bf16.msra.mxu0 %v4443
    %5367 = vmatprep.subr.bf16.mxu0 %v4452
    %5368 = vmatpush1.bf16.msra.mxu0 %v4451
    %5369 = vmatprep.subr.bf16.mxu0 %v4460
    %5370 = vmatpush1.bf16.msra.mxu0 %v4459
    %5371 = vmatprep.subr.bf16.mxu0 %v4468
    %5372 = vmatpush1.bf16.msra.mxu0 %v4467
    %5373 = vmatprep.subr.bf16.mxu0 %v4476
    %5374 = vmatpush1.bf16.msra.mxu0 %v4475
    %5375 = vmatprep.mubr.bf16.mxu0 %v3642
    %5376 = vmatmul.mubr.bf16.gmra.mrb[0].mxu0 %v3641
    %v5377 = vpop.f32.mrb[0].mxu0
    %v5378 = vadd.f32 %v5337, %v5377
    %v5379 = vpop.f32.mrb[0].mxu0
    %v5380 = vadd.f32 %v5339, %v5379
    %v5381 = vpop.f32.mrb[0].mxu0
    %v5382 = vpop.f32.mrb[0].mxu0
    %5383 = vdwg.mxu0
    %5384 = vmatprep.subr.bf16.mxu0 %v4484
    %5385 = vmatpush1.bf16.msra.mxu0 %v4483
    %5386 = vmatprep.subr.bf16.mxu0 %v4492
    %5387 = vmatpush1.bf16.msra.mxu0 %v4491
    %5388 = vmatprep.subr.bf16.mxu0 %v4500
    %5389 = vmatpush1.bf16.msra.mxu0 %v4499
    %5390 = vmatprep.subr.bf16.mxu0 %v4508
    %5391 = vmatpush1.bf16.msra.mxu0 %v4507
    %5392 = vmatprep.subr.bf16.mxu0 %v4516
    %5393 = vmatpush1.bf16.msra.mxu0 %v4515
    %5394 = vmatprep.subr.bf16.mxu0 %v4524
    %5395 = vmatpush1.bf16.msra.mxu0 %v4523
    %5396 = vmatprep.subr.bf16.mxu0 %v4532
    %5397 = vmatpush1.bf16.msra.mxu0 %v4531
    %5398 = vmatprep.subr.bf16.mxu0 %v4540
    %5399 = vmatpush1.bf16.msra.mxu0 %v4539
    %5400 = vmatprep.subr.bf16.mxu0 %v4548
    %5401 = vmatpush1.bf16.msra.mxu0 %v4547
    %5402 = vmatprep.subr.bf16.mxu0 %v4556
    %5403 = vmatpush1.bf16.msra.mxu0 %v4555
    %5404 = vmatprep.subr.bf16.mxu0 %v4564
    %5405 = vmatpush1.bf16.msra.mxu0 %v4563
    %5406 = vmatprep.subr.bf16.mxu0 %v4572
    %5407 = vmatpush1.bf16.msra.mxu0 %v4571
    %5408 = vmatprep.subr.bf16.mxu0 %v4580
    %5409 = vmatpush1.bf16.msra.mxu0 %v4579
    %5410 = vmatprep.subr.bf16.mxu0 %v4588
    %5411 = vmatpush1.bf16.msra.mxu0 %v4587
    %5412 = vmatprep.subr.bf16.mxu0 %v4596
    %5413 = vmatpush1.bf16.msra.mxu0 %v4595
    %5414 = vmatprep.subr.bf16.mxu0 %v4604
    %5415 = vmatpush1.bf16.msra.mxu0 %v4603
    %5416 = vmatprep.mubr.bf16.mxu0 %v3644
    %5417 = vmatmul.mubr.bf16.gmra.mrb[0].mxu0 %v3643
    %v5418 = vpop.f32.mrb[0].mxu0
    %v5419 = vadd.f32 %v5378, %v5418
    %v5420 = vpop.f32.mrb[0].mxu0
    %v5421 = vadd.f32 %v5380, %v5420
    %v5422 = vpop.f32.mrb[0].mxu0
    %v5423 = vpop.f32.mrb[0].mxu0
    %5424 = vdwg.mxu0
    %v5425 = vld [vmem:[#allocation14] sm:$0xff]
    %v5427 = vlaneseq
    %v5428 = vshrl.u32 %v5427, 7
    %v5429 = vsub.s32 0, %v5428
    %v5430 = vrot.slane %v5425, %v5429
    %v5431 = vlaneseq
    %v5432 = vshrl.u32 %v5431, 7
    %v5433 = vsub.s32 1, %v5432
    %v5434 = vrot.slane %v5425, %v5433
    %v5435 = vlaneseq
    %v5436 = vshrl.u32 %v5435, 7
    %v5437 = vsub.s32 2, %v5436
    %v5438 = vrot.slane %v5425, %v5437
    %v5439 = vlaneseq
    %v5440 = vshrl.u32 %v5439, 7
    %v5441 = vsub.s32 3, %v5440
    %v5442 = vrot.slane %v5425, %v5441
    %v5443 = vlaneseq
    %v5444 = vshrl.u32 %v5443, 7
    %v5445 = vsub.s32 4, %v5444
    %v5446 = vrot.slane %v5425, %v5445
    %v5447 = vlaneseq
    %v5448 = vshrl.u32 %v5447, 7
    %v5449 = vsub.s32 5, %v5448
    %v5450 = vrot.slane %v5425, %v5449
    %v5451 = vlaneseq
    %v5452 = vshrl.u32 %v5451, 7
    %v5453 = vsub.s32 6, %v5452
    %v5454 = vrot.slane %v5425, %v5453
    %v5455 = vlaneseq
    %v5456 = vshrl.u32 %v5455, 7
    %v5457 = vsub.s32 7, %v5456
    %v5458 = vrot.slane %v5425, %v5457
    %v5467 = vmul.f32 %v4804, %v5430
    %v5468 = vmul.f32 %v4806, %v5434
    %v5469 = vmul.f32 %v5009, %v5438
    %v5470 = vmul.f32 %v5011, %v5442
    %v5471 = vmul.f32 %v5214, %v5446
    %v5472 = vmul.f32 %v5216, %v5450
    %v5473 = vmul.f32 %v5419, %v5454
    %v5474 = vmul.f32 %v5421, %v5458
    %v5475 = vld [vmem:[#allocation16] sm:$0xff]
    %v5477 = vlaneseq
    %v5478 = vshrl.u32 %v5477, 7
    %v5479 = vsub.s32 0, %v5478
    %v5480 = vrot.slane %v5475, %v5479
    %v5481 = vlaneseq
    %v5482 = vshrl.u32 %v5481, 7
    %v5483 = vsub.s32 1, %v5482
    %v5484 = vrot.slane %v5475, %v5483
    %v5485 = vlaneseq
    %v5486 = vshrl.u32 %v5485, 7
    %v5487 = vsub.s32 2, %v5486
    %v5488 = vrot.slane %v5475, %v5487
    %v5489 = vlaneseq
    %v5490 = vshrl.u32 %v5489, 7
    %v5491 = vsub.s32 3, %v5490
    %v5492 = vrot.slane %v5475, %v5491
    %v5493 = vlaneseq
    %v5494 = vshrl.u32 %v5493, 7
    %v5495 = vsub.s32 4, %v5494
    %v5496 = vrot.slane %v5475, %v5495
    %v5497 = vlaneseq
    %v5498 = vshrl.u32 %v5497, 7
    %v5499 = vsub.s32 5, %v5498
    %v5500 = vrot.slane %v5475, %v5499
    %v5501 = vlaneseq
    %v5502 = vshrl.u32 %v5501, 7
    %v5503 = vsub.s32 6, %v5502
    %v5504 = vrot.slane %v5475, %v5503
    %v5505 = vlaneseq
    %v5506 = vshrl.u32 %v5505, 7
    %v5507 = vsub.s32 7, %v5506
    %v5508 = vrot.slane %v5475, %v5507
    %v5517 = vadd.f32 %v5467, %v5480
    %v5518 = vadd.f32 %v5468, %v5484
    %v5519 = vadd.f32 %v5469, %v5488
    %v5520 = vadd.f32 %v5470, %v5492
    %v5521 = vadd.f32 %v5471, %v5496
    %v5522 = vadd.f32 %v5472, %v5500
    %v5523 = vadd.f32 %v5473, %v5504
    %v5524 = vadd.f32 %v5474, %v5508
    %v5525 = vmul.f32 %v5517, 0.01
    %v5526 = vmul.f32 %v5518, 0.01
    %v5527 = vmul.f32 %v5519, 0.01
    %v5528 = vmul.f32 %v5520, 0.01
    %v5529 = vmul.f32 %v5521, 0.01
    %v5530 = vmul.f32 %v5522, 0.01
    %v5531 = vmul.f32 %v5523, 0.01
    %v5532 = vmul.f32 %v5524, 0.01
    %v5533 = vmax.f32 %v5517, %v5525
    %v5534 = vmax.f32 %v5518, %v5526
    %v5535 = vmax.f32 %v5519, %v5527
    %v5536 = vmax.f32 %v5520, %v5528
    %v5537 = vmax.f32 %v5521, %v5529
    %v5538 = vmax.f32 %v5522, %v5530
    %v5539 = vmax.f32 %v5523, %v5531
    %v5540 = vmax.f32 %v5524, %v5532
    %v5541 = vpack.c.bf16 %v5533, %v5533
    %v5542 = vpack.c.bf16 %v5534, %v5534
    %v5543 = vpack.c.bf16 %v5535, %v5535
    %v5544 = vpack.c.bf16 %v5536, %v5536
    %v5545 = vpack.c.bf16 %v5537, %v5537
    %v5546 = vpack.c.bf16 %v5538, %v5538
    %v5547 = vpack.c.bf16 %v5539, %v5539
    %v5548 = vpack.c.bf16 %v5540, %v5540
    %v5549 = vld [vmem:[#allocation17] sm:$0xff]
    %v5550 = vld [vmem:[#allocation17 + $0x8] sm:$0xff]
    %v5551 = vld [vmem:[#allocation17 + $0x10] sm:$0xff]
    %v5552 = vld [vmem:[#allocation17 + $0x18] sm:$0xff]
    %v5553 = vld [vmem:[#allocation17 + $0x20] sm:$0xff]
    %v5554 = vld [vmem:[#allocation17 + $0x28] sm:$0xff]
    %v5555 = vld [vmem:[#allocation17 + $0x30] sm:$0xff]
    %v5556 = vld [vmem:[#allocation17 + $0x38] sm:$0xff]
    %v5557 = vld [vmem:[#allocation17 + $0x40] sm:$0xff]
    %v5558 = vld [vmem:[#allocation17 + $0x48] sm:$0xff]
    %v5559 = vld [vmem:[#allocation17 + $0x50] sm:$0xff]
    %v5560 = vld [vmem:[#allocation17 + $0x58] sm:$0xff]
    %v5561 = vld [vmem:[#allocation17 + $0x60] sm:$0xff]
    %v5562 = vld [vmem:[#allocation17 + $0x68] sm:$0xff]
    %v5563 = vld [vmem:[#allocation17 + $0x70] sm:$0xff]
    %v5564 = vld [vmem:[#allocation17 + $0x78] sm:$0xff]
    %v5565 = vld [vmem:[#allocation17 + $0x80] sm:$0xff]
    %v5566 = vld [vmem:[#allocation17 + $0x88] sm:$0xff]
    %v5567 = vld [vmem:[#allocation17 + $0x90] sm:$0xff]
    %v5568 = vld [vmem:[#allocation17 + $0x98] sm:$0xff]
    %v5569 = vld [vmem:[#allocation17 + $0xa0] sm:$0xff]
    %v5570 = vld [vmem:[#allocation17 + $0xa8] sm:$0xff]
    %v5571 = vld [vmem:[#allocation17 + $0xb0] sm:$0xff]
    %v5572 = vld [vmem:[#allocation17 + $0xb8] sm:$0xff]
    %v5573 = vld [vmem:[#allocation17 + $0xc0] sm:$0xff]
    %v5574 = vld [vmem:[#allocation17 + $0xc8] sm:$0xff]
    %v5575 = vld [vmem:[#allocation17 + $0xd0] sm:$0xff]
    %v5576 = vld [vmem:[#allocation17 + $0xd8] sm:$0xff]
    %v5577 = vld [vmem:[#allocation17 + $0xe0] sm:$0xff]
    %v5578 = vld [vmem:[#allocation17 + $0xe8] sm:$0xff]
    %v5579 = vld [vmem:[#allocation17 + $0xf0] sm:$0xff]
    %v5580 = vld [vmem:[#allocation17 + $0xf8] sm:$0xff]
    %v5581 = vld [vmem:[#allocation17 + $0x100] sm:$0xff]
    %v5582 = vld [vmem:[#allocation17 + $0x108] sm:$0xff]
    %v5583 = vld [vmem:[#allocation17 + $0x110] sm:$0xff]
    %v5584 = vld [vmem:[#allocation17 + $0x118] sm:$0xff]
    %v5585 = vld [vmem:[#allocation17 + $0x120] sm:$0xff]
    %v5586 = vld [vmem:[#allocation17 + $0x128] sm:$0xff]
    %v5587 = vld [vmem:[#allocation17 + $0x130] sm:$0xff]
    %v5588 = vld [vmem:[#allocation17 + $0x138] sm:$0xff]
    %v5589 = vld [vmem:[#allocation17 + $0x140] sm:$0xff]
    %v5590 = vld [vmem:[#allocation17 + $0x148] sm:$0xff]
    %v5591 = vld [vmem:[#allocation17 + $0x150] sm:$0xff]
    %v5592 = vld [vmem:[#allocation17 + $0x158] sm:$0xff]
    %v5593 = vld [vmem:[#allocation17 + $0x160] sm:$0xff]
    %v5594 = vld [vmem:[#allocation17 + $0x168] sm:$0xff]
    %v5595 = vld [vmem:[#allocation17 + $0x170] sm:$0xff]
    %v5596 = vld [vmem:[#allocation17 + $0x178] sm:$0xff]
    %v5597 = vld [vmem:[#allocation17 + $0x180] sm:$0xff]
    %v5598 = vld [vmem:[#allocation17 + $0x188] sm:$0xff]
    %v5599 = vld [vmem:[#allocation17 + $0x190] sm:$0xff]
    %v5600 = vld [vmem:[#allocation17 + $0x198] sm:$0xff]
    %v5601 = vld [vmem:[#allocation17 + $0x1a0] sm:$0xff]
    %v5602 = vld [vmem:[#allocation17 + $0x1a8] sm:$0xff]
    %v5603 = vld [vmem:[#allocation17 + $0x1b0] sm:$0xff]
    %v5604 = vld [vmem:[#allocation17 + $0x1b8] sm:$0xff]
    %v5605 = vld [vmem:[#allocation17 + $0x1c0] sm:$0xff]
    %v5606 = vld [vmem:[#allocation17 + $0x1c8] sm:$0xff]
    %v5607 = vld [vmem:[#allocation17 + $0x1d0] sm:$0xff]
    %v5608 = vld [vmem:[#allocation17 + $0x1d8] sm:$0xff]
    %v5609 = vld [vmem:[#allocation17 + $0x1e0] sm:$0xff]
    %v5610 = vld [vmem:[#allocation17 + $0x1e8] sm:$0xff]
    %v5611 = vld [vmem:[#allocation17 + $0x1f0] sm:$0xff]
    %v5612 = vld [vmem:[#allocation17 + $0x1f8] sm:$0xff]
    %v5613 = vld [vmem:[#allocation17 + $0x200] sm:$0xff]
    %v5614 = vld [vmem:[#allocation17 + $0x208] sm:$0xff]
    %v5615 = vld [vmem:[#allocation17 + $0x210] sm:$0xff]
    %v5616 = vld [vmem:[#allocation17 + $0x218] sm:$0xff]
    %v5617 = vld [vmem:[#allocation17 + $0x220] sm:$0xff]
    %v5618 = vld [vmem:[#allocation17 + $0x228] sm:$0xff]
    %v5619 = vld [vmem:[#allocation17 + $0x230] sm:$0xff]
    %v5620 = vld [vmem:[#allocation17 + $0x238] sm:$0xff]
    %v5621 = vld [vmem:[#allocation17 + $0x240] sm:$0xff]
    %v5622 = vld [vmem:[#allocation17 + $0x248] sm:$0xff]
    %v5623 = vld [vmem:[#allocation17 + $0x250] sm:$0xff]
    %v5624 = vld [vmem:[#allocation17 + $0x258] sm:$0xff]
    %v5625 = vld [vmem:[#allocation17 + $0x260] sm:$0xff]
    %v5626 = vld [vmem:[#allocation17 + $0x268] sm:$0xff]
    %v5627 = vld [vmem:[#allocation17 + $0x270] sm:$0xff]
    %v5628 = vld [vmem:[#allocation17 + $0x278] sm:$0xff]
    %v5629 = vld [vmem:[#allocation17 + $0x280] sm:$0xff]
    %v5630 = vld [vmem:[#allocation17 + $0x288] sm:$0xff]
    %v5631 = vld [vmem:[#allocation17 + $0x290] sm:$0xff]
    %v5632 = vld [vmem:[#allocation17 + $0x298] sm:$0xff]
    %v5633 = vld [vmem:[#allocation17 + $0x2a0] sm:$0xff]
    %v5634 = vld [vmem:[#allocation17 + $0x2a8] sm:$0xff]
    %v5635 = vld [vmem:[#allocation17 + $0x2b0] sm:$0xff]
    %v5636 = vld [vmem:[#allocation17 + $0x2b8] sm:$0xff]
    %v5637 = vld [vmem:[#allocation17 + $0x2c0] sm:$0xff]
    %v5638 = vld [vmem:[#allocation17 + $0x2c8] sm:$0xff]
    %v5639 = vld [vmem:[#allocation17 + $0x2d0] sm:$0xff]
    %v5640 = vld [vmem:[#allocation17 + $0x2d8] sm:$0xff]
    %v5641 = vld [vmem:[#allocation17 + $0x2e0] sm:$0xff]
    %v5642 = vld [vmem:[#allocation17 + $0x2e8] sm:$0xff]
    %v5643 = vld [vmem:[#allocation17 + $0x2f0] sm:$0xff]
    %v5644 = vld [vmem:[#allocation17 + $0x2f8] sm:$0xff]
    %v5645 = vld [vmem:[#allocation17 + $0x300] sm:$0xff]
    %v5646 = vld [vmem:[#allocation17 + $0x308] sm:$0xff]
    %v5647 = vld [vmem:[#allocation17 + $0x310] sm:$0xff]
    %v5648 = vld [vmem:[#allocation17 + $0x318] sm:$0xff]
    %v5649 = vld [vmem:[#allocation17 + $0x320] sm:$0xff]
    %v5650 = vld [vmem:[#allocation17 + $0x328] sm:$0xff]
    %v5651 = vld [vmem:[#allocation17 + $0x330] sm:$0xff]
    %v5652 = vld [vmem:[#allocation17 + $0x338] sm:$0xff]
    %v5653 = vld [vmem:[#allocation17 + $0x340] sm:$0xff]
    %v5654 = vld [vmem:[#allocation17 + $0x348] sm:$0xff]
    %v5655 = vld [vmem:[#allocation17 + $0x350] sm:$0xff]
    %v5656 = vld [vmem:[#allocation17 + $0x358] sm:$0xff]
    %v5657 = vld [vmem:[#allocation17 + $0x360] sm:$0xff]
    %v5658 = vld [vmem:[#allocation17 + $0x368] sm:$0xff]
    %v5659 = vld [vmem:[#allocation17 + $0x370] sm:$0xff]
    %v5660 = vld [vmem:[#allocation17 + $0x378] sm:$0xff]
    %v5661 = vld [vmem:[#allocation17 + $0x380] sm:$0xff]
    %v5662 = vld [vmem:[#allocation17 + $0x388] sm:$0xff]
    %v5663 = vld [vmem:[#allocation17 + $0x390] sm:$0xff]
    %v5664 = vld [vmem:[#allocation17 + $0x398] sm:$0xff]
    %v5665 = vld [vmem:[#allocation17 + $0x3a0] sm:$0xff]
    %v5666 = vld [vmem:[#allocation17 + $0x3a8] sm:$0xff]
    %v5667 = vld [vmem:[#allocation17 + $0x3b0] sm:$0xff]
    %v5668 = vld [vmem:[#allocation17 + $0x3b8] sm:$0xff]
    %v5669 = vld [vmem:[#allocation17 + $0x3c0] sm:$0xff]
    %v5670 = vld [vmem:[#allocation17 + $0x3c8] sm:$0xff]
    %v5671 = vld [vmem:[#allocation17 + $0x3d0] sm:$0xff]
    %v5672 = vld [vmem:[#allocation17 + $0x3d8] sm:$0xff]
    %v5673 = vld [vmem:[#allocation17 + $0x3e0] sm:$0xff]
    %v5674 = vld [vmem:[#allocation17 + $0x3e8] sm:$0xff]
    %v5675 = vld [vmem:[#allocation17 + $0x3f0] sm:$0xff]
    %v5676 = vld [vmem:[#allocation17 + $0x3f8] sm:$0xff]
    %v5677 = vld [vmem:[#allocation17 + $0x400] sm:$0xff]
    %v5678 = vld [vmem:[#allocation17 + $0x408] sm:$0xff]
    %v5679 = vld [vmem:[#allocation17 + $0x410] sm:$0xff]
    %v5680 = vld [vmem:[#allocation17 + $0x418] sm:$0xff]
    %v5681 = vld [vmem:[#allocation17 + $0x420] sm:$0xff]
    %v5682 = vld [vmem:[#allocation17 + $0x428] sm:$0xff]
    %v5683 = vld [vmem:[#allocation17 + $0x430] sm:$0xff]
    %v5684 = vld [vmem:[#allocation17 + $0x438] sm:$0xff]
    %v5685 = vld [vmem:[#allocation17 + $0x440] sm:$0xff]
    %v5686 = vld [vmem:[#allocation17 + $0x448] sm:$0xff]
    %v5687 = vld [vmem:[#allocation17 + $0x450] sm:$0xff]
    %v5688 = vld [vmem:[#allocation17 + $0x458] sm:$0xff]
    %v5689 = vld [vmem:[#allocation17 + $0x460] sm:$0xff]
    %v5690 = vld [vmem:[#allocation17 + $0x468] sm:$0xff]
    %v5691 = vld [vmem:[#allocation17 + $0x470] sm:$0xff]
    %v5692 = vld [vmem:[#allocation17 + $0x478] sm:$0xff]
    %v5693 = vld [vmem:[#allocation17 + $0x480] sm:$0xff]
    %v5694 = vld [vmem:[#allocation17 + $0x488] sm:$0xff]
    %v5695 = vld [vmem:[#allocation17 + $0x490] sm:$0xff]
    %v5696 = vld [vmem:[#allocation17 + $0x498] sm:$0xff]
    %v5697 = vld [vmem:[#allocation17 + $0x4a0] sm:$0xff]
    %v5698 = vld [vmem:[#allocation17 + $0x4a8] sm:$0xff]
    %v5699 = vld [vmem:[#allocation17 + $0x4b0] sm:$0xff]
    %v5700 = vld [vmem:[#allocation17 + $0x4b8] sm:$0xff]
    %v5701 = vld [vmem:[#allocation17 + $0x4c0] sm:$0xff]
    %v5702 = vld [vmem:[#allocation17 + $0x4c8] sm:$0xff]
    %v5703 = vld [vmem:[#allocation17 + $0x4d0] sm:$0xff]
    %v5704 = vld [vmem:[#allocation17 + $0x4d8] sm:$0xff]
    %v5705 = vld [vmem:[#allocation17 + $0x4e0] sm:$0xff]
    %v5706 = vld [vmem:[#allocation17 + $0x4e8] sm:$0xff]
    %v5707 = vld [vmem:[#allocation17 + $0x4f0] sm:$0xff]
    %v5708 = vld [vmem:[#allocation17 + $0x4f8] sm:$0xff]
    %v5709 = vld [vmem:[#allocation17 + $0x500] sm:$0xff]
    %v5710 = vld [vmem:[#allocation17 + $0x508] sm:$0xff]
    %v5711 = vld [vmem:[#allocation17 + $0x510] sm:$0xff]
    %v5712 = vld [vmem:[#allocation17 + $0x518] sm:$0xff]
    %v5713 = vld [vmem:[#allocation17 + $0x520] sm:$0xff]
    %v5714 = vld [vmem:[#allocation17 + $0x528] sm:$0xff]
    %v5715 = vld [vmem:[#allocation17 + $0x530] sm:$0xff]
    %v5716 = vld [vmem:[#allocation17 + $0x538] sm:$0xff]
    %v5717 = vld [vmem:[#allocation17 + $0x540] sm:$0xff]
    %v5718 = vld [vmem:[#allocation17 + $0x548] sm:$0xff]
    %v5719 = vld [vmem:[#allocation17 + $0x550] sm:$0xff]
    %v5720 = vld [vmem:[#allocation17 + $0x558] sm:$0xff]
    %v5721 = vld [vmem:[#allocation17 + $0x560] sm:$0xff]
    %v5722 = vld [vmem:[#allocation17 + $0x568] sm:$0xff]
    %v5723 = vld [vmem:[#allocation17 + $0x570] sm:$0xff]
    %v5724 = vld [vmem:[#allocation17 + $0x578] sm:$0xff]
    %v5725 = vld [vmem:[#allocation17 + $0x580] sm:$0xff]
    %v5726 = vld [vmem:[#allocation17 + $0x588] sm:$0xff]
    %v5727 = vld [vmem:[#allocation17 + $0x590] sm:$0xff]
    %v5728 = vld [vmem:[#allocation17 + $0x598] sm:$0xff]
    %v5729 = vld [vmem:[#allocation17 + $0x5a0] sm:$0xff]
    %v5730 = vld [vmem:[#allocation17 + $0x5a8] sm:$0xff]
    %v5731 = vld [vmem:[#allocation17 + $0x5b0] sm:$0xff]
    %v5732 = vld [vmem:[#allocation17 + $0x5b8] sm:$0xff]
    %v5733 = vld [vmem:[#allocation17 + $0x5c0] sm:$0xff]
    %v5734 = vld [vmem:[#allocation17 + $0x5c8] sm:$0xff]
    %v5735 = vld [vmem:[#allocation17 + $0x5d0] sm:$0xff]
    %v5736 = vld [vmem:[#allocation17 + $0x5d8] sm:$0xff]
    %v5737 = vld [vmem:[#allocation17 + $0x5e0] sm:$0xff]
    %v5738 = vld [vmem:[#allocation17 + $0x5e8] sm:$0xff]
    %v5739 = vld [vmem:[#allocation17 + $0x5f0] sm:$0xff]
    %v5740 = vld [vmem:[#allocation17 + $0x5f8] sm:$0xff]
    %v5741 = vunpack.c.l.s8.bf16 %v5549
    %v5742 = vunpack.c.l.s8.bf16 %v5550
    %v5743 = vunpack.c.l.s8.bf16 %v5551
    %v5744 = vunpack.c.l.s8.bf16 %v5552
    %v5745 = vunpack.c.l.s8.bf16 %v5553
    %v5746 = vunpack.c.l.s8.bf16 %v5554
    %v5747 = vunpack.c.h.s8.bf16 %v5549
    %v5748 = vunpack.c.h.s8.bf16 %v5550
    %v5749 = vunpack.c.h.s8.bf16 %v5551
    %v5750 = vunpack.c.h.s8.bf16 %v5552
    %v5751 = vunpack.c.h.s8.bf16 %v5553
    %v5752 = vunpack.c.h.s8.bf16 %v5554
    %v5753 = vunpack.c.l.s8.bf16 %v5555
    %v5754 = vunpack.c.l.s8.bf16 %v5556
    %v5755 = vunpack.c.l.s8.bf16 %v5557
    %v5756 = vunpack.c.l.s8.bf16 %v5558
    %v5757 = vunpack.c.l.s8.bf16 %v5559
    %v5758 = vunpack.c.l.s8.bf16 %v5560
    %v5759 = vunpack.c.h.s8.bf16 %v5555
    %v5760 = vunpack.c.h.s8.bf16 %v5556
    %v5761 = vunpack.c.h.s8.bf16 %v5557
    %v5762 = vunpack.c.h.s8.bf16 %v5558
    %v5763 = vunpack.c.h.s8.bf16 %v5559
    %v5764 = vunpack.c.h.s8.bf16 %v5560
    %v5765 = vunpack.c.l.s8.bf16 %v5561
    %v5766 = vunpack.c.l.s8.bf16 %v5562
    %v5767 = vunpack.c.l.s8.bf16 %v5563
    %v5768 = vunpack.c.l.s8.bf16 %v5564
    %v5769 = vunpack.c.l.s8.bf16 %v5565
    %v5770 = vunpack.c.l.s8.bf16 %v5566
    %v5771 = vunpack.c.h.s8.bf16 %v5561
    %v5772 = vunpack.c.h.s8.bf16 %v5562
    %v5773 = vunpack.c.h.s8.bf16 %v5563
    %v5774 = vunpack.c.h.s8.bf16 %v5564
    %v5775 = vunpack.c.h.s8.bf16 %v5565
    %v5776 = vunpack.c.h.s8.bf16 %v5566
    %v5777 = vunpack.c.l.s8.bf16 %v5567
    %v5778 = vunpack.c.l.s8.bf16 %v5568
    %v5779 = vunpack.c.l.s8.bf16 %v5569
    %v5780 = vunpack.c.l.s8.bf16 %v5570
    %v5781 = vunpack.c.l.s8.bf16 %v5571
    %v5782 = vunpack.c.l.s8.bf16 %v5572
    %v5783 = vunpack.c.h.s8.bf16 %v5567
    %v5784 = vunpack.c.h.s8.bf16 %v5568
    %v5785 = vunpack.c.h.s8.bf16 %v5569
    %v5786 = vunpack.c.h.s8.bf16 %v5570
    %v5787 = vunpack.c.h.s8.bf16 %v5571
    %v5788 = vunpack.c.h.s8.bf16 %v5572
    %v5789 = vunpack.c.l.s8.bf16 %v5573
    %v5790 = vunpack.c.l.s8.bf16 %v5574
    %v5791 = vunpack.c.l.s8.bf16 %v5575
    %v5792 = vunpack.c.l.s8.bf16 %v5576
    %v5793 = vunpack.c.l.s8.bf16 %v5577
    %v5794 = vunpack.c.l.s8.bf16 %v5578
    %v5795 = vunpack.c.h.s8.bf16 %v5573
    %v5796 = vunpack.c.h.s8.bf16 %v5574
    %v5797 = vunpack.c.h.s8.bf16 %v5575
    %v5798 = vunpack.c.h.s8.bf16 %v5576
    %v5799 = vunpack.c.h.s8.bf16 %v5577
    %v5800 = vunpack.c.h.s8.bf16 %v5578
    %v5801 = vunpack.c.l.s8.bf16 %v5579
    %v5802 = vunpack.c.l.s8.bf16 %v5580
    %v5803 = vunpack.c.l.s8.bf16 %v5581
    %v5804 = vunpack.c.l.s8.bf16 %v5582
    %v5805 = vunpack.c.l.s8.bf16 %v5583
    %v5806 = vunpack.c.l.s8.bf16 %v5584
    %v5807 = vunpack.c.h.s8.bf16 %v5579
    %v5808 = vunpack.c.h.s8.bf16 %v5580
    %v5809 = vunpack.c.h.s8.bf16 %v5581
    %v5810 = vunpack.c.h.s8.bf16 %v5582
    %v5811 = vunpack.c.h.s8.bf16 %v5583
    %v5812 = vunpack.c.h.s8.bf16 %v5584
    %v5813 = vunpack.c.l.s8.bf16 %v5585
    %v5814 = vunpack.c.l.s8.bf16 %v5586
    %v5815 = vunpack.c.l.s8.bf16 %v5587
    %v5816 = vunpack.c.l.s8.bf16 %v5588
    %v5817 = vunpack.c.l.s8.bf16 %v5589
    %v5818 = vunpack.c.l.s8.bf16 %v5590
    %v5819 = vunpack.c.h.s8.bf16 %v5585
    %v5820 = vunpack.c.h.s8.bf16 %v5586
    %v5821 = vunpack.c.h.s8.bf16 %v5587
    %v5822 = vunpack.c.h.s8.bf16 %v5588
    %v5823 = vunpack.c.h.s8.bf16 %v5589
    %v5824 = vunpack.c.h.s8.bf16 %v5590
    %v5825 = vunpack.c.l.s8.bf16 %v5591
    %v5826 = vunpack.c.l.s8.bf16 %v5592
    %v5827 = vunpack.c.l.s8.bf16 %v5593
    %v5828 = vunpack.c.l.s8.bf16 %v5594
    %v5829 = vunpack.c.l.s8.bf16 %v5595
    %v5830 = vunpack.c.l.s8.bf16 %v5596
    %v5831 = vunpack.c.h.s8.bf16 %v5591
    %v5832 = vunpack.c.h.s8.bf16 %v5592
    %v5833 = vunpack.c.h.s8.bf16 %v5593
    %v5834 = vunpack.c.h.s8.bf16 %v5594
    %v5835 = vunpack.c.h.s8.bf16 %v5595
    %v5836 = vunpack.c.h.s8.bf16 %v5596
    %v5837 = vunpack.c.l.s8.bf16 %v5597
    %v5838 = vunpack.c.l.s8.bf16 %v5598
    %v5839 = vunpack.c.l.s8.bf16 %v5599
    %v5840 = vunpack.c.l.s8.bf16 %v5600
    %v5841 = vunpack.c.l.s8.bf16 %v5601
    %v5842 = vunpack.c.l.s8.bf16 %v5602
    %v5843 = vunpack.c.h.s8.bf16 %v5597
    %v5844 = vunpack.c.h.s8.bf16 %v5598
    %v5845 = vunpack.c.h.s8.bf16 %v5599
    %v5846 = vunpack.c.h.s8.bf16 %v5600
    %v5847 = vunpack.c.h.s8.bf16 %v5601
    %v5848 = vunpack.c.h.s8.bf16 %v5602
    %v5849 = vunpack.c.l.s8.bf16 %v5603
    %v5850 = vunpack.c.l.s8.bf16 %v5604
    %v5851 = vunpack.c.l.s8.bf16 %v5605
    %v5852 = vunpack.c.l.s8.bf16 %v5606
    %v5853 = vunpack.c.l.s8.bf16 %v5607
    %v5854 = vunpack.c.l.s8.bf16 %v5608
    %v5855 = vunpack.c.h.s8.bf16 %v5603
    %v5856 = vunpack.c.h.s8.bf16 %v5604
    %v5857 = vunpack.c.h.s8.bf16 %v5605
    %v5858 = vunpack.c.h.s8.bf16 %v5606
    %v5859 = vunpack.c.h.s8.bf16 %v5607
    %v5860 = vunpack.c.h.s8.bf16 %v5608
    %v5861 = vunpack.c.l.s8.bf16 %v5609
    %v5862 = vunpack.c.l.s8.bf16 %v5610
    %v5863 = vunpack.c.l.s8.bf16 %v5611
    %v5864 = vunpack.c.l.s8.bf16 %v5612
    %v5865 = vunpack.c.l.s8.bf16 %v5613
    %v5866 = vunpack.c.l.s8.bf16 %v5614
    %v5867 = vunpack.c.h.s8.bf16 %v5609
    %v5868 = vunpack.c.h.s8.bf16 %v5610
    %v5869 = vunpack.c.h.s8.bf16 %v5611
    %v5870 = vunpack.c.h.s8.bf16 %v5612
    %v5871 = vunpack.c.h.s8.bf16 %v5613
    %v5872 = vunpack.c.h.s8.bf16 %v5614
    %v5873 = vunpack.c.l.s8.bf16 %v5615
    %v5874 = vunpack.c.l.s8.bf16 %v5616
    %v5875 = vunpack.c.l.s8.bf16 %v5617
    %v5876 = vunpack.c.l.s8.bf16 %v5618
    %v5877 = vunpack.c.l.s8.bf16 %v5619
    %v5878 = vunpack.c.l.s8.bf16 %v5620
    %v5879 = vunpack.c.h.s8.bf16 %v5615
    %v5880 = vunpack.c.h.s8.bf16 %v5616
    %v5881 = vunpack.c.h.s8.bf16 %v5617
    %v5882 = vunpack.c.h.s8.bf16 %v5618
    %v5883 = vunpack.c.h.s8.bf16 %v5619
    %v5884 = vunpack.c.h.s8.bf16 %v5620
    %v5885 = vunpack.c.l.s8.bf16 %v5621
    %v5886 = vunpack.c.l.s8.bf16 %v5622
    %v5887 = vunpack.c.l.s8.bf16 %v5623
    %v5888 = vunpack.c.l.s8.bf16 %v5624
    %v5889 = vunpack.c.l.s8.bf16 %v5625
    %v5890 = vunpack.c.l.s8.bf16 %v5626
    %v5891 = vunpack.c.h.s8.bf16 %v5621
    %v5892 = vunpack.c.h.s8.bf16 %v5622
    %v5893 = vunpack.c.h.s8.bf16 %v5623
    %v5894 = vunpack.c.h.s8.bf16 %v5624
    %v5895 = vunpack.c.h.s8.bf16 %v5625
    %v5896 = vunpack.c.h.s8.bf16 %v5626
    %v5897 = vunpack.c.l.s8.bf16 %v5627
    %v5898 = vunpack.c.l.s8.bf16 %v5628
    %v5899 = vunpack.c.l.s8.bf16 %v5629
    %v5900 = vunpack.c.l.s8.bf16 %v5630
    %v5901 = vunpack.c.l.s8.bf16 %v5631
    %v5902 = vunpack.c.l.s8.bf16 %v5632
    %v5903 = vunpack.c.h.s8.bf16 %v5627
    %v5904 = vunpack.c.h.s8.bf16 %v5628
    %v5905 = vunpack.c.h.s8.bf16 %v5629
    %v5906 = vunpack.c.h.s8.bf16 %v5630
    %v5907 = vunpack.c.h.s8.bf16 %v5631
    %v5908 = vunpack.c.h.s8.bf16 %v5632
    %v5909 = vunpack.c.l.s8.bf16 %v5633
    %v5910 = vunpack.c.l.s8.bf16 %v5634
    %v5911 = vunpack.c.l.s8.bf16 %v5635
    %v5912 = vunpack.c.l.s8.bf16 %v5636
    %v5913 = vunpack.c.l.s8.bf16 %v5637
    %v5914 = vunpack.c.l.s8.bf16 %v5638
    %v5915 = vunpack.c.h.s8.bf16 %v5633
    %v5916 = vunpack.c.h.s8.bf16 %v5634
    %v5917 = vunpack.c.h.s8.bf16 %v5635
    %v5918 = vunpack.c.h.s8.bf16 %v5636
    %v5919 = vunpack.c.h.s8.bf16 %v5637
    %v5920 = vunpack.c.h.s8.bf16 %v5638
    %v5921 = vunpack.c.l.s8.bf16 %v5639
    %v5922 = vunpack.c.l.s8.bf16 %v5640
    %v5923 = vunpack.c.l.s8.bf16 %v5641
    %v5924 = vunpack.c.l.s8.bf16 %v5642
    %v5925 = vunpack.c.l.s8.bf16 %v5643
    %v5926 = vunpack.c.l.s8.bf16 %v5644
    %v5927 = vunpack.c.h.s8.bf16 %v5639
    %v5928 = vunpack.c.h.s8.bf16 %v5640
    %v5929 = vunpack.c.h.s8.bf16 %v5641
    %v5930 = vunpack.c.h.s8.bf16 %v5642
    %v5931 = vunpack.c.h.s8.bf16 %v5643
    %v5932 = vunpack.c.h.s8.bf16 %v5644
    %v5933 = vunpack.c.l.s8.bf16 %v5645
    %v5934 = vunpack.c.l.s8.bf16 %v5646
    %v5935 = vunpack.c.l.s8.bf16 %v5647
    %v5936 = vunpack.c.l.s8.bf16 %v5648
    %v5937 = vunpack.c.l.s8.bf16 %v5649
    %v5938 = vunpack.c.l.s8.bf16 %v5650
    %v5939 = vunpack.c.h.s8.bf16 %v5645
    %v5940 = vunpack.c.h.s8.bf16 %v5646
    %v5941 = vunpack.c.h.s8.bf16 %v5647
    %v5942 = vunpack.c.h.s8.bf16 %v5648
    %v5943 = vunpack.c.h.s8.bf16 %v5649
    %v5944 = vunpack.c.h.s8.bf16 %v5650
    %v5945 = vunpack.c.l.s8.bf16 %v5651
    %v5946 = vunpack.c.l.s8.bf16 %v5652
    %v5947 = vunpack.c.l.s8.bf16 %v5653
    %v5948 = vunpack.c.l.s8.bf16 %v5654
    %v5949 = vunpack.c.l.s8.bf16 %v5655
    %v5950 = vunpack.c.l.s8.bf16 %v5656
    %v5951 = vunpack.c.h.s8.bf16 %v5651
    %v5952 = vunpack.c.h.s8.bf16 %v5652
    %v5953 = vunpack.c.h.s8.bf16 %v5653
    %v5954 = vunpack.c.h.s8.bf16 %v5654
    %v5955 = vunpack.c.h.s8.bf16 %v5655
    %v5956 = vunpack.c.h.s8.bf16 %v5656
    %v5957 = vunpack.c.l.s8.bf16 %v5657
    %v5958 = vunpack.c.l.s8.bf16 %v5658
    %v5959 = vunpack.c.l.s8.bf16 %v5659
    %v5960 = vunpack.c.l.s8.bf16 %v5660
    %v5961 = vunpack.c.l.s8.bf16 %v5661
    %v5962 = vunpack.c.l.s8.bf16 %v5662
    %v5963 = vunpack.c.h.s8.bf16 %v5657
    %v5964 = vunpack.c.h.s8.bf16 %v5658
    %v5965 = vunpack.c.h.s8.bf16 %v5659
    %v5966 = vunpack.c.h.s8.bf16 %v5660
    %v5967 = vunpack.c.h.s8.bf16 %v5661
    %v5968 = vunpack.c.h.s8.bf16 %v5662
    %v5969 = vunpack.c.l.s8.bf16 %v5663
    %v5970 = vunpack.c.l.s8.bf16 %v5664
    %v5971 = vunpack.c.l.s8.bf16 %v5665
    %v5972 = vunpack.c.l.s8.bf16 %v5666
    %v5973 = vunpack.c.l.s8.bf16 %v5667
    %v5974 = vunpack.c.l.s8.bf16 %v5668
    %v5975 = vunpack.c.h.s8.bf16 %v5663
    %v5976 = vunpack.c.h.s8.bf16 %v5664
    %v5977 = vunpack.c.h.s8.bf16 %v5665
    %v5978 = vunpack.c.h.s8.bf16 %v5666
    %v5979 = vunpack.c.h.s8.bf16 %v5667
    %v5980 = vunpack.c.h.s8.bf16 %v5668
    %v5981 = vunpack.c.l.s8.bf16 %v5669
    %v5982 = vunpack.c.l.s8.bf16 %v5670
    %v5983 = vunpack.c.l.s8.bf16 %v5671
    %v5984 = vunpack.c.l.s8.bf16 %v5672
    %v5985 = vunpack.c.l.s8.bf16 %v5673
    %v5986 = vunpack.c.l.s8.bf16 %v5674
    %v5987 = vunpack.c.h.s8.bf16 %v5669
    %v5988 = vunpack.c.h.s8.bf16 %v5670
    %v5989 = vunpack.c.h.s8.bf16 %v5671
    %v5990 = vunpack.c.h.s8.bf16 %v5672
    %v5991 = vunpack.c.h.s8.bf16 %v5673
    %v5992 = vunpack.c.h.s8.bf16 %v5674
    %v5993 = vunpack.c.l.s8.bf16 %v5675
    %v5994 = vunpack.c.l.s8.bf16 %v5676
    %v5995 = vunpack.c.l.s8.bf16 %v5677
    %v5996 = vunpack.c.l.s8.bf16 %v5678
    %v5997 = vunpack.c.l.s8.bf16 %v5679
    %v5998 = vunpack.c.l.s8.bf16 %v5680
    %v5999 = vunpack.c.h.s8.bf16 %v5675
    %v6000 = vunpack.c.h.s8.bf16 %v5676
    %v6001 = vunpack.c.h.s8.bf16 %v5677
    %v6002 = vunpack.c.h.s8.bf16 %v5678
    %v6003 = vunpack.c.h.s8.bf16 %v5679
    %v6004 = vunpack.c.h.s8.bf16 %v5680
    %v6005 = vunpack.c.l.s8.bf16 %v5681
    %v6006 = vunpack.c.l.s8.bf16 %v5682
    %v6007 = vunpack.c.l.s8.bf16 %v5683
    %v6008 = vunpack.c.l.s8.bf16 %v5684
    %v6009 = vunpack.c.l.s8.bf16 %v5685
    %v6010 = vunpack.c.l.s8.bf16 %v5686
    %v6011 = vunpack.c.h.s8.bf16 %v5681
    %v6012 = vunpack.c.h.s8.bf16 %v5682
    %v6013 = vunpack.c.h.s8.bf16 %v5683
    %v6014 = vunpack.c.h.s8.bf16 %v5684
    %v6015 = vunpack.c.h.s8.bf16 %v5685
    %v6016 = vunpack.c.h.s8.bf16 %v5686
    %v6017 = vunpack.c.l.s8.bf16 %v5687
    %v6018 = vunpack.c.l.s8.bf16 %v5688
    %v6019 = vunpack.c.l.s8.bf16 %v5689
    %v6020 = vunpack.c.l.s8.bf16 %v5690
    %v6021 = vunpack.c.l.s8.bf16 %v5691
    %v6022 = vunpack.c.l.s8.bf16 %v5692
    %v6023 = vunpack.c.h.s8.bf16 %v5687
    %v6024 = vunpack.c.h.s8.bf16 %v5688
    %v6025 = vunpack.c.h.s8.bf16 %v5689
    %v6026 = vunpack.c.h.s8.bf16 %v5690
    %v6027 = vunpack.c.h.s8.bf16 %v5691
    %v6028 = vunpack.c.h.s8.bf16 %v5692
    %v6029 = vunpack.c.l.s8.bf16 %v5693
    %v6030 = vunpack.c.l.s8.bf16 %v5694
    %v6031 = vunpack.c.l.s8.bf16 %v5695
    %v6032 = vunpack.c.l.s8.bf16 %v5696
    %v6033 = vunpack.c.l.s8.bf16 %v5697
    %v6034 = vunpack.c.l.s8.bf16 %v5698
    %v6035 = vunpack.c.h.s8.bf16 %v5693
    %v6036 = vunpack.c.h.s8.bf16 %v5694
    %v6037 = vunpack.c.h.s8.bf16 %v5695
    %v6038 = vunpack.c.h.s8.bf16 %v5696
    %v6039 = vunpack.c.h.s8.bf16 %v5697
    %v6040 = vunpack.c.h.s8.bf16 %v5698
    %v6041 = vunpack.c.l.s8.bf16 %v5699
    %v6042 = vunpack.c.l.s8.bf16 %v5700
    %v6043 = vunpack.c.l.s8.bf16 %v5701
    %v6044 = vunpack.c.l.s8.bf16 %v5702
    %v6045 = vunpack.c.l.s8.bf16 %v5703
    %v6046 = vunpack.c.l.s8.bf16 %v5704
    %v6047 = vunpack.c.h.s8.bf16 %v5699
    %v6048 = vunpack.c.h.s8.bf16 %v5700
    %v6049 = vunpack.c.h.s8.bf16 %v5701
    %v6050 = vunpack.c.h.s8.bf16 %v5702
    %v6051 = vunpack.c.h.s8.bf16 %v5703
    %v6052 = vunpack.c.h.s8.bf16 %v5704
    %v6053 = vunpack.c.l.s8.bf16 %v5705
    %v6054 = vunpack.c.l.s8.bf16 %v5706
    %v6055 = vunpack.c.l.s8.bf16 %v5707
    %v6056 = vunpack.c.l.s8.bf16 %v5708
    %v6057 = vunpack.c.l.s8.bf16 %v5709
    %v6058 = vunpack.c.l.s8.bf16 %v5710
    %v6059 = vunpack.c.h.s8.bf16 %v5705
    %v6060 = vunpack.c.h.s8.bf16 %v5706
    %v6061 = vunpack.c.h.s8.bf16 %v5707
    %v6062 = vunpack.c.h.s8.bf16 %v5708
    %v6063 = vunpack.c.h.s8.bf16 %v5709
    %v6064 = vunpack.c.h.s8.bf16 %v5710
    %v6065 = vunpack.c.l.s8.bf16 %v5711
    %v6066 = vunpack.c.l.s8.bf16 %v5712
    %v6067 = vunpack.c.l.s8.bf16 %v5713
    %v6068 = vunpack.c.l.s8.bf16 %v5714
    %v6069 = vunpack.c.l.s8.bf16 %v5715
    %v6070 = vunpack.c.l.s8.bf16 %v5716
    %v6071 = vunpack.c.h.s8.bf16 %v5711
    %v6072 = vunpack.c.h.s8.bf16 %v5712
    %v6073 = vunpack.c.h.s8.bf16 %v5713
    %v6074 = vunpack.c.h.s8.bf16 %v5714
    %v6075 = vunpack.c.h.s8.bf16 %v5715
    %v6076 = vunpack.c.h.s8.bf16 %v5716
    %v6077 = vunpack.c.l.s8.bf16 %v5717
    %v6078 = vunpack.c.l.s8.bf16 %v5718
    %v6079 = vunpack.c.l.s8.bf16 %v5719
    %v6080 = vunpack.c.l.s8.bf16 %v5720
    %v6081 = vunpack.c.l.s8.bf16 %v5721
    %v6082 = vunpack.c.l.s8.bf16 %v5722
    %v6083 = vunpack.c.h.s8.bf16 %v5717
    %v6084 = vunpack.c.h.s8.bf16 %v5718
    %v6085 = vunpack.c.h.s8.bf16 %v5719
    %v6086 = vunpack.c.h.s8.bf16 %v5720
    %v6087 = vunpack.c.h.s8.bf16 %v5721
    %v6088 = vunpack.c.h.s8.bf16 %v5722
    %v6089 = vunpack.c.l.s8.bf16 %v5723
    %v6090 = vunpack.c.l.s8.bf16 %v5724
    %v6091 = vunpack.c.l.s8.bf16 %v5725
    %v6092 = vunpack.c.l.s8.bf16 %v5726
    %v6093 = vunpack.c.l.s8.bf16 %v5727
    %v6094 = vunpack.c.l.s8.bf16 %v5728
    %v6095 = vunpack.c.h.s8.bf16 %v5723
    %v6096 = vunpack.c.h.s8.bf16 %v5724
    %v6097 = vunpack.c.h.s8.bf16 %v5725
    %v6098 = vunpack.c.h.s8.bf16 %v5726
    %v6099 = vunpack.c.h.s8.bf16 %v5727
    %v6100 = vunpack.c.h.s8.bf16 %v5728
    %v6101 = vunpack.c.l.s8.bf16 %v5729
    %v6102 = vunpack.c.l.s8.bf16 %v5730
    %v6103 = vunpack.c.l.s8.bf16 %v5731
    %v6104 = vunpack.c.l.s8.bf16 %v5732
    %v6105 = vunpack.c.l.s8.bf16 %v5733
    %v6106 = vunpack.c.l.s8.bf16 %v5734
    %v6107 = vunpack.c.h.s8.bf16 %v5729
    %v6108 = vunpack.c.h.s8.bf16 %v5730
    %v6109 = vunpack.c.h.s8.bf16 %v5731
    %v6110 = vunpack.c.h.s8.bf16 %v5732
    %v6111 = vunpack.c.h.s8.bf16 %v5733
    %v6112 = vunpack.c.h.s8.bf16 %v5734
    %v6113 = vunpack.c.l.s8.bf16 %v5735
    %v6114 = vunpack.c.l.s8.bf16 %v5736
    %v6115 = vunpack.c.l.s8.bf16 %v5737
    %v6116 = vunpack.c.l.s8.bf16 %v5738
    %v6117 = vunpack.c.l.s8.bf16 %v5739
    %v6118 = vunpack.c.l.s8.bf16 %v5740
    %v6119 = vunpack.c.h.s8.bf16 %v5735
    %v6120 = vunpack.c.h.s8.bf16 %v5736
    %v6121 = vunpack.c.h.s8.bf16 %v5737
    %v6122 = vunpack.c.h.s8.bf16 %v5738
    %v6123 = vunpack.c.h.s8.bf16 %v5739
    %v6124 = vunpack.c.h.s8.bf16 %v5740
    %6125 = vmatprep.subr.bf16.mxu0 %v5742
    %6126 = vmatpush1.bf16.msra.mxu0 %v5741
    %6127 = vmatprep.subr.bf16.mxu0 %v5748
    %6128 = vmatpush1.bf16.msra.mxu0 %v5747
    %6129 = vmatprep.subr.bf16.mxu0 %v5754
    %6130 = vmatpush1.bf16.msra.mxu0 %v5753
    %6131 = vmatprep.subr.bf16.mxu0 %v5760
    %6132 = vmatpush1.bf16.msra.mxu0 %v5759
    %6133 = vmatprep.subr.bf16.mxu0 %v5766
    %6134 = vmatpush1.bf16.msra.mxu0 %v5765
    %6135 = vmatprep.subr.bf16.mxu0 %v5772
    %6136 = vmatpush1.bf16.msra.mxu0 %v5771
    %6137 = vmatprep.subr.bf16.mxu0 %v5778
    %6138 = vmatpush1.bf16.msra.mxu0 %v5777
    %6139 = vmatprep.subr.bf16.mxu0 %v5784
    %6140 = vmatpush1.bf16.msra.mxu0 %v5783
    %6141 = vmatprep.subr.bf16.mxu0 %v5790
    %6142 = vmatpush1.bf16.msra.mxu0 %v5789
    %6143 = vmatprep.subr.bf16.mxu0 %v5796
    %6144 = vmatpush1.bf16.msra.mxu0 %v5795
    %6145 = vmatprep.subr.bf16.mxu0 %v5802
    %6146 = vmatpush1.bf16.msra.mxu0 %v5801
    %6147 = vmatprep.subr.bf16.mxu0 %v5808
    %6148 = vmatpush1.bf16.msra.mxu0 %v5807
    %6149 = vmatprep.subr.bf16.mxu0 %v5814
    %6150 = vmatpush1.bf16.msra.mxu0 %v5813
    %6151 = vmatprep.subr.bf16.mxu0 %v5820
    %6152 = vmatpush1.bf16.msra.mxu0 %v5819
    %6153 = vmatprep.subr.bf16.mxu0 %v5826
    %6154 = vmatpush1.bf16.msra.mxu0 %v5825
    %6155 = vmatprep.subr.bf16.mxu0 %v5832
    %6156 = vmatpush1.bf16.msra.mxu0 %v5831
    %6157 = vmatprep.mubr.bf16.mxu0 %v5542
    %6158 = vmatmul.mubr.bf16.gmra.mrb[0].mxu0 %v5541
    %v6159 = vpop.f32.mrb[0].mxu0
    %v6160 = vadd.f32 0.0, %v6159
    %v6161 = vpop.f32.mrb[0].mxu0
    %v6162 = vadd.f32 0.0, %v6161
    %v6163 = vpop.f32.mrb[0].mxu0
    %v6164 = vpop.f32.mrb[0].mxu0
    %6165 = vdwg.mxu0
    %6166 = vmatprep.subr.bf16.mxu0 %v5838
    %6167 = vmatpush1.bf16.msra.mxu0 %v5837
    %6168 = vmatprep.subr.bf16.mxu0 %v5844
    %6169 = vmatpush1.bf16.msra.mxu0 %v5843
    %6170 = vmatprep.subr.bf16.mxu0 %v5850
    %6171 = vmatpush1.bf16.msra.mxu0 %v5849
    %6172 = vmatprep.subr.bf16.mxu0 %v5856
    %6173 = vmatpush1.bf16.msra.mxu0 %v5855
    %6174 = vmatprep.subr.bf16.mxu0 %v5862
    %6175 = vmatpush1.bf16.msra.mxu0 %v5861
    %6176 = vmatprep.subr.bf16.mxu0 %v5868
    %6177 = vmatpush1.bf16.msra.mxu0 %v5867
    %6178 = vmatprep.subr.bf16.mxu0 %v5874
    %6179 = vmatpush1.bf16.msra.mxu0 %v5873
    %6180 = vmatprep.subr.bf16.mxu0 %v5880
    %6181 = vmatpush1.bf16.msra.mxu0 %v5879
    %6182 = vmatprep.subr.bf16.mxu0 %v5886
    %6183 = vmatpush1.bf16.msra.mxu0 %v5885
    %6184 = vmatprep.subr.bf16.mxu0 %v5892
    %6185 = vmatpush1.bf16.msra.mxu0 %v5891
    %6186 = vmatprep.subr.bf16.mxu0 %v5898
    %6187 = vmatpush1.bf16.msra.mxu0 %v5897
    %6188 = vmatprep.subr.bf16.mxu0 %v5904
    %6189 = vmatpush1.bf16.msra.mxu0 %v5903
    %6190 = vmatprep.subr.bf16.mxu0 %v5910
    %6191 = vmatpush1.bf16.msra.mxu0 %v5909
    %6192 = vmatprep.subr.bf16.mxu0 %v5916
    %6193 = vmatpush1.bf16.msra.mxu0 %v5915
    %6194 = vmatprep.subr.bf16.mxu0 %v5922
    %6195 = vmatpush1.bf16.msra.mxu0 %v5921
    %6196 = vmatprep.subr.bf16.mxu0 %v5928
    %6197 = vmatpush1.bf16.msra.mxu0 %v5927
    %6198 = vmatprep.mubr.bf16.mxu0 %v5544
    %6199 = vmatmul.mubr.bf16.gmra.mrb[0].mxu0 %v5543
    %v6200 = vpop.f32.mrb[0].mxu0
    %v6201 = vadd.f32 %v6160, %v6200
    %v6202 = vpop.f32.mrb[0].mxu0
    %v6203 = vadd.f32 %v6162, %v6202
    %v6204 = vpop.f32.mrb[0].mxu0
    %v6205 = vpop.f32.mrb[0].mxu0
    %6206 = vdwg.mxu0
    %6207 = vmatprep.subr.bf16.mxu0 %v5934
    %6208 = vmatpush1.bf16.msra.mxu0 %v5933
    %6209 = vmatprep.subr.bf16.mxu0 %v5940
    %6210 = vmatpush1.bf16.msra.mxu0 %v5939
    %6211 = vmatprep.subr.bf16.mxu0 %v5946
    %6212 = vmatpush1.bf16.msra.mxu0 %v5945
    %6213 = vmatprep.subr.bf16.mxu0 %v5952
    %6214 = vmatpush1.bf16.msra.mxu0 %v5951
    %6215 = vmatprep.subr.bf16.mxu0 %v5958
    %6216 = vmatpush1.bf16.msra.mxu0 %v5957
    %6217 = vmatprep.subr.bf16.mxu0 %v5964
    %6218 = vmatpush1.bf16.msra.mxu0 %v5963
    %6219 = vmatprep.subr.bf16.mxu0 %v5970
    %6220 = vmatpush1.bf16.msra.mxu0 %v5969
    %6221 = vmatprep.subr.bf16.mxu0 %v5976
    %6222 = vmatpush1.bf16.msra.mxu0 %v5975
    %6223 = vmatprep.subr.bf16.mxu0 %v5982
    %6224 = vmatpush1.bf16.msra.mxu0 %v5981
    %6225 = vmatprep.subr.bf16.mxu0 %v5988
    %6226 = vmatpush1.bf16.msra.mxu0 %v5987
    %6227 = vmatprep.subr.bf16.mxu0 %v5994
    %6228 = vmatpush1.bf16.msra.mxu0 %v5993
    %6229 = vmatprep.subr.bf16.mxu0 %v6000
    %6230 = vmatpush1.bf16.msra.mxu0 %v5999
    %6231 = vmatprep.subr.bf16.mxu0 %v6006
    %6232 = vmatpush1.bf16.msra.mxu0 %v6005
    %6233 = vmatprep.subr.bf16.mxu0 %v6012
    %6234 = vmatpush1.bf16.msra.mxu0 %v6011
    %6235 = vmatprep.subr.bf16.mxu0 %v6018
    %6236 = vmatpush1.bf16.msra.mxu0 %v6017
    %6237 = vmatprep.subr.bf16.mxu0 %v6024
    %6238 = vmatpush1.bf16.msra.mxu0 %v6023
    %6239 = vmatprep.mubr.bf16.mxu0 %v5546
    %6240 = vmatmul.mubr.bf16.gmra.mrb[0].mxu0 %v5545
    %v6241 = vpop.f32.mrb[0].mxu0
    %v6242 = vadd.f32 %v6201, %v6241
    %v6243 = vpop.f32.mrb[0].mxu0
    %v6244 = vadd.f32 %v6203, %v6243
    %v6245 = vpop.f32.mrb[0].mxu0
    %v6246 = vpop.f32.mrb[0].mxu0
    %6247 = vdwg.mxu0
    %6248 = vmatprep.subr.bf16.mxu0 %v6030
    %6249 = vmatpush1.bf16.msra.mxu0 %v6029
    %6250 = vmatprep.subr.bf16.mxu0 %v6036
    %6251 = vmatpush1.bf16.msra.mxu0 %v6035
    %6252 = vmatprep.subr.bf16.mxu0 %v6042
    %6253 = vmatpush1.bf16.msra.mxu0 %v6041
    %6254 = vmatprep.subr.bf16.mxu0 %v6048
    %6255 = vmatpush1.bf16.msra.mxu0 %v6047
    %6256 = vmatprep.subr.bf16.mxu0 %v6054
    %6257 = vmatpush1.bf16.msra.mxu0 %v6053
    %6258 = vmatprep.subr.bf16.mxu0 %v6060
    %6259 = vmatpush1.bf16.msra.mxu0 %v6059
    %6260 = vmatprep.subr.bf16.mxu0 %v6066
    %6261 = vmatpush1.bf16.msra.mxu0 %v6065
    %6262 = vmatprep.subr.bf16.mxu0 %v6072
    %6263 = vmatpush1.bf16.msra.mxu0 %v6071
    %6264 = vmatprep.subr.bf16.mxu0 %v6078
    %6265 = vmatpush1.bf16.msra.mxu0 %v6077
    %6266 = vmatprep.subr.bf16.mxu0 %v6084
    %6267 = vmatpush1.bf16.msra.mxu0 %v6083
    %6268 = vmatprep.subr.bf16.mxu0 %v6090
    %6269 = vmatpush1.bf16.msra.mxu0 %v6089
    %6270 = vmatprep.subr.bf16.mxu0 %v6096
    %6271 = vmatpush1.bf16.msra.mxu0 %v6095
    %6272 = vmatprep.subr.bf16.mxu0 %v6102
    %6273 = vmatpush1.bf16.msra.mxu0 %v6101
    %6274 = vmatprep.subr.bf16.mxu0 %v6108
    %6275 = vmatpush1.bf16.msra.mxu0 %v6107
    %6276 = vmatprep.subr.bf16.mxu0 %v6114
    %6277 = vmatpush1.bf16.msra.mxu0 %v6113
    %6278 = vmatprep.subr.bf16.mxu0 %v6120
    %6279 = vmatpush1.bf16.msra.mxu0 %v6119
    %6280 = vmatprep.mubr.bf16.mxu0 %v5548
    %6281 = vmatmul.mubr.bf16.gmra.mrb[0].mxu0 %v5547
    %v6282 = vpop.f32.mrb[0].mxu0
    %v6283 = vadd.f32 %v6242, %v6282
    %v6284 = vpop.f32.mrb[0].mxu0
    %v6285 = vadd.f32 %v6244, %v6284
    %v6286 = vpop.f32.mrb[0].mxu0
    %v6287 = vpop.f32.mrb[0].mxu0
    %6288 = vdwg.mxu0
    %6289 = vmatprep.subr.bf16.mxu0 %v5744
    %6290 = vmatpush1.bf16.msra.mxu0 %v5743
    %6291 = vmatprep.subr.bf16.mxu0 %v5750
    %6292 = vmatpush1.bf16.msra.mxu0 %v5749
    %6293 = vmatprep.subr.bf16.mxu0 %v5756
    %6294 = vmatpush1.bf16.msra.mxu0 %v5755
    %6295 = vmatprep.subr.bf16.mxu0 %v5762
    %6296 = vmatpush1.bf16.msra.mxu0 %v5761
    %6297 = vmatprep.subr.bf16.mxu0 %v5768
    %6298 = vmatpush1.bf16.msra.mxu0 %v5767
    %6299 = vmatprep.subr.bf16.mxu0 %v5774
    %6300 = vmatpush1.bf16.msra.mxu0 %v5773
    %6301 = vmatprep.subr.bf16.mxu0 %v5780
    %6302 = vmatpush1.bf16.msra.mxu0 %v5779
    %6303 = vmatprep.subr.bf16.mxu0 %v5786
    %6304 = vmatpush1.bf16.msra.mxu0 %v5785
    %6305 = vmatprep.subr.bf16.mxu0 %v5792
    %6306 = vmatpush1.bf16.msra.mxu0 %v5791
    %6307 = vmatprep.subr.bf16.mxu0 %v5798
    %6308 = vmatpush1.bf16.msra.mxu0 %v5797
    %6309 = vmatprep.subr.bf16.mxu0 %v5804
    %6310 = vmatpush1.bf16.msra.mxu0 %v5803
    %6311 = vmatprep.subr.bf16.mxu0 %v5810
    %6312 = vmatpush1.bf16.msra.mxu0 %v5809
    %6313 = vmatprep.subr.bf16.mxu0 %v5816
    %6314 = vmatpush1.bf16.msra.mxu0 %v5815
    %6315 = vmatprep.subr.bf16.mxu0 %v5822
    %6316 = vmatpush1.bf16.msra.mxu0 %v5821
    %6317 = vmatprep.subr.bf16.mxu0 %v5828
    %6318 = vmatpush1.bf16.msra.mxu0 %v5827
    %6319 = vmatprep.subr.bf16.mxu0 %v5834
    %6320 = vmatpush1.bf16.msra.mxu0 %v5833
    %6321 = vmatprep.mubr.bf16.mxu0 %v5542
    %6322 = vmatmul.mubr.bf16.gmra.mrb[0].mxu0 %v5541
    %v6323 = vpop.f32.mrb[0].mxu0
    %v6324 = vadd.f32 0.0, %v6323
    %v6325 = vpop.f32.mrb[0].mxu0
    %v6326 = vadd.f32 0.0, %v6325
    %v6327 = vpop.f32.mrb[0].mxu0
    %v6328 = vpop.f32.mrb[0].mxu0
    %6329 = vdwg.mxu0
    %6330 = vmatprep.subr.bf16.mxu0 %v5840
    %6331 = vmatpush1.bf16.msra.mxu0 %v5839
    %6332 = vmatprep.subr.bf16.mxu0 %v5846
    %6333 = vmatpush1.bf16.msra.mxu0 %v5845
    %6334 = vmatprep.subr.bf16.mxu0 %v5852
    %6335 = vmatpush1.bf16.msra.mxu0 %v5851
    %6336 = vmatprep.subr.bf16.mxu0 %v5858
    %6337 = vmatpush1.bf16.msra.mxu0 %v5857
    %6338 = vmatprep.subr.bf16.mxu0 %v5864
    %6339 = vmatpush1.bf16.msra.mxu0 %v5863
    %6340 = vmatprep.subr.bf16.mxu0 %v5870
    %6341 = vmatpush1.bf16.msra.mxu0 %v5869
    %6342 = vmatprep.subr.bf16.mxu0 %v5876
    %6343 = vmatpush1.bf16.msra.mxu0 %v5875
    %6344 = vmatprep.subr.bf16.mxu0 %v5882
    %6345 = vmatpush1.bf16.msra.mxu0 %v5881
    %6346 = vmatprep.subr.bf16.mxu0 %v5888
    %6347 = vmatpush1.bf16.msra.mxu0 %v5887
    %6348 = vmatprep.subr.bf16.mxu0 %v5894
    %6349 = vmatpush1.bf16.msra.mxu0 %v5893
    %6350 = vmatprep.subr.bf16.mxu0 %v5900
    %6351 = vmatpush1.bf16.msra.mxu0 %v5899
    %6352 = vmatprep.subr.bf16.mxu0 %v5906
    %6353 = vmatpush1.bf16.msra.mxu0 %v5905
    %6354 = vmatprep.subr.bf16.mxu0 %v5912
    %6355 = vmatpush1.bf16.msra.mxu0 %v5911
    %6356 = vmatprep.subr.bf16.mxu0 %v5918
    %6357 = vmatpush1.bf16.msra.mxu0 %v5917
    %6358 = vmatprep.subr.bf16.mxu0 %v5924
    %6359 = vmatpush1.bf16.msra.mxu0 %v5923
    %6360 = vmatprep.subr.bf16.mxu0 %v5930
    %6361 = vmatpush1.bf16.msra.mxu0 %v5929
    %6362 = vmatprep.mubr.bf16.mxu0 %v5544
    %6363 = vmatmul.mubr.bf16.gmra.mrb[0].mxu0 %v5543
    %v6364 = vpop.f32.mrb[0].mxu0
    %v6365 = vadd.f32 %v6324, %v6364
    %v6366 = vpop.f32.mrb[0].mxu0
    %v6367 = vadd.f32 %v6326, %v6366
    %v6368 = vpop.f32.mrb[0].mxu0
    %v6369 = vpop.f32.mrb[0].mxu0
    %6370 = vdwg.mxu0
    %6371 = vmatprep.subr.bf16.mxu0 %v5936
    %6372 = vmatpush1.bf16.msra.mxu0 %v5935
    %6373 = vmatprep.subr.bf16.mxu0 %v5942
    %6374 = vmatpush1.bf16.msra.mxu0 %v5941
    %6375 = vmatprep.subr.bf16.mxu0 %v5948
    %6376 = vmatpush1.bf16.msra.mxu0 %v5947
    %6377 = vmatprep.subr.bf16.mxu0 %v5954
    %6378 = vmatpush1.bf16.msra.mxu0 %v5953
    %6379 = vmatprep.subr.bf16.mxu0 %v5960
    %6380 = vmatpush1.bf16.msra.mxu0 %v5959
    %6381 = vmatprep.subr.bf16.mxu0 %v5966
    %6382 = vmatpush1.bf16.msra.mxu0 %v5965
    %6383 = vmatprep.subr.bf16.mxu0 %v5972
    %6384 = vmatpush1.bf16.msra.mxu0 %v5971
    %6385 = vmatprep.subr.bf16.mxu0 %v5978
    %6386 = vmatpush1.bf16.msra.mxu0 %v5977
    %6387 = vmatprep.subr.bf16.mxu0 %v5984
    %6388 = vmatpush1.bf16.msra.mxu0 %v5983
    %6389 = vmatprep.subr.bf16.mxu0 %v5990
    %6390 = vmatpush1.bf16.msra.mxu0 %v5989
    %6391 = vmatprep.subr.bf16.mxu0 %v5996
    %6392 = vmatpush1.bf16.msra.mxu0 %v5995
    %6393 = vmatprep.subr.bf16.mxu0 %v6002
    %6394 = vmatpush1.bf16.msra.mxu0 %v6001
    %6395 = vmatprep.subr.bf16.mxu0 %v6008
    %6396 = vmatpush1.bf16.msra.mxu0 %v6007
    %6397 = vmatprep.subr.bf16.mxu0 %v6014
    %6398 = vmatpush1.bf16.msra.mxu0 %v6013
    %6399 = vmatprep.subr.bf16.mxu0 %v6020
    %6400 = vmatpush1.bf16.msra.mxu0 %v6019
    %6401 = vmatprep.subr.bf16.mxu0 %v6026
    %6402 = vmatpush1.bf16.msra.mxu0 %v6025
    %6403 = vmatprep.mubr.bf16.mxu0 %v5546
    %6404 = vmatmul.mubr.bf16.gmra.mrb[0].mxu0 %v5545
    %v6405 = vpop.f32.mrb[0].mxu0
    %v6406 = vadd.f32 %v6365, %v6405
    %v6407 = vpop.f32.mrb[0].mxu0
    %v6408 = vadd.f32 %v6367, %v6407
    %v6409 = vpop.f32.mrb[0].mxu0
    %v6410 = vpop.f32.mrb[0].mxu0
    %6411 = vdwg.mxu0
    %6412 = vmatprep.subr.bf16.mxu0 %v6032
    %6413 = vmatpush1.bf16.msra.mxu0 %v6031
    %6414 = vmatprep.subr.bf16.mxu0 %v6038
    %6415 = vmatpush1.bf16.msra.mxu0 %v6037
    %6416 = vmatprep.subr.bf16.mxu0 %v6044
    %6417 = vmatpush1.bf16.msra.mxu0 %v6043
    %6418 = vmatprep.subr.bf16.mxu0 %v6050
    %6419 = vmatpush1.bf16.msra.mxu0 %v6049
    %6420 = vmatprep.subr.bf16.mxu0 %v6056
    %6421 = vmatpush1.bf16.msra.mxu0 %v6055
    %6422 = vmatprep.subr.bf16.mxu0 %v6062
    %6423 = vmatpush1.bf16.msra.mxu0 %v6061
    %6424 = vmatprep.subr.bf16.mxu0 %v6068
    %6425 = vmatpush1.bf16.msra.mxu0 %v6067
    %6426 = vmatprep.subr.bf16.mxu0 %v6074
    %6427 = vmatpush1.bf16.msra.mxu0 %v6073
    %6428 = vmatprep.subr.bf16.mxu0 %v6080
    %6429 = vmatpush1.bf16.msra.mxu0 %v6079
    %6430 = vmatprep.subr.bf16.mxu0 %v6086
    %6431 = vmatpush1.bf16.msra.mxu0 %v6085
    %6432 = vmatprep.subr.bf16.mxu0 %v6092
    %6433 = vmatpush1.bf16.msra.mxu0 %v6091
    %6434 = vmatprep.subr.bf16.mxu0 %v6098
    %6435 = vmatpush1.bf16.msra.mxu0 %v6097
    %6436 = vmatprep.subr.bf16.mxu0 %v6104
    %6437 = vmatpush1.bf16.msra.mxu0 %v6103
    %6438 = vmatprep.subr.bf16.mxu0 %v6110
    %6439 = vmatpush1.bf16.msra.mxu0 %v6109
    %6440 = vmatprep.subr.bf16.mxu0 %v6116
    %6441 = vmatpush1.bf16.msra.mxu0 %v6115
    %6442 = vmatprep.subr.bf16.mxu0 %v6122
    %6443 = vmatpush1.bf16.msra.mxu0 %v6121
    %6444 = vmatprep.mubr.bf16.mxu0 %v5548
    %6445 = vmatmul.mubr.bf16.gmra.mrb[0].mxu0 %v5547
    %v6446 = vpop.f32.mrb[0].mxu0
    %v6447 = vadd.f32 %v6406, %v6446
    %v6448 = vpop.f32.mrb[0].mxu0
    %v6449 = vadd.f32 %v6408, %v6448
    %v6450 = vpop.f32.mrb[0].mxu0
    %v6451 = vpop.f32.mrb[0].mxu0
    %6452 = vdwg.mxu0
    %6453 = vmatprep.subr.bf16.mxu0 %v5746
    %6454 = vmatpush1.bf16.msra.mxu0 %v5745
    %6455 = vmatprep.subr.bf16.mxu0 %v5752
    %6456 = vmatpush1.bf16.msra.mxu0 %v5751
    %6457 = vmatprep.subr.bf16.mxu0 %v5758
    %6458 = vmatpush1.bf16.msra.mxu0 %v5757
    %6459 = vmatprep.subr.bf16.mxu0 %v5764
    %6460 = vmatpush1.bf16.msra.mxu0 %v5763
    %6461 = vmatprep.subr.bf16.mxu0 %v5770
    %6462 = vmatpush1.bf16.msra.mxu0 %v5769
    %6463 = vmatprep.subr.bf16.mxu0 %v5776
    %6464 = vmatpush1.bf16.msra.mxu0 %v5775
    %6465 = vmatprep.subr.bf16.mxu0 %v5782
    %6466 = vmatpush1.bf16.msra.mxu0 %v5781
    %6467 = vmatprep.subr.bf16.mxu0 %v5788
    %6468 = vmatpush1.bf16.msra.mxu0 %v5787
    %6469 = vmatprep.subr.bf16.mxu0 %v5794
    %6470 = vmatpush1.bf16.msra.mxu0 %v5793
    %6471 = vmatprep.subr.bf16.mxu0 %v5800
    %6472 = vmatpush1.bf16.msra.mxu0 %v5799
    %6473 = vmatprep.subr.bf16.mxu0 %v5806
    %6474 = vmatpush1.bf16.msra.mxu0 %v5805
    %6475 = vmatprep.subr.bf16.mxu0 %v5812
    %6476 = vmatpush1.bf16.msra.mxu0 %v5811
    %6477 = vmatprep.subr.bf16.mxu0 %v5818
    %6478 = vmatpush1.bf16.msra.mxu0 %v5817
    %6479 = vmatprep.subr.bf16.mxu0 %v5824
    %6480 = vmatpush1.bf16.msra.mxu0 %v5823
    %6481 = vmatprep.subr.bf16.mxu0 %v5830
    %6482 = vmatpush1.bf16.msra.mxu0 %v5829
    %6483 = vmatprep.subr.bf16.mxu0 %v5836
    %6484 = vmatpush1.bf16.msra.mxu0 %v5835
    %6485 = vmatprep.mubr.bf16.mxu0 %v5542
    %6486 = vmatmul.mubr.bf16.gmra.mrb[0].mxu0 %v5541
    %v6487 = vpop.f32.mrb[0].mxu0
    %v6488 = vadd.f32 0.0, %v6487
    %v6489 = vpop.f32.mrb[0].mxu0
    %v6490 = vadd.f32 0.0, %v6489
    %v6491 = vpop.f32.mrb[0].mxu0
    %v6492 = vpop.f32.mrb[0].mxu0
    %6493 = vdwg.mxu0
    %6494 = vmatprep.subr.bf16.mxu0 %v5842
    %6495 = vmatpush1.bf16.msra.mxu0 %v5841
    %6496 = vmatprep.subr.bf16.mxu0 %v5848
    %6497 = vmatpush1.bf16.msra.mxu0 %v5847
    %6498 = vmatprep.subr.bf16.mxu0 %v5854
    %6499 = vmatpush1.bf16.msra.mxu0 %v5853
    %6500 = vmatprep.subr.bf16.mxu0 %v5860
    %6501 = vmatpush1.bf16.msra.mxu0 %v5859
    %6502 = vmatprep.subr.bf16.mxu0 %v5866
    %6503 = vmatpush1.bf16.msra.mxu0 %v5865
    %6504 = vmatprep.subr.bf16.mxu0 %v5872
    %6505 = vmatpush1.bf16.msra.mxu0 %v5871
    %6506 = vmatprep.subr.bf16.mxu0 %v5878
    %6507 = vmatpush1.bf16.msra.mxu0 %v5877
    %6508 = vmatprep.subr.bf16.mxu0 %v5884
    %6509 = vmatpush1.bf16.msra.mxu0 %v5883
    %6510 = vmatprep.subr.bf16.mxu0 %v5890
    %6511 = vmatpush1.bf16.msra.mxu0 %v5889
    %6512 = vmatprep.subr.bf16.mxu0 %v5896
    %6513 = vmatpush1.bf16.msra.mxu0 %v5895
    %6514 = vmatprep.subr.bf16.mxu0 %v5902
    %6515 = vmatpush1.bf16.msra.mxu0 %v5901
    %6516 = vmatprep.subr.bf16.mxu0 %v5908
    %6517 = vmatpush1.bf16.msra.mxu0 %v5907
    %6518 = vmatprep.subr.bf16.mxu0 %v5914
    %6519 = vmatpush1.bf16.msra.mxu0 %v5913
    %6520 = vmatprep.subr.bf16.mxu0 %v5920
    %6521 = vmatpush1.bf16.msra.mxu0 %v5919
    %6522 = vmatprep.subr.bf16.mxu0 %v5926
    %6523 = vmatpush1.bf16.msra.mxu0 %v5925
    %6524 = vmatprep.subr.bf16.mxu0 %v5932
    %6525 = vmatpush1.bf16.msra.mxu0 %v5931
    %6526 = vmatprep.mubr.bf16.mxu0 %v5544
    %6527 = vmatmul.mubr.bf16.gmra.mrb[0].mxu0 %v5543
    %v6528 = vpop.f32.mrb[0].mxu0
    %v6529 = vadd.f32 %v6488, %v6528
    %v6530 = vpop.f32.mrb[0].mxu0
    %v6531 = vadd.f32 %v6490, %v6530
    %v6532 = vpop.f32.mrb[0].mxu0
    %v6533 = vpop.f32.mrb[0].mxu0
    %6534 = vdwg.mxu0
    %6535 = vmatprep.subr.bf16.mxu0 %v5938
    %6536 = vmatpush1.bf16.msra.mxu0 %v5937
    %6537 = vmatprep.subr.bf16.mxu0 %v5944
    %6538 = vmatpush1.bf16.msra.mxu0 %v5943
    %6539 = vmatprep.subr.bf16.mxu0 %v5950
    %6540 = vmatpush1.bf16.msra.mxu0 %v5949
    %6541 = vmatprep.subr.bf16.mxu0 %v5956
    %6542 = vmatpush1.bf16.msra.mxu0 %v5955
    %6543 = vmatprep.subr.bf16.mxu0 %v5962
    %6544 = vmatpush1.bf16.msra.mxu0 %v5961
    %6545 = vmatprep.subr.bf16.mxu0 %v5968
    %6546 = vmatpush1.bf16.msra.mxu0 %v5967
    %6547 = vmatprep.subr.bf16.mxu0 %v5974
    %6548 = vmatpush1.bf16.msra.mxu0 %v5973
    %6549 = vmatprep.subr.bf16.mxu0 %v5980
    %6550 = vmatpush1.bf16.msra.mxu0 %v5979
    %6551 = vmatprep.subr.bf16.mxu0 %v5986
    %6552 = vmatpush1.bf16.msra.mxu0 %v5985
    %6553 = vmatprep.subr.bf16.mxu0 %v5992
    %6554 = vmatpush1.bf16.msra.mxu0 %v5991
    %6555 = vmatprep.subr.bf16.mxu0 %v5998
    %6556 = vmatpush1.bf16.msra.mxu0 %v5997
    %6557 = vmatprep.subr.bf16.mxu0 %v6004
    %6558 = vmatpush1.bf16.msra.mxu0 %v6003
    %6559 = vmatprep.subr.bf16.mxu0 %v6010
    %6560 = vmatpush1.bf16.msra.mxu0 %v6009
    %6561 = vmatprep.subr.bf16.mxu0 %v6016
    %6562 = vmatpush1.bf16.msra.mxu0 %v6015
    %6563 = vmatprep.subr.bf16.mxu0 %v6022
    %6564 = vmatpush1.bf16.msra.mxu0 %v6021
    %6565 = vmatprep.subr.bf16.mxu0 %v6028
    %6566 = vmatpush1.bf16.msra.mxu0 %v6027
    %6567 = vmatprep.mubr.bf16.mxu0 %v5546
    %6568 = vmatmul.mubr.bf16.gmra.mrb[0].mxu0 %v5545
    %v6569 = vpop.f32.mrb[0].mxu0
    %v6570 = vadd.f32 %v6529, %v6569
    %v6571 = vpop.f32.mrb[0].mxu0
    %v6572 = vadd.f32 %v6531, %v6571
    %v6573 = vpop.f32.mrb[0].mxu0
    %v6574 = vpop.f32.mrb[0].mxu0
    %6575 = vdwg.mxu0
    %6576 = vmatprep.subr.bf16.mxu0 %v6034
    %6577 = vmatpush1.bf16.msra.mxu0 %v6033
    %6578 = vmatprep.subr.bf16.mxu0 %v6040
    %6579 = vmatpush1.bf16.msra.mxu0 %v6039
    %6580 = vmatprep.subr.bf16.mxu0 %v6046
    %6581 = vmatpush1.bf16.msra.mxu0 %v6045
    %6582 = vmatprep.subr.bf16.mxu0 %v6052
    %6583 = vmatpush1.bf16.msra.mxu0 %v6051
    %6584 = vmatprep.subr.bf16.mxu0 %v6058
    %6585 = vmatpush1.bf16.msra.mxu0 %v6057
    %6586 = vmatprep.subr.bf16.mxu0 %v6064
    %6587 = vmatpush1.bf16.msra.mxu0 %v6063
    %6588 = vmatprep.subr.bf16.mxu0 %v6070
    %6589 = vmatpush1.bf16.msra.mxu0 %v6069
    %6590 = vmatprep.subr.bf16.mxu0 %v6076
    %6591 = vmatpush1.bf16.msra.mxu0 %v6075
    %6592 = vmatprep.subr.bf16.mxu0 %v6082
    %6593 = vmatpush1.bf16.msra.mxu0 %v6081
    %6594 = vmatprep.subr.bf16.mxu0 %v6088
    %6595 = vmatpush1.bf16.msra.mxu0 %v6087
    %6596 = vmatprep.subr.bf16.mxu0 %v6094
    %6597 = vmatpush1.bf16.msra.mxu0 %v6093
    %6598 = vmatprep.subr.bf16.mxu0 %v6100
    %6599 = vmatpush1.bf16.msra.mxu0 %v6099
    %6600 = vmatprep.subr.bf16.mxu0 %v6106
    %6601 = vmatpush1.bf16.msra.mxu0 %v6105
    %6602 = vmatprep.subr.bf16.mxu0 %v6112
    %6603 = vmatpush1.bf16.msra.mxu0 %v6111
    %6604 = vmatprep.subr.bf16.mxu0 %v6118
    %6605 = vmatpush1.bf16.msra.mxu0 %v6117
    %6606 = vmatprep.subr.bf16.mxu0 %v6124
    %6607 = vmatpush1.bf16.msra.mxu0 %v6123
    %6608 = vmatprep.mubr.bf16.mxu0 %v5548
    %6609 = vmatmul.mubr.bf16.gmra.mrb[0].mxu0 %v5547
    %v6610 = vpop.f32.mrb[0].mxu0
    %v6611 = vadd.f32 %v6570, %v6610
    %v6612 = vpop.f32.mrb[0].mxu0
    %v6613 = vadd.f32 %v6572, %v6612
    %v6614 = vpop.f32.mrb[0].mxu0
    %v6615 = vpop.f32.mrb[0].mxu0
    %6616 = vdwg.mxu0
    %v6617 = vld [vmem:[#allocation19] sm:$0x3f]
    %v6619 = vlaneseq
    %v6620 = vshrl.u32 %v6619, 7
    %v6621 = vsub.s32 0, %v6620
    %v6622 = vrot.slane %v6617, %v6621
    %v6623 = vlaneseq
    %v6624 = vshrl.u32 %v6623, 7
    %v6625 = vsub.s32 1, %v6624
    %v6626 = vrot.slane %v6617, %v6625
    %v6627 = vlaneseq
    %v6628 = vshrl.u32 %v6627, 7
    %v6629 = vsub.s32 2, %v6628
    %v6630 = vrot.slane %v6617, %v6629
    %v6631 = vlaneseq
    %v6632 = vshrl.u32 %v6631, 7
    %v6633 = vsub.s32 3, %v6632
    %v6634 = vrot.slane %v6617, %v6633
    %v6635 = vlaneseq
    %v6636 = vshrl.u32 %v6635, 7
    %v6637 = vsub.s32 4, %v6636
    %v6638 = vrot.slane %v6617, %v6637
    %v6639 = vlaneseq
    %v6640 = vshrl.u32 %v6639, 7
    %v6641 = vsub.s32 5, %v6640
    %v6642 = vrot.slane %v6617, %v6641
    %v6649 = vmul.f32 %v6283, %v6622
    %v6650 = vmul.f32 %v6285, %v6626
    %v6651 = vmul.f32 %v6447, %v6630
    %v6652 = vmul.f32 %v6449, %v6634
    %v6653 = vmul.f32 %v6611, %v6638
    %v6654 = vmul.f32 %v6613, %v6642
    %v6655 = vld [vmem:[#allocation20] sm:$0x3f]
    %v6657 = vlaneseq
    %v6658 = vshrl.u32 %v6657, 7
    %v6659 = vsub.s32 0, %v6658
    %v6660 = vrot.slane %v6655, %v6659
    %v6661 = vlaneseq
    %v6662 = vshrl.u32 %v6661, 7
    %v6663 = vsub.s32 1, %v6662
    %v6664 = vrot.slane %v6655, %v6663
    %v6665 = vlaneseq
    %v6666 = vshrl.u32 %v6665, 7
    %v6667 = vsub.s32 2, %v6666
    %v6668 = vrot.slane %v6655, %v6667
    %v6669 = vlaneseq
    %v6670 = vshrl.u32 %v6669, 7
    %v6671 = vsub.s32 3, %v6670
    %v6672 = vrot.slane %v6655, %v6671
    %v6673 = vlaneseq
    %v6674 = vshrl.u32 %v6673, 7
    %v6675 = vsub.s32 4, %v6674
    %v6676 = vrot.slane %v6655, %v6675
    %v6677 = vlaneseq
    %v6678 = vshrl.u32 %v6677, 7
    %v6679 = vsub.s32 5, %v6678
    %v6680 = vrot.slane %v6655, %v6679
    %v6687 = vadd.f32 %v6649, %v6660
    %v6688 = vadd.f32 %v6650, %v6664
    %v6689 = vadd.f32 %v6651, %v6668
    %v6690 = vadd.f32 %v6652, %v6672
    %v6691 = vadd.f32 %v6653, %v6676
    %v6692 = vadd.f32 %v6654, %v6680
    %v6693 = vmul.f32 %v6687, 0.01
    %v6694 = vmul.f32 %v6688, 0.01
    %v6695 = vmul.f32 %v6689, 0.01
    %v6696 = vmul.f32 %v6690, 0.01
    %v6697 = vmul.f32 %v6691, 0.01
    %v6698 = vmul.f32 %v6692, 0.01
    %v6699 = vmax.f32 %v6687, %v6693
    %v6700 = vmax.f32 %v6688, %v6694
    %v6701 = vmax.f32 %v6689, %v6695
    %v6702 = vmax.f32 %v6690, %v6696
    %v6703 = vmax.f32 %v6691, %v6697
    %v6704 = vmax.f32 %v6692, %v6698
    %v6705 = vpack.c.bf16 %v6699, %v6699
    %v6706 = vpack.c.bf16 %v6700, %v6700
    %v6707 = vpack.c.bf16 %v6701, %v6701
    %v6708 = vpack.c.bf16 %v6702, %v6702
    %v6709 = vpack.c.bf16 %v6703, %v6703
    %v6710 = vpack.c.bf16 %v6704, %v6704
    %v6711 = vld [vmem:[#allocation22] sm:$0xff]
    %v6712 = vld [vmem:[#allocation22 + $0x8] sm:$0xff]
    %v6713 = vld [vmem:[#allocation22 + $0x10] sm:$0xff]
    %v6714 = vld [vmem:[#allocation22 + $0x18] sm:$0xff]
    %v6715 = vld [vmem:[#allocation22 + $0x20] sm:$0xff]
    %v6716 = vld [vmem:[#allocation22 + $0x28] sm:$0xff]
    %v6717 = vld [vmem:[#allocation22 + $0x30] sm:$0xff]
    %v6718 = vld [vmem:[#allocation22 + $0x38] sm:$0xff]
    %v6719 = vld [vmem:[#allocation22 + $0x40] sm:$0xff]
    %v6720 = vld [vmem:[#allocation22 + $0x48] sm:$0xff]
    %v6721 = vld [vmem:[#allocation22 + $0x50] sm:$0xff]
    %v6722 = vld [vmem:[#allocation22 + $0x58] sm:$0xff]
    %v6723 = vld [vmem:[#allocation22 + $0x60] sm:$0xff]
    %v6724 = vld [vmem:[#allocation22 + $0x68] sm:$0xff]
    %v6725 = vld [vmem:[#allocation22 + $0x70] sm:$0xff]
    %v6726 = vld [vmem:[#allocation22 + $0x78] sm:$0xff]
    %v6727 = vld [vmem:[#allocation22 + $0x80] sm:$0xff]
    %v6728 = vld [vmem:[#allocation22 + $0x88] sm:$0xff]
    %v6729 = vld [vmem:[#allocation22 + $0x90] sm:$0xff]
    %v6730 = vld [vmem:[#allocation22 + $0x98] sm:$0xff]
    %v6731 = vld [vmem:[#allocation22 + $0xa0] sm:$0xff]
    %v6732 = vld [vmem:[#allocation22 + $0xa8] sm:$0xff]
    %v6733 = vld [vmem:[#allocation22 + $0xb0] sm:$0xff]
    %v6734 = vld [vmem:[#allocation22 + $0xb8] sm:$0xff]
    %v6735 = vunpack.c.l.s8.bf16 %v6711
    %v6736 = vunpack.c.h.s8.bf16 %v6711
    %v6737 = vunpack.c.l.s8.bf16 %v6712
    %v6738 = vunpack.c.h.s8.bf16 %v6712
    %v6739 = vunpack.c.l.s8.bf16 %v6713
    %v6740 = vunpack.c.h.s8.bf16 %v6713
    %v6741 = vunpack.c.l.s8.bf16 %v6714
    %v6742 = vunpack.c.h.s8.bf16 %v6714
    %v6743 = vunpack.c.l.s8.bf16 %v6715
    %v6744 = vunpack.c.h.s8.bf16 %v6715
    %v6745 = vunpack.c.l.s8.bf16 %v6716
    %v6746 = vunpack.c.h.s8.bf16 %v6716
    %v6747 = vunpack.c.l.s8.bf16 %v6717
    %v6748 = vunpack.c.h.s8.bf16 %v6717
    %v6749 = vunpack.c.l.s8.bf16 %v6718
    %v6750 = vunpack.c.h.s8.bf16 %v6718
    %v6751 = vunpack.c.l.s8.bf16 %v6719
    %v6752 = vunpack.c.h.s8.bf16 %v6719
    %v6753 = vunpack.c.l.s8.bf16 %v6720
    %v6754 = vunpack.c.h.s8.bf16 %v6720
    %v6755 = vunpack.c.l.s8.bf16 %v6721
    %v6756 = vunpack.c.h.s8.bf16 %v6721
    %v6757 = vunpack.c.l.s8.bf16 %v6722
    %v6758 = vunpack.c.h.s8.bf16 %v6722
    %v6759 = vunpack.c.l.s8.bf16 %v6723
    %v6760 = vunpack.c.h.s8.bf16 %v6723
    %v6761 = vunpack.c.l.s8.bf16 %v6724
    %v6762 = vunpack.c.h.s8.bf16 %v6724
    %v6763 = vunpack.c.l.s8.bf16 %v6725
    %v6764 = vunpack.c.h.s8.bf16 %v6725
    %v6765 = vunpack.c.l.s8.bf16 %v6726
    %v6766 = vunpack.c.h.s8.bf16 %v6726
    %v6767 = vunpack.c.l.s8.bf16 %v6727
    %v6768 = vunpack.c.h.s8.bf16 %v6727
    %v6769 = vunpack.c.l.s8.bf16 %v6728
    %v6770 = vunpack.c.h.s8.bf16 %v6728
    %v6771 = vunpack.c.l.s8.bf16 %v6729
    %v6772 = vunpack.c.h.s8.bf16 %v6729
    %v6773 = vunpack.c.l.s8.bf16 %v6730
    %v6774 = vunpack.c.h.s8.bf16 %v6730
    %v6775 = vunpack.c.l.s8.bf16 %v6731
    %v6776 = vunpack.c.h.s8.bf16 %v6731
    %v6777 = vunpack.c.l.s8.bf16 %v6732
    %v6778 = vunpack.c.h.s8.bf16 %v6732
    %v6779 = vunpack.c.l.s8.bf16 %v6733
    %v6780 = vunpack.c.h.s8.bf16 %v6733
    %v6781 = vunpack.c.l.s8.bf16 %v6734
    %v6782 = vunpack.c.h.s8.bf16 %v6734
    %6783 = vmatprep.subr.bf16.mxu0 0
    %6784 = vmatpush1.bf16.msra.mxu0 %v6735
    %6785 = vmatprep.subr.bf16.mxu0 0
    %6786 = vmatpush1.bf16.msra.mxu0 %v6736
    %6787 = vmatprep.subr.bf16.mxu0 0
    %6788 = vmatpush1.bf16.msra.mxu0 %v6737
    %6789 = vmatprep.subr.bf16.mxu0 0
    %6790 = vmatpush1.bf16.msra.mxu0 %v6738
    %6791 = vmatprep.subr.bf16.mxu0 0
    %6792 = vmatpush1.bf16.msra.mxu0 %v6739
    %6793 = vmatprep.subr.bf16.mxu0 0
    %6794 = vmatpush1.bf16.msra.mxu0 %v6740
    %6795 = vmatprep.subr.bf16.mxu0 0
    %6796 = vmatpush1.bf16.msra.mxu0 %v6741
    %6797 = vmatprep.subr.bf16.mxu0 0
    %6798 = vmatpush1.bf16.msra.mxu0 %v6742
    %6799 = vmatprep.subr.bf16.mxu0 0
    %6800 = vmatpush1.bf16.msra.mxu0 %v6743
    %6801 = vmatprep.subr.bf16.mxu0 0
    %6802 = vmatpush1.bf16.msra.mxu0 %v6744
    %6803 = vmatprep.subr.bf16.mxu0 0
    %6804 = vmatpush1.bf16.msra.mxu0 %v6745
    %6805 = vmatprep.subr.bf16.mxu0 0
    %6806 = vmatpush1.bf16.msra.mxu0 %v6746
    %6807 = vmatprep.subr.bf16.mxu0 0
    %6808 = vmatpush1.bf16.msra.mxu0 %v6747
    %6809 = vmatprep.subr.bf16.mxu0 0
    %6810 = vmatpush1.bf16.msra.mxu0 %v6748
    %6811 = vmatprep.subr.bf16.mxu0 0
    %6812 = vmatpush1.bf16.msra.mxu0 %v6749
    %6813 = vmatprep.subr.bf16.mxu0 0
    %6814 = vmatpush1.bf16.msra.mxu0 %v6750
    %6815 = vmatprep.mubr.bf16.mxu0 %v6706
    %6816 = vmatmul.mubr.bf16.gmra.mrb[0].mxu0 %v6705
    %v6817 = vpop.f32.mrb[0].mxu0
    %v6818 = vadd.f32 0.0, %v6817
    %v6819 = vpop.f32.mrb[0].mxu0
    %v6820 = vpop.f32.mrb[0].mxu0
    %v6821 = vpop.f32.mrb[0].mxu0
    %6822 = vdwg.mxu0
    %6823 = vmatprep.subr.bf16.mxu0 0
    %6824 = vmatpush1.bf16.msra.mxu0 %v6751
    %6825 = vmatprep.subr.bf16.mxu0 0
    %6826 = vmatpush1.bf16.msra.mxu0 %v6752
    %6827 = vmatprep.subr.bf16.mxu0 0
    %6828 = vmatpush1.bf16.msra.mxu0 %v6753
    %6829 = vmatprep.subr.bf16.mxu0 0
    %6830 = vmatpush1.bf16.msra.mxu0 %v6754
    %6831 = vmatprep.subr.bf16.mxu0 0
    %6832 = vmatpush1.bf16.msra.mxu0 %v6755
    %6833 = vmatprep.subr.bf16.mxu0 0
    %6834 = vmatpush1.bf16.msra.mxu0 %v6756
    %6835 = vmatprep.subr.bf16.mxu0 0
    %6836 = vmatpush1.bf16.msra.mxu0 %v6757
    %6837 = vmatprep.subr.bf16.mxu0 0
    %6838 = vmatpush1.bf16.msra.mxu0 %v6758
    %6839 = vmatprep.subr.bf16.mxu0 0
    %6840 = vmatpush1.bf16.msra.mxu0 %v6759
    %6841 = vmatprep.subr.bf16.mxu0 0
    %6842 = vmatpush1.bf16.msra.mxu0 %v6760
    %6843 = vmatprep.subr.bf16.mxu0 0
    %6844 = vmatpush1.bf16.msra.mxu0 %v6761
    %6845 = vmatprep.subr.bf16.mxu0 0
    %6846 = vmatpush1.bf16.msra.mxu0 %v6762
    %6847 = vmatprep.subr.bf16.mxu0 0
    %6848 = vmatpush1.bf16.msra.mxu0 %v6763
    %6849 = vmatprep.subr.bf16.mxu0 0
    %6850 = vmatpush1.bf16.msra.mxu0 %v6764
    %6851 = vmatprep.subr.bf16.mxu0 0
    %6852 = vmatpush1.bf16.msra.mxu0 %v6765
    %6853 = vmatprep.subr.bf16.mxu0 0
    %6854 = vmatpush1.bf16.msra.mxu0 %v6766
    %6855 = vmatprep.mubr.bf16.mxu0 %v6708
    %6856 = vmatmul.mubr.bf16.gmra.mrb[0].mxu0 %v6707
    %v6857 = vpop.f32.mrb[0].mxu0
    %v6858 = vadd.f32 %v6818, %v6857
    %v6859 = vpop.f32.mrb[0].mxu0
    %v6860 = vpop.f32.mrb[0].mxu0
    %v6861 = vpop.f32.mrb[0].mxu0
    %6862 = vdwg.mxu0
    %6863 = vmatprep.subr.bf16.mxu0 0
    %6864 = vmatpush1.bf16.msra.mxu0 %v6767
    %6865 = vmatprep.subr.bf16.mxu0 0
    %6866 = vmatpush1.bf16.msra.mxu0 %v6768
    %6867 = vmatprep.subr.bf16.mxu0 0
    %6868 = vmatpush1.bf16.msra.mxu0 %v6769
    %6869 = vmatprep.subr.bf16.mxu0 0
    %6870 = vmatpush1.bf16.msra.mxu0 %v6770
    %6871 = vmatprep.subr.bf16.mxu0 0
    %6872 = vmatpush1.bf16.msra.mxu0 %v6771
    %6873 = vmatprep.subr.bf16.mxu0 0
    %6874 = vmatpush1.bf16.msra.mxu0 %v6772
    %6875 = vmatprep.subr.bf16.mxu0 0
    %6876 = vmatpush1.bf16.msra.mxu0 %v6773
    %6877 = vmatprep.subr.bf16.mxu0 0
    %6878 = vmatpush1.bf16.msra.mxu0 %v6774
    %6879 = vmatprep.subr.bf16.mxu0 0
    %6880 = vmatpush1.bf16.msra.mxu0 %v6775
    %6881 = vmatprep.subr.bf16.mxu0 0
    %6882 = vmatpush1.bf16.msra.mxu0 %v6776
    %6883 = vmatprep.subr.bf16.mxu0 0
    %6884 = vmatpush1.bf16.msra.mxu0 %v6777
    %6885 = vmatprep.subr.bf16.mxu0 0
    %6886 = vmatpush1.bf16.msra.mxu0 %v6778
    %6887 = vmatprep.subr.bf16.mxu0 0
    %6888 = vmatpush1.bf16.msra.mxu0 %v6779
    %6889 = vmatprep.subr.bf16.mxu0 0
    %6890 = vmatpush1.bf16.msra.mxu0 %v6780
    %6891 = vmatprep.subr.bf16.mxu0 0
    %6892 = vmatpush1.bf16.msra.mxu0 %v6781
    %6893 = vmatprep.subr.bf16.mxu0 0
    %6894 = vmatpush1.bf16.msra.mxu0 %v6782
    %6895 = vmatprep.mubr.bf16.mxu0 %v6710
    %6896 = vmatmul.mubr.bf16.gmra.mrb[0].mxu0 %v6709
    %v6897 = vpop.f32.mrb[0].mxu0
    %v6898 = vadd.f32 %v6858, %v6897
    %v6899 = vpop.f32.mrb[0].mxu0
    %v6900 = vpop.f32.mrb[0].mxu0
    %v6901 = vpop.f32.mrb[0].mxu0
    %6902 = vdwg.mxu0
    %v6903 = vld [vmem:[#allocation23] sm:$0x1]
    %v6905 = vlaneseq
    %v6906 = vshrl.u32 %v6905, 7
    %v6907 = vsub.s32 0, %v6906
    %v6908 = vrot.slane %v6903, %v6907
    %v6910 = vmul.f32 %v6898, %v6908
    %v6911 = vld [vmem:[#allocation25] sm:$0x1]
    %v6913 = vlaneseq
    %v6914 = vshrl.u32 %v6913, 7
    %v6915 = vsub.s32 0, %v6914
    %v6916 = vrot.slane %v6911, %v6915
    %v6918 = vadd.f32 %v6910, %v6916
    %6919 = vst [vmem:[#allocation26] sm:$0xff] %v6918
    // Predicated region
    $region126: #{model_forward.1} parent=1 // pred_check
      _
    $region127: #{model_forward.1} parent=1 // pred_check_branch
      %6921 = sbr.rel (0) target = $region129
    $region128: #{model_forward.1} parent=1 // pred_region
      %s6923 = ssub.s32 128, 128
      %6924 = vsyncadd [#allocation4], %s6923
      %s6926 = sshll.u32 [#allocation26], 4
      %s6927 = int_to_ptr.vmem [resolvable:$true] %s6926
      %6929 = dma.vmem_to_hbm [thread:$0]  %s6927, 128, %s16, [#allocation4]
    $region129: #{model_forward.1} parent=1 // pred_fallthru
      _
    // Predicated region
    $region130: #{model_forward.1} parent=1 // pred_check
      _
    $region131: #{model_forward.1} parent=1 // pred_check_branch
      %6931 = sbr.rel (0) target = $region133
    $region132: #{model_forward.1} parent=1 // pred_region
      %6932 = dma.done [#allocation4], 128
    $region133: #{model_forward.1} parent=1 // pred_fallthru
      _
    %6933 = vsyncpa [#allocation3], 1
    %6934 = vsyncpa [#allocation6], 1
    %6935 = vsyncpa [#allocation9], 1
    %6936 = vsyncpa [#allocation12], 1
    %6937 = vsyncpa [#allocation15], 1
    %6938 = vsyncpa [#allocation18], 1
    %6939 = vsyncpa [#allocation21], 1
    %6940 = vsyncpa [#allocation24], 1
    %6941 = vsyncpa [#allocation4], 1

</llo_original>
